<compile_context>
chip_gen: v7x
topology: tpu7x:2x2x1
jax: 0.10.0
libtpu: 0.0.40
codegen_flags: <defaults>
</compile_context>

<pallas_src>
import numpy as np

import jax
import jax.numpy as jnp
from jax.experimental import pallas as pl
from jax.experimental.pallas import tpu as pltpu


# ----------------------------------------------------------------------------
# Host-side plan construction (runs once, on tiny weight tensors).
# ----------------------------------------------------------------------------
def _conv_mats(w, b, stride, padding, H, W, N):
    """Conv2d with weight (C_out, C_in, KH, KW) -> per-tap matrices."""
    C_out, C_in, KH, KW = w.shape
    s, p = stride, padding
    OH = (H + 2 * p - KH) // s + 1
    OW = (W + 2 * p - KW) // s + 1
    A = np.zeros((KW, OH * C_out, H * C_in), np.float32)
    B = np.zeros((KW, W, OW), np.float32)
    for j in range(KW):
        for o in range(OH):
            for h in range(H):
                i = h + p - s * o
                if 0 <= i < KH:
                    A[j, o * C_out:(o + 1) * C_out, h * C_in:(h + 1) * C_in] = w[:, :, i, j]
        for o in range(OW):
            win = s * o + j - p
            if 0 <= win < W:
                B[j, win, o] = 1.0
    Bblk = np.stack([np.kron(np.eye(N, dtype=np.float32), B[j]) for j in range(KW)])
    bias = np.tile(np.asarray(b, np.float32), OH).reshape(OH * C_out, 1)
    return A, Bblk, bias, OH, OW, C_out


def _convT_mats(w_t, b, stride, padding, H, W, N):
    """ConvTranspose2d with weight (C_in, C_out, KH, KW), rewritten as a stride-1
    conv over the zero-dilated input with flipped kernel and pad = K-1-p."""
    C_in, C_out, KH, KW = w_t.shape
    s, p = stride, padding
    OH = (H - 1) * s - 2 * p + KH
    OW = (W - 1) * s - 2 * p + KW
    wc = np.flip(w_t, axis=(2, 3)).transpose(1, 0, 2, 3)        # (C_out, C_in, KH, KW)
    pe_h, pe_w = KH - 1 - p, KW - 1 - p
    A = np.zeros((KW, OH * C_out, H * C_in), np.float32)
    B = np.zeros((KW, W, OW), np.float32)
    for j in range(KW):
        for o in range(OH):
            for h in range(H):
                i = s * h + pe_h - o
                if 0 <= i < KH:
                    A[j, o * C_out:(o + 1) * C_out, h * C_in:(h + 1) * C_in] = wc[:, :, i, j]
        for win in range(W):
            o = s * win + pe_w - j
            if 0 <= o < OW:
                B[j, win, o] = 1.0
    Bblk = np.stack([np.kron(np.eye(N, dtype=np.float32), B[j]) for j in range(KW)])
    bias = np.tile(np.asarray(b, np.float32), OH).reshape(OH * C_out, 1)
    return A, Bblk, bias, OH, OW, C_out


def _pool_mats(C, k, stride, H, W, N):
    """MaxPool2d(k, stride): exact 0/1 row/column selection matrices per tap."""
    s = stride
    OH = (H - k) // s + 1
    OW = (W - k) // s + 1
    R = np.zeros((k, OH * C, H * C), np.float32)
    Cm = np.zeros((k, W, OW), np.float32)
    eye = np.eye(C, dtype=np.float32)
    for t in range(k):
        for o in range(OH):
            h = s * o + t
            R[t, o * C:(o + 1) * C, h * C:(h + 1) * C] = eye
        for o in range(OW):
            Cm[t, s * o + t, o] = 1.0
    Cblk = np.stack([np.kron(np.eye(N, dtype=np.float32), Cm[t]) for t in range(k)])
    return R, Cblk, OH, OW


# layer schedule of CNNAutoencoder: (kind, activation)
_LAYERS = (("conv", "relu"), ("pool", None), ("conv", "relu"), ("pool", None),
           ("convT", "relu"), ("convT", "relu"), ("convT", "tanh"))


def build_plan(params, N, H, W):
    """Precompute all per-layer matrices (once) for the fused kernel."""
    f = lambda a: np.asarray(a, dtype=np.float32)
    cfgs = [
        (f(params["enc_w1"]), f(params["enc_b1"]), 3, 1),   # Conv2d(1,16,3,s=3,p=1)
        (2, 2),                                             # MaxPool2d(2, s=2)
        (f(params["enc_w2"]), f(params["enc_b2"]), 2, 1),   # Conv2d(16,8,3,s=2,p=1)
        (2, 1),                                             # MaxPool2d(2, s=1)
        (f(params["dec_w1"]), f(params["dec_b1"]), 2, 0),   # ConvT(8,16,3,s=2)
        (f(params["dec_w2"]), f(params["dec_b2"]), 3, 1),   # ConvT(16,8,5,s=3,p=1)
        (f(params["dec_w3"]), f(params["dec_b3"]), 2, 1),   # ConvT(8,1,2,s=2,p=1)
    ]
    arrays, C = [], 1
    for (kind, _), cfg in zip(_LAYERS, cfgs):
        if kind == "conv":
            w, b, s, p = cfg
            A, B, bias, H, W, C = _conv_mats(w, b, s, p, H, W, N)
            arrays += [A, B, bias]
        elif kind == "convT":
            w, b, s, p = cfg
            A, B, bias, H, W, C = _convT_mats(w, b, s, p, H, W, N)
            arrays += [A, B, bias]
        else:  # pool
            k, s = cfg
            R, Cblk, H, W = _pool_mats(C, k, s, H, W, N)
            arrays += [R, Cblk]
    return [jnp.asarray(a) for a in arrays], (H, W, C)


# ----------------------------------------------------------------------------
# The single fused Pallas kernel: whole forward pass, VMEM resident.
# ----------------------------------------------------------------------------
def _fused_autoencoder_kernel(x_ref, *refs):
    o_ref = refs[-1]
    refs = refs[:-1]
    N = x_ref.shape[0]

    # activation layout: (H*C, N*W) f32, batch on the lane axis
    X = jnp.concatenate([x_ref[n, 0, :, :] for n in range(N)], axis=1)

    idx = 0
    for kind, act in _LAYERS:
        if kind in ("conv", "convT"):
            A_ref, B_ref, b_ref = refs[idx], refs[idx + 1], refs[idx + 2]
            idx += 3
            acc = None
            for j in range(A_ref.shape[0]):            # KW column-offset taps
                t = jnp.dot(A_ref[j], X, preferred_element_type=jnp.float32)
                t = jnp.dot(t, B_ref[j], preferred_element_type=jnp.float32)
                acc = t if acc is None else acc + t
            acc = acc + b_ref[...]                     # (rows,1) broadcast over lanes
            X = jnp.maximum(acc, 0.0) if act == "relu" else jnp.tanh(acc)
        else:                                          # max-pool (k x k taps)
            R_ref, C_ref = refs[idx], refs[idx + 1]
            idx += 2
            out = None
            for i in range(R_ref.shape[0]):
                RX = jnp.dot(R_ref[i], X, preferred_element_type=jnp.float32)
                for j in range(C_ref.shape[0]):
                    t = jnp.dot(RX, C_ref[j], preferred_element_type=jnp.float32)
                    out = t if out is None else jnp.maximum(out, t)
            X = out

    OW = o_ref.shape[3]
    for n in range(N):
        o_ref[n, 0, :, :] = X[:, n * OW:(n + 1) * OW]


def cnn_autoencoder_forward(plan_arrays, out_meta, x):
    N = x.shape[0]
    H_out, W_out, C_out = out_meta
    assert C_out == 1
    vmem = pl.BlockSpec(memory_space=pltpu.MemorySpace.VMEM)
    return pl.pallas_call(
        _fused_autoencoder_kernel,
        out_shape=jax.ShapeDtypeStruct((N, C_out, H_out, W_out), jnp.float32),
        in_specs=[vmem] * (1 + len(plan_arrays)),
        out_specs=vmem,
    )(x, *plan_arrays)


# ----------------------------------------------------------------------------
# Parameters (same init scheme as before)
# ----------------------------------------------------------------------------
def init_params(key):
    def uniform(k, shape, fan_in):
        bound = 1.0 / jnp.sqrt(jnp.float32(fan_in))
        return jax.random.uniform(k, shape, jnp.float32, -bound, bound)

    ks = jax.random.split(key, 10)
    return {
        "enc_w1": uniform(ks[0], (16, 1, 3, 3), 1 * 9),
        "enc_b1": uniform(ks[1], (16,), 1 * 9),
        "enc_w2": uniform(ks[2], (8, 16, 3, 3), 16 * 9),
        "enc_b2": uniform(ks[3], (8,), 16 * 9),
        "dec_w1": uniform(ks[4], (8, 16, 3, 3), 8 * 9),
        "dec_b1": uniform(ks[5], (16,), 8 * 9),
        "dec_w2": uniform(ks[6], (16, 8, 5, 5), 16 * 25),
        "dec_w3": uniform(ks[8], (8, 1, 2, 2), 8 * 4),
        "dec_b2": uniform(ks[7], (8,), 16 * 25),
        "dec_b3": uniform(ks[9], (1,), 8 * 4),
    }


# ----------------------------------------------------------------------------
# Pure-JAX reference (plain XLA, no Pallas) for a numerical self-check.
# ----------------------------------------------------------------------------
def _ref_im2col(x, kh, kw, stride, padding):
    N, C, H, W = x.shape
    xp = jnp.pad(x, ((0, 0), (0, 0), (padding, padding), (padding, padding)))
    OH = (H + 2 * padding - kh) // stride + 1
    OW = (W + 2 * padding - kw) // stride + 1
    cols = []
    for i in range(kh):
        for j in range(kw):
            cols.append(xp[:, :, i:i + stride * OH:stride, j:j + stride * OW:stride])
    col = jnp.stack(cols, axis=2).transpose(0, 3, 4, 1, 2).reshape(N * OH * OW, C * kh * kw)
    return col, OH, OW


def _ref_conv2d(x, w, b, stride, padding, act):
    N = x.shape[0]
    OC, C, kh, kw = w.shape
    col, OH, OW = _ref_im2col(x, kh, kw, stride, padding)
    out = col @ w.reshape(OC, -1).T + b
    out = jnp.maximum(out, 0.0) if act == "relu" else jnp.tanh(out)
    return out.reshape(N, OH, OW, OC).transpose(0, 3, 1, 2)


def _ref_convT2d(x, w, b, stride, padding, act):
    IC, OC, kh, kw = w.shape
    N, _, H, W = x.shape
    if stride > 1:
        xd = jnp.zeros((N, IC, (H - 1) * stride + 1, (W - 1) * stride + 1), x.dtype)
        xd = xd.at[:, :, ::stride, ::stride].set(x)
    else:
        xd = x
    wc = jnp.flip(w, axis=(2, 3)).transpose(1, 0, 2, 3)
    return _ref_conv2d(xd, wc, b, stride=1, padding=kh - 1 - padding, act=act)


def _ref_maxpool(x, k, stride):
    N, C, H, W = x.shape
    OH = (H - k) // stride + 1
    OW = (W - k) // stride + 1
    vs = [x[:, :, i:i + stride * OH:stride, j:j + stride * OW:stride]
          for i in range(k) for j in range(k)]
    return jnp.max(jnp.stack(vs, 0), axis=0)


def reference_forward(params, x):
    h = _ref_conv2d(x, params["enc_w1"], params["enc_b1"], 3, 1, "relu")
    h = _ref_maxpool(h, 2, 2)
    h = _ref_conv2d(h, params["enc_w2"], params["enc_b2"], 2, 1, "relu")
    h = _ref_maxpool(h, 2, 1)
    h = _ref_convT2d(h, params["dec_w1"], params["dec_b1"], 2, 0, "relu")
    h = _ref_convT2d(h, params["dec_w2"], params["dec_b2"], 3, 1, "relu")
    h = _ref_convT2d(h, params["dec_w3"], params["dec_b3"], 2, 1, "tanh")
    return h


if __name__ == "__main__":
    key = jax.random.PRNGKey(0)
    pkey, xkey = jax.random.split(key)
    params = init_params(pkey)
    # MNIST-like input implied by the module: (N, 1, 28, 28), NCHW
    x = jax.random.normal(xkey, (2, 1, 28, 28), dtype=jnp.float32)

    plan, out_meta = build_plan(params, N=x.shape[0], H=x.shape[2], W=x.shape[3])
    out = jax.block_until_ready(cnn_autoencoder_forward(plan, out_meta, x))

    assert out.shape == (2, 1, 28, 28), out.shape
    assert out.dtype == jnp.float32
    assert bool(jnp.all(jnp.isfinite(out)))
    assert bool(jnp.all(jnp.abs(out) <= 1.0 + 1e-6))   # tanh output range

    ref = jax.block_until_ready(reference_forward(params, x))
    max_err = float(jnp.max(jnp.abs(out - ref)))
    assert max_err < 2e-3, f"mismatch vs reference: {max_err}"

    print("KERNEL_OK")
</pallas_src>

<mosaic_0001>
module attributes {stable_mosaic.version = 11 : i64} {
  func.func @_fused_autoencoder_kernel(%arg0: memref<2x1x28x28xf32, #tpu.memory_space<vmem>>, %arg1: memref<3x160x28xf32, #tpu.memory_space<vmem>>, %arg2: memref<3x56x20xf32, #tpu.memory_space<vmem>>, %arg3: memref<160x1xf32, #tpu.memory_space<vmem>>, %arg4: memref<2x80x160xf32, #tpu.memory_space<vmem>>, %arg5: memref<2x20x10xf32, #tpu.memory_space<vmem>>, %arg6: memref<3x24x80xf32, #tpu.memory_space<vmem>>, %arg7: memref<3x10x6xf32, #tpu.memory_space<vmem>>, %arg8: memref<24x1xf32, #tpu.memory_space<vmem>>, %arg9: memref<2x16x24xf32, #tpu.memory_space<vmem>>, %arg10: memref<2x6x4xf32, #tpu.memory_space<vmem>>, %arg11: memref<3x80x16xf32, #tpu.memory_space<vmem>>, %arg12: memref<3x4x10xf32, #tpu.memory_space<vmem>>, %arg13: memref<80x1xf32, #tpu.memory_space<vmem>>, %arg14: memref<5x120x80xf32, #tpu.memory_space<vmem>>, %arg15: memref<5x10x30xf32, #tpu.memory_space<vmem>>, %arg16: memref<120x1xf32, #tpu.memory_space<vmem>>, %arg17: memref<2x28x120xf32, #tpu.memory_space<vmem>>, %arg18: memref<2x30x56xf32, #tpu.memory_space<vmem>>, %arg19: memref<28x1xf32, #tpu.memory_space<vmem>>, %arg20: memref<2x1x28x28xf32, #tpu.memory_space<vmem>>) attributes {dimension_semantics = [], scalar_prefetch = 0 : i64, scratch_operands = 0 : i64, tpu.core_type = #tpu.core_type<tc>} {
    %c0 = arith.constant 0 : index
    %c0_0 = arith.constant 0 : index
    %c0_1 = arith.constant 0 : index
    %c0_2 = arith.constant 0 : index
    %0 = vector.load %arg0[%c0, %c0_0, %c0_1, %c0_2] : memref<2x1x28x28xf32, #tpu.memory_space<vmem>>, vector<1x1x28x28xf32>
    %1 = vector.shape_cast %0 : vector<1x1x28x28xf32> to vector<28x28xf32>
    %c1 = arith.constant 1 : index
    %c0_3 = arith.constant 0 : index
    %c0_4 = arith.constant 0 : index
    %c0_5 = arith.constant 0 : index
    %2 = vector.load %arg0[%c1, %c0_3, %c0_4, %c0_5] : memref<2x1x28x28xf32, #tpu.memory_space<vmem>>, vector<1x1x28x28xf32>
    %3 = vector.shape_cast %2 : vector<1x1x28x28xf32> to vector<28x28xf32>
    %4 = tpu.concatenate %1, %3 in 1 : vector<28x28xf32>, vector<28x28xf32> -> vector<28x56xf32>
    %c0_6 = arith.constant 0 : index
    %c0_7 = arith.constant 0 : index
    %c0_8 = arith.constant 0 : index
    %5 = vector.load %arg1[%c0_6, %c0_7, %c0_8] : memref<3x160x28xf32, #tpu.memory_space<vmem>>, vector<1x160x28xf32>
    %6 = vector.shape_cast %5 : vector<1x160x28xf32> to vector<160x28xf32>
    %cst = arith.constant dense<0.000000e+00> : vector<160x56xf32>
    %7 = tpu.matmul %6, %4, %cst {dimension_numbers = #tpu.dot_dimension_numbers<[1], [0], [0], [1], [0, 0, 1, 1], [], []>} : vector<160x28xf32>, vector<28x56xf32>, vector<160x56xf32> -> vector<160x56xf32>
    %c0_9 = arith.constant 0 : index
    %c0_10 = arith.constant 0 : index
    %c0_11 = arith.constant 0 : index
    %8 = vector.load %arg2[%c0_9, %c0_10, %c0_11] : memref<3x56x20xf32, #tpu.memory_space<vmem>>, vector<1x56x20xf32>
    %9 = vector.shape_cast %8 : vector<1x56x20xf32> to vector<56x20xf32>
    %cst_12 = arith.constant dense<0.000000e+00> : vector<160x20xf32>
    %10 = tpu.matmul %7, %9, %cst_12 {dimension_numbers = #tpu.dot_dimension_numbers<[1], [0], [0], [1], [0, 0, 1, 1], [], []>} : vector<160x56xf32>, vector<56x20xf32>, vector<160x20xf32> -> vector<160x20xf32>
    %c1_13 = arith.constant 1 : index
    %c0_14 = arith.constant 0 : index
    %c0_15 = arith.constant 0 : index
    %11 = vector.load %arg1[%c1_13, %c0_14, %c0_15] : memref<3x160x28xf32, #tpu.memory_space<vmem>>, vector<1x160x28xf32>
    %12 = vector.shape_cast %11 : vector<1x160x28xf32> to vector<160x28xf32>
    %cst_16 = arith.constant dense<0.000000e+00> : vector<160x56xf32>
    %13 = tpu.matmul %12, %4, %cst_16 {dimension_numbers = #tpu.dot_dimension_numbers<[1], [0], [0], [1], [0, 0, 1, 1], [], []>} : vector<160x28xf32>, vector<28x56xf32>, vector<160x56xf32> -> vector<160x56xf32>
    %c1_17 = arith.constant 1 : index
    %c0_18 = arith.constant 0 : index
    %c0_19 = arith.constant 0 : index
    %14 = vector.load %arg2[%c1_17, %c0_18, %c0_19] : memref<3x56x20xf32, #tpu.memory_space<vmem>>, vector<1x56x20xf32>
    %15 = vector.shape_cast %14 : vector<1x56x20xf32> to vector<56x20xf32>
    %cst_20 = arith.constant dense<0.000000e+00> : vector<160x20xf32>
    %16 = tpu.matmul %13, %15, %cst_20 {dimension_numbers = #tpu.dot_dimension_numbers<[1], [0], [0], [1], [0, 0, 1, 1], [], []>} : vector<160x56xf32>, vector<56x20xf32>, vector<160x20xf32> -> vector<160x20xf32>
    %17 = arith.addf %10, %16 : vector<160x20xf32>
    %c2 = arith.constant 2 : index
    %c0_21 = arith.constant 0 : index
    %c0_22 = arith.constant 0 : index
    %18 = vector.load %arg1[%c2, %c0_21, %c0_22] : memref<3x160x28xf32, #tpu.memory_space<vmem>>, vector<1x160x28xf32>
    %19 = vector.shape_cast %18 : vector<1x160x28xf32> to vector<160x28xf32>
    %cst_23 = arith.constant dense<0.000000e+00> : vector<160x56xf32>
    %20 = tpu.matmul %19, %4, %cst_23 {dimension_numbers = #tpu.dot_dimension_numbers<[1], [0], [0], [1], [0, 0, 1, 1], [], []>} : vector<160x28xf32>, vector<28x56xf32>, vector<160x56xf32> -> vector<160x56xf32>
    %c2_24 = arith.constant 2 : index
    %c0_25 = arith.constant 0 : index
    %c0_26 = arith.constant 0 : index
    %21 = vector.load %arg2[%c2_24, %c0_25, %c0_26] : memref<3x56x20xf32, #tpu.memory_space<vmem>>, vector<1x56x20xf32>
    %22 = vector.shape_cast %21 : vector<1x56x20xf32> to vector<56x20xf32>
    %cst_27 = arith.constant dense<0.000000e+00> : vector<160x20xf32>
    %23 = tpu.matmul %20, %22, %cst_27 {dimension_numbers = #tpu.dot_dimension_numbers<[1], [0], [0], [1], [0, 0, 1, 1], [], []>} : vector<160x56xf32>, vector<56x20xf32>, vector<160x20xf32> -> vector<160x20xf32>
    %24 = arith.addf %17, %23 : vector<160x20xf32>
    %c0_28 = arith.constant 0 : index
    %c0_29 = arith.constant 0 : index
    %25 = vector.load %arg3[%c0_28, %c0_29] : memref<160x1xf32, #tpu.memory_space<vmem>>, vector<160x1xf32>
    %26 = vector.broadcast %25 : vector<160x1xf32> to vector<160x20xf32>
    %27 = arith.addf %24, %26 : vector<160x20xf32>
    %cst_30 = arith.constant 0.000000e+00 : f32
    %28 = vector.broadcast %cst_30 : f32 to vector<160x20xf32>
    %29 = arith.maximumf %27, %28 : vector<160x20xf32>
    %c0_31 = arith.constant 0 : index
    %c0_32 = arith.constant 0 : index
    %c0_33 = arith.constant 0 : index
    %30 = vector.load %arg4[%c0_31, %c0_32, %c0_33] : memref<2x80x160xf32, #tpu.memory_space<vmem>>, vector<1x80x160xf32>
    %31 = vector.shape_cast %30 : vector<1x80x160xf32> to vector<80x160xf32>
    %cst_34 = arith.constant dense<0.000000e+00> : vector<80x20xf32>
    %32 = tpu.matmul %31, %29, %cst_34 {dimension_numbers = #tpu.dot_dimension_numbers<[1], [0], [0], [1], [0, 0, 1, 1], [], []>} : vector<80x160xf32>, vector<160x20xf32>, vector<80x20xf32> -> vector<80x20xf32>
    %c0_35 = arith.constant 0 : index
    %c0_36 = arith.constant 0 : index
    %c0_37 = arith.constant 0 : index
    %33 = vector.load %arg5[%c0_35, %c0_36, %c0_37] : memref<2x20x10xf32, #tpu.memory_space<vmem>>, vector<1x20x10xf32>
    %34 = vector.shape_cast %33 : vector<1x20x10xf32> to vector<20x10xf32>
    %cst_38 = arith.constant dense<0.000000e+00> : vector<80x10xf32>
    %35 = tpu.matmul %32, %34, %cst_38 {dimension_numbers = #tpu.dot_dimension_numbers<[1], [0], [0], [1], [0, 0, 1, 1], [], []>} : vector<80x20xf32>, vector<20x10xf32>, vector<80x10xf32> -> vector<80x10xf32>
    %c1_39 = arith.constant 1 : index
    %c0_40 = arith.constant 0 : index
    %c0_41 = arith.constant 0 : index
    %36 = vector.load %arg5[%c1_39, %c0_40, %c0_41] : memref<2x20x10xf32, #tpu.memory_space<vmem>>, vector<1x20x10xf32>
    %37 = vector.shape_cast %36 : vector<1x20x10xf32> to vector<20x10xf32>
    %cst_42 = arith.constant dense<0.000000e+00> : vector<80x10xf32>
    %38 = tpu.matmul %32, %37, %cst_42 {dimension_numbers = #tpu.dot_dimension_numbers<[1], [0], [0], [1], [0, 0, 1, 1], [], []>} : vector<80x20xf32>, vector<20x10xf32>, vector<80x10xf32> -> vector<80x10xf32>
    %39 = arith.maximumf %35, %38 : vector<80x10xf32>
    %c1_43 = arith.constant 1 : index
    %c0_44 = arith.constant 0 : index
    %c0_45 = arith.constant 0 : index
    %40 = vector.load %arg4[%c1_43, %c0_44, %c0_45] : memref<2x80x160xf32, #tpu.memory_space<vmem>>, vector<1x80x160xf32>
    %41 = vector.shape_cast %40 : vector<1x80x160xf32> to vector<80x160xf32>
    %cst_46 = arith.constant dense<0.000000e+00> : vector<80x20xf32>
    %42 = tpu.matmul %41, %29, %cst_46 {dimension_numbers = #tpu.dot_dimension_numbers<[1], [0], [0], [1], [0, 0, 1, 1], [], []>} : vector<80x160xf32>, vector<160x20xf32>, vector<80x20xf32> -> vector<80x20xf32>
    %c0_47 = arith.constant 0 : index
    %c0_48 = arith.constant 0 : index
    %c0_49 = arith.constant 0 : index
    %43 = vector.load %arg5[%c0_47, %c0_48, %c0_49] : memref<2x20x10xf32, #tpu.memory_space<vmem>>, vector<1x20x10xf32>
    %44 = vector.shape_cast %43 : vector<1x20x10xf32> to vector<20x10xf32>
    %cst_50 = arith.constant dense<0.000000e+00> : vector<80x10xf32>
    %45 = tpu.matmul %42, %44, %cst_50 {dimension_numbers = #tpu.dot_dimension_numbers<[1], [0], [0], [1], [0, 0, 1, 1], [], []>} : vector<80x20xf32>, vector<20x10xf32>, vector<80x10xf32> -> vector<80x10xf32>
    %46 = arith.maximumf %39, %45 : vector<80x10xf32>
    %c1_51 = arith.constant 1 : index
    %c0_52 = arith.constant 0 : index
    %c0_53 = arith.constant 0 : index
    %47 = vector.load %arg5[%c1_51, %c0_52, %c0_53] : memref<2x20x10xf32, #tpu.memory_space<vmem>>, vector<1x20x10xf32>
    %48 = vector.shape_cast %47 : vector<1x20x10xf32> to vector<20x10xf32>
    %cst_54 = arith.constant dense<0.000000e+00> : vector<80x10xf32>
    %49 = tpu.matmul %42, %48, %cst_54 {dimension_numbers = #tpu.dot_dimension_numbers<[1], [0], [0], [1], [0, 0, 1, 1], [], []>} : vector<80x20xf32>, vector<20x10xf32>, vector<80x10xf32> -> vector<80x10xf32>
    %50 = arith.maximumf %46, %49 : vector<80x10xf32>
    %c0_55 = arith.constant 0 : index
    %c0_56 = arith.constant 0 : index
    %c0_57 = arith.constant 0 : index
    %51 = vector.load %arg6[%c0_55, %c0_56, %c0_57] : memref<3x24x80xf32, #tpu.memory_space<vmem>>, vector<1x24x80xf32>
    %52 = vector.shape_cast %51 : vector<1x24x80xf32> to vector<24x80xf32>
    %cst_58 = arith.constant dense<0.000000e+00> : vector<24x10xf32>
    %53 = tpu.matmul %52, %50, %cst_58 {dimension_numbers = #tpu.dot_dimension_numbers<[1], [0], [0], [1], [0, 0, 1, 1], [], []>} : vector<24x80xf32>, vector<80x10xf32>, vector<24x10xf32> -> vector<24x10xf32>
    %c0_59 = arith.constant 0 : index
    %c0_60 = arith.constant 0 : index
    %c0_61 = arith.constant 0 : index
    %54 = vector.load %arg7[%c0_59, %c0_60, %c0_61] : memref<3x10x6xf32, #tpu.memory_space<vmem>>, vector<1x10x6xf32>
    %55 = vector.shape_cast %54 : vector<1x10x6xf32> to vector<10x6xf32>
    %cst_62 = arith.constant dense<0.000000e+00> : vector<24x6xf32>
    %56 = tpu.matmul %53, %55, %cst_62 {dimension_numbers = #tpu.dot_dimension_numbers<[1], [0], [0], [1], [0, 0, 1, 1], [], []>} : vector<24x10xf32>, vector<10x6xf32>, vector<24x6xf32> -> vector<24x6xf32>
    %c1_63 = arith.constant 1 : index
    %c0_64 = arith.constant 0 : index
    %c0_65 = arith.constant 0 : index
    %57 = vector.load %arg6[%c1_63, %c0_64, %c0_65] : memref<3x24x80xf32, #tpu.memory_space<vmem>>, vector<1x24x80xf32>
    %58 = vector.shape_cast %57 : vector<1x24x80xf32> to vector<24x80xf32>
    %cst_66 = arith.constant dense<0.000000e+00> : vector<24x10xf32>
    %59 = tpu.matmul %58, %50, %cst_66 {dimension_numbers = #tpu.dot_dimension_numbers<[1], [0], [0], [1], [0, 0, 1, 1], [], []>} : vector<24x80xf32>, vector<80x10xf32>, vector<24x10xf32> -> vector<24x10xf32>
    %c1_67 = arith.constant 1 : index
    %c0_68 = arith.constant 0 : index
    %c0_69 = arith.constant 0 : index
    %60 = vector.load %arg7[%c1_67, %c0_68, %c0_69] : memref<3x10x6xf32, #tpu.memory_space<vmem>>, vector<1x10x6xf32>
    %61 = vector.shape_cast %60 : vector<1x10x6xf32> to vector<10x6xf32>
    %cst_70 = arith.constant dense<0.000000e+00> : vector<24x6xf32>
    %62 = tpu.matmul %59, %61, %cst_70 {dimension_numbers = #tpu.dot_dimension_numbers<[1], [0], [0], [1], [0, 0, 1, 1], [], []>} : vector<24x10xf32>, vector<10x6xf32>, vector<24x6xf32> -> vector<24x6xf32>
    %63 = arith.addf %56, %62 : vector<24x6xf32>
    %c2_71 = arith.constant 2 : index
    %c0_72 = arith.constant 0 : index
    %c0_73 = arith.constant 0 : index
    %64 = vector.load %arg6[%c2_71, %c0_72, %c0_73] : memref<3x24x80xf32, #tpu.memory_space<vmem>>, vector<1x24x80xf32>
    %65 = vector.shape_cast %64 : vector<1x24x80xf32> to vector<24x80xf32>
    %cst_74 = arith.constant dense<0.000000e+00> : vector<24x10xf32>
    %66 = tpu.matmul %65, %50, %cst_74 {dimension_numbers = #tpu.dot_dimension_numbers<[1], [0], [0], [1], [0, 0, 1, 1], [], []>} : vector<24x80xf32>, vector<80x10xf32>, vector<24x10xf32> -> vector<24x10xf32>
    %c2_75 = arith.constant 2 : index
    %c0_76 = arith.constant 0 : index
    %c0_77 = arith.constant 0 : index
    %67 = vector.load %arg7[%c2_75, %c0_76, %c0_77] : memref<3x10x6xf32, #tpu.memory_space<vmem>>, vector<1x10x6xf32>
    %68 = vector.shape_cast %67 : vector<1x10x6xf32> to vector<10x6xf32>
    %cst_78 = arith.constant dense<0.000000e+00> : vector<24x6xf32>
    %69 = tpu.matmul %66, %68, %cst_78 {dimension_numbers = #tpu.dot_dimension_numbers<[1], [0], [0], [1], [0, 0, 1, 1], [], []>} : vector<24x10xf32>, vector<10x6xf32>, vector<24x6xf32> -> vector<24x6xf32>
    %70 = arith.addf %63, %69 : vector<24x6xf32>
    %c0_79 = arith.constant 0 : index
    %c0_80 = arith.constant 0 : index
    %71 = vector.load %arg8[%c0_79, %c0_80] : memref<24x1xf32, #tpu.memory_space<vmem>>, vector<24x1xf32>
    %72 = vector.broadcast %71 : vector<24x1xf32> to vector<24x6xf32>
    %73 = arith.addf %70, %72 : vector<24x6xf32>
    %cst_81 = arith.constant 0.000000e+00 : f32
    %74 = vector.broadcast %cst_81 : f32 to vector<24x6xf32>
    %75 = arith.maximumf %73, %74 : vector<24x6xf32>
    %c0_82 = arith.constant 0 : index
    %c0_83 = arith.constant 0 : index
    %c0_84 = arith.constant 0 : index
    %76 = vector.load %arg9[%c0_82, %c0_83, %c0_84] : memref<2x16x24xf32, #tpu.memory_space<vmem>>, vector<1x16x24xf32>
    %77 = vector.shape_cast %76 : vector<1x16x24xf32> to vector<16x24xf32>
    %cst_85 = arith.constant dense<0.000000e+00> : vector<16x6xf32>
    %78 = tpu.matmul %77, %75, %cst_85 {dimension_numbers = #tpu.dot_dimension_numbers<[1], [0], [0], [1], [0, 0, 1, 1], [], []>} : vector<16x24xf32>, vector<24x6xf32>, vector<16x6xf32> -> vector<16x6xf32>
    %c0_86 = arith.constant 0 : index
    %c0_87 = arith.constant 0 : index
    %c0_88 = arith.constant 0 : index
    %79 = vector.load %arg10[%c0_86, %c0_87, %c0_88] : memref<2x6x4xf32, #tpu.memory_space<vmem>>, vector<1x6x4xf32>
    %80 = vector.shape_cast %79 : vector<1x6x4xf32> to vector<6x4xf32>
    %cst_89 = arith.constant dense<0.000000e+00> : vector<16x4xf32>
    %81 = tpu.matmul %78, %80, %cst_89 {dimension_numbers = #tpu.dot_dimension_numbers<[1], [0], [0], [1], [0, 0, 1, 1], [], []>} : vector<16x6xf32>, vector<6x4xf32>, vector<16x4xf32> -> vector<16x4xf32>
    %c1_90 = arith.constant 1 : index
    %c0_91 = arith.constant 0 : index
    %c0_92 = arith.constant 0 : index
    %82 = vector.load %arg10[%c1_90, %c0_91, %c0_92] : memref<2x6x4xf32, #tpu.memory_space<vmem>>, vector<1x6x4xf32>
    %83 = vector.shape_cast %82 : vector<1x6x4xf32> to vector<6x4xf32>
    %cst_93 = arith.constant dense<0.000000e+00> : vector<16x4xf32>
    %84 = tpu.matmul %78, %83, %cst_93 {dimension_numbers = #tpu.dot_dimension_numbers<[1], [0], [0], [1], [0, 0, 1, 1], [], []>} : vector<16x6xf32>, vector<6x4xf32>, vector<16x4xf32> -> vector<16x4xf32>
    %85 = arith.maximumf %81, %84 : vector<16x4xf32>
    %c1_94 = arith.constant 1 : index
    %c0_95 = arith.constant 0 : index
    %c0_96 = arith.constant 0 : index
    %86 = vector.load %arg9[%c1_94, %c0_95, %c0_96] : memref<2x16x24xf32, #tpu.memory_space<vmem>>, vector<1x16x24xf32>
    %87 = vector.shape_cast %86 : vector<1x16x24xf32> to vector<16x24xf32>
    %cst_97 = arith.constant dense<0.000000e+00> : vector<16x6xf32>
    %88 = tpu.matmul %87, %75, %cst_97 {dimension_numbers = #tpu.dot_dimension_numbers<[1], [0], [0], [1], [0, 0, 1, 1], [], []>} : vector<16x24xf32>, vector<24x6xf32>, vector<16x6xf32> -> vector<16x6xf32>
    %c0_98 = arith.constant 0 : index
    %c0_99 = arith.constant 0 : index
    %c0_100 = arith.constant 0 : index
    %89 = vector.load %arg10[%c0_98, %c0_99, %c0_100] : memref<2x6x4xf32, #tpu.memory_space<vmem>>, vector<1x6x4xf32>
    %90 = vector.shape_cast %89 : vector<1x6x4xf32> to vector<6x4xf32>
    %cst_101 = arith.constant dense<0.000000e+00> : vector<16x4xf32>
    %91 = tpu.matmul %88, %90, %cst_101 {dimension_numbers = #tpu.dot_dimension_numbers<[1], [0], [0], [1], [0, 0, 1, 1], [], []>} : vector<16x6xf32>, vector<6x4xf32>, vector<16x4xf32> -> vector<16x4xf32>
    %92 = arith.maximumf %85, %91 : vector<16x4xf32>
    %c1_102 = arith.constant 1 : index
    %c0_103 = arith.constant 0 : index
    %c0_104 = arith.constant 0 : index
    %93 = vector.load %arg10[%c1_102, %c0_103, %c0_104] : memref<2x6x4xf32, #tpu.memory_space<vmem>>, vector<1x6x4xf32>
    %94 = vector.shape_cast %93 : vector<1x6x4xf32> to vector<6x4xf32>
    %cst_105 = arith.constant dense<0.000000e+00> : vector<16x4xf32>
    %95 = tpu.matmul %88, %94, %cst_105 {dimension_numbers = #tpu.dot_dimension_numbers<[1], [0], [0], [1], [0, 0, 1, 1], [], []>} : vector<16x6xf32>, vector<6x4xf32>, vector<16x4xf32> -> vector<16x4xf32>
    %96 = arith.maximumf %92, %95 : vector<16x4xf32>
    %c0_106 = arith.constant 0 : index
    %c0_107 = arith.constant 0 : index
    %c0_108 = arith.constant 0 : index
    %97 = vector.load %arg11[%c0_106, %c0_107, %c0_108] : memref<3x80x16xf32, #tpu.memory_space<vmem>>, vector<1x80x16xf32>
    %98 = vector.shape_cast %97 : vector<1x80x16xf32> to vector<80x16xf32>
    %cst_109 = arith.constant dense<0.000000e+00> : vector<80x4xf32>
    %99 = tpu.matmul %98, %96, %cst_109 {dimension_numbers = #tpu.dot_dimension_numbers<[1], [0], [0], [1], [0, 0, 1, 1], [], []>} : vector<80x16xf32>, vector<16x4xf32>, vector<80x4xf32> -> vector<80x4xf32>
    %c0_110 = arith.constant 0 : index
    %c0_111 = arith.constant 0 : index
    %c0_112 = arith.constant 0 : index
    %100 = vector.load %arg12[%c0_110, %c0_111, %c0_112] : memref<3x4x10xf32, #tpu.memory_space<vmem>>, vector<1x4x10xf32>
    %101 = vector.shape_cast %100 : vector<1x4x10xf32> to vector<4x10xf32>
    %cst_113 = arith.constant dense<0.000000e+00> : vector<80x10xf32>
    %102 = tpu.matmul %99, %101, %cst_113 {dimension_numbers = #tpu.dot_dimension_numbers<[1], [0], [0], [1], [0, 0, 1, 1], [], []>} : vector<80x4xf32>, vector<4x10xf32>, vector<80x10xf32> -> vector<80x10xf32>
    %c1_114 = arith.constant 1 : index
    %c0_115 = arith.constant 0 : index
    %c0_116 = arith.constant 0 : index
    %103 = vector.load %arg11[%c1_114, %c0_115, %c0_116] : memref<3x80x16xf32, #tpu.memory_space<vmem>>, vector<1x80x16xf32>
    %104 = vector.shape_cast %103 : vector<1x80x16xf32> to vector<80x16xf32>
    %cst_117 = arith.constant dense<0.000000e+00> : vector<80x4xf32>
    %105 = tpu.matmul %104, %96, %cst_117 {dimension_numbers = #tpu.dot_dimension_numbers<[1], [0], [0], [1], [0, 0, 1, 1], [], []>} : vector<80x16xf32>, vector<16x4xf32>, vector<80x4xf32> -> vector<80x4xf32>
    %c1_118 = arith.constant 1 : index
    %c0_119 = arith.constant 0 : index
    %c0_120 = arith.constant 0 : index
    %106 = vector.load %arg12[%c1_118, %c0_119, %c0_120] : memref<3x4x10xf32, #tpu.memory_space<vmem>>, vector<1x4x10xf32>
    %107 = vector.shape_cast %106 : vector<1x4x10xf32> to vector<4x10xf32>
    %cst_121 = arith.constant dense<0.000000e+00> : vector<80x10xf32>
    %108 = tpu.matmul %105, %107, %cst_121 {dimension_numbers = #tpu.dot_dimension_numbers<[1], [0], [0], [1], [0, 0, 1, 1], [], []>} : vector<80x4xf32>, vector<4x10xf32>, vector<80x10xf32> -> vector<80x10xf32>
    %109 = arith.addf %102, %108 : vector<80x10xf32>
    %c2_122 = arith.constant 2 : index
    %c0_123 = arith.constant 0 : index
    %c0_124 = arith.constant 0 : index
    %110 = vector.load %arg11[%c2_122, %c0_123, %c0_124] : memref<3x80x16xf32, #tpu.memory_space<vmem>>, vector<1x80x16xf32>
    %111 = vector.shape_cast %110 : vector<1x80x16xf32> to vector<80x16xf32>
    %cst_125 = arith.constant dense<0.000000e+00> : vector<80x4xf32>
    %112 = tpu.matmul %111, %96, %cst_125 {dimension_numbers = #tpu.dot_dimension_numbers<[1], [0], [0], [1], [0, 0, 1, 1], [], []>} : vector<80x16xf32>, vector<16x4xf32>, vector<80x4xf32> -> vector<80x4xf32>
    %c2_126 = arith.constant 2 : index
    %c0_127 = arith.constant 0 : index
    %c0_128 = arith.constant 0 : index
    %113 = vector.load %arg12[%c2_126, %c0_127, %c0_128] : memref<3x4x10xf32, #tpu.memory_space<vmem>>, vector<1x4x10xf32>
    %114 = vector.shape_cast %113 : vector<1x4x10xf32> to vector<4x10xf32>
    %cst_129 = arith.constant dense<0.000000e+00> : vector<80x10xf32>
    %115 = tpu.matmul %112, %114, %cst_129 {dimension_numbers = #tpu.dot_dimension_numbers<[1], [0], [0], [1], [0, 0, 1, 1], [], []>} : vector<80x4xf32>, vector<4x10xf32>, vector<80x10xf32> -> vector<80x10xf32>
    %116 = arith.addf %109, %115 : vector<80x10xf32>
    %c0_130 = arith.constant 0 : index
    %c0_131 = arith.constant 0 : index
    %117 = vector.load %arg13[%c0_130, %c0_131] : memref<80x1xf32, #tpu.memory_space<vmem>>, vector<80x1xf32>
    %118 = vector.broadcast %117 : vector<80x1xf32> to vector<80x10xf32>
    %119 = arith.addf %116, %118 : vector<80x10xf32>
    %cst_132 = arith.constant 0.000000e+00 : f32
    %120 = vector.broadcast %cst_132 : f32 to vector<80x10xf32>
    %121 = arith.maximumf %119, %120 : vector<80x10xf32>
    %c0_133 = arith.constant 0 : index
    %c0_134 = arith.constant 0 : index
    %c0_135 = arith.constant 0 : index
    %122 = vector.load %arg14[%c0_133, %c0_134, %c0_135] : memref<5x120x80xf32, #tpu.memory_space<vmem>>, vector<1x120x80xf32>
    %123 = vector.shape_cast %122 : vector<1x120x80xf32> to vector<120x80xf32>
    %cst_136 = arith.constant dense<0.000000e+00> : vector<120x10xf32>
    %124 = tpu.matmul %123, %121, %cst_136 {dimension_numbers = #tpu.dot_dimension_numbers<[1], [0], [0], [1], [0, 0, 1, 1], [], []>} : vector<120x80xf32>, vector<80x10xf32>, vector<120x10xf32> -> vector<120x10xf32>
    %c0_137 = arith.constant 0 : index
    %c0_138 = arith.constant 0 : index
    %c0_139 = arith.constant 0 : index
    %125 = vector.load %arg15[%c0_137, %c0_138, %c0_139] : memref<5x10x30xf32, #tpu.memory_space<vmem>>, vector<1x10x30xf32>
    %126 = vector.shape_cast %125 : vector<1x10x30xf32> to vector<10x30xf32>
    %cst_140 = arith.constant dense<0.000000e+00> : vector<120x30xf32>
    %127 = tpu.matmul %124, %126, %cst_140 {dimension_numbers = #tpu.dot_dimension_numbers<[1], [0], [0], [1], [0, 0, 1, 1], [], []>} : vector<120x10xf32>, vector<10x30xf32>, vector<120x30xf32> -> vector<120x30xf32>
    %c1_141 = arith.constant 1 : index
    %c0_142 = arith.constant 0 : index
    %c0_143 = arith.constant 0 : index
    %128 = vector.load %arg14[%c1_141, %c0_142, %c0_143] : memref<5x120x80xf32, #tpu.memory_space<vmem>>, vector<1x120x80xf32>
    %129 = vector.shape_cast %128 : vector<1x120x80xf32> to vector<120x80xf32>
    %cst_144 = arith.constant dense<0.000000e+00> : vector<120x10xf32>
    %130 = tpu.matmul %129, %121, %cst_144 {dimension_numbers = #tpu.dot_dimension_numbers<[1], [0], [0], [1], [0, 0, 1, 1], [], []>} : vector<120x80xf32>, vector<80x10xf32>, vector<120x10xf32> -> vector<120x10xf32>
    %c1_145 = arith.constant 1 : index
    %c0_146 = arith.constant 0 : index
    %c0_147 = arith.constant 0 : index
    %131 = vector.load %arg15[%c1_145, %c0_146, %c0_147] : memref<5x10x30xf32, #tpu.memory_space<vmem>>, vector<1x10x30xf32>
    %132 = vector.shape_cast %131 : vector<1x10x30xf32> to vector<10x30xf32>
    %cst_148 = arith.constant dense<0.000000e+00> : vector<120x30xf32>
    %133 = tpu.matmul %130, %132, %cst_148 {dimension_numbers = #tpu.dot_dimension_numbers<[1], [0], [0], [1], [0, 0, 1, 1], [], []>} : vector<120x10xf32>, vector<10x30xf32>, vector<120x30xf32> -> vector<120x30xf32>
    %134 = arith.addf %127, %133 : vector<120x30xf32>
    %c2_149 = arith.constant 2 : index
    %c0_150 = arith.constant 0 : index
    %c0_151 = arith.constant 0 : index
    %135 = vector.load %arg14[%c2_149, %c0_150, %c0_151] : memref<5x120x80xf32, #tpu.memory_space<vmem>>, vector<1x120x80xf32>
    %136 = vector.shape_cast %135 : vector<1x120x80xf32> to vector<120x80xf32>
    %cst_152 = arith.constant dense<0.000000e+00> : vector<120x10xf32>
    %137 = tpu.matmul %136, %121, %cst_152 {dimension_numbers = #tpu.dot_dimension_numbers<[1], [0], [0], [1], [0, 0, 1, 1], [], []>} : vector<120x80xf32>, vector<80x10xf32>, vector<120x10xf32> -> vector<120x10xf32>
    %c2_153 = arith.constant 2 : index
    %c0_154 = arith.constant 0 : index
    %c0_155 = arith.constant 0 : index
    %138 = vector.load %arg15[%c2_153, %c0_154, %c0_155] : memref<5x10x30xf32, #tpu.memory_space<vmem>>, vector<1x10x30xf32>
    %139 = vector.shape_cast %138 : vector<1x10x30xf32> to vector<10x30xf32>
    %cst_156 = arith.constant dense<0.000000e+00> : vector<120x30xf32>
    %140 = tpu.matmul %137, %139, %cst_156 {dimension_numbers = #tpu.dot_dimension_numbers<[1], [0], [0], [1], [0, 0, 1, 1], [], []>} : vector<120x10xf32>, vector<10x30xf32>, vector<120x30xf32> -> vector<120x30xf32>
    %141 = arith.addf %134, %140 : vector<120x30xf32>
    %c3 = arith.constant 3 : index
    %c0_157 = arith.constant 0 : index
    %c0_158 = arith.constant 0 : index
    %142 = vector.load %arg14[%c3, %c0_157, %c0_158] : memref<5x120x80xf32, #tpu.memory_space<vmem>>, vector<1x120x80xf32>
    %143 = vector.shape_cast %142 : vector<1x120x80xf32> to vector<120x80xf32>
    %cst_159 = arith.constant dense<0.000000e+00> : vector<120x10xf32>
    %144 = tpu.matmul %143, %121, %cst_159 {dimension_numbers = #tpu.dot_dimension_numbers<[1], [0], [0], [1], [0, 0, 1, 1], [], []>} : vector<120x80xf32>, vector<80x10xf32>, vector<120x10xf32> -> vector<120x10xf32>
    %c3_160 = arith.constant 3 : index
    %c0_161 = arith.constant 0 : index
    %c0_162 = arith.constant 0 : index
    %145 = vector.load %arg15[%c3_160, %c0_161, %c0_162] : memref<5x10x30xf32, #tpu.memory_space<vmem>>, vector<1x10x30xf32>
    %146 = vector.shape_cast %145 : vector<1x10x30xf32> to vector<10x30xf32>
    %cst_163 = arith.constant dense<0.000000e+00> : vector<120x30xf32>
    %147 = tpu.matmul %144, %146, %cst_163 {dimension_numbers = #tpu.dot_dimension_numbers<[1], [0], [0], [1], [0, 0, 1, 1], [], []>} : vector<120x10xf32>, vector<10x30xf32>, vector<120x30xf32> -> vector<120x30xf32>
    %148 = arith.addf %141, %147 : vector<120x30xf32>
    %c4 = arith.constant 4 : index
    %c0_164 = arith.constant 0 : index
    %c0_165 = arith.constant 0 : index
    %149 = vector.load %arg14[%c4, %c0_164, %c0_165] : memref<5x120x80xf32, #tpu.memory_space<vmem>>, vector<1x120x80xf32>
    %150 = vector.shape_cast %149 : vector<1x120x80xf32> to vector<120x80xf32>
    %cst_166 = arith.constant dense<0.000000e+00> : vector<120x10xf32>
    %151 = tpu.matmul %150, %121, %cst_166 {dimension_numbers = #tpu.dot_dimension_numbers<[1], [0], [0], [1], [0, 0, 1, 1], [], []>} : vector<120x80xf32>, vector<80x10xf32>, vector<120x10xf32> -> vector<120x10xf32>
    %c4_167 = arith.constant 4 : index
    %c0_168 = arith.constant 0 : index
    %c0_169 = arith.constant 0 : index
    %152 = vector.load %arg15[%c4_167, %c0_168, %c0_169] : memref<5x10x30xf32, #tpu.memory_space<vmem>>, vector<1x10x30xf32>
    %153 = vector.shape_cast %152 : vector<1x10x30xf32> to vector<10x30xf32>
    %cst_170 = arith.constant dense<0.000000e+00> : vector<120x30xf32>
    %154 = tpu.matmul %151, %153, %cst_170 {dimension_numbers = #tpu.dot_dimension_numbers<[1], [0], [0], [1], [0, 0, 1, 1], [], []>} : vector<120x10xf32>, vector<10x30xf32>, vector<120x30xf32> -> vector<120x30xf32>
    %155 = arith.addf %148, %154 : vector<120x30xf32>
    %c0_171 = arith.constant 0 : index
    %c0_172 = arith.constant 0 : index
    %156 = vector.load %arg16[%c0_171, %c0_172] : memref<120x1xf32, #tpu.memory_space<vmem>>, vector<120x1xf32>
    %157 = vector.broadcast %156 : vector<120x1xf32> to vector<120x30xf32>
    %158 = arith.addf %155, %157 : vector<120x30xf32>
    %cst_173 = arith.constant 0.000000e+00 : f32
    %159 = vector.broadcast %cst_173 : f32 to vector<120x30xf32>
    %160 = arith.maximumf %158, %159 : vector<120x30xf32>
    %c0_174 = arith.constant 0 : index
    %c0_175 = arith.constant 0 : index
    %c0_176 = arith.constant 0 : index
    %161 = vector.load %arg17[%c0_174, %c0_175, %c0_176] : memref<2x28x120xf32, #tpu.memory_space<vmem>>, vector<1x28x120xf32>
    %162 = vector.shape_cast %161 : vector<1x28x120xf32> to vector<28x120xf32>
    %cst_177 = arith.constant dense<0.000000e+00> : vector<28x30xf32>
    %163 = tpu.matmul %162, %160, %cst_177 {dimension_numbers = #tpu.dot_dimension_numbers<[1], [0], [0], [1], [0, 0, 1, 1], [], []>} : vector<28x120xf32>, vector<120x30xf32>, vector<28x30xf32> -> vector<28x30xf32>
    %c0_178 = arith.constant 0 : index
    %c0_179 = arith.constant 0 : index
    %c0_180 = arith.constant 0 : index
    %164 = vector.load %arg18[%c0_178, %c0_179, %c0_180] : memref<2x30x56xf32, #tpu.memory_space<vmem>>, vector<1x30x56xf32>
    %165 = vector.shape_cast %164 : vector<1x30x56xf32> to vector<30x56xf32>
    %cst_181 = arith.constant dense<0.000000e+00> : vector<28x56xf32>
    %166 = tpu.matmul %163, %165, %cst_181 {dimension_numbers = #tpu.dot_dimension_numbers<[1], [0], [0], [1], [0, 0, 1, 1], [], []>} : vector<28x30xf32>, vector<30x56xf32>, vector<28x56xf32> -> vector<28x56xf32>
    %c1_182 = arith.constant 1 : index
    %c0_183 = arith.constant 0 : index
    %c0_184 = arith.constant 0 : index
    %167 = vector.load %arg17[%c1_182, %c0_183, %c0_184] : memref<2x28x120xf32, #tpu.memory_space<vmem>>, vector<1x28x120xf32>
    %168 = vector.shape_cast %167 : vector<1x28x120xf32> to vector<28x120xf32>
    %cst_185 = arith.constant dense<0.000000e+00> : vector<28x30xf32>
    %169 = tpu.matmul %168, %160, %cst_185 {dimension_numbers = #tpu.dot_dimension_numbers<[1], [0], [0], [1], [0, 0, 1, 1], [], []>} : vector<28x120xf32>, vector<120x30xf32>, vector<28x30xf32> -> vector<28x30xf32>
    %c1_186 = arith.constant 1 : index
    %c0_187 = arith.constant 0 : index
    %c0_188 = arith.constant 0 : index
    %170 = vector.load %arg18[%c1_186, %c0_187, %c0_188] : memref<2x30x56xf32, #tpu.memory_space<vmem>>, vector<1x30x56xf32>
    %171 = vector.shape_cast %170 : vector<1x30x56xf32> to vector<30x56xf32>
    %cst_189 = arith.constant dense<0.000000e+00> : vector<28x56xf32>
    %172 = tpu.matmul %169, %171, %cst_189 {dimension_numbers = #tpu.dot_dimension_numbers<[1], [0], [0], [1], [0, 0, 1, 1], [], []>} : vector<28x30xf32>, vector<30x56xf32>, vector<28x56xf32> -> vector<28x56xf32>
    %173 = arith.addf %166, %172 : vector<28x56xf32>
    %c0_190 = arith.constant 0 : index
    %c0_191 = arith.constant 0 : index
    %174 = vector.load %arg19[%c0_190, %c0_191] : memref<28x1xf32, #tpu.memory_space<vmem>>, vector<28x1xf32>
    %175 = vector.broadcast %174 : vector<28x1xf32> to vector<28x56xf32>
    %176 = arith.addf %173, %175 : vector<28x56xf32>
    %177 = math.tanh %176 : vector<28x56xf32>
    %178 = vector.extract_strided_slice %177 {offsets = [0, 0], sizes = [28, 28], strides = [1, 1]} : vector<28x56xf32> to vector<28x28xf32>
    %c0_192 = arith.constant 0 : index
    %c0_193 = arith.constant 0 : index
    %c0_194 = arith.constant 0 : index
    %c0_195 = arith.constant 0 : index
    %179 = vector.load %arg20[%c0_192, %c0_193, %c0_194, %c0_195] : memref<2x1x28x28xf32, #tpu.memory_space<vmem>>, vector<1x1x28x28xf32>
    %180 = vector.shape_cast %179 : vector<1x1x28x28xf32> to vector<28x28xf32>
    %181 = vector.shape_cast %178 : vector<28x28xf32> to vector<1x1x28x28xf32>
    tpu.vector_store %arg20[%c0_192, %c0_193, %c0_194, %c0_195], %181 {strides = array<i32>} : memref<2x1x28x28xf32, #tpu.memory_space<vmem>>, vector<1x1x28x28xf32>,
    %182 = vector.extract_strided_slice %177 {offsets = [0, 28], sizes = [28, 28], strides = [1, 1]} : vector<28x56xf32> to vector<28x28xf32>
    %c1_196 = arith.constant 1 : index
    %c0_197 = arith.constant 0 : index
    %c0_198 = arith.constant 0 : index
    %c0_199 = arith.constant 0 : index
    %183 = vector.load %arg20[%c1_196, %c0_197, %c0_198, %c0_199] : memref<2x1x28x28xf32, #tpu.memory_space<vmem>>, vector<1x1x28x28xf32>
    %184 = vector.shape_cast %183 : vector<1x1x28x28xf32> to vector<28x28xf32>
    %185 = vector.shape_cast %182 : vector<28x28xf32> to vector<1x1x28x28xf32>
    tpu.vector_store %arg20[%c1_196, %c0_197, %c0_198, %c0_199], %185 {strides = array<i32>} : memref<2x1x28x28xf32, #tpu.memory_space<vmem>>, vector<1x1x28x28xf32>,
    return
  }
}

</mosaic_0001>

<llo_original>
// kernel: tpu_custom_call.1
$region0: #{tpu_custom_call.1}
  #allocation0 [shape = 'u32[]', space=smem, size = 0x4, offset = 0x4, fixed_abs, tag = 'smem constant byte address 0x4 - core index']
  #allocation1 [shape = 'u32[144,128]{1,0:T(1,128)}', space=vmem, size = 0x12000, scoped, tag = 'internal scratch']
  %s0 = inlined_call_operand.vmem [shape: f32[2,1,28,28], index: 0, kind: input, shape index: {}]
  %s1 = inlined_call_operand.vmem [shape: f32[3,160,28], index: 1, kind: input, shape index: {}]
  %s2 = inlined_call_operand.vmem [shape: f32[3,56,20], index: 2, kind: input, shape index: {}]
  %s3 = inlined_call_operand.vmem [shape: f32[160,1], index: 3, kind: input, shape index: {}]
  %s4 = inlined_call_operand.vmem [shape: f32[2,80,160], index: 4, kind: input, shape index: {}]
  %s5 = inlined_call_operand.vmem [shape: f32[2,20,10], index: 5, kind: input, shape index: {}]
  %s6 = inlined_call_operand.vmem [shape: f32[3,24,80], index: 6, kind: input, shape index: {}]
  %s7 = inlined_call_operand.vmem [shape: f32[3,10,6], index: 7, kind: input, shape index: {}]
  %s8 = inlined_call_operand.vmem [shape: f32[24,1], index: 8, kind: input, shape index: {}]
  %s9 = inlined_call_operand.vmem [shape: f32[2,16,24], index: 9, kind: input, shape index: {}]
  %s10 = inlined_call_operand.vmem [shape: f32[2,6,4], index: 10, kind: input, shape index: {}]
  %s11 = inlined_call_operand.vmem [shape: f32[3,80,16], index: 11, kind: input, shape index: {}]
  %s12 = inlined_call_operand.vmem [shape: f32[3,4,10], index: 12, kind: input, shape index: {}]
  %s13 = inlined_call_operand.vmem [shape: f32[80,1], index: 13, kind: input, shape index: {}]
  %s14 = inlined_call_operand.vmem [shape: f32[5,120,80], index: 14, kind: input, shape index: {}]
  %s15 = inlined_call_operand.vmem [shape: f32[5,10,30], index: 15, kind: input, shape index: {}]
  %s16 = inlined_call_operand.vmem [shape: f32[120,1], index: 16, kind: input, shape index: {}]
  %s17 = inlined_call_operand.vmem [shape: f32[2,28,120], index: 17, kind: input, shape index: {}]
  %s18 = inlined_call_operand.vmem [shape: f32[2,30,56], index: 18, kind: input, shape index: {}]
  %s19 = inlined_call_operand.vmem [shape: f32[28,1], index: 19, kind: input, shape index: {}]
  %s20 = inlined_call_operand.vmem [shape: f32[2,1,28,28], index: 20, kind: output, shape index: {}]
  %s21 = sld [smem:[#allocation0]]
  $region90: #{tpu_custom_call.1} parent=0
    _
  %s23 = ssub.s32 1, %s21
  %s24 = scalar_select 0, %s23, %s21
  // Predicated region
  $region2: #{tpu_custom_call.1} parent=0 // pred_check
    _
  $region3: #{tpu_custom_call.1} parent=0 // pred_check_branch
    %26 = sbr.rel (0) target = $region5
  $region4: #{tpu_custom_call.1} parent=0 // pred_region
    _
  $region5: #{tpu_custom_call.1} parent=0 // pred_fallthru
    _
  // Predicated region
  $region6: #{tpu_custom_call.1} parent=0 // pred_check
    _
  $region7: #{tpu_custom_call.1} parent=0 // pred_check_branch
    %28 = sbr.rel (0) target = $region9
  $region8: #{tpu_custom_call.1} parent=0 // pred_region
    _
  $region9: #{tpu_custom_call.1} parent=0 // pred_fallthru
    _
  // Predicated region
  $region10: #{tpu_custom_call.1} parent=0 // pred_check
    _
  $region11: #{tpu_custom_call.1} parent=0 // pred_check_branch
    %30 = sbr.rel (0) target = $region13
  $region12: #{tpu_custom_call.1} parent=0 // pred_region
    _
  $region13: #{tpu_custom_call.1} parent=0 // pred_fallthru
    _
  // Predicated region
  $region14: #{tpu_custom_call.1} parent=0 // pred_check
    _
  $region15: #{tpu_custom_call.1} parent=0 // pred_check_branch
    %32 = sbr.rel (0) target = $region17
  $region16: #{tpu_custom_call.1} parent=0 // pred_region
    _
  $region17: #{tpu_custom_call.1} parent=0 // pred_fallthru
    _
  // Predicated region
  $region18: #{tpu_custom_call.1} parent=0 // pred_check
    _
  $region19: #{tpu_custom_call.1} parent=0 // pred_check_branch
    %34 = sbr.rel (0) target = $region21
  $region20: #{tpu_custom_call.1} parent=0 // pred_region
    _
  $region21: #{tpu_custom_call.1} parent=0 // pred_fallthru
    _
  // Predicated region
  $region22: #{tpu_custom_call.1} parent=0 // pred_check
    _
  $region23: #{tpu_custom_call.1} parent=0 // pred_check_branch
    %36 = sbr.rel (0) target = $region25
  $region24: #{tpu_custom_call.1} parent=0 // pred_region
    _
  $region25: #{tpu_custom_call.1} parent=0 // pred_fallthru
    _
  // Predicated region
  $region26: #{tpu_custom_call.1} parent=0 // pred_check
    _
  $region27: #{tpu_custom_call.1} parent=0 // pred_check_branch
    %38 = sbr.rel (0) target = $region29
  $region28: #{tpu_custom_call.1} parent=0 // pred_region
    _
  $region29: #{tpu_custom_call.1} parent=0 // pred_fallthru
    _
  // Predicated region
  $region30: #{tpu_custom_call.1} parent=0 // pred_check
    _
  $region31: #{tpu_custom_call.1} parent=0 // pred_check_branch
    %40 = sbr.rel (0) target = $region33
  $region32: #{tpu_custom_call.1} parent=0 // pred_region
    _
  $region33: #{tpu_custom_call.1} parent=0 // pred_fallthru
    _
  // Predicated region
  $region34: #{tpu_custom_call.1} parent=0 // pred_check
    _
  $region35: #{tpu_custom_call.1} parent=0 // pred_check_branch
    %42 = sbr.rel (0) target = $region37
  $region36: #{tpu_custom_call.1} parent=0 // pred_region
    _
  $region37: #{tpu_custom_call.1} parent=0 // pred_fallthru
    _
  // Predicated region
  $region38: #{tpu_custom_call.1} parent=0 // pred_check
    _
  $region39: #{tpu_custom_call.1} parent=0 // pred_check_branch
    %44 = sbr.rel (0) target = $region41
  $region40: #{tpu_custom_call.1} parent=0 // pred_region
    _
  $region41: #{tpu_custom_call.1} parent=0 // pred_fallthru
    _
  // Predicated region
  $region42: #{tpu_custom_call.1} parent=0 // pred_check
    _
  $region43: #{tpu_custom_call.1} parent=0 // pred_check_branch
    %46 = sbr.rel (0) target = $region45
  $region44: #{tpu_custom_call.1} parent=0 // pred_region
    _
  $region45: #{tpu_custom_call.1} parent=0 // pred_fallthru
    _
  // Predicated region
  $region46: #{tpu_custom_call.1} parent=0 // pred_check
    _
  $region47: #{tpu_custom_call.1} parent=0 // pred_check_branch
    %48 = sbr.rel (0) target = $region49
  $region48: #{tpu_custom_call.1} parent=0 // pred_region
    _
  $region49: #{tpu_custom_call.1} parent=0 // pred_fallthru
    _
  // Predicated region
  $region50: #{tpu_custom_call.1} parent=0 // pred_check
    _
  $region51: #{tpu_custom_call.1} parent=0 // pred_check_branch
    %50 = sbr.rel (0) target = $region53
  $region52: #{tpu_custom_call.1} parent=0 // pred_region
    _
  $region53: #{tpu_custom_call.1} parent=0 // pred_fallthru
    _
  // Predicated region
  $region54: #{tpu_custom_call.1} parent=0 // pred_check
    _
  $region55: #{tpu_custom_call.1} parent=0 // pred_check_branch
    %52 = sbr.rel (0) target = $region57
  $region56: #{tpu_custom_call.1} parent=0 // pred_region
    _
  $region57: #{tpu_custom_call.1} parent=0 // pred_fallthru
    _
  // Predicated region
  $region58: #{tpu_custom_call.1} parent=0 // pred_check
    _
  $region59: #{tpu_custom_call.1} parent=0 // pred_check_branch
    %54 = sbr.rel (0) target = $region61
  $region60: #{tpu_custom_call.1} parent=0 // pred_region
    _
  $region61: #{tpu_custom_call.1} parent=0 // pred_fallthru
    _
  // Predicated region
  $region62: #{tpu_custom_call.1} parent=0 // pred_check
    _
  $region63: #{tpu_custom_call.1} parent=0 // pred_check_branch
    %56 = sbr.rel (0) target = $region65
  $region64: #{tpu_custom_call.1} parent=0 // pred_region
    _
  $region65: #{tpu_custom_call.1} parent=0 // pred_fallthru
    _
  // Predicated region
  $region66: #{tpu_custom_call.1} parent=0 // pred_check
    _
  $region67: #{tpu_custom_call.1} parent=0 // pred_check_branch
    %58 = sbr.rel (0) target = $region69
  $region68: #{tpu_custom_call.1} parent=0 // pred_region
    _
  $region69: #{tpu_custom_call.1} parent=0 // pred_fallthru
    _
  // Predicated region
  $region70: #{tpu_custom_call.1} parent=0 // pred_check
    _
  $region71: #{tpu_custom_call.1} parent=0 // pred_check_branch
    %60 = sbr.rel (0) target = $region73
  $region72: #{tpu_custom_call.1} parent=0 // pred_region
    _
  $region73: #{tpu_custom_call.1} parent=0 // pred_fallthru
    _
  // Predicated region
  $region74: #{tpu_custom_call.1} parent=0 // pred_check
    _
  $region75: #{tpu_custom_call.1} parent=0 // pred_check_branch
    %62 = sbr.rel (0) target = $region77
  $region76: #{tpu_custom_call.1} parent=0 // pred_region
    _
  $region77: #{tpu_custom_call.1} parent=0 // pred_fallthru
    _
  // Predicated region
  $region78: #{tpu_custom_call.1} parent=0 // pred_check
    _
  $region79: #{tpu_custom_call.1} parent=0 // pred_check_branch
    %64 = sbr.rel (0) target = $region81
  $region80: #{tpu_custom_call.1} parent=0 // pred_region
    _
  $region81: #{tpu_custom_call.1} parent=0 // pred_fallthru
    _
  %v65 = vld [vmem:[%s0] sm:$0xff]
  %v66 = vld [vmem:[%s0 + $0x8] sm:$0xff]
  %v67 = vld [vmem:[%s0 + $0x10] sm:$0xff]
  %v68 = vld [vmem:[%s0 + $0x18] sm:$0xf]
  %s69 = scalar_lea.vmem %s0, 32
  %v70 = vld [vmem:[%s69] sm:$0xff]
  %v71 = vld [vmem:[%s69 + $0x8] sm:$0xff]
  %v72 = vld [vmem:[%s69 + $0x10] sm:$0xff]
  %v73 = vld [vmem:[%s69 + $0x18] sm:$0xf]
  %78 = vrot.lane.b32.xlu0 %v70, 28
  %v79 = vpop.permute.xlu0 %78
  %80 = vrot.lane.b32.xlu0 %v71, 28
  %v81 = vpop.permute.xlu0 %80
  %82 = vrot.lane.b32.xlu0 %v72, 28
  %v83 = vpop.permute.xlu0 %82
  %84 = vrot.lane.b32.xlu0 %v73, 28
  %v85 = vpop.permute.xlu0 %84
  %vm90 = vcmask 228352
  %v91 = vsel %vm90, %v65, %v79
  %v92 = vsel %vm90, %v66, %v81
  %v93 = vsel %vm90, %v67, %v83
  %v94 = vsel %vm90, %v68, %v85
  %v95 = vld [vmem:[%s1] sm:$0xff]
  %v96 = vld [vmem:[%s1 + $0x8] sm:$0xff]
  %v97 = vld [vmem:[%s1 + $0x10] sm:$0xff]
  %v98 = vld [vmem:[%s1 + $0x18] sm:$0xff]
  %v99 = vld [vmem:[%s1 + $0x20] sm:$0xff]
  %v100 = vld [vmem:[%s1 + $0x28] sm:$0xff]
  %v101 = vld [vmem:[%s1 + $0x30] sm:$0xff]
  %v102 = vld [vmem:[%s1 + $0x38] sm:$0xff]
  %v103 = vld [vmem:[%s1 + $0x40] sm:$0xff]
  %v104 = vld [vmem:[%s1 + $0x48] sm:$0xff]
  %v105 = vld [vmem:[%s1 + $0x50] sm:$0xff]
  %v106 = vld [vmem:[%s1 + $0x58] sm:$0xff]
  %v107 = vld [vmem:[%s1 + $0x60] sm:$0xff]
  %v108 = vld [vmem:[%s1 + $0x68] sm:$0xff]
  %v109 = vld [vmem:[%s1 + $0x70] sm:$0xff]
  %v110 = vld [vmem:[%s1 + $0x78] sm:$0xff]
  %v111 = vld [vmem:[%s1 + $0x80] sm:$0xff]
  %v112 = vld [vmem:[%s1 + $0x88] sm:$0xff]
  %v113 = vld [vmem:[%s1 + $0x90] sm:$0xff]
  %v114 = vld [vmem:[%s1 + $0x98] sm:$0xff]
  %v116 = vsel %vm90, %v95, 0
  %v119 = vsel %vm90, %v96, 0
  %v122 = vsel %vm90, %v97, 0
  %v125 = vsel %vm90, %v98, 0
  %v128 = vsel %vm90, %v99, 0
  %v131 = vsel %vm90, %v100, 0
  %v134 = vsel %vm90, %v101, 0
  %v137 = vsel %vm90, %v102, 0
  %v140 = vsel %vm90, %v103, 0
  %v143 = vsel %vm90, %v104, 0
  %v146 = vsel %vm90, %v105, 0
  %v149 = vsel %vm90, %v106, 0
  %v152 = vsel %vm90, %v107, 0
  %v155 = vsel %vm90, %v108, 0
  %v158 = vsel %vm90, %v109, 0
  %v161 = vsel %vm90, %v110, 0
  %v164 = vsel %vm90, %v111, 0
  %v167 = vsel %vm90, %v112, 0
  %v170 = vsel %vm90, %v113, 0
  %v173 = vsel %vm90, %v114, 0
  %vm175 = vcmask 1043456
  %v177 = vsel %vm175, %v94, 0
  %179 = vmatprep.subr.mxu0 0.0
  %180 = vmatpush1.msra.mxu0 %v91
  %181 = vmatprep.subr.mxu0 0.0
  %182 = vmatpush1.msra.mxu0 %v92
  %183 = vmatprep.subr.mxu0 0.0
  %184 = vmatpush1.msra.mxu0 %v93
  %185 = vmatprep.subr.mxu0 0.0
  %186 = vmatpush1.msra.mxu0 %v177
  %187 = vmatprep.subr.mxu0 0.0
  %188 = vmatpush1.msra.mxu0 0.0
  %189 = vmatprep.subr.mxu0 0.0
  %190 = vmatpush1.msra.mxu0 0.0
  %191 = vmatprep.subr.mxu0 0.0
  %192 = vmatpush1.msra.mxu0 0.0
  %193 = vmatprep.subr.mxu0 0.0
  %194 = vmatpush1.msra.mxu0 0.0
  %195 = vmatprep.subr.mxu0 0.0
  %196 = vmatpush1.msra.mxu0 0.0
  %197 = vmatprep.subr.mxu0 0.0
  %198 = vmatpush1.msra.mxu0 0.0
  %199 = vmatprep.subr.mxu0 0.0
  %200 = vmatpush1.msra.mxu0 0.0
  %201 = vmatprep.subr.mxu0 0.0
  %202 = vmatpush1.msra.mxu0 0.0
  %203 = vmatprep.subr.mxu0 0.0
  %204 = vmatpush1.msra.mxu0 0.0
  %205 = vmatprep.subr.mxu0 0.0
  %206 = vmatpush1.msra.mxu0 0.0
  %207 = vmatprep.subr.mxu0 0.0
  %208 = vmatpush1.msra.mxu0 0.0
  %209 = vmatprep.subr.mxu0 0.0
  %210 = vmatpush1.msra.mxu0 0.0
  %211 = vmatprep.subr.mxu0 0.0
  %212 = vmatpush1.msra.mxu0 0.0
  %213 = vmatprep.subr.mxu0 0.0
  %214 = vmatpush1.msra.mxu0 0.0
  %215 = vmatprep.subr.mxu0 0.0
  %216 = vmatpush1.msra.mxu0 0.0
  %217 = vmatprep.subr.mxu0 0.0
  %218 = vmatpush1.msra.mxu0 0.0
  %219 = vmatprep.subr.mxu0 0.0
  %220 = vmatpush1.msra.mxu0 0.0
  %221 = vmatprep.subr.mxu0 0.0
  %222 = vmatpush1.msra.mxu0 0.0
  %223 = vmatprep.subr.mxu0 0.0
  %224 = vmatpush1.msra.mxu0 0.0
  %225 = vmatprep.subr.mxu0 0.0
  %226 = vmatpush1.msra.mxu0 0.0
  %227 = vmatprep.subr.mxu0 0.0
  %228 = vmatpush1.msra.mxu0 0.0
  %229 = vmatprep.subr.mxu0 0.0
  %230 = vmatpush1.msra.mxu0 0.0
  %231 = vmatprep.subr.mxu0 0.0
  %232 = vmatpush1.msra.mxu0 0.0
  %233 = vmatprep.subr.mxu0 0.0
  %234 = vmatpush1.msra.mxu0 0.0
  %235 = vmatprep.subr.mxu0 0.0
  %236 = vmatpush1.msra.mxu0 0.0
  %237 = vmatprep.subr.mxu0 0.0
  %238 = vmatpush1.msra.mxu0 0.0
  %239 = vmatprep.subr.mxu0 0.0
  %240 = vmatpush1.msra.mxu0 0.0
  %241 = vmatprep.subr.mxu0 0.0
  %242 = vmatpush1.msra.mxu0 0.0
  %243 = vmatprep.mubr.f32.mxu0 0.0
  %244 = vmatmul.mubr.f32.gmra.mrb[0].mxu0 %v116
  %v245 = vpop.f32.mrb[0].mxu0
  %v246 = vadd.f32 0.0, %v245
  %v247 = vpop.f32.mrb[0].mxu0
  %248 = vmatprep.mubr.f32.mxu0 0.0
  %249 = vmatmul.mubr.f32.gmra.mrb[0].mxu0 %v119
  %v250 = vpop.f32.mrb[0].mxu0
  %v251 = vadd.f32 0.0, %v250
  %v252 = vpop.f32.mrb[0].mxu0
  %253 = vmatprep.mubr.f32.mxu0 0.0
  %254 = vmatmul.mubr.f32.gmra.mrb[0].mxu0 %v122
  %v255 = vpop.f32.mrb[0].mxu0
  %v256 = vadd.f32 0.0, %v255
  %v257 = vpop.f32.mrb[0].mxu0
  %258 = vmatprep.mubr.f32.mxu0 0.0
  %259 = vmatmul.mubr.f32.gmra.mrb[0].mxu0 %v125
  %v260 = vpop.f32.mrb[0].mxu0
  %v261 = vadd.f32 0.0, %v260
  %v262 = vpop.f32.mrb[0].mxu0
  %263 = vmatprep.mubr.f32.mxu0 0.0
  %264 = vmatmul.mubr.f32.gmra.mrb[0].mxu0 %v128
  %v265 = vpop.f32.mrb[0].mxu0
  %v266 = vadd.f32 0.0, %v265
  %v267 = vpop.f32.mrb[0].mxu0
  %268 = vmatprep.mubr.f32.mxu0 0.0
  %269 = vmatmul.mubr.f32.gmra.mrb[0].mxu0 %v131
  %v270 = vpop.f32.mrb[0].mxu0
  %v271 = vadd.f32 0.0, %v270
  %v272 = vpop.f32.mrb[0].mxu0
  %273 = vmatprep.mubr.f32.mxu0 0.0
  %274 = vmatmul.mubr.f32.gmra.mrb[0].mxu0 %v134
  %v275 = vpop.f32.mrb[0].mxu0
  %v276 = vadd.f32 0.0, %v275
  %v277 = vpop.f32.mrb[0].mxu0
  %278 = vmatprep.mubr.f32.mxu0 0.0
  %279 = vmatmul.mubr.f32.gmra.mrb[0].mxu0 %v137
  %v280 = vpop.f32.mrb[0].mxu0
  %v281 = vadd.f32 0.0, %v280
  %v282 = vpop.f32.mrb[0].mxu0
  %283 = vmatprep.mubr.f32.mxu0 0.0
  %284 = vmatmul.mubr.f32.gmra.mrb[0].mxu0 %v140
  %v285 = vpop.f32.mrb[0].mxu0
  %v286 = vadd.f32 0.0, %v285
  %v287 = vpop.f32.mrb[0].mxu0
  %288 = vmatprep.mubr.f32.mxu0 0.0
  %289 = vmatmul.mubr.f32.gmra.mrb[0].mxu0 %v143
  %v290 = vpop.f32.mrb[0].mxu0
  %v291 = vadd.f32 0.0, %v290
  %v292 = vpop.f32.mrb[0].mxu0
  %293 = vmatprep.mubr.f32.mxu0 0.0
  %294 = vmatmul.mubr.f32.gmra.mrb[0].mxu0 %v146
  %v295 = vpop.f32.mrb[0].mxu0
  %v296 = vadd.f32 0.0, %v295
  %v297 = vpop.f32.mrb[0].mxu0
  %298 = vmatprep.mubr.f32.mxu0 0.0
  %299 = vmatmul.mubr.f32.gmra.mrb[0].mxu0 %v149
  %v300 = vpop.f32.mrb[0].mxu0
  %v301 = vadd.f32 0.0, %v300
  %v302 = vpop.f32.mrb[0].mxu0
  %303 = vmatprep.mubr.f32.mxu0 0.0
  %304 = vmatmul.mubr.f32.gmra.mrb[0].mxu0 %v152
  %v305 = vpop.f32.mrb[0].mxu0
  %v306 = vadd.f32 0.0, %v305
  %v307 = vpop.f32.mrb[0].mxu0
  %308 = vmatprep.mubr.f32.mxu0 0.0
  %309 = vmatmul.mubr.f32.gmra.mrb[0].mxu0 %v155
  %v310 = vpop.f32.mrb[0].mxu0
  %v311 = vadd.f32 0.0, %v310
  %v312 = vpop.f32.mrb[0].mxu0
  %313 = vmatprep.mubr.f32.mxu0 0.0
  %314 = vmatmul.mubr.f32.gmra.mrb[0].mxu0 %v158
  %v315 = vpop.f32.mrb[0].mxu0
  %v316 = vadd.f32 0.0, %v315
  %v317 = vpop.f32.mrb[0].mxu0
  %318 = vmatprep.mubr.f32.mxu0 0.0
  %319 = vmatmul.mubr.f32.gmra.mrb[0].mxu0 %v161
  %v320 = vpop.f32.mrb[0].mxu0
  %v321 = vadd.f32 0.0, %v320
  %v322 = vpop.f32.mrb[0].mxu0
  %323 = vmatprep.mubr.f32.mxu0 0.0
  %324 = vmatmul.mubr.f32.gmra.mrb[0].mxu0 %v164
  %v325 = vpop.f32.mrb[0].mxu0
  %v326 = vadd.f32 0.0, %v325
  %v327 = vpop.f32.mrb[0].mxu0
  %328 = vmatprep.mubr.f32.mxu0 0.0
  %329 = vmatmul.mubr.f32.gmra.mrb[0].mxu0 %v167
  %v330 = vpop.f32.mrb[0].mxu0
  %v331 = vadd.f32 0.0, %v330
  %v332 = vpop.f32.mrb[0].mxu0
  %333 = vmatprep.mubr.f32.mxu0 0.0
  %334 = vmatmul.mubr.f32.gmra.mrb[0].mxu0 %v170
  %v335 = vpop.f32.mrb[0].mxu0
  %v336 = vadd.f32 0.0, %v335
  %v337 = vpop.f32.mrb[0].mxu0
  %338 = vmatprep.mubr.f32.mxu0 0.0
  %339 = vmatmul.mubr.f32.gmra.mrb[0].mxu0 %v173
  %v340 = vpop.f32.mrb[0].mxu0
  %v341 = vadd.f32 0.0, %v340
  %v342 = vpop.f32.mrb[0].mxu0
  %343 = vdwg.mxu0
  %v344 = vld [vmem:[%s2] sm:$0xff]
  %v345 = vld [vmem:[%s2 + $0x8] sm:$0xff]
  %v346 = vld [vmem:[%s2 + $0x10] sm:$0xff]
  %v347 = vld [vmem:[%s2 + $0x18] sm:$0xff]
  %v348 = vld [vmem:[%s2 + $0x20] sm:$0xff]
  %v349 = vld [vmem:[%s2 + $0x28] sm:$0xff]
  %v350 = vld [vmem:[%s2 + $0x30] sm:$0xff]
  %s351 = scalar_lea.vmem %s1, 160
  %v352 = vld [vmem:[%s351] sm:$0xff]
  %v353 = vld [vmem:[%s351 + $0x8] sm:$0xff]
  %v354 = vld [vmem:[%s351 + $0x10] sm:$0xff]
  %v355 = vld [vmem:[%s351 + $0x18] sm:$0xff]
  %v356 = vld [vmem:[%s351 + $0x20] sm:$0xff]
  %v357 = vld [vmem:[%s351 + $0x28] sm:$0xff]
  %v358 = vld [vmem:[%s351 + $0x30] sm:$0xff]
  %v359 = vld [vmem:[%s351 + $0x38] sm:$0xff]
  %v360 = vld [vmem:[%s351 + $0x40] sm:$0xff]
  %v361 = vld [vmem:[%s351 + $0x48] sm:$0xff]
  %v362 = vld [vmem:[%s351 + $0x50] sm:$0xff]
  %v363 = vld [vmem:[%s351 + $0x58] sm:$0xff]
  %v364 = vld [vmem:[%s351 + $0x60] sm:$0xff]
  %v365 = vld [vmem:[%s351 + $0x68] sm:$0xff]
  %v366 = vld [vmem:[%s351 + $0x70] sm:$0xff]
  %v367 = vld [vmem:[%s351 + $0x78] sm:$0xff]
  %v368 = vld [vmem:[%s351 + $0x80] sm:$0xff]
  %v369 = vld [vmem:[%s351 + $0x88] sm:$0xff]
  %v370 = vld [vmem:[%s351 + $0x90] sm:$0xff]
  %v371 = vld [vmem:[%s351 + $0x98] sm:$0xff]
  %v373 = vsel %vm90, %v352, 0
  %v376 = vsel %vm90, %v353, 0
  %v379 = vsel %vm90, %v354, 0
  %v382 = vsel %vm90, %v355, 0
  %v385 = vsel %vm90, %v356, 0
  %v388 = vsel %vm90, %v357, 0
  %v391 = vsel %vm90, %v358, 0
  %v394 = vsel %vm90, %v359, 0
  %v397 = vsel %vm90, %v360, 0
  %v400 = vsel %vm90, %v361, 0
  %v403 = vsel %vm90, %v362, 0
  %v406 = vsel %vm90, %v363, 0
  %v409 = vsel %vm90, %v364, 0
  %v412 = vsel %vm90, %v365, 0
  %v415 = vsel %vm90, %v366, 0
  %v418 = vsel %vm90, %v367, 0
  %v421 = vsel %vm90, %v368, 0
  %v424 = vsel %vm90, %v369, 0
  %v427 = vsel %vm90, %v370, 0
  %v430 = vsel %vm90, %v371, 0
  %432 = vmatprep.subr.mxu0 0.0
  %433 = vmatpush1.msra.mxu0 %v91
  %434 = vmatprep.subr.mxu0 0.0
  %435 = vmatpush1.msra.mxu0 %v92
  %436 = vmatprep.subr.mxu0 0.0
  %437 = vmatpush1.msra.mxu0 %v93
  %438 = vmatprep.subr.mxu0 0.0
  %439 = vmatpush1.msra.mxu0 %v177
  %440 = vmatprep.subr.mxu0 0.0
  %441 = vmatpush1.msra.mxu0 0.0
  %442 = vmatprep.subr.mxu0 0.0
  %443 = vmatpush1.msra.mxu0 0.0
  %444 = vmatprep.subr.mxu0 0.0
  %445 = vmatpush1.msra.mxu0 0.0
  %446 = vmatprep.subr.mxu0 0.0
  %447 = vmatpush1.msra.mxu0 0.0
  %448 = vmatprep.subr.mxu0 0.0
  %449 = vmatpush1.msra.mxu0 0.0
  %450 = vmatprep.subr.mxu0 0.0
  %451 = vmatpush1.msra.mxu0 0.0
  %452 = vmatprep.subr.mxu0 0.0
  %453 = vmatpush1.msra.mxu0 0.0
  %454 = vmatprep.subr.mxu0 0.0
  %455 = vmatpush1.msra.mxu0 0.0
  %456 = vmatprep.subr.mxu0 0.0
  %457 = vmatpush1.msra.mxu0 0.0
  %458 = vmatprep.subr.mxu0 0.0
  %459 = vmatpush1.msra.mxu0 0.0
  %460 = vmatprep.subr.mxu0 0.0
  %461 = vmatpush1.msra.mxu0 0.0
  %462 = vmatprep.subr.mxu0 0.0
  %463 = vmatpush1.msra.mxu0 0.0
  %464 = vmatprep.subr.mxu0 0.0
  %465 = vmatpush1.msra.mxu0 0.0
  %466 = vmatprep.subr.mxu0 0.0
  %467 = vmatpush1.msra.mxu0 0.0
  %468 = vmatprep.subr.mxu0 0.0
  %469 = vmatpush1.msra.mxu0 0.0
  %470 = vmatprep.subr.mxu0 0.0
  %471 = vmatpush1.msra.mxu0 0.0
  %472 = vmatprep.subr.mxu0 0.0
  %473 = vmatpush1.msra.mxu0 0.0
  %474 = vmatprep.subr.mxu0 0.0
  %475 = vmatpush1.msra.mxu0 0.0
  %476 = vmatprep.subr.mxu0 0.0
  %477 = vmatpush1.msra.mxu0 0.0
  %478 = vmatprep.subr.mxu0 0.0
  %479 = vmatpush1.msra.mxu0 0.0
  %480 = vmatprep.subr.mxu0 0.0
  %481 = vmatpush1.msra.mxu0 0.0
  %482 = vmatprep.subr.mxu0 0.0
  %483 = vmatpush1.msra.mxu0 0.0
  %484 = vmatprep.subr.mxu0 0.0
  %485 = vmatpush1.msra.mxu0 0.0
  %486 = vmatprep.subr.mxu0 0.0
  %487 = vmatpush1.msra.mxu0 0.0
  %488 = vmatprep.subr.mxu0 0.0
  %489 = vmatpush1.msra.mxu0 0.0
  %490 = vmatprep.subr.mxu0 0.0
  %491 = vmatpush1.msra.mxu0 0.0
  %492 = vmatprep.subr.mxu0 0.0
  %493 = vmatpush1.msra.mxu0 0.0
  %494 = vmatprep.subr.mxu0 0.0
  %495 = vmatpush1.msra.mxu0 0.0
  %496 = vmatprep.mubr.f32.mxu0 0.0
  %497 = vmatmul.mubr.f32.gmra.mrb[0].mxu0 %v373
  %v498 = vpop.f32.mrb[0].mxu0
  %v499 = vadd.f32 0.0, %v498
  %v500 = vpop.f32.mrb[0].mxu0
  %501 = vmatprep.mubr.f32.mxu0 0.0
  %502 = vmatmul.mubr.f32.gmra.mrb[0].mxu0 %v376
  %v503 = vpop.f32.mrb[0].mxu0
  %v504 = vadd.f32 0.0, %v503
  %v505 = vpop.f32.mrb[0].mxu0
  %506 = vmatprep.mubr.f32.mxu0 0.0
  %507 = vmatmul.mubr.f32.gmra.mrb[0].mxu0 %v379
  %v508 = vpop.f32.mrb[0].mxu0
  %v509 = vadd.f32 0.0, %v508
  %v510 = vpop.f32.mrb[0].mxu0
  %511 = vmatprep.mubr.f32.mxu0 0.0
  %512 = vmatmul.mubr.f32.gmra.mrb[0].mxu0 %v382
  %v513 = vpop.f32.mrb[0].mxu0
  %v514 = vadd.f32 0.0, %v513
  %v515 = vpop.f32.mrb[0].mxu0
  %516 = vmatprep.mubr.f32.mxu0 0.0
  %517 = vmatmul.mubr.f32.gmra.mrb[0].mxu0 %v385
  %v518 = vpop.f32.mrb[0].mxu0
  %v519 = vadd.f32 0.0, %v518
  %v520 = vpop.f32.mrb[0].mxu0
  %521 = vmatprep.mubr.f32.mxu0 0.0
  %522 = vmatmul.mubr.f32.gmra.mrb[0].mxu0 %v388
  %v523 = vpop.f32.mrb[0].mxu0
  %v524 = vadd.f32 0.0, %v523
  %v525 = vpop.f32.mrb[0].mxu0
  %526 = vmatprep.mubr.f32.mxu0 0.0
  %527 = vmatmul.mubr.f32.gmra.mrb[0].mxu0 %v391
  %v528 = vpop.f32.mrb[0].mxu0
  %v529 = vadd.f32 0.0, %v528
  %v530 = vpop.f32.mrb[0].mxu0
  %531 = vmatprep.mubr.f32.mxu0 0.0
  %532 = vmatmul.mubr.f32.gmra.mrb[0].mxu0 %v394
  %v533 = vpop.f32.mrb[0].mxu0
  %v534 = vadd.f32 0.0, %v533
  %v535 = vpop.f32.mrb[0].mxu0
  %536 = vmatprep.mubr.f32.mxu0 0.0
  %537 = vmatmul.mubr.f32.gmra.mrb[0].mxu0 %v397
  %v538 = vpop.f32.mrb[0].mxu0
  %v539 = vadd.f32 0.0, %v538
  %v540 = vpop.f32.mrb[0].mxu0
  %541 = vmatprep.mubr.f32.mxu0 0.0
  %542 = vmatmul.mubr.f32.gmra.mrb[0].mxu0 %v400
  %v543 = vpop.f32.mrb[0].mxu0
  %v544 = vadd.f32 0.0, %v543
  %v545 = vpop.f32.mrb[0].mxu0
  %546 = vmatprep.mubr.f32.mxu0 0.0
  %547 = vmatmul.mubr.f32.gmra.mrb[0].mxu0 %v403
  %v548 = vpop.f32.mrb[0].mxu0
  %v549 = vadd.f32 0.0, %v548
  %v550 = vpop.f32.mrb[0].mxu0
  %551 = vmatprep.mubr.f32.mxu0 0.0
  %552 = vmatmul.mubr.f32.gmra.mrb[0].mxu0 %v406
  %v553 = vpop.f32.mrb[0].mxu0
  %v554 = vadd.f32 0.0, %v553
  %v555 = vpop.f32.mrb[0].mxu0
  %556 = vmatprep.mubr.f32.mxu0 0.0
  %557 = vmatmul.mubr.f32.gmra.mrb[0].mxu0 %v409
  %v558 = vpop.f32.mrb[0].mxu0
  %v559 = vadd.f32 0.0, %v558
  %v560 = vpop.f32.mrb[0].mxu0
  %561 = vmatprep.mubr.f32.mxu0 0.0
  %562 = vmatmul.mubr.f32.gmra.mrb[0].mxu0 %v412
  %v563 = vpop.f32.mrb[0].mxu0
  %v564 = vadd.f32 0.0, %v563
  %v565 = vpop.f32.mrb[0].mxu0
  %566 = vmatprep.mubr.f32.mxu0 0.0
  %567 = vmatmul.mubr.f32.gmra.mrb[0].mxu0 %v415
  %v568 = vpop.f32.mrb[0].mxu0
  %v569 = vadd.f32 0.0, %v568
  %v570 = vpop.f32.mrb[0].mxu0
  %571 = vmatprep.mubr.f32.mxu0 0.0
  %572 = vmatmul.mubr.f32.gmra.mrb[0].mxu0 %v418
  %v573 = vpop.f32.mrb[0].mxu0
  %v574 = vadd.f32 0.0, %v573
  %v575 = vpop.f32.mrb[0].mxu0
  %576 = vmatprep.mubr.f32.mxu0 0.0
  %577 = vmatmul.mubr.f32.gmra.mrb[0].mxu0 %v421
  %v578 = vpop.f32.mrb[0].mxu0
  %v579 = vadd.f32 0.0, %v578
  %v580 = vpop.f32.mrb[0].mxu0
  %581 = vmatprep.mubr.f32.mxu0 0.0
  %582 = vmatmul.mubr.f32.gmra.mrb[0].mxu0 %v424
  %v583 = vpop.f32.mrb[0].mxu0
  %v584 = vadd.f32 0.0, %v583
  %v585 = vpop.f32.mrb[0].mxu0
  %586 = vmatprep.mubr.f32.mxu0 0.0
  %587 = vmatmul.mubr.f32.gmra.mrb[0].mxu0 %v427
  %v588 = vpop.f32.mrb[0].mxu0
  %v589 = vadd.f32 0.0, %v588
  %v590 = vpop.f32.mrb[0].mxu0
  %591 = vmatprep.mubr.f32.mxu0 0.0
  %592 = vmatmul.mubr.f32.gmra.mrb[0].mxu0 %v430
  %v593 = vpop.f32.mrb[0].mxu0
  %v594 = vadd.f32 0.0, %v593
  %v595 = vpop.f32.mrb[0].mxu0
  %596 = vdwg.mxu0
  %s597 = scalar_lea.vmem %s2, 56
  %v598 = vld [vmem:[%s597] sm:$0xff]
  %v599 = vld [vmem:[%s597 + $0x8] sm:$0xff]
  %v600 = vld [vmem:[%s597 + $0x10] sm:$0xff]
  %v601 = vld [vmem:[%s597 + $0x18] sm:$0xff]
  %v602 = vld [vmem:[%s597 + $0x20] sm:$0xff]
  %v603 = vld [vmem:[%s597 + $0x28] sm:$0xff]
  %v604 = vld [vmem:[%s597 + $0x30] sm:$0xff]
  %vm605 = vcmask 457728
  %v607 = vsel %vm605, %v499, 0
  %v610 = vsel %vm605, %v504, 0
  %v613 = vsel %vm605, %v509, 0
  %v616 = vsel %vm605, %v514, 0
  %v619 = vsel %vm605, %v519, 0
  %v622 = vsel %vm605, %v524, 0
  %v625 = vsel %vm605, %v529, 0
  %v628 = vsel %vm605, %v534, 0
  %v631 = vsel %vm605, %v539, 0
  %v634 = vsel %vm605, %v544, 0
  %v637 = vsel %vm605, %v549, 0
  %v640 = vsel %vm605, %v554, 0
  %v643 = vsel %vm605, %v559, 0
  %v646 = vsel %vm605, %v564, 0
  %v649 = vsel %vm605, %v569, 0
  %v652 = vsel %vm605, %v574, 0
  %v655 = vsel %vm605, %v579, 0
  %v658 = vsel %vm605, %v584, 0
  %v661 = vsel %vm605, %v589, 0
  %v664 = vsel %vm605, %v594, 0
  %666 = vmatprep.subr.mxu0 0.0
  %667 = vmatpush1.msra.mxu0 %v598
  %668 = vmatprep.subr.mxu0 0.0
  %669 = vmatpush1.msra.mxu0 %v599
  %670 = vmatprep.subr.mxu0 0.0
  %671 = vmatpush1.msra.mxu0 %v600
  %672 = vmatprep.subr.mxu0 0.0
  %673 = vmatpush1.msra.mxu0 %v601
  %674 = vmatprep.subr.mxu0 0.0
  %675 = vmatpush1.msra.mxu0 %v602
  %676 = vmatprep.subr.mxu0 0.0
  %677 = vmatpush1.msra.mxu0 %v603
  %678 = vmatprep.subr.mxu0 0.0
  %679 = vmatpush1.msra.mxu0 %v604
  %680 = vmatprep.subr.mxu0 0.0
  %681 = vmatpush1.msra.mxu0 0.0
  %682 = vmatprep.subr.mxu0 0.0
  %683 = vmatpush1.msra.mxu0 0.0
  %684 = vmatprep.subr.mxu0 0.0
  %685 = vmatpush1.msra.mxu0 0.0
  %686 = vmatprep.subr.mxu0 0.0
  %687 = vmatpush1.msra.mxu0 0.0
  %688 = vmatprep.subr.mxu0 0.0
  %689 = vmatpush1.msra.mxu0 0.0
  %690 = vmatprep.subr.mxu0 0.0
  %691 = vmatpush1.msra.mxu0 0.0
  %692 = vmatprep.subr.mxu0 0.0
  %693 = vmatpush1.msra.mxu0 0.0
  %694 = vmatprep.subr.mxu0 0.0
  %695 = vmatpush1.msra.mxu0 0.0
  %696 = vmatprep.subr.mxu0 0.0
  %697 = vmatpush1.msra.mxu0 0.0
  %698 = vmatprep.subr.mxu0 0.0
  %699 = vmatpush1.msra.mxu0 0.0
  %700 = vmatprep.subr.mxu0 0.0
  %701 = vmatpush1.msra.mxu0 0.0
  %702 = vmatprep.subr.mxu0 0.0
  %703 = vmatpush1.msra.mxu0 0.0
  %704 = vmatprep.subr.mxu0 0.0
  %705 = vmatpush1.msra.mxu0 0.0
  %706 = vmatprep.subr.mxu0 0.0
  %707 = vmatpush1.msra.mxu0 0.0
  %708 = vmatprep.subr.mxu0 0.0
  %709 = vmatpush1.msra.mxu0 0.0
  %710 = vmatprep.subr.mxu0 0.0
  %711 = vmatpush1.msra.mxu0 0.0
  %712 = vmatprep.subr.mxu0 0.0
  %713 = vmatpush1.msra.mxu0 0.0
  %714 = vmatprep.subr.mxu0 0.0
  %715 = vmatpush1.msra.mxu0 0.0
  %716 = vmatprep.subr.mxu0 0.0
  %717 = vmatpush1.msra.mxu0 0.0
  %718 = vmatprep.subr.mxu0 0.0
  %719 = vmatpush1.msra.mxu0 0.0
  %720 = vmatprep.subr.mxu0 0.0
  %721 = vmatpush1.msra.mxu0 0.0
  %722 = vmatprep.subr.mxu0 0.0
  %723 = vmatpush1.msra.mxu0 0.0
  %724 = vmatprep.subr.mxu0 0.0
  %725 = vmatpush1.msra.mxu0 0.0
  %726 = vmatprep.subr.mxu0 0.0
  %727 = vmatpush1.msra.mxu0 0.0
  %728 = vmatprep.subr.mxu0 0.0
  %729 = vmatpush1.msra.mxu0 0.0
  %730 = vmatprep.mubr.f32.mxu0 0.0
  %731 = vmatmul.mubr.f32.gmra.mrb[0].mxu0 %v607
  %v732 = vpop.f32.mrb[0].mxu0
  %v733 = vadd.f32 0.0, %v732
  %v734 = vpop.f32.mrb[0].mxu0
  %735 = vmatprep.mubr.f32.mxu0 0.0
  %736 = vmatmul.mubr.f32.gmra.mrb[0].mxu0 %v610
  %v737 = vpop.f32.mrb[0].mxu0
  %v738 = vadd.f32 0.0, %v737
  %v739 = vpop.f32.mrb[0].mxu0
  %740 = vmatprep.mubr.f32.mxu0 0.0
  %741 = vmatmul.mubr.f32.gmra.mrb[0].mxu0 %v613
  %v742 = vpop.f32.mrb[0].mxu0
  %v743 = vadd.f32 0.0, %v742
  %v744 = vpop.f32.mrb[0].mxu0
  %745 = vmatprep.mubr.f32.mxu0 0.0
  %746 = vmatmul.mubr.f32.gmra.mrb[0].mxu0 %v616
  %v747 = vpop.f32.mrb[0].mxu0
  %v748 = vadd.f32 0.0, %v747
  %v749 = vpop.f32.mrb[0].mxu0
  %750 = vmatprep.mubr.f32.mxu0 0.0
  %751 = vmatmul.mubr.f32.gmra.mrb[0].mxu0 %v619
  %v752 = vpop.f32.mrb[0].mxu0
  %v753 = vadd.f32 0.0, %v752
  %v754 = vpop.f32.mrb[0].mxu0
  %755 = vmatprep.mubr.f32.mxu0 0.0
  %756 = vmatmul.mubr.f32.gmra.mrb[0].mxu0 %v622
  %v757 = vpop.f32.mrb[0].mxu0
  %v758 = vadd.f32 0.0, %v757
  %v759 = vpop.f32.mrb[0].mxu0
  %760 = vmatprep.mubr.f32.mxu0 0.0
  %761 = vmatmul.mubr.f32.gmra.mrb[0].mxu0 %v625
  %v762 = vpop.f32.mrb[0].mxu0
  %v763 = vadd.f32 0.0, %v762
  %v764 = vpop.f32.mrb[0].mxu0
  %765 = vmatprep.mubr.f32.mxu0 0.0
  %766 = vmatmul.mubr.f32.gmra.mrb[0].mxu0 %v628
  %v767 = vpop.f32.mrb[0].mxu0
  %v768 = vadd.f32 0.0, %v767
  %v769 = vpop.f32.mrb[0].mxu0
  %770 = vmatprep.mubr.f32.mxu0 0.0
  %771 = vmatmul.mubr.f32.gmra.mrb[0].mxu0 %v631
  %v772 = vpop.f32.mrb[0].mxu0
  %v773 = vadd.f32 0.0, %v772
  %v774 = vpop.f32.mrb[0].mxu0
  %775 = vmatprep.mubr.f32.mxu0 0.0
  %776 = vmatmul.mubr.f32.gmra.mrb[0].mxu0 %v634
  %v777 = vpop.f32.mrb[0].mxu0
  %v778 = vadd.f32 0.0, %v777
  %v779 = vpop.f32.mrb[0].mxu0
  %780 = vmatprep.mubr.f32.mxu0 0.0
  %781 = vmatmul.mubr.f32.gmra.mrb[0].mxu0 %v637
  %v782 = vpop.f32.mrb[0].mxu0
  %v783 = vadd.f32 0.0, %v782
  %v784 = vpop.f32.mrb[0].mxu0
  %785 = vmatprep.mubr.f32.mxu0 0.0
  %786 = vmatmul.mubr.f32.gmra.mrb[0].mxu0 %v640
  %v787 = vpop.f32.mrb[0].mxu0
  %v788 = vadd.f32 0.0, %v787
  %v789 = vpop.f32.mrb[0].mxu0
  %790 = vmatprep.mubr.f32.mxu0 0.0
  %791 = vmatmul.mubr.f32.gmra.mrb[0].mxu0 %v643
  %v792 = vpop.f32.mrb[0].mxu0
  %v793 = vadd.f32 0.0, %v792
  %v794 = vpop.f32.mrb[0].mxu0
  %795 = vmatprep.mubr.f32.mxu0 0.0
  %796 = vmatmul.mubr.f32.gmra.mrb[0].mxu0 %v646
  %v797 = vpop.f32.mrb[0].mxu0
  %v798 = vadd.f32 0.0, %v797
  %v799 = vpop.f32.mrb[0].mxu0
  %800 = vmatprep.mubr.f32.mxu0 0.0
  %801 = vmatmul.mubr.f32.gmra.mrb[0].mxu0 %v649
  %v802 = vpop.f32.mrb[0].mxu0
  %v803 = vadd.f32 0.0, %v802
  %v804 = vpop.f32.mrb[0].mxu0
  %805 = vmatprep.mubr.f32.mxu0 0.0
  %806 = vmatmul.mubr.f32.gmra.mrb[0].mxu0 %v652
  %v807 = vpop.f32.mrb[0].mxu0
  %v808 = vadd.f32 0.0, %v807
  %v809 = vpop.f32.mrb[0].mxu0
  %810 = vmatprep.mubr.f32.mxu0 0.0
  %811 = vmatmul.mubr.f32.gmra.mrb[0].mxu0 %v655
  %v812 = vpop.f32.mrb[0].mxu0
  %v813 = vadd.f32 0.0, %v812
  %v814 = vpop.f32.mrb[0].mxu0
  %815 = vmatprep.mubr.f32.mxu0 0.0
  %816 = vmatmul.mubr.f32.gmra.mrb[0].mxu0 %v658
  %v817 = vpop.f32.mrb[0].mxu0
  %v818 = vadd.f32 0.0, %v817
  %v819 = vpop.f32.mrb[0].mxu0
  %820 = vmatprep.mubr.f32.mxu0 0.0
  %821 = vmatmul.mubr.f32.gmra.mrb[0].mxu0 %v661
  %v822 = vpop.f32.mrb[0].mxu0
  %v823 = vadd.f32 0.0, %v822
  %v824 = vpop.f32.mrb[0].mxu0
  %825 = vmatprep.mubr.f32.mxu0 0.0
  %826 = vmatmul.mubr.f32.gmra.mrb[0].mxu0 %v664
  %v827 = vpop.f32.mrb[0].mxu0
  %v828 = vadd.f32 0.0, %v827
  %v829 = vpop.f32.mrb[0].mxu0
  %830 = vdwg.mxu0
  %v832 = vsel %vm605, %v246, 0
  %v835 = vsel %vm605, %v251, 0
  %v838 = vsel %vm605, %v256, 0
  %v841 = vsel %vm605, %v261, 0
  %v844 = vsel %vm605, %v266, 0
  %v847 = vsel %vm605, %v271, 0
  %v850 = vsel %vm605, %v276, 0
  %v853 = vsel %vm605, %v281, 0
  %v856 = vsel %vm605, %v286, 0
  %v859 = vsel %vm605, %v291, 0
  %v862 = vsel %vm605, %v296, 0
  %v865 = vsel %vm605, %v301, 0
  %v868 = vsel %vm605, %v306, 0
  %v871 = vsel %vm605, %v311, 0
  %v874 = vsel %vm605, %v316, 0
  %v877 = vsel %vm605, %v321, 0
  %v880 = vsel %vm605, %v326, 0
  %v883 = vsel %vm605, %v331, 0
  %v886 = vsel %vm605, %v336, 0
  %v889 = vsel %vm605, %v341, 0
  %891 = vmatprep.subr.mxu0 0.0
  %892 = vmatpush1.msra.mxu0 %v344
  %893 = vmatprep.subr.mxu0 0.0
  %894 = vmatpush1.msra.mxu0 %v345
  %895 = vmatprep.subr.mxu0 0.0
  %896 = vmatpush1.msra.mxu0 %v346
  %897 = vmatprep.subr.mxu0 0.0
  %898 = vmatpush1.msra.mxu0 %v347
  %899 = vmatprep.subr.mxu0 0.0
  %900 = vmatpush1.msra.mxu0 %v348
  %901 = vmatprep.subr.mxu0 0.0
  %902 = vmatpush1.msra.mxu0 %v349
  %903 = vmatprep.subr.mxu0 0.0
  %904 = vmatpush1.msra.mxu0 %v350
  %905 = vmatprep.subr.mxu0 0.0
  %906 = vmatpush1.msra.mxu0 0.0
  %907 = vmatprep.subr.mxu0 0.0
  %908 = vmatpush1.msra.mxu0 0.0
  %909 = vmatprep.subr.mxu0 0.0
  %910 = vmatpush1.msra.mxu0 0.0
  %911 = vmatprep.subr.mxu0 0.0
  %912 = vmatpush1.msra.mxu0 0.0
  %913 = vmatprep.subr.mxu0 0.0
  %914 = vmatpush1.msra.mxu0 0.0
  %915 = vmatprep.subr.mxu0 0.0
  %916 = vmatpush1.msra.mxu0 0.0
  %917 = vmatprep.subr.mxu0 0.0
  %918 = vmatpush1.msra.mxu0 0.0
  %919 = vmatprep.subr.mxu0 0.0
  %920 = vmatpush1.msra.mxu0 0.0
  %921 = vmatprep.subr.mxu0 0.0
  %922 = vmatpush1.msra.mxu0 0.0
  %923 = vmatprep.subr.mxu0 0.0
  %924 = vmatpush1.msra.mxu0 0.0
  %925 = vmatprep.subr.mxu0 0.0
  %926 = vmatpush1.msra.mxu0 0.0
  %927 = vmatprep.subr.mxu0 0.0
  %928 = vmatpush1.msra.mxu0 0.0
  %929 = vmatprep.subr.mxu0 0.0
  %930 = vmatpush1.msra.mxu0 0.0
  %931 = vmatprep.subr.mxu0 0.0
  %932 = vmatpush1.msra.mxu0 0.0
  %933 = vmatprep.subr.mxu0 0.0
  %934 = vmatpush1.msra.mxu0 0.0
  %935 = vmatprep.subr.mxu0 0.0
  %936 = vmatpush1.msra.mxu0 0.0
  %937 = vmatprep.subr.mxu0 0.0
  %938 = vmatpush1.msra.mxu0 0.0
  %939 = vmatprep.subr.mxu0 0.0
  %940 = vmatpush1.msra.mxu0 0.0
  %941 = vmatprep.subr.mxu0 0.0
  %942 = vmatpush1.msra.mxu0 0.0
  %943 = vmatprep.subr.mxu0 0.0
  %944 = vmatpush1.msra.mxu0 0.0
  %945 = vmatprep.subr.mxu0 0.0
  %946 = vmatpush1.msra.mxu0 0.0
  %947 = vmatprep.subr.mxu0 0.0
  %948 = vmatpush1.msra.mxu0 0.0
  %949 = vmatprep.subr.mxu0 0.0
  %950 = vmatpush1.msra.mxu0 0.0
  %951 = vmatprep.subr.mxu0 0.0
  %952 = vmatpush1.msra.mxu0 0.0
  %953 = vmatprep.subr.mxu0 0.0
  %954 = vmatpush1.msra.mxu0 0.0
  %955 = vmatprep.mubr.f32.mxu0 0.0
  %956 = vmatmul.mubr.f32.gmra.mrb[0].mxu0 %v832
  %v957 = vpop.f32.mrb[0].mxu0
  %v958 = vadd.f32 %v733, %v957
  %v959 = vpop.f32.mrb[0].mxu0
  %960 = vmatprep.mubr.f32.mxu0 0.0
  %961 = vmatmul.mubr.f32.gmra.mrb[0].mxu0 %v835
  %v962 = vpop.f32.mrb[0].mxu0
  %v963 = vadd.f32 %v738, %v962
  %v964 = vpop.f32.mrb[0].mxu0
  %965 = vmatprep.mubr.f32.mxu0 0.0
  %966 = vmatmul.mubr.f32.gmra.mrb[0].mxu0 %v838
  %v967 = vpop.f32.mrb[0].mxu0
  %v968 = vadd.f32 %v743, %v967
  %v969 = vpop.f32.mrb[0].mxu0
  %970 = vmatprep.mubr.f32.mxu0 0.0
  %971 = vmatmul.mubr.f32.gmra.mrb[0].mxu0 %v841
  %v972 = vpop.f32.mrb[0].mxu0
  %v973 = vadd.f32 %v748, %v972
  %v974 = vpop.f32.mrb[0].mxu0
  %975 = vmatprep.mubr.f32.mxu0 0.0
  %976 = vmatmul.mubr.f32.gmra.mrb[0].mxu0 %v844
  %v977 = vpop.f32.mrb[0].mxu0
  %v978 = vadd.f32 %v753, %v977
  %v979 = vpop.f32.mrb[0].mxu0
  %980 = vmatprep.mubr.f32.mxu0 0.0
  %981 = vmatmul.mubr.f32.gmra.mrb[0].mxu0 %v847
  %v982 = vpop.f32.mrb[0].mxu0
  %v983 = vadd.f32 %v758, %v982
  %v984 = vpop.f32.mrb[0].mxu0
  %985 = vmatprep.mubr.f32.mxu0 0.0
  %986 = vmatmul.mubr.f32.gmra.mrb[0].mxu0 %v850
  %v987 = vpop.f32.mrb[0].mxu0
  %v988 = vadd.f32 %v763, %v987
  %v989 = vpop.f32.mrb[0].mxu0
  %990 = vmatprep.mubr.f32.mxu0 0.0
  %991 = vmatmul.mubr.f32.gmra.mrb[0].mxu0 %v853
  %v992 = vpop.f32.mrb[0].mxu0
  %v993 = vadd.f32 %v768, %v992
  %v994 = vpop.f32.mrb[0].mxu0
  %995 = vmatprep.mubr.f32.mxu0 0.0
  %996 = vmatmul.mubr.f32.gmra.mrb[0].mxu0 %v856
  %v997 = vpop.f32.mrb[0].mxu0
  %v998 = vadd.f32 %v773, %v997
  %v999 = vpop.f32.mrb[0].mxu0
  %1000 = vmatprep.mubr.f32.mxu0 0.0
  %1001 = vmatmul.mubr.f32.gmra.mrb[0].mxu0 %v859
  %v1002 = vpop.f32.mrb[0].mxu0
  %v1003 = vadd.f32 %v778, %v1002
  %v1004 = vpop.f32.mrb[0].mxu0
  %1005 = vmatprep.mubr.f32.mxu0 0.0
  %1006 = vmatmul.mubr.f32.gmra.mrb[0].mxu0 %v862
  %v1007 = vpop.f32.mrb[0].mxu0
  %v1008 = vadd.f32 %v783, %v1007
  %v1009 = vpop.f32.mrb[0].mxu0
  %1010 = vmatprep.mubr.f32.mxu0 0.0
  %1011 = vmatmul.mubr.f32.gmra.mrb[0].mxu0 %v865
  %v1012 = vpop.f32.mrb[0].mxu0
  %v1013 = vadd.f32 %v788, %v1012
  %v1014 = vpop.f32.mrb[0].mxu0
  %1015 = vmatprep.mubr.f32.mxu0 0.0
  %1016 = vmatmul.mubr.f32.gmra.mrb[0].mxu0 %v868
  %v1017 = vpop.f32.mrb[0].mxu0
  %v1018 = vadd.f32 %v793, %v1017
  %v1019 = vpop.f32.mrb[0].mxu0
  %1020 = vmatprep.mubr.f32.mxu0 0.0
  %1021 = vmatmul.mubr.f32.gmra.mrb[0].mxu0 %v871
  %v1022 = vpop.f32.mrb[0].mxu0
  %v1023 = vadd.f32 %v798, %v1022
  %v1024 = vpop.f32.mrb[0].mxu0
  %1025 = vmatprep.mubr.f32.mxu0 0.0
  %1026 = vmatmul.mubr.f32.gmra.mrb[0].mxu0 %v874
  %v1027 = vpop.f32.mrb[0].mxu0
  %v1028 = vadd.f32 %v803, %v1027
  %v1029 = vpop.f32.mrb[0].mxu0
  %1030 = vmatprep.mubr.f32.mxu0 0.0
  %1031 = vmatmul.mubr.f32.gmra.mrb[0].mxu0 %v877
  %v1032 = vpop.f32.mrb[0].mxu0
  %v1033 = vadd.f32 %v808, %v1032
  %v1034 = vpop.f32.mrb[0].mxu0
  %1035 = vmatprep.mubr.f32.mxu0 0.0
  %1036 = vmatmul.mubr.f32.gmra.mrb[0].mxu0 %v880
  %v1037 = vpop.f32.mrb[0].mxu0
  %v1038 = vadd.f32 %v813, %v1037
  %v1039 = vpop.f32.mrb[0].mxu0
  %1040 = vmatprep.mubr.f32.mxu0 0.0
  %1041 = vmatmul.mubr.f32.gmra.mrb[0].mxu0 %v883
  %v1042 = vpop.f32.mrb[0].mxu0
  %v1043 = vadd.f32 %v818, %v1042
  %v1044 = vpop.f32.mrb[0].mxu0
  %1045 = vmatprep.mubr.f32.mxu0 0.0
  %1046 = vmatmul.mubr.f32.gmra.mrb[0].mxu0 %v886
  %v1047 = vpop.f32.mrb[0].mxu0
  %v1048 = vadd.f32 %v823, %v1047
  %v1049 = vpop.f32.mrb[0].mxu0
  %1050 = vmatprep.mubr.f32.mxu0 0.0
  %1051 = vmatmul.mubr.f32.gmra.mrb[0].mxu0 %v889
  %v1052 = vpop.f32.mrb[0].mxu0
  %v1053 = vadd.f32 %v828, %v1052
  %v1054 = vpop.f32.mrb[0].mxu0
  %1055 = vdwg.mxu0
  %s1056 = scalar_lea.vmem %s1, 320
  %v1057 = vld [vmem:[%s1056] sm:$0xff]
  %v1058 = vld [vmem:[%s1056 + $0x8] sm:$0xff]
  %v1059 = vld [vmem:[%s1056 + $0x10] sm:$0xff]
  %v1060 = vld [vmem:[%s1056 + $0x18] sm:$0xff]
  %v1061 = vld [vmem:[%s1056 + $0x20] sm:$0xff]
  %v1062 = vld [vmem:[%s1056 + $0x28] sm:$0xff]
  %v1063 = vld [vmem:[%s1056 + $0x30] sm:$0xff]
  %v1064 = vld [vmem:[%s1056 + $0x38] sm:$0xff]
  %v1065 = vld [vmem:[%s1056 + $0x40] sm:$0xff]
  %v1066 = vld [vmem:[%s1056 + $0x48] sm:$0xff]
  %v1067 = vld [vmem:[%s1056 + $0x50] sm:$0xff]
  %v1068 = vld [vmem:[%s1056 + $0x58] sm:$0xff]
  %v1069 = vld [vmem:[%s1056 + $0x60] sm:$0xff]
  %v1070 = vld [vmem:[%s1056 + $0x68] sm:$0xff]
  %v1071 = vld [vmem:[%s1056 + $0x70] sm:$0xff]
  %v1072 = vld [vmem:[%s1056 + $0x78] sm:$0xff]
  %v1073 = vld [vmem:[%s1056 + $0x80] sm:$0xff]
  %v1074 = vld [vmem:[%s1056 + $0x88] sm:$0xff]
  %v1075 = vld [vmem:[%s1056 + $0x90] sm:$0xff]
  %v1076 = vld [vmem:[%s1056 + $0x98] sm:$0xff]
  %v1078 = vsel %vm90, %v1057, 0
  %v1081 = vsel %vm90, %v1058, 0
  %v1084 = vsel %vm90, %v1059, 0
  %v1087 = vsel %vm90, %v1060, 0
  %v1090 = vsel %vm90, %v1061, 0
  %v1093 = vsel %vm90, %v1062, 0
  %v1096 = vsel %vm90, %v1063, 0
  %v1099 = vsel %vm90, %v1064, 0
  %v1102 = vsel %vm90, %v1065, 0
  %v1105 = vsel %vm90, %v1066, 0
  %v1108 = vsel %vm90, %v1067, 0
  %v1111 = vsel %vm90, %v1068, 0
  %v1114 = vsel %vm90, %v1069, 0
  %v1117 = vsel %vm90, %v1070, 0
  %v1120 = vsel %vm90, %v1071, 0
  %v1123 = vsel %vm90, %v1072, 0
  %v1126 = vsel %vm90, %v1073, 0
  %v1129 = vsel %vm90, %v1074, 0
  %v1132 = vsel %vm90, %v1075, 0
  %v1135 = vsel %vm90, %v1076, 0
  %1137 = vmatprep.subr.mxu0 0.0
  %1138 = vmatpush1.msra.mxu0 %v91
  %1139 = vmatprep.subr.mxu0 0.0
  %1140 = vmatpush1.msra.mxu0 %v92
  %1141 = vmatprep.subr.mxu0 0.0
  %1142 = vmatpush1.msra.mxu0 %v93
  %1143 = vmatprep.subr.mxu0 0.0
  %1144 = vmatpush1.msra.mxu0 %v177
  %1145 = vmatprep.subr.mxu0 0.0
  %1146 = vmatpush1.msra.mxu0 0.0
  %1147 = vmatprep.subr.mxu0 0.0
  %1148 = vmatpush1.msra.mxu0 0.0
  %1149 = vmatprep.subr.mxu0 0.0
  %1150 = vmatpush1.msra.mxu0 0.0
  %1151 = vmatprep.subr.mxu0 0.0
  %1152 = vmatpush1.msra.mxu0 0.0
  %1153 = vmatprep.subr.mxu0 0.0
  %1154 = vmatpush1.msra.mxu0 0.0
  %1155 = vmatprep.subr.mxu0 0.0
  %1156 = vmatpush1.msra.mxu0 0.0
  %1157 = vmatprep.subr.mxu0 0.0
  %1158 = vmatpush1.msra.mxu0 0.0
  %1159 = vmatprep.subr.mxu0 0.0
  %1160 = vmatpush1.msra.mxu0 0.0
  %1161 = vmatprep.subr.mxu0 0.0
  %1162 = vmatpush1.msra.mxu0 0.0
  %1163 = vmatprep.subr.mxu0 0.0
  %1164 = vmatpush1.msra.mxu0 0.0
  %1165 = vmatprep.subr.mxu0 0.0
  %1166 = vmatpush1.msra.mxu0 0.0
  %1167 = vmatprep.subr.mxu0 0.0
  %1168 = vmatpush1.msra.mxu0 0.0
  %1169 = vmatprep.subr.mxu0 0.0
  %1170 = vmatpush1.msra.mxu0 0.0
  %1171 = vmatprep.subr.mxu0 0.0
  %1172 = vmatpush1.msra.mxu0 0.0
  %1173 = vmatprep.subr.mxu0 0.0
  %1174 = vmatpush1.msra.mxu0 0.0
  %1175 = vmatprep.subr.mxu0 0.0
  %1176 = vmatpush1.msra.mxu0 0.0
  %1177 = vmatprep.subr.mxu0 0.0
  %1178 = vmatpush1.msra.mxu0 0.0
  %1179 = vmatprep.subr.mxu0 0.0
  %1180 = vmatpush1.msra.mxu0 0.0
  %1181 = vmatprep.subr.mxu0 0.0
  %1182 = vmatpush1.msra.mxu0 0.0
  %1183 = vmatprep.subr.mxu0 0.0
  %1184 = vmatpush1.msra.mxu0 0.0
  %1185 = vmatprep.subr.mxu0 0.0
  %1186 = vmatpush1.msra.mxu0 0.0
  %1187 = vmatprep.subr.mxu0 0.0
  %1188 = vmatpush1.msra.mxu0 0.0
  %1189 = vmatprep.subr.mxu0 0.0
  %1190 = vmatpush1.msra.mxu0 0.0
  %1191 = vmatprep.subr.mxu0 0.0
  %1192 = vmatpush1.msra.mxu0 0.0
  %1193 = vmatprep.subr.mxu0 0.0
  %1194 = vmatpush1.msra.mxu0 0.0
  %1195 = vmatprep.subr.mxu0 0.0
  %1196 = vmatpush1.msra.mxu0 0.0
  %1197 = vmatprep.subr.mxu0 0.0
  %1198 = vmatpush1.msra.mxu0 0.0
  %1199 = vmatprep.subr.mxu0 0.0
  %1200 = vmatpush1.msra.mxu0 0.0
  %1201 = vmatprep.mubr.f32.mxu0 0.0
  %1202 = vmatmul.mubr.f32.gmra.mrb[0].mxu0 %v1078
  %v1203 = vpop.f32.mrb[0].mxu0
  %v1204 = vadd.f32 0.0, %v1203
  %v1205 = vpop.f32.mrb[0].mxu0
  %1206 = vmatprep.mubr.f32.mxu0 0.0
  %1207 = vmatmul.mubr.f32.gmra.mrb[0].mxu0 %v1081
  %v1208 = vpop.f32.mrb[0].mxu0
  %v1209 = vadd.f32 0.0, %v1208
  %v1210 = vpop.f32.mrb[0].mxu0
  %1211 = vmatprep.mubr.f32.mxu0 0.0
  %1212 = vmatmul.mubr.f32.gmra.mrb[0].mxu0 %v1084
  %v1213 = vpop.f32.mrb[0].mxu0
  %v1214 = vadd.f32 0.0, %v1213
  %v1215 = vpop.f32.mrb[0].mxu0
  %1216 = vmatprep.mubr.f32.mxu0 0.0
  %1217 = vmatmul.mubr.f32.gmra.mrb[0].mxu0 %v1087
  %v1218 = vpop.f32.mrb[0].mxu0
  %v1219 = vadd.f32 0.0, %v1218
  %v1220 = vpop.f32.mrb[0].mxu0
  %1221 = vmatprep.mubr.f32.mxu0 0.0
  %1222 = vmatmul.mubr.f32.gmra.mrb[0].mxu0 %v1090
  %v1223 = vpop.f32.mrb[0].mxu0
  %v1224 = vadd.f32 0.0, %v1223
  %v1225 = vpop.f32.mrb[0].mxu0
  %1226 = vmatprep.mubr.f32.mxu0 0.0
  %1227 = vmatmul.mubr.f32.gmra.mrb[0].mxu0 %v1093
  %v1228 = vpop.f32.mrb[0].mxu0
  %v1229 = vadd.f32 0.0, %v1228
  %v1230 = vpop.f32.mrb[0].mxu0
  %1231 = vmatprep.mubr.f32.mxu0 0.0
  %1232 = vmatmul.mubr.f32.gmra.mrb[0].mxu0 %v1096
  %v1233 = vpop.f32.mrb[0].mxu0
  %v1234 = vadd.f32 0.0, %v1233
  %v1235 = vpop.f32.mrb[0].mxu0
  %1236 = vmatprep.mubr.f32.mxu0 0.0
  %1237 = vmatmul.mubr.f32.gmra.mrb[0].mxu0 %v1099
  %v1238 = vpop.f32.mrb[0].mxu0
  %v1239 = vadd.f32 0.0, %v1238
  %v1240 = vpop.f32.mrb[0].mxu0
  %1241 = vmatprep.mubr.f32.mxu0 0.0
  %1242 = vmatmul.mubr.f32.gmra.mrb[0].mxu0 %v1102
  %v1243 = vpop.f32.mrb[0].mxu0
  %v1244 = vadd.f32 0.0, %v1243
  %v1245 = vpop.f32.mrb[0].mxu0
  %1246 = vmatprep.mubr.f32.mxu0 0.0
  %1247 = vmatmul.mubr.f32.gmra.mrb[0].mxu0 %v1105
  %v1248 = vpop.f32.mrb[0].mxu0
  %v1249 = vadd.f32 0.0, %v1248
  %v1250 = vpop.f32.mrb[0].mxu0
  %1251 = vmatprep.mubr.f32.mxu0 0.0
  %1252 = vmatmul.mubr.f32.gmra.mrb[0].mxu0 %v1108
  %v1253 = vpop.f32.mrb[0].mxu0
  %v1254 = vadd.f32 0.0, %v1253
  %v1255 = vpop.f32.mrb[0].mxu0
  %1256 = vmatprep.mubr.f32.mxu0 0.0
  %1257 = vmatmul.mubr.f32.gmra.mrb[0].mxu0 %v1111
  %v1258 = vpop.f32.mrb[0].mxu0
  %v1259 = vadd.f32 0.0, %v1258
  %v1260 = vpop.f32.mrb[0].mxu0
  %1261 = vmatprep.mubr.f32.mxu0 0.0
  %1262 = vmatmul.mubr.f32.gmra.mrb[0].mxu0 %v1114
  %v1263 = vpop.f32.mrb[0].mxu0
  %v1264 = vadd.f32 0.0, %v1263
  %v1265 = vpop.f32.mrb[0].mxu0
  %1266 = vmatprep.mubr.f32.mxu0 0.0
  %1267 = vmatmul.mubr.f32.gmra.mrb[0].mxu0 %v1117
  %v1268 = vpop.f32.mrb[0].mxu0
  %v1269 = vadd.f32 0.0, %v1268
  %v1270 = vpop.f32.mrb[0].mxu0
  %1271 = vmatprep.mubr.f32.mxu0 0.0
  %1272 = vmatmul.mubr.f32.gmra.mrb[0].mxu0 %v1120
  %v1273 = vpop.f32.mrb[0].mxu0
  %v1274 = vadd.f32 0.0, %v1273
  %v1275 = vpop.f32.mrb[0].mxu0
  %1276 = vmatprep.mubr.f32.mxu0 0.0
  %1277 = vmatmul.mubr.f32.gmra.mrb[0].mxu0 %v1123
  %v1278 = vpop.f32.mrb[0].mxu0
  %v1279 = vadd.f32 0.0, %v1278
  %v1280 = vpop.f32.mrb[0].mxu0
  %1281 = vmatprep.mubr.f32.mxu0 0.0
  %1282 = vmatmul.mubr.f32.gmra.mrb[0].mxu0 %v1126
  %v1283 = vpop.f32.mrb[0].mxu0
  %v1284 = vadd.f32 0.0, %v1283
  %v1285 = vpop.f32.mrb[0].mxu0
  %1286 = vmatprep.mubr.f32.mxu0 0.0
  %1287 = vmatmul.mubr.f32.gmra.mrb[0].mxu0 %v1129
  %v1288 = vpop.f32.mrb[0].mxu0
  %v1289 = vadd.f32 0.0, %v1288
  %v1290 = vpop.f32.mrb[0].mxu0
  %1291 = vmatprep.mubr.f32.mxu0 0.0
  %1292 = vmatmul.mubr.f32.gmra.mrb[0].mxu0 %v1132
  %v1293 = vpop.f32.mrb[0].mxu0
  %v1294 = vadd.f32 0.0, %v1293
  %v1295 = vpop.f32.mrb[0].mxu0
  %1296 = vmatprep.mubr.f32.mxu0 0.0
  %1297 = vmatmul.mubr.f32.gmra.mrb[0].mxu0 %v1135
  %v1298 = vpop.f32.mrb[0].mxu0
  %v1299 = vadd.f32 0.0, %v1298
  %v1300 = vpop.f32.mrb[0].mxu0
  %1301 = vdwg.mxu0
  %s1302 = scalar_lea.vmem %s2, 112
  %v1303 = vld [vmem:[%s1302] sm:$0xff]
  %v1304 = vld [vmem:[%s1302 + $0x8] sm:$0xff]
  %v1305 = vld [vmem:[%s1302 + $0x10] sm:$0xff]
  %v1306 = vld [vmem:[%s1302 + $0x18] sm:$0xff]
  %v1307 = vld [vmem:[%s1302 + $0x20] sm:$0xff]
  %v1308 = vld [vmem:[%s1302 + $0x28] sm:$0xff]
  %v1309 = vld [vmem:[%s1302 + $0x30] sm:$0xff]
  %v1311 = vsel %vm605, %v1204, 0
  %v1314 = vsel %vm605, %v1209, 0
  %v1317 = vsel %vm605, %v1214, 0
  %v1320 = vsel %vm605, %v1219, 0
  %v1323 = vsel %vm605, %v1224, 0
  %v1326 = vsel %vm605, %v1229, 0
  %v1329 = vsel %vm605, %v1234, 0
  %v1332 = vsel %vm605, %v1239, 0
  %v1335 = vsel %vm605, %v1244, 0
  %v1338 = vsel %vm605, %v1249, 0
  %v1341 = vsel %vm605, %v1254, 0
  %v1344 = vsel %vm605, %v1259, 0
  %v1347 = vsel %vm605, %v1264, 0
  %v1350 = vsel %vm605, %v1269, 0
  %v1353 = vsel %vm605, %v1274, 0
  %v1356 = vsel %vm605, %v1279, 0
  %v1359 = vsel %vm605, %v1284, 0
  %v1362 = vsel %vm605, %v1289, 0
  %v1365 = vsel %vm605, %v1294, 0
  %v1368 = vsel %vm605, %v1299, 0
  %1370 = vmatprep.subr.mxu0 0.0
  %1371 = vmatpush1.msra.mxu0 %v1303
  %1372 = vmatprep.subr.mxu0 0.0
  %1373 = vmatpush1.msra.mxu0 %v1304
  %1374 = vmatprep.subr.mxu0 0.0
  %1375 = vmatpush1.msra.mxu0 %v1305
  %1376 = vmatprep.subr.mxu0 0.0
  %1377 = vmatpush1.msra.mxu0 %v1306
  %1378 = vmatprep.subr.mxu0 0.0
  %1379 = vmatpush1.msra.mxu0 %v1307
  %1380 = vmatprep.subr.mxu0 0.0
  %1381 = vmatpush1.msra.mxu0 %v1308
  %1382 = vmatprep.subr.mxu0 0.0
  %1383 = vmatpush1.msra.mxu0 %v1309
  %1384 = vmatprep.subr.mxu0 0.0
  %1385 = vmatpush1.msra.mxu0 0.0
  %1386 = vmatprep.subr.mxu0 0.0
  %1387 = vmatpush1.msra.mxu0 0.0
  %1388 = vmatprep.subr.mxu0 0.0
  %1389 = vmatpush1.msra.mxu0 0.0
  %1390 = vmatprep.subr.mxu0 0.0
  %1391 = vmatpush1.msra.mxu0 0.0
  %1392 = vmatprep.subr.mxu0 0.0
  %1393 = vmatpush1.msra.mxu0 0.0
  %1394 = vmatprep.subr.mxu0 0.0
  %1395 = vmatpush1.msra.mxu0 0.0
  %1396 = vmatprep.subr.mxu0 0.0
  %1397 = vmatpush1.msra.mxu0 0.0
  %1398 = vmatprep.subr.mxu0 0.0
  %1399 = vmatpush1.msra.mxu0 0.0
  %1400 = vmatprep.subr.mxu0 0.0
  %1401 = vmatpush1.msra.mxu0 0.0
  %1402 = vmatprep.subr.mxu0 0.0
  %1403 = vmatpush1.msra.mxu0 0.0
  %1404 = vmatprep.subr.mxu0 0.0
  %1405 = vmatpush1.msra.mxu0 0.0
  %1406 = vmatprep.subr.mxu0 0.0
  %1407 = vmatpush1.msra.mxu0 0.0
  %1408 = vmatprep.subr.mxu0 0.0
  %1409 = vmatpush1.msra.mxu0 0.0
  %1410 = vmatprep.subr.mxu0 0.0
  %1411 = vmatpush1.msra.mxu0 0.0
  %1412 = vmatprep.subr.mxu0 0.0
  %1413 = vmatpush1.msra.mxu0 0.0
  %1414 = vmatprep.subr.mxu0 0.0
  %1415 = vmatpush1.msra.mxu0 0.0
  %1416 = vmatprep.subr.mxu0 0.0
  %1417 = vmatpush1.msra.mxu0 0.0
  %1418 = vmatprep.subr.mxu0 0.0
  %1419 = vmatpush1.msra.mxu0 0.0
  %1420 = vmatprep.subr.mxu0 0.0
  %1421 = vmatpush1.msra.mxu0 0.0
  %1422 = vmatprep.subr.mxu0 0.0
  %1423 = vmatpush1.msra.mxu0 0.0
  %1424 = vmatprep.subr.mxu0 0.0
  %1425 = vmatpush1.msra.mxu0 0.0
  %1426 = vmatprep.subr.mxu0 0.0
  %1427 = vmatpush1.msra.mxu0 0.0
  %1428 = vmatprep.subr.mxu0 0.0
  %1429 = vmatpush1.msra.mxu0 0.0
  %1430 = vmatprep.subr.mxu0 0.0
  %1431 = vmatpush1.msra.mxu0 0.0
  %1432 = vmatprep.subr.mxu0 0.0
  %1433 = vmatpush1.msra.mxu0 0.0
  %1434 = vmatprep.mubr.f32.mxu0 0.0
  %1435 = vmatmul.mubr.f32.gmra.mrb[0].mxu0 %v1311
  %v1436 = vpop.f32.mrb[0].mxu0
  %v1437 = vadd.f32 0.0, %v1436
  %v1438 = vpop.f32.mrb[0].mxu0
  %1439 = vmatprep.mubr.f32.mxu0 0.0
  %1440 = vmatmul.mubr.f32.gmra.mrb[0].mxu0 %v1314
  %v1441 = vpop.f32.mrb[0].mxu0
  %v1442 = vadd.f32 0.0, %v1441
  %v1443 = vpop.f32.mrb[0].mxu0
  %1444 = vmatprep.mubr.f32.mxu0 0.0
  %1445 = vmatmul.mubr.f32.gmra.mrb[0].mxu0 %v1317
  %v1446 = vpop.f32.mrb[0].mxu0
  %v1447 = vadd.f32 0.0, %v1446
  %v1448 = vpop.f32.mrb[0].mxu0
  %1449 = vmatprep.mubr.f32.mxu0 0.0
  %1450 = vmatmul.mubr.f32.gmra.mrb[0].mxu0 %v1320
  %v1451 = vpop.f32.mrb[0].mxu0
  %v1452 = vadd.f32 0.0, %v1451
  %v1453 = vpop.f32.mrb[0].mxu0
  %1454 = vmatprep.mubr.f32.mxu0 0.0
  %1455 = vmatmul.mubr.f32.gmra.mrb[0].mxu0 %v1323
  %v1456 = vpop.f32.mrb[0].mxu0
  %v1457 = vadd.f32 0.0, %v1456
  %v1458 = vpop.f32.mrb[0].mxu0
  %1459 = vmatprep.mubr.f32.mxu0 0.0
  %1460 = vmatmul.mubr.f32.gmra.mrb[0].mxu0 %v1326
  %v1461 = vpop.f32.mrb[0].mxu0
  %v1462 = vadd.f32 0.0, %v1461
  %v1463 = vpop.f32.mrb[0].mxu0
  %1464 = vmatprep.mubr.f32.mxu0 0.0
  %1465 = vmatmul.mubr.f32.gmra.mrb[0].mxu0 %v1329
  %v1466 = vpop.f32.mrb[0].mxu0
  %v1467 = vadd.f32 0.0, %v1466
  %v1468 = vpop.f32.mrb[0].mxu0
  %1469 = vmatprep.mubr.f32.mxu0 0.0
  %1470 = vmatmul.mubr.f32.gmra.mrb[0].mxu0 %v1332
  %v1471 = vpop.f32.mrb[0].mxu0
  %v1472 = vadd.f32 0.0, %v1471
  %v1473 = vpop.f32.mrb[0].mxu0
  %1474 = vmatprep.mubr.f32.mxu0 0.0
  %1475 = vmatmul.mubr.f32.gmra.mrb[0].mxu0 %v1335
  %v1476 = vpop.f32.mrb[0].mxu0
  %v1477 = vadd.f32 0.0, %v1476
  %v1478 = vpop.f32.mrb[0].mxu0
  %1479 = vmatprep.mubr.f32.mxu0 0.0
  %1480 = vmatmul.mubr.f32.gmra.mrb[0].mxu0 %v1338
  %v1481 = vpop.f32.mrb[0].mxu0
  %v1482 = vadd.f32 0.0, %v1481
  %v1483 = vpop.f32.mrb[0].mxu0
  %1484 = vmatprep.mubr.f32.mxu0 0.0
  %1485 = vmatmul.mubr.f32.gmra.mrb[0].mxu0 %v1341
  %v1486 = vpop.f32.mrb[0].mxu0
  %v1487 = vadd.f32 0.0, %v1486
  %v1488 = vpop.f32.mrb[0].mxu0
  %1489 = vmatprep.mubr.f32.mxu0 0.0
  %1490 = vmatmul.mubr.f32.gmra.mrb[0].mxu0 %v1344
  %v1491 = vpop.f32.mrb[0].mxu0
  %v1492 = vadd.f32 0.0, %v1491
  %v1493 = vpop.f32.mrb[0].mxu0
  %1494 = vmatprep.mubr.f32.mxu0 0.0
  %1495 = vmatmul.mubr.f32.gmra.mrb[0].mxu0 %v1347
  %v1496 = vpop.f32.mrb[0].mxu0
  %v1497 = vadd.f32 0.0, %v1496
  %v1498 = vpop.f32.mrb[0].mxu0
  %1499 = vmatprep.mubr.f32.mxu0 0.0
  %1500 = vmatmul.mubr.f32.gmra.mrb[0].mxu0 %v1350
  %v1501 = vpop.f32.mrb[0].mxu0
  %v1502 = vadd.f32 0.0, %v1501
  %v1503 = vpop.f32.mrb[0].mxu0
  %1504 = vmatprep.mubr.f32.mxu0 0.0
  %1505 = vmatmul.mubr.f32.gmra.mrb[0].mxu0 %v1353
  %v1506 = vpop.f32.mrb[0].mxu0
  %v1507 = vadd.f32 0.0, %v1506
  %v1508 = vpop.f32.mrb[0].mxu0
  %1509 = vmatprep.mubr.f32.mxu0 0.0
  %1510 = vmatmul.mubr.f32.gmra.mrb[0].mxu0 %v1356
  %v1511 = vpop.f32.mrb[0].mxu0
  %v1512 = vadd.f32 0.0, %v1511
  %v1513 = vpop.f32.mrb[0].mxu0
  %1514 = vmatprep.mubr.f32.mxu0 0.0
  %1515 = vmatmul.mubr.f32.gmra.mrb[0].mxu0 %v1359
  %v1516 = vpop.f32.mrb[0].mxu0
  %v1517 = vadd.f32 0.0, %v1516
  %v1518 = vpop.f32.mrb[0].mxu0
  %1519 = vmatprep.mubr.f32.mxu0 0.0
  %1520 = vmatmul.mubr.f32.gmra.mrb[0].mxu0 %v1362
  %v1521 = vpop.f32.mrb[0].mxu0
  %v1522 = vadd.f32 0.0, %v1521
  %v1523 = vpop.f32.mrb[0].mxu0
  %1524 = vmatprep.mubr.f32.mxu0 0.0
  %1525 = vmatmul.mubr.f32.gmra.mrb[0].mxu0 %v1365
  %v1526 = vpop.f32.mrb[0].mxu0
  %v1527 = vadd.f32 0.0, %v1526
  %v1528 = vpop.f32.mrb[0].mxu0
  %1529 = vmatprep.mubr.f32.mxu0 0.0
  %1530 = vmatmul.mubr.f32.gmra.mrb[0].mxu0 %v1368
  %v1531 = vpop.f32.mrb[0].mxu0
  %v1532 = vadd.f32 0.0, %v1531
  %v1533 = vpop.f32.mrb[0].mxu0
  %1534 = vdwg.mxu0
  %v1535 = vadd.f32 %v958, %v1437
  %v1536 = vadd.f32 %v963, %v1442
  %v1537 = vadd.f32 %v968, %v1447
  %v1538 = vadd.f32 %v973, %v1452
  %v1539 = vadd.f32 %v978, %v1457
  %v1540 = vadd.f32 %v983, %v1462
  %v1541 = vadd.f32 %v988, %v1467
  %v1542 = vadd.f32 %v993, %v1472
  %v1543 = vadd.f32 %v998, %v1477
  %v1544 = vadd.f32 %v1003, %v1482
  %v1545 = vadd.f32 %v1008, %v1487
  %v1546 = vadd.f32 %v1013, %v1492
  %v1547 = vadd.f32 %v1018, %v1497
  %v1548 = vadd.f32 %v1023, %v1502
  %v1549 = vadd.f32 %v1028, %v1507
  %v1550 = vadd.f32 %v1033, %v1512
  %v1551 = vadd.f32 %v1038, %v1517
  %v1552 = vadd.f32 %v1043, %v1522
  %v1553 = vadd.f32 %v1048, %v1527
  %v1554 = vadd.f32 %v1053, %v1532
  %v1555 = vld [vmem:[%s3] sm:$0xff]
  %v1556 = vld [vmem:[%s3 + $0x8] sm:$0xff]
  %v1557 = vld [vmem:[%s3 + $0x10] sm:$0xff]
  %v1558 = vld [vmem:[%s3 + $0x18] sm:$0xff]
  %v1559 = vld [vmem:[%s3 + $0x20] sm:$0xff]
  %v1560 = vld [vmem:[%s3 + $0x28] sm:$0xff]
  %v1561 = vld [vmem:[%s3 + $0x30] sm:$0xff]
  %v1562 = vld [vmem:[%s3 + $0x38] sm:$0xff]
  %v1563 = vld [vmem:[%s3 + $0x40] sm:$0xff]
  %v1564 = vld [vmem:[%s3 + $0x48] sm:$0xff]
  %v1565 = vld [vmem:[%s3 + $0x50] sm:$0xff]
  %v1566 = vld [vmem:[%s3 + $0x58] sm:$0xff]
  %v1567 = vld [vmem:[%s3 + $0x60] sm:$0xff]
  %v1568 = vld [vmem:[%s3 + $0x68] sm:$0xff]
  %v1569 = vld [vmem:[%s3 + $0x70] sm:$0xff]
  %v1570 = vld [vmem:[%s3 + $0x78] sm:$0xff]
  %v1571 = vld [vmem:[%s3 + $0x80] sm:$0xff]
  %v1572 = vld [vmem:[%s3 + $0x88] sm:$0xff]
  %v1573 = vld [vmem:[%s3 + $0x90] sm:$0xff]
  %v1574 = vld [vmem:[%s3 + $0x98] sm:$0xff]
  %1576 = vset.pattern.permute.xlu0 0
  %1577 = vperm.xlu0 %1576, %v1555
  %v1578 = vpop.permute.xlu0 %1577
  %1581 = vset.pattern.permute.xlu0 0
  %1582 = vperm.xlu0 %1581, %v1556
  %v1583 = vpop.permute.xlu0 %1582
  %1586 = vset.pattern.permute.xlu0 0
  %1587 = vperm.xlu0 %1586, %v1557
  %v1588 = vpop.permute.xlu0 %1587
  %1591 = vset.pattern.permute.xlu0 0
  %1592 = vperm.xlu0 %1591, %v1558
  %v1593 = vpop.permute.xlu0 %1592
  %1596 = vset.pattern.permute.xlu0 0
  %1597 = vperm.xlu0 %1596, %v1559
  %v1598 = vpop.permute.xlu0 %1597
  %1601 = vset.pattern.permute.xlu0 0
  %1602 = vperm.xlu0 %1601, %v1560
  %v1603 = vpop.permute.xlu0 %1602
  %1606 = vset.pattern.permute.xlu0 0
  %1607 = vperm.xlu0 %1606, %v1561
  %v1608 = vpop.permute.xlu0 %1607
  %1611 = vset.pattern.permute.xlu0 0
  %1612 = vperm.xlu0 %1611, %v1562
  %v1613 = vpop.permute.xlu0 %1612
  %1616 = vset.pattern.permute.xlu0 0
  %1617 = vperm.xlu0 %1616, %v1563
  %v1618 = vpop.permute.xlu0 %1617
  %1621 = vset.pattern.permute.xlu0 0
  %1622 = vperm.xlu0 %1621, %v1564
  %v1623 = vpop.permute.xlu0 %1622
  %1626 = vset.pattern.permute.xlu0 0
  %1627 = vperm.xlu0 %1626, %v1565
  %v1628 = vpop.permute.xlu0 %1627
  %1631 = vset.pattern.permute.xlu0 0
  %1632 = vperm.xlu0 %1631, %v1566
  %v1633 = vpop.permute.xlu0 %1632
  %1636 = vset.pattern.permute.xlu0 0
  %1637 = vperm.xlu0 %1636, %v1567
  %v1638 = vpop.permute.xlu0 %1637
  %1641 = vset.pattern.permute.xlu0 0
  %1642 = vperm.xlu0 %1641, %v1568
  %v1643 = vpop.permute.xlu0 %1642
  %1646 = vset.pattern.permute.xlu0 0
  %1647 = vperm.xlu0 %1646, %v1569
  %v1648 = vpop.permute.xlu0 %1647
  %1651 = vset.pattern.permute.xlu0 0
  %1652 = vperm.xlu0 %1651, %v1570
  %v1653 = vpop.permute.xlu0 %1652
  %1656 = vset.pattern.permute.xlu0 0
  %1657 = vperm.xlu0 %1656, %v1571
  %v1658 = vpop.permute.xlu0 %1657
  %1661 = vset.pattern.permute.xlu0 0
  %1662 = vperm.xlu0 %1661, %v1572
  %v1663 = vpop.permute.xlu0 %1662
  %1666 = vset.pattern.permute.xlu0 0
  %1667 = vperm.xlu0 %1666, %v1573
  %v1668 = vpop.permute.xlu0 %1667
  %1671 = vset.pattern.permute.xlu0 0
  %1672 = vperm.xlu0 %1671, %v1574
  %v1673 = vpop.permute.xlu0 %1672
  %v1675 = vadd.f32 %v1535, %v1578
  %v1676 = vadd.f32 %v1536, %v1583
  %v1677 = vadd.f32 %v1537, %v1588
  %v1678 = vadd.f32 %v1538, %v1593
  %v1679 = vadd.f32 %v1539, %v1598
  %v1680 = vadd.f32 %v1540, %v1603
  %v1681 = vadd.f32 %v1541, %v1608
  %v1682 = vadd.f32 %v1542, %v1613
  %v1683 = vadd.f32 %v1543, %v1618
  %v1684 = vadd.f32 %v1544, %v1623
  %v1685 = vadd.f32 %v1545, %v1628
  %v1686 = vadd.f32 %v1546, %v1633
  %v1687 = vadd.f32 %v1547, %v1638
  %v1688 = vadd.f32 %v1548, %v1643
  %v1689 = vadd.f32 %v1549, %v1648
  %v1690 = vadd.f32 %v1550, %v1653
  %v1691 = vadd.f32 %v1551, %v1658
  %v1692 = vadd.f32 %v1552, %v1663
  %v1693 = vadd.f32 %v1553, %v1668
  %v1694 = vadd.f32 %v1554, %v1673
  %v1695 = vmax.f32 %v1675, 0.0
  %v1696 = vmax.f32 %v1676, 0.0
  %v1697 = vmax.f32 %v1677, 0.0
  %v1698 = vmax.f32 %v1678, 0.0
  %v1699 = vmax.f32 %v1679, 0.0
  %v1700 = vmax.f32 %v1680, 0.0
  %v1701 = vmax.f32 %v1681, 0.0
  %v1702 = vmax.f32 %v1682, 0.0
  %v1703 = vmax.f32 %v1683, 0.0
  %v1704 = vmax.f32 %v1684, 0.0
  %v1705 = vmax.f32 %v1685, 0.0
  %v1706 = vmax.f32 %v1686, 0.0
  %v1707 = vmax.f32 %v1687, 0.0
  %v1708 = vmax.f32 %v1688, 0.0
  %v1709 = vmax.f32 %v1689, 0.0
  %v1710 = vmax.f32 %v1690, 0.0
  %v1711 = vmax.f32 %v1691, 0.0
  %v1712 = vmax.f32 %v1692, 0.0
  %v1713 = vmax.f32 %v1693, 0.0
  %v1714 = vmax.f32 %v1694, 0.0
  %v1715 = vld [vmem:[%s4] sm:$0xff]
  %v1716 = vld [vmem:[%s4 + $0x8] sm:$0xff]
  %v1717 = vld [vmem:[%s4 + $0x10] sm:$0xff]
  %v1718 = vld [vmem:[%s4 + $0x18] sm:$0xff]
  %v1719 = vld [vmem:[%s4 + $0x20] sm:$0xff]
  %v1720 = vld [vmem:[%s4 + $0x28] sm:$0xff]
  %v1721 = vld [vmem:[%s4 + $0x30] sm:$0xff]
  %v1722 = vld [vmem:[%s4 + $0x38] sm:$0xff]
  %v1723 = vld [vmem:[%s4 + $0x40] sm:$0xff]
  %v1724 = vld [vmem:[%s4 + $0x48] sm:$0xff]
  %v1725 = vld [vmem:[%s4 + $0x50] sm:$0xff]
  %v1726 = vld [vmem:[%s4 + $0x58] sm:$0xff]
  %v1727 = vld [vmem:[%s4 + $0x60] sm:$0xff]
  %v1728 = vld [vmem:[%s4 + $0x68] sm:$0xff]
  %v1729 = vld [vmem:[%s4 + $0x70] sm:$0xff]
  %v1730 = vld [vmem:[%s4 + $0x78] sm:$0xff]
  %v1731 = vld [vmem:[%s4 + $0x80] sm:$0xff]
  %v1732 = vld [vmem:[%s4 + $0x88] sm:$0xff]
  %v1733 = vld [vmem:[%s4 + $0x90] sm:$0xff]
  %v1734 = vld [vmem:[%s4 + $0x98] sm:$0xff]
  %vm1735 = vcmask 261120
  %v1737 = vsel %vm1735, %v1716, 0
  %v1740 = vsel %vm1735, %v1718, 0
  %v1743 = vsel %vm1735, %v1720, 0
  %v1746 = vsel %vm1735, %v1722, 0
  %v1749 = vsel %vm1735, %v1724, 0
  %v1752 = vsel %vm1735, %v1726, 0
  %v1755 = vsel %vm1735, %v1728, 0
  %v1758 = vsel %vm1735, %v1730, 0
  %v1761 = vsel %vm1735, %v1732, 0
  %v1764 = vsel %vm1735, %v1734, 0
  %1766 = vmatprep.subr.mxu0 0.0
  %1767 = vmatpush1.msra.mxu0 %v1695
  %1768 = vmatprep.subr.mxu0 0.0
  %1769 = vmatpush1.msra.mxu0 %v1696
  %1770 = vmatprep.subr.mxu0 0.0
  %1771 = vmatpush1.msra.mxu0 %v1697
  %1772 = vmatprep.subr.mxu0 0.0
  %1773 = vmatpush1.msra.mxu0 %v1698
  %1774 = vmatprep.subr.mxu0 0.0
  %1775 = vmatpush1.msra.mxu0 %v1699
  %1776 = vmatprep.subr.mxu0 0.0
  %1777 = vmatpush1.msra.mxu0 %v1700
  %1778 = vmatprep.subr.mxu0 0.0
  %1779 = vmatpush1.msra.mxu0 %v1701
  %1780 = vmatprep.subr.mxu0 0.0
  %1781 = vmatpush1.msra.mxu0 %v1702
  %1782 = vmatprep.subr.mxu0 0.0
  %1783 = vmatpush1.msra.mxu0 %v1703
  %1784 = vmatprep.subr.mxu0 0.0
  %1785 = vmatpush1.msra.mxu0 %v1704
  %1786 = vmatprep.subr.mxu0 0.0
  %1787 = vmatpush1.msra.mxu0 %v1705
  %1788 = vmatprep.subr.mxu0 0.0
  %1789 = vmatpush1.msra.mxu0 %v1706
  %1790 = vmatprep.subr.mxu0 0.0
  %1791 = vmatpush1.msra.mxu0 %v1707
  %1792 = vmatprep.subr.mxu0 0.0
  %1793 = vmatpush1.msra.mxu0 %v1708
  %1794 = vmatprep.subr.mxu0 0.0
  %1795 = vmatpush1.msra.mxu0 %v1709
  %1796 = vmatprep.subr.mxu0 0.0
  %1797 = vmatpush1.msra.mxu0 %v1710
  %1798 = vmatprep.subr.mxu0 0.0
  %1799 = vmatpush1.msra.mxu0 %v1711
  %1800 = vmatprep.subr.mxu0 0.0
  %1801 = vmatpush1.msra.mxu0 %v1712
  %1802 = vmatprep.subr.mxu0 0.0
  %1803 = vmatpush1.msra.mxu0 %v1713
  %1804 = vmatprep.subr.mxu0 0.0
  %1805 = vmatpush1.msra.mxu0 %v1714
  %1806 = vmatprep.subr.mxu0 0.0
  %1807 = vmatpush1.msra.mxu0 0.0
  %1808 = vmatprep.subr.mxu0 0.0
  %1809 = vmatpush1.msra.mxu0 0.0
  %1810 = vmatprep.subr.mxu0 0.0
  %1811 = vmatpush1.msra.mxu0 0.0
  %1812 = vmatprep.subr.mxu0 0.0
  %1813 = vmatpush1.msra.mxu0 0.0
  %1814 = vmatprep.subr.mxu0 0.0
  %1815 = vmatpush1.msra.mxu0 0.0
  %1816 = vmatprep.subr.mxu0 0.0
  %1817 = vmatpush1.msra.mxu0 0.0
  %1818 = vmatprep.subr.mxu0 0.0
  %1819 = vmatpush1.msra.mxu0 0.0
  %1820 = vmatprep.subr.mxu0 0.0
  %1821 = vmatpush1.msra.mxu0 0.0
  %1822 = vmatprep.subr.mxu0 0.0
  %1823 = vmatpush1.msra.mxu0 0.0
  %1824 = vmatprep.subr.mxu0 0.0
  %1825 = vmatpush1.msra.mxu0 0.0
  %1826 = vmatprep.subr.mxu0 0.0
  %1827 = vmatpush1.msra.mxu0 0.0
  %1828 = vmatprep.subr.mxu0 0.0
  %1829 = vmatpush1.msra.mxu0 0.0
  %1830 = vmatprep.mubr.f32.mxu0 %v1737
  %1831 = vmatmul.mubr.f32.gmra.mrb[0].mxu0 %v1715
  %v1832 = vpop.f32.mrb[0].mxu0
  %v1833 = vadd.f32 0.0, %v1832
  %v1834 = vpop.f32.mrb[0].mxu0
  %1835 = vmatprep.mubr.f32.mxu0 %v1740
  %1836 = vmatmul.mubr.f32.gmra.mrb[0].mxu0 %v1717
  %v1837 = vpop.f32.mrb[0].mxu0
  %v1838 = vadd.f32 0.0, %v1837
  %v1839 = vpop.f32.mrb[0].mxu0
  %1840 = vmatprep.mubr.f32.mxu0 %v1743
  %1841 = vmatmul.mubr.f32.gmra.mrb[0].mxu0 %v1719
  %v1842 = vpop.f32.mrb[0].mxu0
  %v1843 = vadd.f32 0.0, %v1842
  %v1844 = vpop.f32.mrb[0].mxu0
  %1845 = vmatprep.mubr.f32.mxu0 %v1746
  %1846 = vmatmul.mubr.f32.gmra.mrb[0].mxu0 %v1721
  %v1847 = vpop.f32.mrb[0].mxu0
  %v1848 = vadd.f32 0.0, %v1847
  %v1849 = vpop.f32.mrb[0].mxu0
  %1850 = vmatprep.mubr.f32.mxu0 %v1749
  %1851 = vmatmul.mubr.f32.gmra.mrb[0].mxu0 %v1723
  %v1852 = vpop.f32.mrb[0].mxu0
  %v1853 = vadd.f32 0.0, %v1852
  %v1854 = vpop.f32.mrb[0].mxu0
  %1855 = vmatprep.mubr.f32.mxu0 %v1752
  %1856 = vmatmul.mubr.f32.gmra.mrb[0].mxu0 %v1725
  %v1857 = vpop.f32.mrb[0].mxu0
  %v1858 = vadd.f32 0.0, %v1857
  %v1859 = vpop.f32.mrb[0].mxu0
  %1860 = vmatprep.mubr.f32.mxu0 %v1755
  %1861 = vmatmul.mubr.f32.gmra.mrb[0].mxu0 %v1727
  %v1862 = vpop.f32.mrb[0].mxu0
  %v1863 = vadd.f32 0.0, %v1862
  %v1864 = vpop.f32.mrb[0].mxu0
  %1865 = vmatprep.mubr.f32.mxu0 %v1758
  %1866 = vmatmul.mubr.f32.gmra.mrb[0].mxu0 %v1729
  %v1867 = vpop.f32.mrb[0].mxu0
  %v1868 = vadd.f32 0.0, %v1867
  %v1869 = vpop.f32.mrb[0].mxu0
  %1870 = vmatprep.mubr.f32.mxu0 %v1761
  %1871 = vmatmul.mubr.f32.gmra.mrb[0].mxu0 %v1731
  %v1872 = vpop.f32.mrb[0].mxu0
  %v1873 = vadd.f32 0.0, %v1872
  %v1874 = vpop.f32.mrb[0].mxu0
  %1875 = vmatprep.mubr.f32.mxu0 %v1764
  %1876 = vmatmul.mubr.f32.gmra.mrb[0].mxu0 %v1733
  %v1877 = vpop.f32.mrb[0].mxu0
  %v1878 = vadd.f32 0.0, %v1877
  %v1879 = vpop.f32.mrb[0].mxu0
  %1880 = vdwg.mxu0
  %v1881 = vld [vmem:[%s5] sm:$0xff]
  %v1882 = vld [vmem:[%s5 + $0x8] sm:$0xff]
  %v1883 = vld [vmem:[%s5 + $0x10] sm:$0xf]
  %vm1884 = vcmask 162816
  %v1886 = vsel %vm1884, %v1833, 0
  %v1889 = vsel %vm1884, %v1838, 0
  %v1892 = vsel %vm1884, %v1843, 0
  %v1895 = vsel %vm1884, %v1848, 0
  %v1898 = vsel %vm1884, %v1853, 0
  %v1901 = vsel %vm1884, %v1858, 0
  %v1904 = vsel %vm1884, %v1863, 0
  %v1907 = vsel %vm1884, %v1868, 0
  %v1910 = vsel %vm1884, %v1873, 0
  %v1913 = vsel %vm1884, %v1878, 0
  %v1916 = vsel %vm175, %v1883, 0
  %1918 = vmatprep.subr.mxu0 0.0
  %1919 = vmatpush1.msra.mxu0 %v1881
  %1920 = vmatprep.subr.mxu0 0.0
  %1921 = vmatpush1.msra.mxu0 %v1882
  %1922 = vmatprep.subr.mxu0 0.0
  %1923 = vmatpush1.msra.mxu0 %v1916
  %1924 = vmatprep.subr.mxu0 0.0
  %1925 = vmatpush1.msra.mxu0 0.0
  %1926 = vmatprep.subr.mxu0 0.0
  %1927 = vmatpush1.msra.mxu0 0.0
  %1928 = vmatprep.subr.mxu0 0.0
  %1929 = vmatpush1.msra.mxu0 0.0
  %1930 = vmatprep.subr.mxu0 0.0
  %1931 = vmatpush1.msra.mxu0 0.0
  %1932 = vmatprep.subr.mxu0 0.0
  %1933 = vmatpush1.msra.mxu0 0.0
  %1934 = vmatprep.subr.mxu0 0.0
  %1935 = vmatpush1.msra.mxu0 0.0
  %1936 = vmatprep.subr.mxu0 0.0
  %1937 = vmatpush1.msra.mxu0 0.0
  %1938 = vmatprep.subr.mxu0 0.0
  %1939 = vmatpush1.msra.mxu0 0.0
  %1940 = vmatprep.subr.mxu0 0.0
  %1941 = vmatpush1.msra.mxu0 0.0
  %1942 = vmatprep.subr.mxu0 0.0
  %1943 = vmatpush1.msra.mxu0 0.0
  %1944 = vmatprep.subr.mxu0 0.0
  %1945 = vmatpush1.msra.mxu0 0.0
  %1946 = vmatprep.subr.mxu0 0.0
  %1947 = vmatpush1.msra.mxu0 0.0
  %1948 = vmatprep.subr.mxu0 0.0
  %1949 = vmatpush1.msra.mxu0 0.0
  %1950 = vmatprep.subr.mxu0 0.0
  %1951 = vmatpush1.msra.mxu0 0.0
  %1952 = vmatprep.subr.mxu0 0.0
  %1953 = vmatpush1.msra.mxu0 0.0
  %1954 = vmatprep.subr.mxu0 0.0
  %1955 = vmatpush1.msra.mxu0 0.0
  %1956 = vmatprep.subr.mxu0 0.0
  %1957 = vmatpush1.msra.mxu0 0.0
  %1958 = vmatprep.subr.mxu0 0.0
  %1959 = vmatpush1.msra.mxu0 0.0
  %1960 = vmatprep.subr.mxu0 0.0
  %1961 = vmatpush1.msra.mxu0 0.0
  %1962 = vmatprep.subr.mxu0 0.0
  %1963 = vmatpush1.msra.mxu0 0.0
  %1964 = vmatprep.subr.mxu0 0.0
  %1965 = vmatpush1.msra.mxu0 0.0
  %1966 = vmatprep.subr.mxu0 0.0
  %1967 = vmatpush1.msra.mxu0 0.0
  %1968 = vmatprep.subr.mxu0 0.0
  %1969 = vmatpush1.msra.mxu0 0.0
  %1970 = vmatprep.subr.mxu0 0.0
  %1971 = vmatpush1.msra.mxu0 0.0
  %1972 = vmatprep.subr.mxu0 0.0
  %1973 = vmatpush1.msra.mxu0 0.0
  %1974 = vmatprep.subr.mxu0 0.0
  %1975 = vmatpush1.msra.mxu0 0.0
  %1976 = vmatprep.subr.mxu0 0.0
  %1977 = vmatpush1.msra.mxu0 0.0
  %1978 = vmatprep.subr.mxu0 0.0
  %1979 = vmatpush1.msra.mxu0 0.0
  %1980 = vmatprep.subr.mxu0 0.0
  %1981 = vmatpush1.msra.mxu0 0.0
  %1982 = vmatprep.mubr.f32.mxu0 0.0
  %1983 = vmatmul.mubr.f32.gmra.mrb[0].mxu0 %v1886
  %v1984 = vpop.f32.mrb[0].mxu0
  %v1985 = vadd.f32 0.0, %v1984
  %v1986 = vpop.f32.mrb[0].mxu0
  %1987 = vmatprep.mubr.f32.mxu0 0.0
  %1988 = vmatmul.mubr.f32.gmra.mrb[0].mxu0 %v1889
  %v1989 = vpop.f32.mrb[0].mxu0
  %v1990 = vadd.f32 0.0, %v1989
  %v1991 = vpop.f32.mrb[0].mxu0
  %1992 = vmatprep.mubr.f32.mxu0 0.0
  %1993 = vmatmul.mubr.f32.gmra.mrb[0].mxu0 %v1892
  %v1994 = vpop.f32.mrb[0].mxu0
  %v1995 = vadd.f32 0.0, %v1994
  %v1996 = vpop.f32.mrb[0].mxu0
  %1997 = vmatprep.mubr.f32.mxu0 0.0
  %1998 = vmatmul.mubr.f32.gmra.mrb[0].mxu0 %v1895
  %v1999 = vpop.f32.mrb[0].mxu0
  %v2000 = vadd.f32 0.0, %v1999
  %v2001 = vpop.f32.mrb[0].mxu0
  %2002 = vmatprep.mubr.f32.mxu0 0.0
  %2003 = vmatmul.mubr.f32.gmra.mrb[0].mxu0 %v1898
  %v2004 = vpop.f32.mrb[0].mxu0
  %v2005 = vadd.f32 0.0, %v2004
  %v2006 = vpop.f32.mrb[0].mxu0
  %2007 = vmatprep.mubr.f32.mxu0 0.0
  %2008 = vmatmul.mubr.f32.gmra.mrb[0].mxu0 %v1901
  %v2009 = vpop.f32.mrb[0].mxu0
  %v2010 = vadd.f32 0.0, %v2009
  %v2011 = vpop.f32.mrb[0].mxu0
  %2012 = vmatprep.mubr.f32.mxu0 0.0
  %2013 = vmatmul.mubr.f32.gmra.mrb[0].mxu0 %v1904
  %v2014 = vpop.f32.mrb[0].mxu0
  %v2015 = vadd.f32 0.0, %v2014
  %v2016 = vpop.f32.mrb[0].mxu0
  %2017 = vmatprep.mubr.f32.mxu0 0.0
  %2018 = vmatmul.mubr.f32.gmra.mrb[0].mxu0 %v1907
  %v2019 = vpop.f32.mrb[0].mxu0
  %v2020 = vadd.f32 0.0, %v2019
  %v2021 = vpop.f32.mrb[0].mxu0
  %2022 = vmatprep.mubr.f32.mxu0 0.0
  %2023 = vmatmul.mubr.f32.gmra.mrb[0].mxu0 %v1910
  %v2024 = vpop.f32.mrb[0].mxu0
  %v2025 = vadd.f32 0.0, %v2024
  %v2026 = vpop.f32.mrb[0].mxu0
  %2027 = vmatprep.mubr.f32.mxu0 0.0
  %2028 = vmatmul.mubr.f32.gmra.mrb[0].mxu0 %v1913
  %v2029 = vpop.f32.mrb[0].mxu0
  %v2030 = vadd.f32 0.0, %v2029
  %v2031 = vpop.f32.mrb[0].mxu0
  %2032 = vdwg.mxu0
  %s2033 = scalar_lea.vmem %s5, 24
  %v2034 = vld [vmem:[%s2033] sm:$0xff]
  %v2035 = vld [vmem:[%s2033 + $0x8] sm:$0xff]
  %v2036 = vld [vmem:[%s2033 + $0x10] sm:$0xf]
  %v2038 = vsel %vm175, %v2036, 0
  %2040 = vmatprep.subr.mxu0 0.0
  %2041 = vmatpush1.msra.mxu0 %v2034
  %2042 = vmatprep.subr.mxu0 0.0
  %2043 = vmatpush1.msra.mxu0 %v2035
  %2044 = vmatprep.subr.mxu0 0.0
  %2045 = vmatpush1.msra.mxu0 %v2038
  %2046 = vmatprep.subr.mxu0 0.0
  %2047 = vmatpush1.msra.mxu0 0.0
  %2048 = vmatprep.subr.mxu0 0.0
  %2049 = vmatpush1.msra.mxu0 0.0
  %2050 = vmatprep.subr.mxu0 0.0
  %2051 = vmatpush1.msra.mxu0 0.0
  %2052 = vmatprep.subr.mxu0 0.0
  %2053 = vmatpush1.msra.mxu0 0.0
  %2054 = vmatprep.subr.mxu0 0.0
  %2055 = vmatpush1.msra.mxu0 0.0
  %2056 = vmatprep.subr.mxu0 0.0
  %2057 = vmatpush1.msra.mxu0 0.0
  %2058 = vmatprep.subr.mxu0 0.0
  %2059 = vmatpush1.msra.mxu0 0.0
  %2060 = vmatprep.subr.mxu0 0.0
  %2061 = vmatpush1.msra.mxu0 0.0
  %2062 = vmatprep.subr.mxu0 0.0
  %2063 = vmatpush1.msra.mxu0 0.0
  %2064 = vmatprep.subr.mxu0 0.0
  %2065 = vmatpush1.msra.mxu0 0.0
  %2066 = vmatprep.subr.mxu0 0.0
  %2067 = vmatpush1.msra.mxu0 0.0
  %2068 = vmatprep.subr.mxu0 0.0
  %2069 = vmatpush1.msra.mxu0 0.0
  %2070 = vmatprep.subr.mxu0 0.0
  %2071 = vmatpush1.msra.mxu0 0.0
  %2072 = vmatprep.subr.mxu0 0.0
  %2073 = vmatpush1.msra.mxu0 0.0
  %2074 = vmatprep.subr.mxu0 0.0
  %2075 = vmatpush1.msra.mxu0 0.0
  %2076 = vmatprep.subr.mxu0 0.0
  %2077 = vmatpush1.msra.mxu0 0.0
  %2078 = vmatprep.subr.mxu0 0.0
  %2079 = vmatpush1.msra.mxu0 0.0
  %2080 = vmatprep.subr.mxu0 0.0
  %2081 = vmatpush1.msra.mxu0 0.0
  %2082 = vmatprep.subr.mxu0 0.0
  %2083 = vmatpush1.msra.mxu0 0.0
  %2084 = vmatprep.subr.mxu0 0.0
  %2085 = vmatpush1.msra.mxu0 0.0
  %2086 = vmatprep.subr.mxu0 0.0
  %2087 = vmatpush1.msra.mxu0 0.0
  %2088 = vmatprep.subr.mxu0 0.0
  %2089 = vmatpush1.msra.mxu0 0.0
  %2090 = vmatprep.subr.mxu0 0.0
  %2091 = vmatpush1.msra.mxu0 0.0
  %2092 = vmatprep.subr.mxu0 0.0
  %2093 = vmatpush1.msra.mxu0 0.0
  %2094 = vmatprep.subr.mxu0 0.0
  %2095 = vmatpush1.msra.mxu0 0.0
  %2096 = vmatprep.subr.mxu0 0.0
  %2097 = vmatpush1.msra.mxu0 0.0
  %2098 = vmatprep.subr.mxu0 0.0
  %2099 = vmatpush1.msra.mxu0 0.0
  %2100 = vmatprep.subr.mxu0 0.0
  %2101 = vmatpush1.msra.mxu0 0.0
  %2102 = vmatprep.subr.mxu0 0.0
  %2103 = vmatpush1.msra.mxu0 0.0
  %2104 = vmatprep.mubr.f32.mxu0 0.0
  %2105 = vmatmul.mubr.f32.gmra.mrb[0].mxu0 %v1886
  %v2106 = vpop.f32.mrb[0].mxu0
  %v2107 = vadd.f32 0.0, %v2106
  %v2108 = vpop.f32.mrb[0].mxu0
  %2109 = vmatprep.mubr.f32.mxu0 0.0
  %2110 = vmatmul.mubr.f32.gmra.mrb[0].mxu0 %v1889
  %v2111 = vpop.f32.mrb[0].mxu0
  %v2112 = vadd.f32 0.0, %v2111
  %v2113 = vpop.f32.mrb[0].mxu0
  %2114 = vmatprep.mubr.f32.mxu0 0.0
  %2115 = vmatmul.mubr.f32.gmra.mrb[0].mxu0 %v1892
  %v2116 = vpop.f32.mrb[0].mxu0
  %v2117 = vadd.f32 0.0, %v2116
  %v2118 = vpop.f32.mrb[0].mxu0
  %2119 = vmatprep.mubr.f32.mxu0 0.0
  %2120 = vmatmul.mubr.f32.gmra.mrb[0].mxu0 %v1895
  %v2121 = vpop.f32.mrb[0].mxu0
  %v2122 = vadd.f32 0.0, %v2121
  %v2123 = vpop.f32.mrb[0].mxu0
  %2124 = vmatprep.mubr.f32.mxu0 0.0
  %2125 = vmatmul.mubr.f32.gmra.mrb[0].mxu0 %v1898
  %v2126 = vpop.f32.mrb[0].mxu0
  %v2127 = vadd.f32 0.0, %v2126
  %v2128 = vpop.f32.mrb[0].mxu0
  %2129 = vmatprep.mubr.f32.mxu0 0.0
  %2130 = vmatmul.mubr.f32.gmra.mrb[0].mxu0 %v1901
  %v2131 = vpop.f32.mrb[0].mxu0
  %v2132 = vadd.f32 0.0, %v2131
  %v2133 = vpop.f32.mrb[0].mxu0
  %2134 = vmatprep.mubr.f32.mxu0 0.0
  %2135 = vmatmul.mubr.f32.gmra.mrb[0].mxu0 %v1904
  %v2136 = vpop.f32.mrb[0].mxu0
  %v2137 = vadd.f32 0.0, %v2136
  %v2138 = vpop.f32.mrb[0].mxu0
  %2139 = vmatprep.mubr.f32.mxu0 0.0
  %2140 = vmatmul.mubr.f32.gmra.mrb[0].mxu0 %v1907
  %v2141 = vpop.f32.mrb[0].mxu0
  %v2142 = vadd.f32 0.0, %v2141
  %v2143 = vpop.f32.mrb[0].mxu0
  %2144 = vmatprep.mubr.f32.mxu0 0.0
  %2145 = vmatmul.mubr.f32.gmra.mrb[0].mxu0 %v1910
  %v2146 = vpop.f32.mrb[0].mxu0
  %v2147 = vadd.f32 0.0, %v2146
  %v2148 = vpop.f32.mrb[0].mxu0
  %2149 = vmatprep.mubr.f32.mxu0 0.0
  %2150 = vmatmul.mubr.f32.gmra.mrb[0].mxu0 %v1913
  %v2151 = vpop.f32.mrb[0].mxu0
  %v2152 = vadd.f32 0.0, %v2151
  %v2153 = vpop.f32.mrb[0].mxu0
  %2154 = vdwg.mxu0
  %v2155 = vmax.f32 %v1985, %v2107
  %v2156 = vmax.f32 %v1990, %v2112
  %v2157 = vmax.f32 %v1995, %v2117
  %v2158 = vmax.f32 %v2000, %v2122
  %v2159 = vmax.f32 %v2005, %v2127
  %v2160 = vmax.f32 %v2010, %v2132
  %v2161 = vmax.f32 %v2015, %v2137
  %v2162 = vmax.f32 %v2020, %v2142
  %v2163 = vmax.f32 %v2025, %v2147
  %v2164 = vmax.f32 %v2030, %v2152
  %s2165 = scalar_lea.vmem %s4, 160
  %v2166 = vld [vmem:[%s2165] sm:$0xff]
  %v2167 = vld [vmem:[%s2165 + $0x8] sm:$0xff]
  %v2168 = vld [vmem:[%s2165 + $0x10] sm:$0xff]
  %v2169 = vld [vmem:[%s2165 + $0x18] sm:$0xff]
  %v2170 = vld [vmem:[%s2165 + $0x20] sm:$0xff]
  %v2171 = vld [vmem:[%s2165 + $0x28] sm:$0xff]
  %v2172 = vld [vmem:[%s2165 + $0x30] sm:$0xff]
  %v2173 = vld [vmem:[%s2165 + $0x38] sm:$0xff]
  %v2174 = vld [vmem:[%s2165 + $0x40] sm:$0xff]
  %v2175 = vld [vmem:[%s2165 + $0x48] sm:$0xff]
  %v2176 = vld [vmem:[%s2165 + $0x50] sm:$0xff]
  %v2177 = vld [vmem:[%s2165 + $0x58] sm:$0xff]
  %v2178 = vld [vmem:[%s2165 + $0x60] sm:$0xff]
  %v2179 = vld [vmem:[%s2165 + $0x68] sm:$0xff]
  %v2180 = vld [vmem:[%s2165 + $0x70] sm:$0xff]
  %v2181 = vld [vmem:[%s2165 + $0x78] sm:$0xff]
  %v2182 = vld [vmem:[%s2165 + $0x80] sm:$0xff]
  %v2183 = vld [vmem:[%s2165 + $0x88] sm:$0xff]
  %v2184 = vld [vmem:[%s2165 + $0x90] sm:$0xff]
  %v2185 = vld [vmem:[%s2165 + $0x98] sm:$0xff]
  %v2187 = vsel %vm1735, %v2167, 0
  %v2190 = vsel %vm1735, %v2169, 0
  %v2193 = vsel %vm1735, %v2171, 0
  %v2196 = vsel %vm1735, %v2173, 0
  %v2199 = vsel %vm1735, %v2175, 0
  %v2202 = vsel %vm1735, %v2177, 0
  %v2205 = vsel %vm1735, %v2179, 0
  %v2208 = vsel %vm1735, %v2181, 0
  %v2211 = vsel %vm1735, %v2183, 0
  %v2214 = vsel %vm1735, %v2185, 0
  %2216 = vmatprep.subr.mxu0 0.0
  %2217 = vmatpush1.msra.mxu0 %v1695
  %2218 = vmatprep.subr.mxu0 0.0
  %2219 = vmatpush1.msra.mxu0 %v1696
  %2220 = vmatprep.subr.mxu0 0.0
  %2221 = vmatpush1.msra.mxu0 %v1697
  %2222 = vmatprep.subr.mxu0 0.0
  %2223 = vmatpush1.msra.mxu0 %v1698
  %2224 = vmatprep.subr.mxu0 0.0
  %2225 = vmatpush1.msra.mxu0 %v1699
  %2226 = vmatprep.subr.mxu0 0.0
  %2227 = vmatpush1.msra.mxu0 %v1700
  %2228 = vmatprep.subr.mxu0 0.0
  %2229 = vmatpush1.msra.mxu0 %v1701
  %2230 = vmatprep.subr.mxu0 0.0
  %2231 = vmatpush1.msra.mxu0 %v1702
  %2232 = vmatprep.subr.mxu0 0.0
  %2233 = vmatpush1.msra.mxu0 %v1703
  %2234 = vmatprep.subr.mxu0 0.0
  %2235 = vmatpush1.msra.mxu0 %v1704
  %2236 = vmatprep.subr.mxu0 0.0
  %2237 = vmatpush1.msra.mxu0 %v1705
  %2238 = vmatprep.subr.mxu0 0.0
  %2239 = vmatpush1.msra.mxu0 %v1706
  %2240 = vmatprep.subr.mxu0 0.0
  %2241 = vmatpush1.msra.mxu0 %v1707
  %2242 = vmatprep.subr.mxu0 0.0
  %2243 = vmatpush1.msra.mxu0 %v1708
  %2244 = vmatprep.subr.mxu0 0.0
  %2245 = vmatpush1.msra.mxu0 %v1709
  %2246 = vmatprep.subr.mxu0 0.0
  %2247 = vmatpush1.msra.mxu0 %v1710
  %2248 = vmatprep.subr.mxu0 0.0
  %2249 = vmatpush1.msra.mxu0 %v1711
  %2250 = vmatprep.subr.mxu0 0.0
  %2251 = vmatpush1.msra.mxu0 %v1712
  %2252 = vmatprep.subr.mxu0 0.0
  %2253 = vmatpush1.msra.mxu0 %v1713
  %2254 = vmatprep.subr.mxu0 0.0
  %2255 = vmatpush1.msra.mxu0 %v1714
  %2256 = vmatprep.subr.mxu0 0.0
  %2257 = vmatpush1.msra.mxu0 0.0
  %2258 = vmatprep.subr.mxu0 0.0
  %2259 = vmatpush1.msra.mxu0 0.0
  %2260 = vmatprep.subr.mxu0 0.0
  %2261 = vmatpush1.msra.mxu0 0.0
  %2262 = vmatprep.subr.mxu0 0.0
  %2263 = vmatpush1.msra.mxu0 0.0
  %2264 = vmatprep.subr.mxu0 0.0
  %2265 = vmatpush1.msra.mxu0 0.0
  %2266 = vmatprep.subr.mxu0 0.0
  %2267 = vmatpush1.msra.mxu0 0.0
  %2268 = vmatprep.subr.mxu0 0.0
  %2269 = vmatpush1.msra.mxu0 0.0
  %2270 = vmatprep.subr.mxu0 0.0
  %2271 = vmatpush1.msra.mxu0 0.0
  %2272 = vmatprep.subr.mxu0 0.0
  %2273 = vmatpush1.msra.mxu0 0.0
  %2274 = vmatprep.subr.mxu0 0.0
  %2275 = vmatpush1.msra.mxu0 0.0
  %2276 = vmatprep.subr.mxu0 0.0
  %2277 = vmatpush1.msra.mxu0 0.0
  %2278 = vmatprep.subr.mxu0 0.0
  %2279 = vmatpush1.msra.mxu0 0.0
  %2280 = vmatprep.mubr.f32.mxu0 %v2187
  %2281 = vmatmul.mubr.f32.gmra.mrb[0].mxu0 %v2166
  %v2282 = vpop.f32.mrb[0].mxu0
  %v2283 = vadd.f32 0.0, %v2282
  %v2284 = vpop.f32.mrb[0].mxu0
  %2285 = vmatprep.mubr.f32.mxu0 %v2190
  %2286 = vmatmul.mubr.f32.gmra.mrb[0].mxu0 %v2168
  %v2287 = vpop.f32.mrb[0].mxu0
  %v2288 = vadd.f32 0.0, %v2287
  %v2289 = vpop.f32.mrb[0].mxu0
  %2290 = vmatprep.mubr.f32.mxu0 %v2193
  %2291 = vmatmul.mubr.f32.gmra.mrb[0].mxu0 %v2170
  %v2292 = vpop.f32.mrb[0].mxu0
  %v2293 = vadd.f32 0.0, %v2292
  %v2294 = vpop.f32.mrb[0].mxu0
  %2295 = vmatprep.mubr.f32.mxu0 %v2196
  %2296 = vmatmul.mubr.f32.gmra.mrb[0].mxu0 %v2172
  %v2297 = vpop.f32.mrb[0].mxu0
  %v2298 = vadd.f32 0.0, %v2297
  %v2299 = vpop.f32.mrb[0].mxu0
  %2300 = vmatprep.mubr.f32.mxu0 %v2199
  %2301 = vmatmul.mubr.f32.gmra.mrb[0].mxu0 %v2174
  %v2302 = vpop.f32.mrb[0].mxu0
  %v2303 = vadd.f32 0.0, %v2302
  %v2304 = vpop.f32.mrb[0].mxu0
  %2305 = vmatprep.mubr.f32.mxu0 %v2202
  %2306 = vmatmul.mubr.f32.gmra.mrb[0].mxu0 %v2176
  %v2307 = vpop.f32.mrb[0].mxu0
  %v2308 = vadd.f32 0.0, %v2307
  %v2309 = vpop.f32.mrb[0].mxu0
  %2310 = vmatprep.mubr.f32.mxu0 %v2205
  %2311 = vmatmul.mubr.f32.gmra.mrb[0].mxu0 %v2178
  %v2312 = vpop.f32.mrb[0].mxu0
  %v2313 = vadd.f32 0.0, %v2312
  %v2314 = vpop.f32.mrb[0].mxu0
  %2315 = vmatprep.mubr.f32.mxu0 %v2208
  %2316 = vmatmul.mubr.f32.gmra.mrb[0].mxu0 %v2180
  %v2317 = vpop.f32.mrb[0].mxu0
  %v2318 = vadd.f32 0.0, %v2317
  %v2319 = vpop.f32.mrb[0].mxu0
  %2320 = vmatprep.mubr.f32.mxu0 %v2211
  %2321 = vmatmul.mubr.f32.gmra.mrb[0].mxu0 %v2182
  %v2322 = vpop.f32.mrb[0].mxu0
  %v2323 = vadd.f32 0.0, %v2322
  %v2324 = vpop.f32.mrb[0].mxu0
  %2325 = vmatprep.mubr.f32.mxu0 %v2214
  %2326 = vmatmul.mubr.f32.gmra.mrb[0].mxu0 %v2184
  %v2327 = vpop.f32.mrb[0].mxu0
  %v2328 = vadd.f32 0.0, %v2327
  %v2329 = vpop.f32.mrb[0].mxu0
  %2330 = vdwg.mxu0
  %v2332 = vsel %vm1884, %v2283, 0
  %v2335 = vsel %vm1884, %v2288, 0
  %v2338 = vsel %vm1884, %v2293, 0
  %v2341 = vsel %vm1884, %v2298, 0
  %v2344 = vsel %vm1884, %v2303, 0
  %v2347 = vsel %vm1884, %v2308, 0
  %v2350 = vsel %vm1884, %v2313, 0
  %v2353 = vsel %vm1884, %v2318, 0
  %v2356 = vsel %vm1884, %v2323, 0
  %v2359 = vsel %vm1884, %v2328, 0
  %2361 = vmatprep.subr.mxu0 0.0
  %2362 = vmatpush1.msra.mxu0 %v1881
  %2363 = vmatprep.subr.mxu0 0.0
  %2364 = vmatpush1.msra.mxu0 %v1882
  %2365 = vmatprep.subr.mxu0 0.0
  %2366 = vmatpush1.msra.mxu0 %v1916
  %2367 = vmatprep.subr.mxu0 0.0
  %2368 = vmatpush1.msra.mxu0 0.0
  %2369 = vmatprep.subr.mxu0 0.0
  %2370 = vmatpush1.msra.mxu0 0.0
  %2371 = vmatprep.subr.mxu0 0.0
  %2372 = vmatpush1.msra.mxu0 0.0
  %2373 = vmatprep.subr.mxu0 0.0
  %2374 = vmatpush1.msra.mxu0 0.0
  %2375 = vmatprep.subr.mxu0 0.0
  %2376 = vmatpush1.msra.mxu0 0.0
  %2377 = vmatprep.subr.mxu0 0.0
  %2378 = vmatpush1.msra.mxu0 0.0
  %2379 = vmatprep.subr.mxu0 0.0
  %2380 = vmatpush1.msra.mxu0 0.0
  %2381 = vmatprep.subr.mxu0 0.0
  %2382 = vmatpush1.msra.mxu0 0.0
  %2383 = vmatprep.subr.mxu0 0.0
  %2384 = vmatpush1.msra.mxu0 0.0
  %2385 = vmatprep.subr.mxu0 0.0
  %2386 = vmatpush1.msra.mxu0 0.0
  %2387 = vmatprep.subr.mxu0 0.0
  %2388 = vmatpush1.msra.mxu0 0.0
  %2389 = vmatprep.subr.mxu0 0.0
  %2390 = vmatpush1.msra.mxu0 0.0
  %2391 = vmatprep.subr.mxu0 0.0
  %2392 = vmatpush1.msra.mxu0 0.0
  %2393 = vmatprep.subr.mxu0 0.0
  %2394 = vmatpush1.msra.mxu0 0.0
  %2395 = vmatprep.subr.mxu0 0.0
  %2396 = vmatpush1.msra.mxu0 0.0
  %2397 = vmatprep.subr.mxu0 0.0
  %2398 = vmatpush1.msra.mxu0 0.0
  %2399 = vmatprep.subr.mxu0 0.0
  %2400 = vmatpush1.msra.mxu0 0.0
  %2401 = vmatprep.subr.mxu0 0.0
  %2402 = vmatpush1.msra.mxu0 0.0
  %2403 = vmatprep.subr.mxu0 0.0
  %2404 = vmatpush1.msra.mxu0 0.0
  %2405 = vmatprep.subr.mxu0 0.0
  %2406 = vmatpush1.msra.mxu0 0.0
  %2407 = vmatprep.subr.mxu0 0.0
  %2408 = vmatpush1.msra.mxu0 0.0
  %2409 = vmatprep.subr.mxu0 0.0
  %2410 = vmatpush1.msra.mxu0 0.0
  %2411 = vmatprep.subr.mxu0 0.0
  %2412 = vmatpush1.msra.mxu0 0.0
  %2413 = vmatprep.subr.mxu0 0.0
  %2414 = vmatpush1.msra.mxu0 0.0
  %2415 = vmatprep.subr.mxu0 0.0
  %2416 = vmatpush1.msra.mxu0 0.0
  %2417 = vmatprep.subr.mxu0 0.0
  %2418 = vmatpush1.msra.mxu0 0.0
  %2419 = vmatprep.subr.mxu0 0.0
  %2420 = vmatpush1.msra.mxu0 0.0
  %2421 = vmatprep.subr.mxu0 0.0
  %2422 = vmatpush1.msra.mxu0 0.0
  %2423 = vmatprep.subr.mxu0 0.0
  %2424 = vmatpush1.msra.mxu0 0.0
  %2425 = vmatprep.mubr.f32.mxu0 0.0
  %2426 = vmatmul.mubr.f32.gmra.mrb[0].mxu0 %v2332
  %v2427 = vpop.f32.mrb[0].mxu0
  %v2428 = vadd.f32 0.0, %v2427
  %v2429 = vpop.f32.mrb[0].mxu0
  %2430 = vmatprep.mubr.f32.mxu0 0.0
  %2431 = vmatmul.mubr.f32.gmra.mrb[0].mxu0 %v2335
  %v2432 = vpop.f32.mrb[0].mxu0
  %v2433 = vadd.f32 0.0, %v2432
  %v2434 = vpop.f32.mrb[0].mxu0
  %2435 = vmatprep.mubr.f32.mxu0 0.0
  %2436 = vmatmul.mubr.f32.gmra.mrb[0].mxu0 %v2338
  %v2437 = vpop.f32.mrb[0].mxu0
  %v2438 = vadd.f32 0.0, %v2437
  %v2439 = vpop.f32.mrb[0].mxu0
  %2440 = vmatprep.mubr.f32.mxu0 0.0
  %2441 = vmatmul.mubr.f32.gmra.mrb[0].mxu0 %v2341
  %v2442 = vpop.f32.mrb[0].mxu0
  %v2443 = vadd.f32 0.0, %v2442
  %v2444 = vpop.f32.mrb[0].mxu0
  %2445 = vmatprep.mubr.f32.mxu0 0.0
  %2446 = vmatmul.mubr.f32.gmra.mrb[0].mxu0 %v2344
  %v2447 = vpop.f32.mrb[0].mxu0
  %v2448 = vadd.f32 0.0, %v2447
  %v2449 = vpop.f32.mrb[0].mxu0
  %2450 = vmatprep.mubr.f32.mxu0 0.0
  %2451 = vmatmul.mubr.f32.gmra.mrb[0].mxu0 %v2347
  %v2452 = vpop.f32.mrb[0].mxu0
  %v2453 = vadd.f32 0.0, %v2452
  %v2454 = vpop.f32.mrb[0].mxu0
  %2455 = vmatprep.mubr.f32.mxu0 0.0
  %2456 = vmatmul.mubr.f32.gmra.mrb[0].mxu0 %v2350
  %v2457 = vpop.f32.mrb[0].mxu0
  %v2458 = vadd.f32 0.0, %v2457
  %v2459 = vpop.f32.mrb[0].mxu0
  %2460 = vmatprep.mubr.f32.mxu0 0.0
  %2461 = vmatmul.mubr.f32.gmra.mrb[0].mxu0 %v2353
  %v2462 = vpop.f32.mrb[0].mxu0
  %v2463 = vadd.f32 0.0, %v2462
  %v2464 = vpop.f32.mrb[0].mxu0
  %2465 = vmatprep.mubr.f32.mxu0 0.0
  %2466 = vmatmul.mubr.f32.gmra.mrb[0].mxu0 %v2356
  %v2467 = vpop.f32.mrb[0].mxu0
  %v2468 = vadd.f32 0.0, %v2467
  %v2469 = vpop.f32.mrb[0].mxu0
  %2470 = vmatprep.mubr.f32.mxu0 0.0
  %2471 = vmatmul.mubr.f32.gmra.mrb[0].mxu0 %v2359
  %v2472 = vpop.f32.mrb[0].mxu0
  %v2473 = vadd.f32 0.0, %v2472
  %v2474 = vpop.f32.mrb[0].mxu0
  %2475 = vdwg.mxu0
  %v2476 = vmax.f32 %v2155, %v2428
  %v2477 = vmax.f32 %v2156, %v2433
  %v2478 = vmax.f32 %v2157, %v2438
  %v2479 = vmax.f32 %v2158, %v2443
  %v2480 = vmax.f32 %v2159, %v2448
  %v2481 = vmax.f32 %v2160, %v2453
  %v2482 = vmax.f32 %v2161, %v2458
  %v2483 = vmax.f32 %v2162, %v2463
  %v2484 = vmax.f32 %v2163, %v2468
  %v2485 = vmax.f32 %v2164, %v2473
  %2486 = vmatprep.subr.mxu0 0.0
  %2487 = vmatpush1.msra.mxu0 %v2034
  %2488 = vmatprep.subr.mxu0 0.0
  %2489 = vmatpush1.msra.mxu0 %v2035
  %2490 = vmatprep.subr.mxu0 0.0
  %2491 = vmatpush1.msra.mxu0 %v2038
  %2492 = vmatprep.subr.mxu0 0.0
  %2493 = vmatpush1.msra.mxu0 0.0
  %2494 = vmatprep.subr.mxu0 0.0
  %2495 = vmatpush1.msra.mxu0 0.0
  %2496 = vmatprep.subr.mxu0 0.0
  %2497 = vmatpush1.msra.mxu0 0.0
  %2498 = vmatprep.subr.mxu0 0.0
  %2499 = vmatpush1.msra.mxu0 0.0
  %2500 = vmatprep.subr.mxu0 0.0
  %2501 = vmatpush1.msra.mxu0 0.0
  %2502 = vmatprep.subr.mxu0 0.0
  %2503 = vmatpush1.msra.mxu0 0.0
  %2504 = vmatprep.subr.mxu0 0.0
  %2505 = vmatpush1.msra.mxu0 0.0
  %2506 = vmatprep.subr.mxu0 0.0
  %2507 = vmatpush1.msra.mxu0 0.0
  %2508 = vmatprep.subr.mxu0 0.0
  %2509 = vmatpush1.msra.mxu0 0.0
  %2510 = vmatprep.subr.mxu0 0.0
  %2511 = vmatpush1.msra.mxu0 0.0
  %2512 = vmatprep.subr.mxu0 0.0
  %2513 = vmatpush1.msra.mxu0 0.0
  %2514 = vmatprep.subr.mxu0 0.0
  %2515 = vmatpush1.msra.mxu0 0.0
  %2516 = vmatprep.subr.mxu0 0.0
  %2517 = vmatpush1.msra.mxu0 0.0
  %2518 = vmatprep.subr.mxu0 0.0
  %2519 = vmatpush1.msra.mxu0 0.0
  %2520 = vmatprep.subr.mxu0 0.0
  %2521 = vmatpush1.msra.mxu0 0.0
  %2522 = vmatprep.subr.mxu0 0.0
  %2523 = vmatpush1.msra.mxu0 0.0
  %2524 = vmatprep.subr.mxu0 0.0
  %2525 = vmatpush1.msra.mxu0 0.0
  %2526 = vmatprep.subr.mxu0 0.0
  %2527 = vmatpush1.msra.mxu0 0.0
  %2528 = vmatprep.subr.mxu0 0.0
  %2529 = vmatpush1.msra.mxu0 0.0
  %2530 = vmatprep.subr.mxu0 0.0
  %2531 = vmatpush1.msra.mxu0 0.0
  %2532 = vmatprep.subr.mxu0 0.0
  %2533 = vmatpush1.msra.mxu0 0.0
  %2534 = vmatprep.subr.mxu0 0.0
  %2535 = vmatpush1.msra.mxu0 0.0
  %2536 = vmatprep.subr.mxu0 0.0
  %2537 = vmatpush1.msra.mxu0 0.0
  %2538 = vmatprep.subr.mxu0 0.0
  %2539 = vmatpush1.msra.mxu0 0.0
  %2540 = vmatprep.subr.mxu0 0.0
  %2541 = vmatpush1.msra.mxu0 0.0
  %2542 = vmatprep.subr.mxu0 0.0
  %2543 = vmatpush1.msra.mxu0 0.0
  %2544 = vmatprep.subr.mxu0 0.0
  %2545 = vmatpush1.msra.mxu0 0.0
  %2546 = vmatprep.subr.mxu0 0.0
  %2547 = vmatpush1.msra.mxu0 0.0
  %2548 = vmatprep.subr.mxu0 0.0
  %2549 = vmatpush1.msra.mxu0 0.0
  %2550 = vmatprep.mubr.f32.mxu0 0.0
  %2551 = vmatmul.mubr.f32.gmra.mrb[0].mxu0 %v2332
  %v2552 = vpop.f32.mrb[0].mxu0
  %v2553 = vadd.f32 0.0, %v2552
  %v2554 = vpop.f32.mrb[0].mxu0
  %2555 = vmatprep.mubr.f32.mxu0 0.0
  %2556 = vmatmul.mubr.f32.gmra.mrb[0].mxu0 %v2335
  %v2557 = vpop.f32.mrb[0].mxu0
  %v2558 = vadd.f32 0.0, %v2557
  %v2559 = vpop.f32.mrb[0].mxu0
  %2560 = vmatprep.mubr.f32.mxu0 0.0
  %2561 = vmatmul.mubr.f32.gmra.mrb[0].mxu0 %v2338
  %v2562 = vpop.f32.mrb[0].mxu0
  %v2563 = vadd.f32 0.0, %v2562
  %v2564 = vpop.f32.mrb[0].mxu0
  %2565 = vmatprep.mubr.f32.mxu0 0.0
  %2566 = vmatmul.mubr.f32.gmra.mrb[0].mxu0 %v2341
  %v2567 = vpop.f32.mrb[0].mxu0
  %v2568 = vadd.f32 0.0, %v2567
  %v2569 = vpop.f32.mrb[0].mxu0
  %2570 = vmatprep.mubr.f32.mxu0 0.0
  %2571 = vmatmul.mubr.f32.gmra.mrb[0].mxu0 %v2344
  %v2572 = vpop.f32.mrb[0].mxu0
  %v2573 = vadd.f32 0.0, %v2572
  %v2574 = vpop.f32.mrb[0].mxu0
  %2575 = vmatprep.mubr.f32.mxu0 0.0
  %2576 = vmatmul.mubr.f32.gmra.mrb[0].mxu0 %v2347
  %v2577 = vpop.f32.mrb[0].mxu0
  %v2578 = vadd.f32 0.0, %v2577
  %v2579 = vpop.f32.mrb[0].mxu0
  %2580 = vmatprep.mubr.f32.mxu0 0.0
  %2581 = vmatmul.mubr.f32.gmra.mrb[0].mxu0 %v2350
  %v2582 = vpop.f32.mrb[0].mxu0
  %v2583 = vadd.f32 0.0, %v2582
  %v2584 = vpop.f32.mrb[0].mxu0
  %2585 = vmatprep.mubr.f32.mxu0 0.0
  %2586 = vmatmul.mubr.f32.gmra.mrb[0].mxu0 %v2353
  %v2587 = vpop.f32.mrb[0].mxu0
  %v2588 = vadd.f32 0.0, %v2587
  %v2589 = vpop.f32.mrb[0].mxu0
  %2590 = vmatprep.mubr.f32.mxu0 0.0
  %2591 = vmatmul.mubr.f32.gmra.mrb[0].mxu0 %v2356
  %v2592 = vpop.f32.mrb[0].mxu0
  %v2593 = vadd.f32 0.0, %v2592
  %v2594 = vpop.f32.mrb[0].mxu0
  %2595 = vmatprep.mubr.f32.mxu0 0.0
  %2596 = vmatmul.mubr.f32.gmra.mrb[0].mxu0 %v2359
  %v2597 = vpop.f32.mrb[0].mxu0
  %v2598 = vadd.f32 0.0, %v2597
  %v2599 = vpop.f32.mrb[0].mxu0
  %2600 = vdwg.mxu0
  %v2601 = vmax.f32 %v2476, %v2553
  %v2602 = vmax.f32 %v2477, %v2558
  %v2603 = vmax.f32 %v2478, %v2563
  %v2604 = vmax.f32 %v2479, %v2568
  %v2605 = vmax.f32 %v2480, %v2573
  %v2606 = vmax.f32 %v2481, %v2578
  %v2607 = vmax.f32 %v2482, %v2583
  %v2608 = vmax.f32 %v2483, %v2588
  %v2609 = vmax.f32 %v2484, %v2593
  %v2610 = vmax.f32 %v2485, %v2598
  %v2611 = vld [vmem:[%s6] sm:$0xff]
  %v2612 = vld [vmem:[%s6 + $0x8] sm:$0xff]
  %v2613 = vld [vmem:[%s6 + $0x10] sm:$0xff]
  %vm2614 = vcmask 654336
  %v2616 = vsel %vm2614, %v2611, 0
  %v2619 = vsel %vm2614, %v2612, 0
  %v2622 = vsel %vm2614, %v2613, 0
  %2624 = vmatprep.subr.mxu0 0.0
  %2625 = vmatpush1.msra.mxu0 %v2601
  %2626 = vmatprep.subr.mxu0 0.0
  %2627 = vmatpush1.msra.mxu0 %v2602
  %2628 = vmatprep.subr.mxu0 0.0
  %2629 = vmatpush1.msra.mxu0 %v2603
  %2630 = vmatprep.subr.mxu0 0.0
  %2631 = vmatpush1.msra.mxu0 %v2604
  %2632 = vmatprep.subr.mxu0 0.0
  %2633 = vmatpush1.msra.mxu0 %v2605
  %2634 = vmatprep.subr.mxu0 0.0
  %2635 = vmatpush1.msra.mxu0 %v2606
  %2636 = vmatprep.subr.mxu0 0.0
  %2637 = vmatpush1.msra.mxu0 %v2607
  %2638 = vmatprep.subr.mxu0 0.0
  %2639 = vmatpush1.msra.mxu0 %v2608
  %2640 = vmatprep.subr.mxu0 0.0
  %2641 = vmatpush1.msra.mxu0 %v2609
  %2642 = vmatprep.subr.mxu0 0.0
  %2643 = vmatpush1.msra.mxu0 %v2610
  %2644 = vmatprep.subr.mxu0 0.0
  %2645 = vmatpush1.msra.mxu0 0.0
  %2646 = vmatprep.subr.mxu0 0.0
  %2647 = vmatpush1.msra.mxu0 0.0
  %2648 = vmatprep.subr.mxu0 0.0
  %2649 = vmatpush1.msra.mxu0 0.0
  %2650 = vmatprep.subr.mxu0 0.0
  %2651 = vmatpush1.msra.mxu0 0.0
  %2652 = vmatprep.subr.mxu0 0.0
  %2653 = vmatpush1.msra.mxu0 0.0
  %2654 = vmatprep.subr.mxu0 0.0
  %2655 = vmatpush1.msra.mxu0 0.0
  %2656 = vmatprep.subr.mxu0 0.0
  %2657 = vmatpush1.msra.mxu0 0.0
  %2658 = vmatprep.subr.mxu0 0.0
  %2659 = vmatpush1.msra.mxu0 0.0
  %2660 = vmatprep.subr.mxu0 0.0
  %2661 = vmatpush1.msra.mxu0 0.0
  %2662 = vmatprep.subr.mxu0 0.0
  %2663 = vmatpush1.msra.mxu0 0.0
  %2664 = vmatprep.subr.mxu0 0.0
  %2665 = vmatpush1.msra.mxu0 0.0
  %2666 = vmatprep.subr.mxu0 0.0
  %2667 = vmatpush1.msra.mxu0 0.0
  %2668 = vmatprep.subr.mxu0 0.0
  %2669 = vmatpush1.msra.mxu0 0.0
  %2670 = vmatprep.subr.mxu0 0.0
  %2671 = vmatpush1.msra.mxu0 0.0
  %2672 = vmatprep.subr.mxu0 0.0
  %2673 = vmatpush1.msra.mxu0 0.0
  %2674 = vmatprep.subr.mxu0 0.0
  %2675 = vmatpush1.msra.mxu0 0.0
  %2676 = vmatprep.subr.mxu0 0.0
  %2677 = vmatpush1.msra.mxu0 0.0
  %2678 = vmatprep.subr.mxu0 0.0
  %2679 = vmatpush1.msra.mxu0 0.0
  %2680 = vmatprep.subr.mxu0 0.0
  %2681 = vmatpush1.msra.mxu0 0.0
  %2682 = vmatprep.subr.mxu0 0.0
  %2683 = vmatpush1.msra.mxu0 0.0
  %2684 = vmatprep.subr.mxu0 0.0
  %2685 = vmatpush1.msra.mxu0 0.0
  %2686 = vmatprep.subr.mxu0 0.0
  %2687 = vmatpush1.msra.mxu0 0.0
  %2688 = vmatprep.mubr.f32.mxu0 0.0
  %2689 = vmatmul.mubr.f32.gmra.mrb[0].mxu0 %v2616
  %v2690 = vpop.f32.mrb[0].mxu0
  %v2691 = vadd.f32 0.0, %v2690
  %v2692 = vpop.f32.mrb[0].mxu0
  %2693 = vmatprep.mubr.f32.mxu0 0.0
  %2694 = vmatmul.mubr.f32.gmra.mrb[0].mxu0 %v2619
  %v2695 = vpop.f32.mrb[0].mxu0
  %v2696 = vadd.f32 0.0, %v2695
  %v2697 = vpop.f32.mrb[0].mxu0
  %2698 = vmatprep.mubr.f32.mxu0 0.0
  %2699 = vmatmul.mubr.f32.gmra.mrb[0].mxu0 %v2622
  %v2700 = vpop.f32.mrb[0].mxu0
  %v2701 = vadd.f32 0.0, %v2700
  %v2702 = vpop.f32.mrb[0].mxu0
  %2703 = vdwg.mxu0
  %v2704 = vld [vmem:[%s7] sm:$0xff]
  %v2705 = vld [vmem:[%s7 + $0x8] sm:$0x3]
  %s2706 = scalar_lea.vmem %s6, 24
  %v2707 = vld [vmem:[%s2706] sm:$0xff]
  %v2708 = vld [vmem:[%s2706 + $0x8] sm:$0xff]
  %v2709 = vld [vmem:[%s2706 + $0x10] sm:$0xff]
  %v2711 = vsel %vm2614, %v2707, 0
  %v2714 = vsel %vm2614, %v2708, 0
  %v2717 = vsel %vm2614, %v2709, 0
  %2719 = vmatprep.subr.mxu0 0.0
  %2720 = vmatpush1.msra.mxu0 %v2601
  %2721 = vmatprep.subr.mxu0 0.0
  %2722 = vmatpush1.msra.mxu0 %v2602
  %2723 = vmatprep.subr.mxu0 0.0
  %2724 = vmatpush1.msra.mxu0 %v2603
  %2725 = vmatprep.subr.mxu0 0.0
  %2726 = vmatpush1.msra.mxu0 %v2604
  %2727 = vmatprep.subr.mxu0 0.0
  %2728 = vmatpush1.msra.mxu0 %v2605
  %2729 = vmatprep.subr.mxu0 0.0
  %2730 = vmatpush1.msra.mxu0 %v2606
  %2731 = vmatprep.subr.mxu0 0.0
  %2732 = vmatpush1.msra.mxu0 %v2607
  %2733 = vmatprep.subr.mxu0 0.0
  %2734 = vmatpush1.msra.mxu0 %v2608
  %2735 = vmatprep.subr.mxu0 0.0
  %2736 = vmatpush1.msra.mxu0 %v2609
  %2737 = vmatprep.subr.mxu0 0.0
  %2738 = vmatpush1.msra.mxu0 %v2610
  %2739 = vmatprep.subr.mxu0 0.0
  %2740 = vmatpush1.msra.mxu0 0.0
  %2741 = vmatprep.subr.mxu0 0.0
  %2742 = vmatpush1.msra.mxu0 0.0
  %2743 = vmatprep.subr.mxu0 0.0
  %2744 = vmatpush1.msra.mxu0 0.0
  %2745 = vmatprep.subr.mxu0 0.0
  %2746 = vmatpush1.msra.mxu0 0.0
  %2747 = vmatprep.subr.mxu0 0.0
  %2748 = vmatpush1.msra.mxu0 0.0
  %2749 = vmatprep.subr.mxu0 0.0
  %2750 = vmatpush1.msra.mxu0 0.0
  %2751 = vmatprep.subr.mxu0 0.0
  %2752 = vmatpush1.msra.mxu0 0.0
  %2753 = vmatprep.subr.mxu0 0.0
  %2754 = vmatpush1.msra.mxu0 0.0
  %2755 = vmatprep.subr.mxu0 0.0
  %2756 = vmatpush1.msra.mxu0 0.0
  %2757 = vmatprep.subr.mxu0 0.0
  %2758 = vmatpush1.msra.mxu0 0.0
  %2759 = vmatprep.subr.mxu0 0.0
  %2760 = vmatpush1.msra.mxu0 0.0
  %2761 = vmatprep.subr.mxu0 0.0
  %2762 = vmatpush1.msra.mxu0 0.0
  %2763 = vmatprep.subr.mxu0 0.0
  %2764 = vmatpush1.msra.mxu0 0.0
  %2765 = vmatprep.subr.mxu0 0.0
  %2766 = vmatpush1.msra.mxu0 0.0
  %2767 = vmatprep.subr.mxu0 0.0
  %2768 = vmatpush1.msra.mxu0 0.0
  %2769 = vmatprep.subr.mxu0 0.0
  %2770 = vmatpush1.msra.mxu0 0.0
  %2771 = vmatprep.subr.mxu0 0.0
  %2772 = vmatpush1.msra.mxu0 0.0
  %2773 = vmatprep.subr.mxu0 0.0
  %2774 = vmatpush1.msra.mxu0 0.0
  %2775 = vmatprep.subr.mxu0 0.0
  %2776 = vmatpush1.msra.mxu0 0.0
  %2777 = vmatprep.subr.mxu0 0.0
  %2778 = vmatpush1.msra.mxu0 0.0
  %2779 = vmatprep.subr.mxu0 0.0
  %2780 = vmatpush1.msra.mxu0 0.0
  %2781 = vmatprep.subr.mxu0 0.0
  %2782 = vmatpush1.msra.mxu0 0.0
  %2783 = vmatprep.mubr.f32.mxu0 0.0
  %2784 = vmatmul.mubr.f32.gmra.mrb[0].mxu0 %v2711
  %v2785 = vpop.f32.mrb[0].mxu0
  %v2786 = vadd.f32 0.0, %v2785
  %v2787 = vpop.f32.mrb[0].mxu0
  %2788 = vmatprep.mubr.f32.mxu0 0.0
  %2789 = vmatmul.mubr.f32.gmra.mrb[0].mxu0 %v2714
  %v2790 = vpop.f32.mrb[0].mxu0
  %v2791 = vadd.f32 0.0, %v2790
  %v2792 = vpop.f32.mrb[0].mxu0
  %2793 = vmatprep.mubr.f32.mxu0 0.0
  %2794 = vmatmul.mubr.f32.gmra.mrb[0].mxu0 %v2717
  %v2795 = vpop.f32.mrb[0].mxu0
  %v2796 = vadd.f32 0.0, %v2795
  %v2797 = vpop.f32.mrb[0].mxu0
  %2798 = vdwg.mxu0
  %s2799 = scalar_lea.vmem %s7, 16
  %v2800 = vld [vmem:[%s2799] sm:$0xff]
  %v2801 = vld [vmem:[%s2799 + $0x8] sm:$0x3]
  %vm2802 = vcmask 80896
  %v2804 = vsel %vm2802, %v2786, 0
  %v2807 = vsel %vm2802, %v2791, 0
  %v2810 = vsel %vm2802, %v2796, 0
  %vm2812 = vcmask 1041408
  %v2814 = vsel %vm2812, %v2801, 0
  %2816 = vmatprep.subr.mxu0 0.0
  %2817 = vmatpush1.msra.mxu0 %v2800
  %2818 = vmatprep.subr.mxu0 0.0
  %2819 = vmatpush1.msra.mxu0 %v2814
  %2820 = vmatprep.subr.mxu0 0.0
  %2821 = vmatpush1.msra.mxu0 0.0
  %2822 = vmatprep.subr.mxu0 0.0
  %2823 = vmatpush1.msra.mxu0 0.0
  %2824 = vmatprep.subr.mxu0 0.0
  %2825 = vmatpush1.msra.mxu0 0.0
  %2826 = vmatprep.subr.mxu0 0.0
  %2827 = vmatpush1.msra.mxu0 0.0
  %2828 = vmatprep.subr.mxu0 0.0
  %2829 = vmatpush1.msra.mxu0 0.0
  %2830 = vmatprep.subr.mxu0 0.0
  %2831 = vmatpush1.msra.mxu0 0.0
  %2832 = vmatprep.subr.mxu0 0.0
  %2833 = vmatpush1.msra.mxu0 0.0
  %2834 = vmatprep.subr.mxu0 0.0
  %2835 = vmatpush1.msra.mxu0 0.0
  %2836 = vmatprep.subr.mxu0 0.0
  %2837 = vmatpush1.msra.mxu0 0.0
  %2838 = vmatprep.subr.mxu0 0.0
  %2839 = vmatpush1.msra.mxu0 0.0
  %2840 = vmatprep.subr.mxu0 0.0
  %2841 = vmatpush1.msra.mxu0 0.0
  %2842 = vmatprep.subr.mxu0 0.0
  %2843 = vmatpush1.msra.mxu0 0.0
  %2844 = vmatprep.subr.mxu0 0.0
  %2845 = vmatpush1.msra.mxu0 0.0
  %2846 = vmatprep.subr.mxu0 0.0
  %2847 = vmatpush1.msra.mxu0 0.0
  %2848 = vmatprep.subr.mxu0 0.0
  %2849 = vmatpush1.msra.mxu0 0.0
  %2850 = vmatprep.subr.mxu0 0.0
  %2851 = vmatpush1.msra.mxu0 0.0
  %2852 = vmatprep.subr.mxu0 0.0
  %2853 = vmatpush1.msra.mxu0 0.0
  %2854 = vmatprep.subr.mxu0 0.0
  %2855 = vmatpush1.msra.mxu0 0.0
  %2856 = vmatprep.subr.mxu0 0.0
  %2857 = vmatpush1.msra.mxu0 0.0
  %2858 = vmatprep.subr.mxu0 0.0
  %2859 = vmatpush1.msra.mxu0 0.0
  %2860 = vmatprep.subr.mxu0 0.0
  %2861 = vmatpush1.msra.mxu0 0.0
  %2862 = vmatprep.subr.mxu0 0.0
  %2863 = vmatpush1.msra.mxu0 0.0
  %2864 = vmatprep.subr.mxu0 0.0
  %2865 = vmatpush1.msra.mxu0 0.0
  %2866 = vmatprep.subr.mxu0 0.0
  %2867 = vmatpush1.msra.mxu0 0.0
  %2868 = vmatprep.subr.mxu0 0.0
  %2869 = vmatpush1.msra.mxu0 0.0
  %2870 = vmatprep.subr.mxu0 0.0
  %2871 = vmatpush1.msra.mxu0 0.0
  %2872 = vmatprep.subr.mxu0 0.0
  %2873 = vmatpush1.msra.mxu0 0.0
  %2874 = vmatprep.subr.mxu0 0.0
  %2875 = vmatpush1.msra.mxu0 0.0
  %2876 = vmatprep.subr.mxu0 0.0
  %2877 = vmatpush1.msra.mxu0 0.0
  %2878 = vmatprep.subr.mxu0 0.0
  %2879 = vmatpush1.msra.mxu0 0.0
  %2880 = vmatprep.mubr.f32.mxu0 0.0
  %2881 = vmatmul.mubr.f32.gmra.mrb[0].mxu0 %v2804
  %v2882 = vpop.f32.mrb[0].mxu0
  %v2883 = vadd.f32 0.0, %v2882
  %v2884 = vpop.f32.mrb[0].mxu0
  %2885 = vmatprep.mubr.f32.mxu0 0.0
  %2886 = vmatmul.mubr.f32.gmra.mrb[0].mxu0 %v2807
  %v2887 = vpop.f32.mrb[0].mxu0
  %v2888 = vadd.f32 0.0, %v2887
  %v2889 = vpop.f32.mrb[0].mxu0
  %2890 = vmatprep.mubr.f32.mxu0 0.0
  %2891 = vmatmul.mubr.f32.gmra.mrb[0].mxu0 %v2810
  %v2892 = vpop.f32.mrb[0].mxu0
  %v2893 = vadd.f32 0.0, %v2892
  %v2894 = vpop.f32.mrb[0].mxu0
  %2895 = vdwg.mxu0
  %v2897 = vsel %vm2802, %v2691, 0
  %v2900 = vsel %vm2802, %v2696, 0
  %v2903 = vsel %vm2802, %v2701, 0
  %v2906 = vsel %vm2812, %v2705, 0
  %2908 = vmatprep.subr.mxu0 0.0
  %2909 = vmatpush1.msra.mxu0 %v2704
  %2910 = vmatprep.subr.mxu0 0.0
  %2911 = vmatpush1.msra.mxu0 %v2906
  %2912 = vmatprep.subr.mxu0 0.0
  %2913 = vmatpush1.msra.mxu0 0.0
  %2914 = vmatprep.subr.mxu0 0.0
  %2915 = vmatpush1.msra.mxu0 0.0
  %2916 = vmatprep.subr.mxu0 0.0
  %2917 = vmatpush1.msra.mxu0 0.0
  %2918 = vmatprep.subr.mxu0 0.0
  %2919 = vmatpush1.msra.mxu0 0.0
  %2920 = vmatprep.subr.mxu0 0.0
  %2921 = vmatpush1.msra.mxu0 0.0
  %2922 = vmatprep.subr.mxu0 0.0
  %2923 = vmatpush1.msra.mxu0 0.0
  %2924 = vmatprep.subr.mxu0 0.0
  %2925 = vmatpush1.msra.mxu0 0.0
  %2926 = vmatprep.subr.mxu0 0.0
  %2927 = vmatpush1.msra.mxu0 0.0
  %2928 = vmatprep.subr.mxu0 0.0
  %2929 = vmatpush1.msra.mxu0 0.0
  %2930 = vmatprep.subr.mxu0 0.0
  %2931 = vmatpush1.msra.mxu0 0.0
  %2932 = vmatprep.subr.mxu0 0.0
  %2933 = vmatpush1.msra.mxu0 0.0
  %2934 = vmatprep.subr.mxu0 0.0
  %2935 = vmatpush1.msra.mxu0 0.0
  %2936 = vmatprep.subr.mxu0 0.0
  %2937 = vmatpush1.msra.mxu0 0.0
  %2938 = vmatprep.subr.mxu0 0.0
  %2939 = vmatpush1.msra.mxu0 0.0
  %2940 = vmatprep.subr.mxu0 0.0
  %2941 = vmatpush1.msra.mxu0 0.0
  %2942 = vmatprep.subr.mxu0 0.0
  %2943 = vmatpush1.msra.mxu0 0.0
  %2944 = vmatprep.subr.mxu0 0.0
  %2945 = vmatpush1.msra.mxu0 0.0
  %2946 = vmatprep.subr.mxu0 0.0
  %2947 = vmatpush1.msra.mxu0 0.0
  %2948 = vmatprep.subr.mxu0 0.0
  %2949 = vmatpush1.msra.mxu0 0.0
  %2950 = vmatprep.subr.mxu0 0.0
  %2951 = vmatpush1.msra.mxu0 0.0
  %2952 = vmatprep.subr.mxu0 0.0
  %2953 = vmatpush1.msra.mxu0 0.0
  %2954 = vmatprep.subr.mxu0 0.0
  %2955 = vmatpush1.msra.mxu0 0.0
  %2956 = vmatprep.subr.mxu0 0.0
  %2957 = vmatpush1.msra.mxu0 0.0
  %2958 = vmatprep.subr.mxu0 0.0
  %2959 = vmatpush1.msra.mxu0 0.0
  %2960 = vmatprep.subr.mxu0 0.0
  %2961 = vmatpush1.msra.mxu0 0.0
  %2962 = vmatprep.subr.mxu0 0.0
  %2963 = vmatpush1.msra.mxu0 0.0
  %2964 = vmatprep.subr.mxu0 0.0
  %2965 = vmatpush1.msra.mxu0 0.0
  %2966 = vmatprep.subr.mxu0 0.0
  %2967 = vmatpush1.msra.mxu0 0.0
  %2968 = vmatprep.subr.mxu0 0.0
  %2969 = vmatpush1.msra.mxu0 0.0
  %2970 = vmatprep.subr.mxu0 0.0
  %2971 = vmatpush1.msra.mxu0 0.0
  %2972 = vmatprep.mubr.f32.mxu0 0.0
  %2973 = vmatmul.mubr.f32.gmra.mrb[0].mxu0 %v2897
  %v2974 = vpop.f32.mrb[0].mxu0
  %v2975 = vadd.f32 %v2883, %v2974
  %v2976 = vpop.f32.mrb[0].mxu0
  %2977 = vmatprep.mubr.f32.mxu0 0.0
  %2978 = vmatmul.mubr.f32.gmra.mrb[0].mxu0 %v2900
  %v2979 = vpop.f32.mrb[0].mxu0
  %v2980 = vadd.f32 %v2888, %v2979
  %v2981 = vpop.f32.mrb[0].mxu0
  %2982 = vmatprep.mubr.f32.mxu0 0.0
  %2983 = vmatmul.mubr.f32.gmra.mrb[0].mxu0 %v2903
  %v2984 = vpop.f32.mrb[0].mxu0
  %v2985 = vadd.f32 %v2893, %v2984
  %v2986 = vpop.f32.mrb[0].mxu0
  %2987 = vdwg.mxu0
  %s2988 = scalar_lea.vmem %s6, 48
  %v2989 = vld [vmem:[%s2988] sm:$0xff]
  %v2990 = vld [vmem:[%s2988 + $0x8] sm:$0xff]
  %v2991 = vld [vmem:[%s2988 + $0x10] sm:$0xff]
  %v2993 = vsel %vm2614, %v2989, 0
  %v2996 = vsel %vm2614, %v2990, 0
  %v2999 = vsel %vm2614, %v2991, 0
  %3001 = vmatprep.subr.mxu0 0.0
  %3002 = vmatpush1.msra.mxu0 %v2601
  %3003 = vmatprep.subr.mxu0 0.0
  %3004 = vmatpush1.msra.mxu0 %v2602
  %3005 = vmatprep.subr.mxu0 0.0
  %3006 = vmatpush1.msra.mxu0 %v2603
  %3007 = vmatprep.subr.mxu0 0.0
  %3008 = vmatpush1.msra.mxu0 %v2604
  %3009 = vmatprep.subr.mxu0 0.0
  %3010 = vmatpush1.msra.mxu0 %v2605
  %3011 = vmatprep.subr.mxu0 0.0
  %3012 = vmatpush1.msra.mxu0 %v2606
  %3013 = vmatprep.subr.mxu0 0.0
  %3014 = vmatpush1.msra.mxu0 %v2607
  %3015 = vmatprep.subr.mxu0 0.0
  %3016 = vmatpush1.msra.mxu0 %v2608
  %3017 = vmatprep.subr.mxu0 0.0
  %3018 = vmatpush1.msra.mxu0 %v2609
  %3019 = vmatprep.subr.mxu0 0.0
  %3020 = vmatpush1.msra.mxu0 %v2610
  %3021 = vmatprep.subr.mxu0 0.0
  %3022 = vmatpush1.msra.mxu0 0.0
  %3023 = vmatprep.subr.mxu0 0.0
  %3024 = vmatpush1.msra.mxu0 0.0
  %3025 = vmatprep.subr.mxu0 0.0
  %3026 = vmatpush1.msra.mxu0 0.0
  %3027 = vmatprep.subr.mxu0 0.0
  %3028 = vmatpush1.msra.mxu0 0.0
  %3029 = vmatprep.subr.mxu0 0.0
  %3030 = vmatpush1.msra.mxu0 0.0
  %3031 = vmatprep.subr.mxu0 0.0
  %3032 = vmatpush1.msra.mxu0 0.0
  %3033 = vmatprep.subr.mxu0 0.0
  %3034 = vmatpush1.msra.mxu0 0.0
  %3035 = vmatprep.subr.mxu0 0.0
  %3036 = vmatpush1.msra.mxu0 0.0
  %3037 = vmatprep.subr.mxu0 0.0
  %3038 = vmatpush1.msra.mxu0 0.0
  %3039 = vmatprep.subr.mxu0 0.0
  %3040 = vmatpush1.msra.mxu0 0.0
  %3041 = vmatprep.subr.mxu0 0.0
  %3042 = vmatpush1.msra.mxu0 0.0
  %3043 = vmatprep.subr.mxu0 0.0
  %3044 = vmatpush1.msra.mxu0 0.0
  %3045 = vmatprep.subr.mxu0 0.0
  %3046 = vmatpush1.msra.mxu0 0.0
  %3047 = vmatprep.subr.mxu0 0.0
  %3048 = vmatpush1.msra.mxu0 0.0
  %3049 = vmatprep.subr.mxu0 0.0
  %3050 = vmatpush1.msra.mxu0 0.0
  %3051 = vmatprep.subr.mxu0 0.0
  %3052 = vmatpush1.msra.mxu0 0.0
  %3053 = vmatprep.subr.mxu0 0.0
  %3054 = vmatpush1.msra.mxu0 0.0
  %3055 = vmatprep.subr.mxu0 0.0
  %3056 = vmatpush1.msra.mxu0 0.0
  %3057 = vmatprep.subr.mxu0 0.0
  %3058 = vmatpush1.msra.mxu0 0.0
  %3059 = vmatprep.subr.mxu0 0.0
  %3060 = vmatpush1.msra.mxu0 0.0
  %3061 = vmatprep.subr.mxu0 0.0
  %3062 = vmatpush1.msra.mxu0 0.0
  %3063 = vmatprep.subr.mxu0 0.0
  %3064 = vmatpush1.msra.mxu0 0.0
  %3065 = vmatprep.mubr.f32.mxu0 0.0
  %3066 = vmatmul.mubr.f32.gmra.mrb[0].mxu0 %v2993
  %v3067 = vpop.f32.mrb[0].mxu0
  %v3068 = vadd.f32 0.0, %v3067
  %v3069 = vpop.f32.mrb[0].mxu0
  %3070 = vmatprep.mubr.f32.mxu0 0.0
  %3071 = vmatmul.mubr.f32.gmra.mrb[0].mxu0 %v2996
  %v3072 = vpop.f32.mrb[0].mxu0
  %v3073 = vadd.f32 0.0, %v3072
  %v3074 = vpop.f32.mrb[0].mxu0
  %3075 = vmatprep.mubr.f32.mxu0 0.0
  %3076 = vmatmul.mubr.f32.gmra.mrb[0].mxu0 %v2999
  %v3077 = vpop.f32.mrb[0].mxu0
  %v3078 = vadd.f32 0.0, %v3077
  %v3079 = vpop.f32.mrb[0].mxu0
  %3080 = vdwg.mxu0
  %s3081 = scalar_lea.vmem %s7, 32
  %v3082 = vld [vmem:[%s3081] sm:$0xff]
  %v3083 = vld [vmem:[%s3081 + $0x8] sm:$0x3]
  %v3085 = vsel %vm2802, %v3068, 0
  %v3088 = vsel %vm2802, %v3073, 0
  %v3091 = vsel %vm2802, %v3078, 0
  %v3094 = vsel %vm2812, %v3083, 0
  %3096 = vmatprep.subr.mxu0 0.0
  %3097 = vmatpush1.msra.mxu0 %v3082
  %3098 = vmatprep.subr.mxu0 0.0
  %3099 = vmatpush1.msra.mxu0 %v3094
  %3100 = vmatprep.subr.mxu0 0.0
  %3101 = vmatpush1.msra.mxu0 0.0
  %3102 = vmatprep.subr.mxu0 0.0
  %3103 = vmatpush1.msra.mxu0 0.0
  %3104 = vmatprep.subr.mxu0 0.0
  %3105 = vmatpush1.msra.mxu0 0.0
  %3106 = vmatprep.subr.mxu0 0.0
  %3107 = vmatpush1.msra.mxu0 0.0
  %3108 = vmatprep.subr.mxu0 0.0
  %3109 = vmatpush1.msra.mxu0 0.0
  %3110 = vmatprep.subr.mxu0 0.0
  %3111 = vmatpush1.msra.mxu0 0.0
  %3112 = vmatprep.subr.mxu0 0.0
  %3113 = vmatpush1.msra.mxu0 0.0
  %3114 = vmatprep.subr.mxu0 0.0
  %3115 = vmatpush1.msra.mxu0 0.0
  %3116 = vmatprep.subr.mxu0 0.0
  %3117 = vmatpush1.msra.mxu0 0.0
  %3118 = vmatprep.subr.mxu0 0.0
  %3119 = vmatpush1.msra.mxu0 0.0
  %3120 = vmatprep.subr.mxu0 0.0
  %3121 = vmatpush1.msra.mxu0 0.0
  %3122 = vmatprep.subr.mxu0 0.0
  %3123 = vmatpush1.msra.mxu0 0.0
  %3124 = vmatprep.subr.mxu0 0.0
  %3125 = vmatpush1.msra.mxu0 0.0
  %3126 = vmatprep.subr.mxu0 0.0
  %3127 = vmatpush1.msra.mxu0 0.0
  %3128 = vmatprep.subr.mxu0 0.0
  %3129 = vmatpush1.msra.mxu0 0.0
  %3130 = vmatprep.subr.mxu0 0.0
  %3131 = vmatpush1.msra.mxu0 0.0
  %3132 = vmatprep.subr.mxu0 0.0
  %3133 = vmatpush1.msra.mxu0 0.0
  %3134 = vmatprep.subr.mxu0 0.0
  %3135 = vmatpush1.msra.mxu0 0.0
  %3136 = vmatprep.subr.mxu0 0.0
  %3137 = vmatpush1.msra.mxu0 0.0
  %3138 = vmatprep.subr.mxu0 0.0
  %3139 = vmatpush1.msra.mxu0 0.0
  %3140 = vmatprep.subr.mxu0 0.0
  %3141 = vmatpush1.msra.mxu0 0.0
  %3142 = vmatprep.subr.mxu0 0.0
  %3143 = vmatpush1.msra.mxu0 0.0
  %3144 = vmatprep.subr.mxu0 0.0
  %3145 = vmatpush1.msra.mxu0 0.0
  %3146 = vmatprep.subr.mxu0 0.0
  %3147 = vmatpush1.msra.mxu0 0.0
  %3148 = vmatprep.subr.mxu0 0.0
  %3149 = vmatpush1.msra.mxu0 0.0
  %3150 = vmatprep.subr.mxu0 0.0
  %3151 = vmatpush1.msra.mxu0 0.0
  %3152 = vmatprep.subr.mxu0 0.0
  %3153 = vmatpush1.msra.mxu0 0.0
  %3154 = vmatprep.subr.mxu0 0.0
  %3155 = vmatpush1.msra.mxu0 0.0
  %3156 = vmatprep.subr.mxu0 0.0
  %3157 = vmatpush1.msra.mxu0 0.0
  %3158 = vmatprep.subr.mxu0 0.0
  %3159 = vmatpush1.msra.mxu0 0.0
  %3160 = vmatprep.mubr.f32.mxu0 0.0
  %3161 = vmatmul.mubr.f32.gmra.mrb[0].mxu0 %v3085
  %v3162 = vpop.f32.mrb[0].mxu0
  %v3163 = vadd.f32 0.0, %v3162
  %v3164 = vpop.f32.mrb[0].mxu0
  %3165 = vmatprep.mubr.f32.mxu0 0.0
  %3166 = vmatmul.mubr.f32.gmra.mrb[0].mxu0 %v3088
  %v3167 = vpop.f32.mrb[0].mxu0
  %v3168 = vadd.f32 0.0, %v3167
  %v3169 = vpop.f32.mrb[0].mxu0
  %3170 = vmatprep.mubr.f32.mxu0 0.0
  %3171 = vmatmul.mubr.f32.gmra.mrb[0].mxu0 %v3091
  %v3172 = vpop.f32.mrb[0].mxu0
  %v3173 = vadd.f32 0.0, %v3172
  %v3174 = vpop.f32.mrb[0].mxu0
  %3175 = vdwg.mxu0
  %v3176 = vadd.f32 %v2975, %v3163
  %v3177 = vadd.f32 %v2980, %v3168
  %v3178 = vadd.f32 %v2985, %v3173
  %v3179 = vld [vmem:[%s8] sm:$0xff]
  %v3180 = vld [vmem:[%s8 + $0x8] sm:$0xff]
  %v3181 = vld [vmem:[%s8 + $0x10] sm:$0xff]
  %3183 = vset.pattern.permute.xlu0 0
  %3184 = vperm.xlu0 %3183, %v3179
  %v3185 = vpop.permute.xlu0 %3184
  %3188 = vset.pattern.permute.xlu0 0
  %3189 = vperm.xlu0 %3188, %v3180
  %v3190 = vpop.permute.xlu0 %3189
  %3193 = vset.pattern.permute.xlu0 0
  %3194 = vperm.xlu0 %3193, %v3181
  %v3195 = vpop.permute.xlu0 %3194
  %v3197 = vadd.f32 %v3176, %v3185
  %v3198 = vadd.f32 %v3177, %v3190
  %v3199 = vadd.f32 %v3178, %v3195
  %v3200 = vmax.f32 %v3197, 0.0
  %v3201 = vmax.f32 %v3198, 0.0
  %v3202 = vmax.f32 %v3199, 0.0
  %v3203 = vld [vmem:[%s9] sm:$0xff]
  %v3204 = vld [vmem:[%s9 + $0x8] sm:$0xff]
  %vm3205 = vcmask 195584
  %v3207 = vsel %vm3205, %v3203, 0
  %v3210 = vsel %vm3205, %v3204, 0
  %3212 = vmatprep.subr.mxu0 0.0
  %3213 = vmatpush1.msra.mxu0 %v3200
  %3214 = vmatprep.subr.mxu0 0.0
  %3215 = vmatpush1.msra.mxu0 %v3201
  %3216 = vmatprep.subr.mxu0 0.0
  %3217 = vmatpush1.msra.mxu0 %v3202
  %3218 = vmatprep.subr.mxu0 0.0
  %3219 = vmatpush1.msra.mxu0 0.0
  %3220 = vmatprep.subr.mxu0 0.0
  %3221 = vmatpush1.msra.mxu0 0.0
  %3222 = vmatprep.subr.mxu0 0.0
  %3223 = vmatpush1.msra.mxu0 0.0
  %3224 = vmatprep.subr.mxu0 0.0
  %3225 = vmatpush1.msra.mxu0 0.0
  %3226 = vmatprep.subr.mxu0 0.0
  %3227 = vmatpush1.msra.mxu0 0.0
  %3228 = vmatprep.subr.mxu0 0.0
  %3229 = vmatpush1.msra.mxu0 0.0
  %3230 = vmatprep.subr.mxu0 0.0
  %3231 = vmatpush1.msra.mxu0 0.0
  %3232 = vmatprep.subr.mxu0 0.0
  %3233 = vmatpush1.msra.mxu0 0.0
  %3234 = vmatprep.subr.mxu0 0.0
  %3235 = vmatpush1.msra.mxu0 0.0
  %3236 = vmatprep.subr.mxu0 0.0
  %3237 = vmatpush1.msra.mxu0 0.0
  %3238 = vmatprep.subr.mxu0 0.0
  %3239 = vmatpush1.msra.mxu0 0.0
  %3240 = vmatprep.subr.mxu0 0.0
  %3241 = vmatpush1.msra.mxu0 0.0
  %3242 = vmatprep.subr.mxu0 0.0
  %3243 = vmatpush1.msra.mxu0 0.0
  %3244 = vmatprep.subr.mxu0 0.0
  %3245 = vmatpush1.msra.mxu0 0.0
  %3246 = vmatprep.subr.mxu0 0.0
  %3247 = vmatpush1.msra.mxu0 0.0
  %3248 = vmatprep.subr.mxu0 0.0
  %3249 = vmatpush1.msra.mxu0 0.0
  %3250 = vmatprep.subr.mxu0 0.0
  %3251 = vmatpush1.msra.mxu0 0.0
  %3252 = vmatprep.subr.mxu0 0.0
  %3253 = vmatpush1.msra.mxu0 0.0
  %3254 = vmatprep.subr.mxu0 0.0
  %3255 = vmatpush1.msra.mxu0 0.0
  %3256 = vmatprep.subr.mxu0 0.0
  %3257 = vmatpush1.msra.mxu0 0.0
  %3258 = vmatprep.subr.mxu0 0.0
  %3259 = vmatpush1.msra.mxu0 0.0
  %3260 = vmatprep.subr.mxu0 0.0
  %3261 = vmatpush1.msra.mxu0 0.0
  %3262 = vmatprep.subr.mxu0 0.0
  %3263 = vmatpush1.msra.mxu0 0.0
  %3264 = vmatprep.subr.mxu0 0.0
  %3265 = vmatpush1.msra.mxu0 0.0
  %3266 = vmatprep.subr.mxu0 0.0
  %3267 = vmatpush1.msra.mxu0 0.0
  %3268 = vmatprep.subr.mxu0 0.0
  %3269 = vmatpush1.msra.mxu0 0.0
  %3270 = vmatprep.subr.mxu0 0.0
  %3271 = vmatpush1.msra.mxu0 0.0
  %3272 = vmatprep.subr.mxu0 0.0
  %3273 = vmatpush1.msra.mxu0 0.0
  %3274 = vmatprep.subr.mxu0 0.0
  %3275 = vmatpush1.msra.mxu0 0.0
  %3276 = vmatprep.mubr.f32.mxu0 0.0
  %3277 = vmatmul.mubr.f32.gmra.mrb[0].mxu0 %v3207
  %v3278 = vpop.f32.mrb[0].mxu0
  %v3279 = vadd.f32 0.0, %v3278
  %v3280 = vpop.f32.mrb[0].mxu0
  %3281 = vmatprep.mubr.f32.mxu0 0.0
  %3282 = vmatmul.mubr.f32.gmra.mrb[0].mxu0 %v3210
  %v3283 = vpop.f32.mrb[0].mxu0
  %v3284 = vadd.f32 0.0, %v3283
  %v3285 = vpop.f32.mrb[0].mxu0
  %3286 = vdwg.mxu0
  %v3287 = vld [vmem:[%s10] sm:$0x3f]
  %vm3288 = vcmask 48128
  %v3290 = vsel %vm3288, %v3279, 0
  %v3293 = vsel %vm3288, %v3284, 0
  %vm3295 = vcmask 1045504
  %v3297 = vsel %vm3295, %v3287, 0
  %3299 = vmatprep.subr.mxu0 0.0
  %3300 = vmatpush1.msra.mxu0 %v3297
  %3301 = vmatprep.subr.mxu0 0.0
  %3302 = vmatpush1.msra.mxu0 0.0
  %3303 = vmatprep.subr.mxu0 0.0
  %3304 = vmatpush1.msra.mxu0 0.0
  %3305 = vmatprep.subr.mxu0 0.0
  %3306 = vmatpush1.msra.mxu0 0.0
  %3307 = vmatprep.subr.mxu0 0.0
  %3308 = vmatpush1.msra.mxu0 0.0
  %3309 = vmatprep.subr.mxu0 0.0
  %3310 = vmatpush1.msra.mxu0 0.0
  %3311 = vmatprep.subr.mxu0 0.0
  %3312 = vmatpush1.msra.mxu0 0.0
  %3313 = vmatprep.subr.mxu0 0.0
  %3314 = vmatpush1.msra.mxu0 0.0
  %3315 = vmatprep.subr.mxu0 0.0
  %3316 = vmatpush1.msra.mxu0 0.0
  %3317 = vmatprep.subr.mxu0 0.0
  %3318 = vmatpush1.msra.mxu0 0.0
  %3319 = vmatprep.subr.mxu0 0.0
  %3320 = vmatpush1.msra.mxu0 0.0
  %3321 = vmatprep.subr.mxu0 0.0
  %3322 = vmatpush1.msra.mxu0 0.0
  %3323 = vmatprep.subr.mxu0 0.0
  %3324 = vmatpush1.msra.mxu0 0.0
  %3325 = vmatprep.subr.mxu0 0.0
  %3326 = vmatpush1.msra.mxu0 0.0
  %3327 = vmatprep.subr.mxu0 0.0
  %3328 = vmatpush1.msra.mxu0 0.0
  %3329 = vmatprep.subr.mxu0 0.0
  %3330 = vmatpush1.msra.mxu0 0.0
  %3331 = vmatprep.subr.mxu0 0.0
  %3332 = vmatpush1.msra.mxu0 0.0
  %3333 = vmatprep.subr.mxu0 0.0
  %3334 = vmatpush1.msra.mxu0 0.0
  %3335 = vmatprep.subr.mxu0 0.0
  %3336 = vmatpush1.msra.mxu0 0.0
  %3337 = vmatprep.subr.mxu0 0.0
  %3338 = vmatpush1.msra.mxu0 0.0
  %3339 = vmatprep.subr.mxu0 0.0
  %3340 = vmatpush1.msra.mxu0 0.0
  %3341 = vmatprep.subr.mxu0 0.0
  %3342 = vmatpush1.msra.mxu0 0.0
  %3343 = vmatprep.subr.mxu0 0.0
  %3344 = vmatpush1.msra.mxu0 0.0
  %3345 = vmatprep.subr.mxu0 0.0
  %3346 = vmatpush1.msra.mxu0 0.0
  %3347 = vmatprep.subr.mxu0 0.0
  %3348 = vmatpush1.msra.mxu0 0.0
  %3349 = vmatprep.subr.mxu0 0.0
  %3350 = vmatpush1.msra.mxu0 0.0
  %3351 = vmatprep.subr.mxu0 0.0
  %3352 = vmatpush1.msra.mxu0 0.0
  %3353 = vmatprep.subr.mxu0 0.0
  %3354 = vmatpush1.msra.mxu0 0.0
  %3355 = vmatprep.subr.mxu0 0.0
  %3356 = vmatpush1.msra.mxu0 0.0
  %3357 = vmatprep.subr.mxu0 0.0
  %3358 = vmatpush1.msra.mxu0 0.0
  %3359 = vmatprep.subr.mxu0 0.0
  %3360 = vmatpush1.msra.mxu0 0.0
  %3361 = vmatprep.subr.mxu0 0.0
  %3362 = vmatpush1.msra.mxu0 0.0
  %3363 = vmatprep.mubr.f32.mxu0 0.0
  %3364 = vmatmul.mubr.f32.gmra.mrb[0].mxu0 %v3290
  %v3365 = vpop.f32.mrb[0].mxu0
  %v3366 = vadd.f32 0.0, %v3365
  %v3367 = vpop.f32.mrb[0].mxu0
  %3368 = vmatprep.mubr.f32.mxu0 0.0
  %3369 = vmatmul.mubr.f32.gmra.mrb[0].mxu0 %v3293
  %v3370 = vpop.f32.mrb[0].mxu0
  %v3371 = vadd.f32 0.0, %v3370
  %v3372 = vpop.f32.mrb[0].mxu0
  %3373 = vdwg.mxu0
  %s3374 = scalar_lea.vmem %s10, 8
  %v3375 = vld [vmem:[%s3374] sm:$0x3f]
  %v3377 = vsel %vm3295, %v3375, 0
  %3379 = vmatprep.subr.mxu0 0.0
  %3380 = vmatpush1.msra.mxu0 %v3377
  %3381 = vmatprep.subr.mxu0 0.0
  %3382 = vmatpush1.msra.mxu0 0.0
  %3383 = vmatprep.subr.mxu0 0.0
  %3384 = vmatpush1.msra.mxu0 0.0
  %3385 = vmatprep.subr.mxu0 0.0
  %3386 = vmatpush1.msra.mxu0 0.0
  %3387 = vmatprep.subr.mxu0 0.0
  %3388 = vmatpush1.msra.mxu0 0.0
  %3389 = vmatprep.subr.mxu0 0.0
  %3390 = vmatpush1.msra.mxu0 0.0
  %3391 = vmatprep.subr.mxu0 0.0
  %3392 = vmatpush1.msra.mxu0 0.0
  %3393 = vmatprep.subr.mxu0 0.0
  %3394 = vmatpush1.msra.mxu0 0.0
  %3395 = vmatprep.subr.mxu0 0.0
  %3396 = vmatpush1.msra.mxu0 0.0
  %3397 = vmatprep.subr.mxu0 0.0
  %3398 = vmatpush1.msra.mxu0 0.0
  %3399 = vmatprep.subr.mxu0 0.0
  %3400 = vmatpush1.msra.mxu0 0.0
  %3401 = vmatprep.subr.mxu0 0.0
  %3402 = vmatpush1.msra.mxu0 0.0
  %3403 = vmatprep.subr.mxu0 0.0
  %3404 = vmatpush1.msra.mxu0 0.0
  %3405 = vmatprep.subr.mxu0 0.0
  %3406 = vmatpush1.msra.mxu0 0.0
  %3407 = vmatprep.subr.mxu0 0.0
  %3408 = vmatpush1.msra.mxu0 0.0
  %3409 = vmatprep.subr.mxu0 0.0
  %3410 = vmatpush1.msra.mxu0 0.0
  %3411 = vmatprep.subr.mxu0 0.0
  %3412 = vmatpush1.msra.mxu0 0.0
  %3413 = vmatprep.subr.mxu0 0.0
  %3414 = vmatpush1.msra.mxu0 0.0
  %3415 = vmatprep.subr.mxu0 0.0
  %3416 = vmatpush1.msra.mxu0 0.0
  %3417 = vmatprep.subr.mxu0 0.0
  %3418 = vmatpush1.msra.mxu0 0.0
  %3419 = vmatprep.subr.mxu0 0.0
  %3420 = vmatpush1.msra.mxu0 0.0
  %3421 = vmatprep.subr.mxu0 0.0
  %3422 = vmatpush1.msra.mxu0 0.0
  %3423 = vmatprep.subr.mxu0 0.0
  %3424 = vmatpush1.msra.mxu0 0.0
  %3425 = vmatprep.subr.mxu0 0.0
  %3426 = vmatpush1.msra.mxu0 0.0
  %3427 = vmatprep.subr.mxu0 0.0
  %3428 = vmatpush1.msra.mxu0 0.0
  %3429 = vmatprep.subr.mxu0 0.0
  %3430 = vmatpush1.msra.mxu0 0.0
  %3431 = vmatprep.subr.mxu0 0.0
  %3432 = vmatpush1.msra.mxu0 0.0
  %3433 = vmatprep.subr.mxu0 0.0
  %3434 = vmatpush1.msra.mxu0 0.0
  %3435 = vmatprep.subr.mxu0 0.0
  %3436 = vmatpush1.msra.mxu0 0.0
  %3437 = vmatprep.subr.mxu0 0.0
  %3438 = vmatpush1.msra.mxu0 0.0
  %3439 = vmatprep.subr.mxu0 0.0
  %3440 = vmatpush1.msra.mxu0 0.0
  %3441 = vmatprep.subr.mxu0 0.0
  %3442 = vmatpush1.msra.mxu0 0.0
  %3443 = vmatprep.mubr.f32.mxu0 0.0
  %3444 = vmatmul.mubr.f32.gmra.mrb[0].mxu0 %v3290
  %v3445 = vpop.f32.mrb[0].mxu0
  %v3446 = vadd.f32 0.0, %v3445
  %v3447 = vpop.f32.mrb[0].mxu0
  %3448 = vmatprep.mubr.f32.mxu0 0.0
  %3449 = vmatmul.mubr.f32.gmra.mrb[0].mxu0 %v3293
  %v3450 = vpop.f32.mrb[0].mxu0
  %v3451 = vadd.f32 0.0, %v3450
  %v3452 = vpop.f32.mrb[0].mxu0
  %3453 = vdwg.mxu0
  %v3454 = vmax.f32 %v3366, %v3446
  %v3455 = vmax.f32 %v3371, %v3451
  %s3456 = scalar_lea.vmem %s9, 16
  %v3457 = vld [vmem:[%s3456] sm:$0xff]
  %v3458 = vld [vmem:[%s3456 + $0x8] sm:$0xff]
  %v3460 = vsel %vm3205, %v3457, 0
  %v3463 = vsel %vm3205, %v3458, 0
  %3465 = vmatprep.subr.mxu0 0.0
  %3466 = vmatpush1.msra.mxu0 %v3200
  %3467 = vmatprep.subr.mxu0 0.0
  %3468 = vmatpush1.msra.mxu0 %v3201
  %3469 = vmatprep.subr.mxu0 0.0
  %3470 = vmatpush1.msra.mxu0 %v3202
  %3471 = vmatprep.subr.mxu0 0.0
  %3472 = vmatpush1.msra.mxu0 0.0
  %3473 = vmatprep.subr.mxu0 0.0
  %3474 = vmatpush1.msra.mxu0 0.0
  %3475 = vmatprep.subr.mxu0 0.0
  %3476 = vmatpush1.msra.mxu0 0.0
  %3477 = vmatprep.subr.mxu0 0.0
  %3478 = vmatpush1.msra.mxu0 0.0
  %3479 = vmatprep.subr.mxu0 0.0
  %3480 = vmatpush1.msra.mxu0 0.0
  %3481 = vmatprep.subr.mxu0 0.0
  %3482 = vmatpush1.msra.mxu0 0.0
  %3483 = vmatprep.subr.mxu0 0.0
  %3484 = vmatpush1.msra.mxu0 0.0
  %3485 = vmatprep.subr.mxu0 0.0
  %3486 = vmatpush1.msra.mxu0 0.0
  %3487 = vmatprep.subr.mxu0 0.0
  %3488 = vmatpush1.msra.mxu0 0.0
  %3489 = vmatprep.subr.mxu0 0.0
  %3490 = vmatpush1.msra.mxu0 0.0
  %3491 = vmatprep.subr.mxu0 0.0
  %3492 = vmatpush1.msra.mxu0 0.0
  %3493 = vmatprep.subr.mxu0 0.0
  %3494 = vmatpush1.msra.mxu0 0.0
  %3495 = vmatprep.subr.mxu0 0.0
  %3496 = vmatpush1.msra.mxu0 0.0
  %3497 = vmatprep.subr.mxu0 0.0
  %3498 = vmatpush1.msra.mxu0 0.0
  %3499 = vmatprep.subr.mxu0 0.0
  %3500 = vmatpush1.msra.mxu0 0.0
  %3501 = vmatprep.subr.mxu0 0.0
  %3502 = vmatpush1.msra.mxu0 0.0
  %3503 = vmatprep.subr.mxu0 0.0
  %3504 = vmatpush1.msra.mxu0 0.0
  %3505 = vmatprep.subr.mxu0 0.0
  %3506 = vmatpush1.msra.mxu0 0.0
  %3507 = vmatprep.subr.mxu0 0.0
  %3508 = vmatpush1.msra.mxu0 0.0
  %3509 = vmatprep.subr.mxu0 0.0
  %3510 = vmatpush1.msra.mxu0 0.0
  %3511 = vmatprep.subr.mxu0 0.0
  %3512 = vmatpush1.msra.mxu0 0.0
  %3513 = vmatprep.subr.mxu0 0.0
  %3514 = vmatpush1.msra.mxu0 0.0
  %3515 = vmatprep.subr.mxu0 0.0
  %3516 = vmatpush1.msra.mxu0 0.0
  %3517 = vmatprep.subr.mxu0 0.0
  %3518 = vmatpush1.msra.mxu0 0.0
  %3519 = vmatprep.subr.mxu0 0.0
  %3520 = vmatpush1.msra.mxu0 0.0
  %3521 = vmatprep.subr.mxu0 0.0
  %3522 = vmatpush1.msra.mxu0 0.0
  %3523 = vmatprep.subr.mxu0 0.0
  %3524 = vmatpush1.msra.mxu0 0.0
  %3525 = vmatprep.subr.mxu0 0.0
  %3526 = vmatpush1.msra.mxu0 0.0
  %3527 = vmatprep.subr.mxu0 0.0
  %3528 = vmatpush1.msra.mxu0 0.0
  %3529 = vmatprep.mubr.f32.mxu0 0.0
  %3530 = vmatmul.mubr.f32.gmra.mrb[0].mxu0 %v3460
  %v3531 = vpop.f32.mrb[0].mxu0
  %v3532 = vadd.f32 0.0, %v3531
  %v3533 = vpop.f32.mrb[0].mxu0
  %3534 = vmatprep.mubr.f32.mxu0 0.0
  %3535 = vmatmul.mubr.f32.gmra.mrb[0].mxu0 %v3463
  %v3536 = vpop.f32.mrb[0].mxu0
  %v3537 = vadd.f32 0.0, %v3536
  %v3538 = vpop.f32.mrb[0].mxu0
  %3539 = vdwg.mxu0
  %v3541 = vsel %vm3288, %v3532, 0
  %v3544 = vsel %vm3288, %v3537, 0
  %3546 = vmatprep.subr.mxu0 0.0
  %3547 = vmatpush1.msra.mxu0 %v3297
  %3548 = vmatprep.subr.mxu0 0.0
  %3549 = vmatpush1.msra.mxu0 0.0
  %3550 = vmatprep.subr.mxu0 0.0
  %3551 = vmatpush1.msra.mxu0 0.0
  %3552 = vmatprep.subr.mxu0 0.0
  %3553 = vmatpush1.msra.mxu0 0.0
  %3554 = vmatprep.subr.mxu0 0.0
  %3555 = vmatpush1.msra.mxu0 0.0
  %3556 = vmatprep.subr.mxu0 0.0
  %3557 = vmatpush1.msra.mxu0 0.0
  %3558 = vmatprep.subr.mxu0 0.0
  %3559 = vmatpush1.msra.mxu0 0.0
  %3560 = vmatprep.subr.mxu0 0.0
  %3561 = vmatpush1.msra.mxu0 0.0
  %3562 = vmatprep.subr.mxu0 0.0
  %3563 = vmatpush1.msra.mxu0 0.0
  %3564 = vmatprep.subr.mxu0 0.0
  %3565 = vmatpush1.msra.mxu0 0.0
  %3566 = vmatprep.subr.mxu0 0.0
  %3567 = vmatpush1.msra.mxu0 0.0
  %3568 = vmatprep.subr.mxu0 0.0
  %3569 = vmatpush1.msra.mxu0 0.0
  %3570 = vmatprep.subr.mxu0 0.0
  %3571 = vmatpush1.msra.mxu0 0.0
  %3572 = vmatprep.subr.mxu0 0.0
  %3573 = vmatpush1.msra.mxu0 0.0
  %3574 = vmatprep.subr.mxu0 0.0
  %3575 = vmatpush1.msra.mxu0 0.0
  %3576 = vmatprep.subr.mxu0 0.0
  %3577 = vmatpush1.msra.mxu0 0.0
  %3578 = vmatprep.subr.mxu0 0.0
  %3579 = vmatpush1.msra.mxu0 0.0
  %3580 = vmatprep.subr.mxu0 0.0
  %3581 = vmatpush1.msra.mxu0 0.0
  %3582 = vmatprep.subr.mxu0 0.0
  %3583 = vmatpush1.msra.mxu0 0.0
  %3584 = vmatprep.subr.mxu0 0.0
  %3585 = vmatpush1.msra.mxu0 0.0
  %3586 = vmatprep.subr.mxu0 0.0
  %3587 = vmatpush1.msra.mxu0 0.0
  %3588 = vmatprep.subr.mxu0 0.0
  %3589 = vmatpush1.msra.mxu0 0.0
  %3590 = vmatprep.subr.mxu0 0.0
  %3591 = vmatpush1.msra.mxu0 0.0
  %3592 = vmatprep.subr.mxu0 0.0
  %3593 = vmatpush1.msra.mxu0 0.0
  %3594 = vmatprep.subr.mxu0 0.0
  %3595 = vmatpush1.msra.mxu0 0.0
  %3596 = vmatprep.subr.mxu0 0.0
  %3597 = vmatpush1.msra.mxu0 0.0
  %3598 = vmatprep.subr.mxu0 0.0
  %3599 = vmatpush1.msra.mxu0 0.0
  %3600 = vmatprep.subr.mxu0 0.0
  %3601 = vmatpush1.msra.mxu0 0.0
  %3602 = vmatprep.subr.mxu0 0.0
  %3603 = vmatpush1.msra.mxu0 0.0
  %3604 = vmatprep.subr.mxu0 0.0
  %3605 = vmatpush1.msra.mxu0 0.0
  %3606 = vmatprep.subr.mxu0 0.0
  %3607 = vmatpush1.msra.mxu0 0.0
  %3608 = vmatprep.subr.mxu0 0.0
  %3609 = vmatpush1.msra.mxu0 0.0
  %3610 = vmatprep.mubr.f32.mxu0 0.0
  %3611 = vmatmul.mubr.f32.gmra.mrb[0].mxu0 %v3541
  %v3612 = vpop.f32.mrb[0].mxu0
  %v3613 = vadd.f32 0.0, %v3612
  %v3614 = vpop.f32.mrb[0].mxu0
  %3615 = vmatprep.mubr.f32.mxu0 0.0
  %3616 = vmatmul.mubr.f32.gmra.mrb[0].mxu0 %v3544
  %v3617 = vpop.f32.mrb[0].mxu0
  %v3618 = vadd.f32 0.0, %v3617
  %v3619 = vpop.f32.mrb[0].mxu0
  %3620 = vdwg.mxu0
  %v3621 = vmax.f32 %v3454, %v3613
  %v3622 = vmax.f32 %v3455, %v3618
  %3623 = vmatprep.subr.mxu0 0.0
  %3624 = vmatpush1.msra.mxu0 %v3377
  %3625 = vmatprep.subr.mxu0 0.0
  %3626 = vmatpush1.msra.mxu0 0.0
  %3627 = vmatprep.subr.mxu0 0.0
  %3628 = vmatpush1.msra.mxu0 0.0
  %3629 = vmatprep.subr.mxu0 0.0
  %3630 = vmatpush1.msra.mxu0 0.0
  %3631 = vmatprep.subr.mxu0 0.0
  %3632 = vmatpush1.msra.mxu0 0.0
  %3633 = vmatprep.subr.mxu0 0.0
  %3634 = vmatpush1.msra.mxu0 0.0
  %3635 = vmatprep.subr.mxu0 0.0
  %3636 = vmatpush1.msra.mxu0 0.0
  %3637 = vmatprep.subr.mxu0 0.0
  %3638 = vmatpush1.msra.mxu0 0.0
  %3639 = vmatprep.subr.mxu0 0.0
  %3640 = vmatpush1.msra.mxu0 0.0
  %3641 = vmatprep.subr.mxu0 0.0
  %3642 = vmatpush1.msra.mxu0 0.0
  %3643 = vmatprep.subr.mxu0 0.0
  %3644 = vmatpush1.msra.mxu0 0.0
  %3645 = vmatprep.subr.mxu0 0.0
  %3646 = vmatpush1.msra.mxu0 0.0
  %3647 = vmatprep.subr.mxu0 0.0
  %3648 = vmatpush1.msra.mxu0 0.0
  %3649 = vmatprep.subr.mxu0 0.0
  %3650 = vmatpush1.msra.mxu0 0.0
  %3651 = vmatprep.subr.mxu0 0.0
  %3652 = vmatpush1.msra.mxu0 0.0
  %3653 = vmatprep.subr.mxu0 0.0
  %3654 = vmatpush1.msra.mxu0 0.0
  %3655 = vmatprep.subr.mxu0 0.0
  %3656 = vmatpush1.msra.mxu0 0.0
  %3657 = vmatprep.subr.mxu0 0.0
  %3658 = vmatpush1.msra.mxu0 0.0
  %3659 = vmatprep.subr.mxu0 0.0
  %3660 = vmatpush1.msra.mxu0 0.0
  %3661 = vmatprep.subr.mxu0 0.0
  %3662 = vmatpush1.msra.mxu0 0.0
  %3663 = vmatprep.subr.mxu0 0.0
  %3664 = vmatpush1.msra.mxu0 0.0
  %3665 = vmatprep.subr.mxu0 0.0
  %3666 = vmatpush1.msra.mxu0 0.0
  %3667 = vmatprep.subr.mxu0 0.0
  %3668 = vmatpush1.msra.mxu0 0.0
  %3669 = vmatprep.subr.mxu0 0.0
  %3670 = vmatpush1.msra.mxu0 0.0
  %3671 = vmatprep.subr.mxu0 0.0
  %3672 = vmatpush1.msra.mxu0 0.0
  %3673 = vmatprep.subr.mxu0 0.0
  %3674 = vmatpush1.msra.mxu0 0.0
  %3675 = vmatprep.subr.mxu0 0.0
  %3676 = vmatpush1.msra.mxu0 0.0
  %3677 = vmatprep.subr.mxu0 0.0
  %3678 = vmatpush1.msra.mxu0 0.0
  %3679 = vmatprep.subr.mxu0 0.0
  %3680 = vmatpush1.msra.mxu0 0.0
  %3681 = vmatprep.subr.mxu0 0.0
  %3682 = vmatpush1.msra.mxu0 0.0
  %3683 = vmatprep.subr.mxu0 0.0
  %3684 = vmatpush1.msra.mxu0 0.0
  %3685 = vmatprep.subr.mxu0 0.0
  %3686 = vmatpush1.msra.mxu0 0.0
  %3687 = vmatprep.mubr.f32.mxu0 0.0
  %3688 = vmatmul.mubr.f32.gmra.mrb[0].mxu0 %v3541
  %v3689 = vpop.f32.mrb[0].mxu0
  %v3690 = vadd.f32 0.0, %v3689
  %v3691 = vpop.f32.mrb[0].mxu0
  %3692 = vmatprep.mubr.f32.mxu0 0.0
  %3693 = vmatmul.mubr.f32.gmra.mrb[0].mxu0 %v3544
  %v3694 = vpop.f32.mrb[0].mxu0
  %v3695 = vadd.f32 0.0, %v3694
  %v3696 = vpop.f32.mrb[0].mxu0
  %3697 = vdwg.mxu0
  %v3698 = vmax.f32 %v3621, %v3690
  %v3699 = vmax.f32 %v3622, %v3695
  %v3700 = vld [vmem:[%s11] sm:$0xff]
  %v3701 = vld [vmem:[%s11 + $0x8] sm:$0xff]
  %v3702 = vld [vmem:[%s11 + $0x10] sm:$0xff]
  %v3703 = vld [vmem:[%s11 + $0x18] sm:$0xff]
  %v3704 = vld [vmem:[%s11 + $0x20] sm:$0xff]
  %v3705 = vld [vmem:[%s11 + $0x28] sm:$0xff]
  %v3706 = vld [vmem:[%s11 + $0x30] sm:$0xff]
  %v3707 = vld [vmem:[%s11 + $0x38] sm:$0xff]
  %v3708 = vld [vmem:[%s11 + $0x40] sm:$0xff]
  %v3709 = vld [vmem:[%s11 + $0x48] sm:$0xff]
  %vm3710 = vcmask 130048
  %v3712 = vsel %vm3710, %v3700, 0
  %v3715 = vsel %vm3710, %v3701, 0
  %v3718 = vsel %vm3710, %v3702, 0
  %v3721 = vsel %vm3710, %v3703, 0
  %v3724 = vsel %vm3710, %v3704, 0
  %v3727 = vsel %vm3710, %v3705, 0
  %v3730 = vsel %vm3710, %v3706, 0
  %v3733 = vsel %vm3710, %v3707, 0
  %v3736 = vsel %vm3710, %v3708, 0
  %v3739 = vsel %vm3710, %v3709, 0
  %3741 = vmatprep.subr.mxu0 0.0
  %3742 = vmatpush1.msra.mxu0 %v3698
  %3743 = vmatprep.subr.mxu0 0.0
  %3744 = vmatpush1.msra.mxu0 %v3699
  %3745 = vmatprep.subr.mxu0 0.0
  %3746 = vmatpush1.msra.mxu0 0.0
  %3747 = vmatprep.subr.mxu0 0.0
  %3748 = vmatpush1.msra.mxu0 0.0
  %3749 = vmatprep.subr.mxu0 0.0
  %3750 = vmatpush1.msra.mxu0 0.0
  %3751 = vmatprep.subr.mxu0 0.0
  %3752 = vmatpush1.msra.mxu0 0.0
  %3753 = vmatprep.subr.mxu0 0.0
  %3754 = vmatpush1.msra.mxu0 0.0
  %3755 = vmatprep.subr.mxu0 0.0
  %3756 = vmatpush1.msra.mxu0 0.0
  %3757 = vmatprep.subr.mxu0 0.0
  %3758 = vmatpush1.msra.mxu0 0.0
  %3759 = vmatprep.subr.mxu0 0.0
  %3760 = vmatpush1.msra.mxu0 0.0
  %3761 = vmatprep.subr.mxu0 0.0
  %3762 = vmatpush1.msra.mxu0 0.0
  %3763 = vmatprep.subr.mxu0 0.0
  %3764 = vmatpush1.msra.mxu0 0.0
  %3765 = vmatprep.subr.mxu0 0.0
  %3766 = vmatpush1.msra.mxu0 0.0
  %3767 = vmatprep.subr.mxu0 0.0
  %3768 = vmatpush1.msra.mxu0 0.0
  %3769 = vmatprep.subr.mxu0 0.0
  %3770 = vmatpush1.msra.mxu0 0.0
  %3771 = vmatprep.subr.mxu0 0.0
  %3772 = vmatpush1.msra.mxu0 0.0
  %3773 = vmatprep.subr.mxu0 0.0
  %3774 = vmatpush1.msra.mxu0 0.0
  %3775 = vmatprep.subr.mxu0 0.0
  %3776 = vmatpush1.msra.mxu0 0.0
  %3777 = vmatprep.subr.mxu0 0.0
  %3778 = vmatpush1.msra.mxu0 0.0
  %3779 = vmatprep.subr.mxu0 0.0
  %3780 = vmatpush1.msra.mxu0 0.0
  %3781 = vmatprep.subr.mxu0 0.0
  %3782 = vmatpush1.msra.mxu0 0.0
  %3783 = vmatprep.subr.mxu0 0.0
  %3784 = vmatpush1.msra.mxu0 0.0
  %3785 = vmatprep.subr.mxu0 0.0
  %3786 = vmatpush1.msra.mxu0 0.0
  %3787 = vmatprep.subr.mxu0 0.0
  %3788 = vmatpush1.msra.mxu0 0.0
  %3789 = vmatprep.subr.mxu0 0.0
  %3790 = vmatpush1.msra.mxu0 0.0
  %3791 = vmatprep.subr.mxu0 0.0
  %3792 = vmatpush1.msra.mxu0 0.0
  %3793 = vmatprep.subr.mxu0 0.0
  %3794 = vmatpush1.msra.mxu0 0.0
  %3795 = vmatprep.subr.mxu0 0.0
  %3796 = vmatpush1.msra.mxu0 0.0
  %3797 = vmatprep.subr.mxu0 0.0
  %3798 = vmatpush1.msra.mxu0 0.0
  %3799 = vmatprep.subr.mxu0 0.0
  %3800 = vmatpush1.msra.mxu0 0.0
  %3801 = vmatprep.subr.mxu0 0.0
  %3802 = vmatpush1.msra.mxu0 0.0
  %3803 = vmatprep.subr.mxu0 0.0
  %3804 = vmatpush1.msra.mxu0 0.0
  %3805 = vmatprep.mubr.f32.mxu0 0.0
  %3806 = vmatmul.mubr.f32.gmra.mrb[0].mxu0 %v3712
  %v3807 = vpop.f32.mrb[0].mxu0
  %v3808 = vadd.f32 0.0, %v3807
  %v3809 = vpop.f32.mrb[0].mxu0
  %3810 = vmatprep.mubr.f32.mxu0 0.0
  %3811 = vmatmul.mubr.f32.gmra.mrb[0].mxu0 %v3715
  %v3812 = vpop.f32.mrb[0].mxu0
  %v3813 = vadd.f32 0.0, %v3812
  %v3814 = vpop.f32.mrb[0].mxu0
  %3815 = vmatprep.mubr.f32.mxu0 0.0
  %3816 = vmatmul.mubr.f32.gmra.mrb[0].mxu0 %v3718
  %v3817 = vpop.f32.mrb[0].mxu0
  %v3818 = vadd.f32 0.0, %v3817
  %v3819 = vpop.f32.mrb[0].mxu0
  %3820 = vmatprep.mubr.f32.mxu0 0.0
  %3821 = vmatmul.mubr.f32.gmra.mrb[0].mxu0 %v3721
  %v3822 = vpop.f32.mrb[0].mxu0
  %v3823 = vadd.f32 0.0, %v3822
  %v3824 = vpop.f32.mrb[0].mxu0
  %3825 = vmatprep.mubr.f32.mxu0 0.0
  %3826 = vmatmul.mubr.f32.gmra.mrb[0].mxu0 %v3724
  %v3827 = vpop.f32.mrb[0].mxu0
  %v3828 = vadd.f32 0.0, %v3827
  %v3829 = vpop.f32.mrb[0].mxu0
  %3830 = vmatprep.mubr.f32.mxu0 0.0
  %3831 = vmatmul.mubr.f32.gmra.mrb[0].mxu0 %v3727
  %v3832 = vpop.f32.mrb[0].mxu0
  %v3833 = vadd.f32 0.0, %v3832
  %v3834 = vpop.f32.mrb[0].mxu0
  %3835 = vmatprep.mubr.f32.mxu0 0.0
  %3836 = vmatmul.mubr.f32.gmra.mrb[0].mxu0 %v3730
  %v3837 = vpop.f32.mrb[0].mxu0
  %v3838 = vadd.f32 0.0, %v3837
  %v3839 = vpop.f32.mrb[0].mxu0
  %3840 = vmatprep.mubr.f32.mxu0 0.0
  %3841 = vmatmul.mubr.f32.gmra.mrb[0].mxu0 %v3733
  %v3842 = vpop.f32.mrb[0].mxu0
  %v3843 = vadd.f32 0.0, %v3842
  %v3844 = vpop.f32.mrb[0].mxu0
  %3845 = vmatprep.mubr.f32.mxu0 0.0
  %3846 = vmatmul.mubr.f32.gmra.mrb[0].mxu0 %v3736
  %v3847 = vpop.f32.mrb[0].mxu0
  %v3848 = vadd.f32 0.0, %v3847
  %v3849 = vpop.f32.mrb[0].mxu0
  %3850 = vmatprep.mubr.f32.mxu0 0.0
  %3851 = vmatmul.mubr.f32.gmra.mrb[0].mxu0 %v3739
  %v3852 = vpop.f32.mrb[0].mxu0
  %v3853 = vadd.f32 0.0, %v3852
  %v3854 = vpop.f32.mrb[0].mxu0
  %3855 = vdwg.mxu0
  %v3856 = vld [vmem:[%s12] sm:$0xf]
  %s3857 = scalar_lea.vmem %s11, 80
  %v3858 = vld [vmem:[%s3857] sm:$0xff]
  %v3859 = vld [vmem:[%s3857 + $0x8] sm:$0xff]
  %v3860 = vld [vmem:[%s3857 + $0x10] sm:$0xff]
  %v3861 = vld [vmem:[%s3857 + $0x18] sm:$0xff]
  %v3862 = vld [vmem:[%s3857 + $0x20] sm:$0xff]
  %v3863 = vld [vmem:[%s3857 + $0x28] sm:$0xff]
  %v3864 = vld [vmem:[%s3857 + $0x30] sm:$0xff]
  %v3865 = vld [vmem:[%s3857 + $0x38] sm:$0xff]
  %v3866 = vld [vmem:[%s3857 + $0x40] sm:$0xff]
  %v3867 = vld [vmem:[%s3857 + $0x48] sm:$0xff]
  %v3869 = vsel %vm3710, %v3858, 0
  %v3872 = vsel %vm3710, %v3859, 0
  %v3875 = vsel %vm3710, %v3860, 0
  %v3878 = vsel %vm3710, %v3861, 0
  %v3881 = vsel %vm3710, %v3862, 0
  %v3884 = vsel %vm3710, %v3863, 0
  %v3887 = vsel %vm3710, %v3864, 0
  %v3890 = vsel %vm3710, %v3865, 0
  %v3893 = vsel %vm3710, %v3866, 0
  %v3896 = vsel %vm3710, %v3867, 0
  %3898 = vmatprep.subr.mxu0 0.0
  %3899 = vmatpush1.msra.mxu0 %v3698
  %3900 = vmatprep.subr.mxu0 0.0
  %3901 = vmatpush1.msra.mxu0 %v3699
  %3902 = vmatprep.subr.mxu0 0.0
  %3903 = vmatpush1.msra.mxu0 0.0
  %3904 = vmatprep.subr.mxu0 0.0
  %3905 = vmatpush1.msra.mxu0 0.0
  %3906 = vmatprep.subr.mxu0 0.0
  %3907 = vmatpush1.msra.mxu0 0.0
  %3908 = vmatprep.subr.mxu0 0.0
  %3909 = vmatpush1.msra.mxu0 0.0
  %3910 = vmatprep.subr.mxu0 0.0
  %3911 = vmatpush1.msra.mxu0 0.0
  %3912 = vmatprep.subr.mxu0 0.0
  %3913 = vmatpush1.msra.mxu0 0.0
  %3914 = vmatprep.subr.mxu0 0.0
  %3915 = vmatpush1.msra.mxu0 0.0
  %3916 = vmatprep.subr.mxu0 0.0
  %3917 = vmatpush1.msra.mxu0 0.0
  %3918 = vmatprep.subr.mxu0 0.0
  %3919 = vmatpush1.msra.mxu0 0.0
  %3920 = vmatprep.subr.mxu0 0.0
  %3921 = vmatpush1.msra.mxu0 0.0
  %3922 = vmatprep.subr.mxu0 0.0
  %3923 = vmatpush1.msra.mxu0 0.0
  %3924 = vmatprep.subr.mxu0 0.0
  %3925 = vmatpush1.msra.mxu0 0.0
  %3926 = vmatprep.subr.mxu0 0.0
  %3927 = vmatpush1.msra.mxu0 0.0
  %3928 = vmatprep.subr.mxu0 0.0
  %3929 = vmatpush1.msra.mxu0 0.0
  %3930 = vmatprep.subr.mxu0 0.0
  %3931 = vmatpush1.msra.mxu0 0.0
  %3932 = vmatprep.subr.mxu0 0.0
  %3933 = vmatpush1.msra.mxu0 0.0
  %3934 = vmatprep.subr.mxu0 0.0
  %3935 = vmatpush1.msra.mxu0 0.0
  %3936 = vmatprep.subr.mxu0 0.0
  %3937 = vmatpush1.msra.mxu0 0.0
  %3938 = vmatprep.subr.mxu0 0.0
  %3939 = vmatpush1.msra.mxu0 0.0
  %3940 = vmatprep.subr.mxu0 0.0
  %3941 = vmatpush1.msra.mxu0 0.0
  %3942 = vmatprep.subr.mxu0 0.0
  %3943 = vmatpush1.msra.mxu0 0.0
  %3944 = vmatprep.subr.mxu0 0.0
  %3945 = vmatpush1.msra.mxu0 0.0
  %3946 = vmatprep.subr.mxu0 0.0
  %3947 = vmatpush1.msra.mxu0 0.0
  %3948 = vmatprep.subr.mxu0 0.0
  %3949 = vmatpush1.msra.mxu0 0.0
  %3950 = vmatprep.subr.mxu0 0.0
  %3951 = vmatpush1.msra.mxu0 0.0
  %3952 = vmatprep.subr.mxu0 0.0
  %3953 = vmatpush1.msra.mxu0 0.0
  %3954 = vmatprep.subr.mxu0 0.0
  %3955 = vmatpush1.msra.mxu0 0.0
  %3956 = vmatprep.subr.mxu0 0.0
  %3957 = vmatpush1.msra.mxu0 0.0
  %3958 = vmatprep.subr.mxu0 0.0
  %3959 = vmatpush1.msra.mxu0 0.0
  %3960 = vmatprep.subr.mxu0 0.0
  %3961 = vmatpush1.msra.mxu0 0.0
  %3962 = vmatprep.mubr.f32.mxu0 0.0
  %3963 = vmatmul.mubr.f32.gmra.mrb[0].mxu0 %v3869
  %v3964 = vpop.f32.mrb[0].mxu0
  %v3965 = vadd.f32 0.0, %v3964
  %v3966 = vpop.f32.mrb[0].mxu0
  %3967 = vmatprep.mubr.f32.mxu0 0.0
  %3968 = vmatmul.mubr.f32.gmra.mrb[0].mxu0 %v3872
  %v3969 = vpop.f32.mrb[0].mxu0
  %v3970 = vadd.f32 0.0, %v3969
  %v3971 = vpop.f32.mrb[0].mxu0
  %3972 = vmatprep.mubr.f32.mxu0 0.0
  %3973 = vmatmul.mubr.f32.gmra.mrb[0].mxu0 %v3875
  %v3974 = vpop.f32.mrb[0].mxu0
  %v3975 = vadd.f32 0.0, %v3974
  %v3976 = vpop.f32.mrb[0].mxu0
  %3977 = vmatprep.mubr.f32.mxu0 0.0
  %3978 = vmatmul.mubr.f32.gmra.mrb[0].mxu0 %v3878
  %v3979 = vpop.f32.mrb[0].mxu0
  %v3980 = vadd.f32 0.0, %v3979
  %v3981 = vpop.f32.mrb[0].mxu0
  %3982 = vmatprep.mubr.f32.mxu0 0.0
  %3983 = vmatmul.mubr.f32.gmra.mrb[0].mxu0 %v3881
  %v3984 = vpop.f32.mrb[0].mxu0
  %v3985 = vadd.f32 0.0, %v3984
  %v3986 = vpop.f32.mrb[0].mxu0
  %3987 = vmatprep.mubr.f32.mxu0 0.0
  %3988 = vmatmul.mubr.f32.gmra.mrb[0].mxu0 %v3884
  %v3989 = vpop.f32.mrb[0].mxu0
  %v3990 = vadd.f32 0.0, %v3989
  %v3991 = vpop.f32.mrb[0].mxu0
  %3992 = vmatprep.mubr.f32.mxu0 0.0
  %3993 = vmatmul.mubr.f32.gmra.mrb[0].mxu0 %v3887
  %v3994 = vpop.f32.mrb[0].mxu0
  %v3995 = vadd.f32 0.0, %v3994
  %v3996 = vpop.f32.mrb[0].mxu0
  %3997 = vmatprep.mubr.f32.mxu0 0.0
  %3998 = vmatmul.mubr.f32.gmra.mrb[0].mxu0 %v3890
  %v3999 = vpop.f32.mrb[0].mxu0
  %v4000 = vadd.f32 0.0, %v3999
  %v4001 = vpop.f32.mrb[0].mxu0
  %4002 = vmatprep.mubr.f32.mxu0 0.0
  %4003 = vmatmul.mubr.f32.gmra.mrb[0].mxu0 %v3893
  %v4004 = vpop.f32.mrb[0].mxu0
  %v4005 = vadd.f32 0.0, %v4004
  %v4006 = vpop.f32.mrb[0].mxu0
  %4007 = vmatprep.mubr.f32.mxu0 0.0
  %4008 = vmatmul.mubr.f32.gmra.mrb[0].mxu0 %v3896
  %v4009 = vpop.f32.mrb[0].mxu0
  %v4010 = vadd.f32 0.0, %v4009
  %v4011 = vpop.f32.mrb[0].mxu0
  %4012 = vdwg.mxu0
  %s4013 = scalar_lea.vmem %s12, 4
  %v4014 = vld [vmem:[%s4013] sm:$0xf]
  %vm4015 = vcmask 31744
  %v4017 = vsel %vm4015, %v3965, 0
  %v4020 = vsel %vm4015, %v3970, 0
  %v4023 = vsel %vm4015, %v3975, 0
  %v4026 = vsel %vm4015, %v3980, 0
  %v4029 = vsel %vm4015, %v3985, 0
  %v4032 = vsel %vm4015, %v3990, 0
  %v4035 = vsel %vm4015, %v3995, 0
  %v4038 = vsel %vm4015, %v4000, 0
  %v4041 = vsel %vm4015, %v4005, 0
  %v4044 = vsel %vm4015, %v4010, 0
  %v4047 = vsel %vm175, %v4014, 0
  %4049 = vmatprep.subr.mxu0 0.0
  %4050 = vmatpush1.msra.mxu0 %v4047
  %4051 = vmatprep.subr.mxu0 0.0
  %4052 = vmatpush1.msra.mxu0 0.0
  %4053 = vmatprep.subr.mxu0 0.0
  %4054 = vmatpush1.msra.mxu0 0.0
  %4055 = vmatprep.subr.mxu0 0.0
  %4056 = vmatpush1.msra.mxu0 0.0
  %4057 = vmatprep.subr.mxu0 0.0
  %4058 = vmatpush1.msra.mxu0 0.0
  %4059 = vmatprep.subr.mxu0 0.0
  %4060 = vmatpush1.msra.mxu0 0.0
  %4061 = vmatprep.subr.mxu0 0.0
  %4062 = vmatpush1.msra.mxu0 0.0
  %4063 = vmatprep.subr.mxu0 0.0
  %4064 = vmatpush1.msra.mxu0 0.0
  %4065 = vmatprep.subr.mxu0 0.0
  %4066 = vmatpush1.msra.mxu0 0.0
  %4067 = vmatprep.subr.mxu0 0.0
  %4068 = vmatpush1.msra.mxu0 0.0
  %4069 = vmatprep.subr.mxu0 0.0
  %4070 = vmatpush1.msra.mxu0 0.0
  %4071 = vmatprep.subr.mxu0 0.0
  %4072 = vmatpush1.msra.mxu0 0.0
  %4073 = vmatprep.subr.mxu0 0.0
  %4074 = vmatpush1.msra.mxu0 0.0
  %4075 = vmatprep.subr.mxu0 0.0
  %4076 = vmatpush1.msra.mxu0 0.0
  %4077 = vmatprep.subr.mxu0 0.0
  %4078 = vmatpush1.msra.mxu0 0.0
  %4079 = vmatprep.subr.mxu0 0.0
  %4080 = vmatpush1.msra.mxu0 0.0
  %4081 = vmatprep.subr.mxu0 0.0
  %4082 = vmatpush1.msra.mxu0 0.0
  %4083 = vmatprep.subr.mxu0 0.0
  %4084 = vmatpush1.msra.mxu0 0.0
  %4085 = vmatprep.subr.mxu0 0.0
  %4086 = vmatpush1.msra.mxu0 0.0
  %4087 = vmatprep.subr.mxu0 0.0
  %4088 = vmatpush1.msra.mxu0 0.0
  %4089 = vmatprep.subr.mxu0 0.0
  %4090 = vmatpush1.msra.mxu0 0.0
  %4091 = vmatprep.subr.mxu0 0.0
  %4092 = vmatpush1.msra.mxu0 0.0
  %4093 = vmatprep.subr.mxu0 0.0
  %4094 = vmatpush1.msra.mxu0 0.0
  %4095 = vmatprep.subr.mxu0 0.0
  %4096 = vmatpush1.msra.mxu0 0.0
  %4097 = vmatprep.subr.mxu0 0.0
  %4098 = vmatpush1.msra.mxu0 0.0
  %4099 = vmatprep.subr.mxu0 0.0
  %4100 = vmatpush1.msra.mxu0 0.0
  %4101 = vmatprep.subr.mxu0 0.0
  %4102 = vmatpush1.msra.mxu0 0.0
  %4103 = vmatprep.subr.mxu0 0.0
  %4104 = vmatpush1.msra.mxu0 0.0
  %4105 = vmatprep.subr.mxu0 0.0
  %4106 = vmatpush1.msra.mxu0 0.0
  %4107 = vmatprep.subr.mxu0 0.0
  %4108 = vmatpush1.msra.mxu0 0.0
  %4109 = vmatprep.subr.mxu0 0.0
  %4110 = vmatpush1.msra.mxu0 0.0
  %4111 = vmatprep.subr.mxu0 0.0
  %4112 = vmatpush1.msra.mxu0 0.0
  %4113 = vmatprep.mubr.f32.mxu0 0.0
  %4114 = vmatmul.mubr.f32.gmra.mrb[0].mxu0 %v4017
  %v4115 = vpop.f32.mrb[0].mxu0
  %v4116 = vadd.f32 0.0, %v4115
  %v4117 = vpop.f32.mrb[0].mxu0
  %4118 = vmatprep.mubr.f32.mxu0 0.0
  %4119 = vmatmul.mubr.f32.gmra.mrb[0].mxu0 %v4020
  %v4120 = vpop.f32.mrb[0].mxu0
  %v4121 = vadd.f32 0.0, %v4120
  %v4122 = vpop.f32.mrb[0].mxu0
  %4123 = vmatprep.mubr.f32.mxu0 0.0
  %4124 = vmatmul.mubr.f32.gmra.mrb[0].mxu0 %v4023
  %v4125 = vpop.f32.mrb[0].mxu0
  %v4126 = vadd.f32 0.0, %v4125
  %v4127 = vpop.f32.mrb[0].mxu0
  %4128 = vmatprep.mubr.f32.mxu0 0.0
  %4129 = vmatmul.mubr.f32.gmra.mrb[0].mxu0 %v4026
  %v4130 = vpop.f32.mrb[0].mxu0
  %v4131 = vadd.f32 0.0, %v4130
  %v4132 = vpop.f32.mrb[0].mxu0
  %4133 = vmatprep.mubr.f32.mxu0 0.0
  %4134 = vmatmul.mubr.f32.gmra.mrb[0].mxu0 %v4029
  %v4135 = vpop.f32.mrb[0].mxu0
  %v4136 = vadd.f32 0.0, %v4135
  %v4137 = vpop.f32.mrb[0].mxu0
  %4138 = vmatprep.mubr.f32.mxu0 0.0
  %4139 = vmatmul.mubr.f32.gmra.mrb[0].mxu0 %v4032
  %v4140 = vpop.f32.mrb[0].mxu0
  %v4141 = vadd.f32 0.0, %v4140
  %v4142 = vpop.f32.mrb[0].mxu0
  %4143 = vmatprep.mubr.f32.mxu0 0.0
  %4144 = vmatmul.mubr.f32.gmra.mrb[0].mxu0 %v4035
  %v4145 = vpop.f32.mrb[0].mxu0
  %v4146 = vadd.f32 0.0, %v4145
  %v4147 = vpop.f32.mrb[0].mxu0
  %4148 = vmatprep.mubr.f32.mxu0 0.0
  %4149 = vmatmul.mubr.f32.gmra.mrb[0].mxu0 %v4038
  %v4150 = vpop.f32.mrb[0].mxu0
  %v4151 = vadd.f32 0.0, %v4150
  %v4152 = vpop.f32.mrb[0].mxu0
  %4153 = vmatprep.mubr.f32.mxu0 0.0
  %4154 = vmatmul.mubr.f32.gmra.mrb[0].mxu0 %v4041
  %v4155 = vpop.f32.mrb[0].mxu0
  %v4156 = vadd.f32 0.0, %v4155
  %v4157 = vpop.f32.mrb[0].mxu0
  %4158 = vmatprep.mubr.f32.mxu0 0.0
  %4159 = vmatmul.mubr.f32.gmra.mrb[0].mxu0 %v4044
  %v4160 = vpop.f32.mrb[0].mxu0
  %v4161 = vadd.f32 0.0, %v4160
  %v4162 = vpop.f32.mrb[0].mxu0
  %4163 = vdwg.mxu0
  %v4165 = vsel %vm4015, %v3808, 0
  %v4168 = vsel %vm4015, %v3813, 0
  %v4171 = vsel %vm4015, %v3818, 0
  %v4174 = vsel %vm4015, %v3823, 0
  %v4177 = vsel %vm4015, %v3828, 0
  %v4180 = vsel %vm4015, %v3833, 0
  %v4183 = vsel %vm4015, %v3838, 0
  %v4186 = vsel %vm4015, %v3843, 0
  %v4189 = vsel %vm4015, %v3848, 0
  %v4192 = vsel %vm4015, %v3853, 0
  %v4195 = vsel %vm175, %v3856, 0
  %4197 = vmatprep.subr.mxu0 0.0
  %4198 = vmatpush1.msra.mxu0 %v4195
  %4199 = vmatprep.subr.mxu0 0.0
  %4200 = vmatpush1.msra.mxu0 0.0
  %4201 = vmatprep.subr.mxu0 0.0
  %4202 = vmatpush1.msra.mxu0 0.0
  %4203 = vmatprep.subr.mxu0 0.0
  %4204 = vmatpush1.msra.mxu0 0.0
  %4205 = vmatprep.subr.mxu0 0.0
  %4206 = vmatpush1.msra.mxu0 0.0
  %4207 = vmatprep.subr.mxu0 0.0
  %4208 = vmatpush1.msra.mxu0 0.0
  %4209 = vmatprep.subr.mxu0 0.0
  %4210 = vmatpush1.msra.mxu0 0.0
  %4211 = vmatprep.subr.mxu0 0.0
  %4212 = vmatpush1.msra.mxu0 0.0
  %4213 = vmatprep.subr.mxu0 0.0
  %4214 = vmatpush1.msra.mxu0 0.0
  %4215 = vmatprep.subr.mxu0 0.0
  %4216 = vmatpush1.msra.mxu0 0.0
  %4217 = vmatprep.subr.mxu0 0.0
  %4218 = vmatpush1.msra.mxu0 0.0
  %4219 = vmatprep.subr.mxu0 0.0
  %4220 = vmatpush1.msra.mxu0 0.0
  %4221 = vmatprep.subr.mxu0 0.0
  %4222 = vmatpush1.msra.mxu0 0.0
  %4223 = vmatprep.subr.mxu0 0.0
  %4224 = vmatpush1.msra.mxu0 0.0
  %4225 = vmatprep.subr.mxu0 0.0
  %4226 = vmatpush1.msra.mxu0 0.0
  %4227 = vmatprep.subr.mxu0 0.0
  %4228 = vmatpush1.msra.mxu0 0.0
  %4229 = vmatprep.subr.mxu0 0.0
  %4230 = vmatpush1.msra.mxu0 0.0
  %4231 = vmatprep.subr.mxu0 0.0
  %4232 = vmatpush1.msra.mxu0 0.0
  %4233 = vmatprep.subr.mxu0 0.0
  %4234 = vmatpush1.msra.mxu0 0.0
  %4235 = vmatprep.subr.mxu0 0.0
  %4236 = vmatpush1.msra.mxu0 0.0
  %4237 = vmatprep.subr.mxu0 0.0
  %4238 = vmatpush1.msra.mxu0 0.0
  %4239 = vmatprep.subr.mxu0 0.0
  %4240 = vmatpush1.msra.mxu0 0.0
  %4241 = vmatprep.subr.mxu0 0.0
  %4242 = vmatpush1.msra.mxu0 0.0
  %4243 = vmatprep.subr.mxu0 0.0
  %4244 = vmatpush1.msra.mxu0 0.0
  %4245 = vmatprep.subr.mxu0 0.0
  %4246 = vmatpush1.msra.mxu0 0.0
  %4247 = vmatprep.subr.mxu0 0.0
  %4248 = vmatpush1.msra.mxu0 0.0
  %4249 = vmatprep.subr.mxu0 0.0
  %4250 = vmatpush1.msra.mxu0 0.0
  %4251 = vmatprep.subr.mxu0 0.0
  %4252 = vmatpush1.msra.mxu0 0.0
  %4253 = vmatprep.subr.mxu0 0.0
  %4254 = vmatpush1.msra.mxu0 0.0
  %4255 = vmatprep.subr.mxu0 0.0
  %4256 = vmatpush1.msra.mxu0 0.0
  %4257 = vmatprep.subr.mxu0 0.0
  %4258 = vmatpush1.msra.mxu0 0.0
  %4259 = vmatprep.subr.mxu0 0.0
  %4260 = vmatpush1.msra.mxu0 0.0
  %4261 = vmatprep.mubr.f32.mxu0 0.0
  %4262 = vmatmul.mubr.f32.gmra.mrb[0].mxu0 %v4165
  %v4263 = vpop.f32.mrb[0].mxu0
  %v4264 = vadd.f32 %v4116, %v4263
  %v4265 = vpop.f32.mrb[0].mxu0
  %4266 = vmatprep.mubr.f32.mxu0 0.0
  %4267 = vmatmul.mubr.f32.gmra.mrb[0].mxu0 %v4168
  %v4268 = vpop.f32.mrb[0].mxu0
  %v4269 = vadd.f32 %v4121, %v4268
  %v4270 = vpop.f32.mrb[0].mxu0
  %4271 = vmatprep.mubr.f32.mxu0 0.0
  %4272 = vmatmul.mubr.f32.gmra.mrb[0].mxu0 %v4171
  %v4273 = vpop.f32.mrb[0].mxu0
  %v4274 = vadd.f32 %v4126, %v4273
  %v4275 = vpop.f32.mrb[0].mxu0
  %4276 = vmatprep.mubr.f32.mxu0 0.0
  %4277 = vmatmul.mubr.f32.gmra.mrb[0].mxu0 %v4174
  %v4278 = vpop.f32.mrb[0].mxu0
  %v4279 = vadd.f32 %v4131, %v4278
  %v4280 = vpop.f32.mrb[0].mxu0
  %4281 = vmatprep.mubr.f32.mxu0 0.0
  %4282 = vmatmul.mubr.f32.gmra.mrb[0].mxu0 %v4177
  %v4283 = vpop.f32.mrb[0].mxu0
  %v4284 = vadd.f32 %v4136, %v4283
  %v4285 = vpop.f32.mrb[0].mxu0
  %4286 = vmatprep.mubr.f32.mxu0 0.0
  %4287 = vmatmul.mubr.f32.gmra.mrb[0].mxu0 %v4180
  %v4288 = vpop.f32.mrb[0].mxu0
  %v4289 = vadd.f32 %v4141, %v4288
  %v4290 = vpop.f32.mrb[0].mxu0
  %4291 = vmatprep.mubr.f32.mxu0 0.0
  %4292 = vmatmul.mubr.f32.gmra.mrb[0].mxu0 %v4183
  %v4293 = vpop.f32.mrb[0].mxu0
  %v4294 = vadd.f32 %v4146, %v4293
  %v4295 = vpop.f32.mrb[0].mxu0
  %4296 = vmatprep.mubr.f32.mxu0 0.0
  %4297 = vmatmul.mubr.f32.gmra.mrb[0].mxu0 %v4186
  %v4298 = vpop.f32.mrb[0].mxu0
  %v4299 = vadd.f32 %v4151, %v4298
  %v4300 = vpop.f32.mrb[0].mxu0
  %4301 = vmatprep.mubr.f32.mxu0 0.0
  %4302 = vmatmul.mubr.f32.gmra.mrb[0].mxu0 %v4189
  %v4303 = vpop.f32.mrb[0].mxu0
  %v4304 = vadd.f32 %v4156, %v4303
  %v4305 = vpop.f32.mrb[0].mxu0
  %4306 = vmatprep.mubr.f32.mxu0 0.0
  %4307 = vmatmul.mubr.f32.gmra.mrb[0].mxu0 %v4192
  %v4308 = vpop.f32.mrb[0].mxu0
  %v4309 = vadd.f32 %v4161, %v4308
  %v4310 = vpop.f32.mrb[0].mxu0
  %4311 = vdwg.mxu0
  %s4312 = scalar_lea.vmem %s11, 160
  %v4313 = vld [vmem:[%s4312] sm:$0xff]
  %v4314 = vld [vmem:[%s4312 + $0x8] sm:$0xff]
  %v4315 = vld [vmem:[%s4312 + $0x10] sm:$0xff]
  %v4316 = vld [vmem:[%s4312 + $0x18] sm:$0xff]
  %v4317 = vld [vmem:[%s4312 + $0x20] sm:$0xff]
  %v4318 = vld [vmem:[%s4312 + $0x28] sm:$0xff]
  %v4319 = vld [vmem:[%s4312 + $0x30] sm:$0xff]
  %v4320 = vld [vmem:[%s4312 + $0x38] sm:$0xff]
  %v4321 = vld [vmem:[%s4312 + $0x40] sm:$0xff]
  %v4322 = vld [vmem:[%s4312 + $0x48] sm:$0xff]
  %v4324 = vsel %vm3710, %v4313, 0
  %v4327 = vsel %vm3710, %v4314, 0
  %v4330 = vsel %vm3710, %v4315, 0
  %v4333 = vsel %vm3710, %v4316, 0
  %v4336 = vsel %vm3710, %v4317, 0
  %v4339 = vsel %vm3710, %v4318, 0
  %v4342 = vsel %vm3710, %v4319, 0
  %v4345 = vsel %vm3710, %v4320, 0
  %v4348 = vsel %vm3710, %v4321, 0
  %v4351 = vsel %vm3710, %v4322, 0
  %4353 = vmatprep.subr.mxu0 0.0
  %4354 = vmatpush1.msra.mxu0 %v3698
  %4355 = vmatprep.subr.mxu0 0.0
  %4356 = vmatpush1.msra.mxu0 %v3699
  %4357 = vmatprep.subr.mxu0 0.0
  %4358 = vmatpush1.msra.mxu0 0.0
  %4359 = vmatprep.subr.mxu0 0.0
  %4360 = vmatpush1.msra.mxu0 0.0
  %4361 = vmatprep.subr.mxu0 0.0
  %4362 = vmatpush1.msra.mxu0 0.0
  %4363 = vmatprep.subr.mxu0 0.0
  %4364 = vmatpush1.msra.mxu0 0.0
  %4365 = vmatprep.subr.mxu0 0.0
  %4366 = vmatpush1.msra.mxu0 0.0
  %4367 = vmatprep.subr.mxu0 0.0
  %4368 = vmatpush1.msra.mxu0 0.0
  %4369 = vmatprep.subr.mxu0 0.0
  %4370 = vmatpush1.msra.mxu0 0.0
  %4371 = vmatprep.subr.mxu0 0.0
  %4372 = vmatpush1.msra.mxu0 0.0
  %4373 = vmatprep.subr.mxu0 0.0
  %4374 = vmatpush1.msra.mxu0 0.0
  %4375 = vmatprep.subr.mxu0 0.0
  %4376 = vmatpush1.msra.mxu0 0.0
  %4377 = vmatprep.subr.mxu0 0.0
  %4378 = vmatpush1.msra.mxu0 0.0
  %4379 = vmatprep.subr.mxu0 0.0
  %4380 = vmatpush1.msra.mxu0 0.0
  %4381 = vmatprep.subr.mxu0 0.0
  %4382 = vmatpush1.msra.mxu0 0.0
  %4383 = vmatprep.subr.mxu0 0.0
  %4384 = vmatpush1.msra.mxu0 0.0
  %4385 = vmatprep.subr.mxu0 0.0
  %4386 = vmatpush1.msra.mxu0 0.0
  %4387 = vmatprep.subr.mxu0 0.0
  %4388 = vmatpush1.msra.mxu0 0.0
  %4389 = vmatprep.subr.mxu0 0.0
  %4390 = vmatpush1.msra.mxu0 0.0
  %4391 = vmatprep.subr.mxu0 0.0
  %4392 = vmatpush1.msra.mxu0 0.0
  %4393 = vmatprep.subr.mxu0 0.0
  %4394 = vmatpush1.msra.mxu0 0.0
  %4395 = vmatprep.subr.mxu0 0.0
  %4396 = vmatpush1.msra.mxu0 0.0
  %4397 = vmatprep.subr.mxu0 0.0
  %4398 = vmatpush1.msra.mxu0 0.0
  %4399 = vmatprep.subr.mxu0 0.0
  %4400 = vmatpush1.msra.mxu0 0.0
  %4401 = vmatprep.subr.mxu0 0.0
  %4402 = vmatpush1.msra.mxu0 0.0
  %4403 = vmatprep.subr.mxu0 0.0
  %4404 = vmatpush1.msra.mxu0 0.0
  %4405 = vmatprep.subr.mxu0 0.0
  %4406 = vmatpush1.msra.mxu0 0.0
  %4407 = vmatprep.subr.mxu0 0.0
  %4408 = vmatpush1.msra.mxu0 0.0
  %4409 = vmatprep.subr.mxu0 0.0
  %4410 = vmatpush1.msra.mxu0 0.0
  %4411 = vmatprep.subr.mxu0 0.0
  %4412 = vmatpush1.msra.mxu0 0.0
  %4413 = vmatprep.subr.mxu0 0.0
  %4414 = vmatpush1.msra.mxu0 0.0
  %4415 = vmatprep.subr.mxu0 0.0
  %4416 = vmatpush1.msra.mxu0 0.0
  %4417 = vmatprep.mubr.f32.mxu0 0.0
  %4418 = vmatmul.mubr.f32.gmra.mrb[0].mxu0 %v4324
  %v4419 = vpop.f32.mrb[0].mxu0
  %v4420 = vadd.f32 0.0, %v4419
  %v4421 = vpop.f32.mrb[0].mxu0
  %4422 = vmatprep.mubr.f32.mxu0 0.0
  %4423 = vmatmul.mubr.f32.gmra.mrb[0].mxu0 %v4327
  %v4424 = vpop.f32.mrb[0].mxu0
  %v4425 = vadd.f32 0.0, %v4424
  %v4426 = vpop.f32.mrb[0].mxu0
  %4427 = vmatprep.mubr.f32.mxu0 0.0
  %4428 = vmatmul.mubr.f32.gmra.mrb[0].mxu0 %v4330
  %v4429 = vpop.f32.mrb[0].mxu0
  %v4430 = vadd.f32 0.0, %v4429
  %v4431 = vpop.f32.mrb[0].mxu0
  %4432 = vmatprep.mubr.f32.mxu0 0.0
  %4433 = vmatmul.mubr.f32.gmra.mrb[0].mxu0 %v4333
  %v4434 = vpop.f32.mrb[0].mxu0
  %v4435 = vadd.f32 0.0, %v4434
  %v4436 = vpop.f32.mrb[0].mxu0
  %4437 = vmatprep.mubr.f32.mxu0 0.0
  %4438 = vmatmul.mubr.f32.gmra.mrb[0].mxu0 %v4336
  %v4439 = vpop.f32.mrb[0].mxu0
  %v4440 = vadd.f32 0.0, %v4439
  %v4441 = vpop.f32.mrb[0].mxu0
  %4442 = vmatprep.mubr.f32.mxu0 0.0
  %4443 = vmatmul.mubr.f32.gmra.mrb[0].mxu0 %v4339
  %v4444 = vpop.f32.mrb[0].mxu0
  %v4445 = vadd.f32 0.0, %v4444
  %v4446 = vpop.f32.mrb[0].mxu0
  %4447 = vmatprep.mubr.f32.mxu0 0.0
  %4448 = vmatmul.mubr.f32.gmra.mrb[0].mxu0 %v4342
  %v4449 = vpop.f32.mrb[0].mxu0
  %v4450 = vadd.f32 0.0, %v4449
  %v4451 = vpop.f32.mrb[0].mxu0
  %4452 = vmatprep.mubr.f32.mxu0 0.0
  %4453 = vmatmul.mubr.f32.gmra.mrb[0].mxu0 %v4345
  %v4454 = vpop.f32.mrb[0].mxu0
  %v4455 = vadd.f32 0.0, %v4454
  %v4456 = vpop.f32.mrb[0].mxu0
  %4457 = vmatprep.mubr.f32.mxu0 0.0
  %4458 = vmatmul.mubr.f32.gmra.mrb[0].mxu0 %v4348
  %v4459 = vpop.f32.mrb[0].mxu0
  %v4460 = vadd.f32 0.0, %v4459
  %v4461 = vpop.f32.mrb[0].mxu0
  %4462 = vmatprep.mubr.f32.mxu0 0.0
  %4463 = vmatmul.mubr.f32.gmra.mrb[0].mxu0 %v4351
  %v4464 = vpop.f32.mrb[0].mxu0
  %v4465 = vadd.f32 0.0, %v4464
  %v4466 = vpop.f32.mrb[0].mxu0
  %4467 = vdwg.mxu0
  %s4468 = scalar_lea.vmem %s12, 8
  %v4469 = vld [vmem:[%s4468] sm:$0xf]
  %v4471 = vsel %vm4015, %v4420, 0
  %v4474 = vsel %vm4015, %v4425, 0
  %v4477 = vsel %vm4015, %v4430, 0
  %v4480 = vsel %vm4015, %v4435, 0
  %v4483 = vsel %vm4015, %v4440, 0
  %v4486 = vsel %vm4015, %v4445, 0
  %v4489 = vsel %vm4015, %v4450, 0
  %v4492 = vsel %vm4015, %v4455, 0
  %v4495 = vsel %vm4015, %v4460, 0
  %v4498 = vsel %vm4015, %v4465, 0
  %v4501 = vsel %vm175, %v4469, 0
  %4503 = vmatprep.subr.mxu0 0.0
  %4504 = vmatpush1.msra.mxu0 %v4501
  %4505 = vmatprep.subr.mxu0 0.0
  %4506 = vmatpush1.msra.mxu0 0.0
  %4507 = vmatprep.subr.mxu0 0.0
  %4508 = vmatpush1.msra.mxu0 0.0
  %4509 = vmatprep.subr.mxu0 0.0
  %4510 = vmatpush1.msra.mxu0 0.0
  %4511 = vmatprep.subr.mxu0 0.0
  %4512 = vmatpush1.msra.mxu0 0.0
  %4513 = vmatprep.subr.mxu0 0.0
  %4514 = vmatpush1.msra.mxu0 0.0
  %4515 = vmatprep.subr.mxu0 0.0
  %4516 = vmatpush1.msra.mxu0 0.0
  %4517 = vmatprep.subr.mxu0 0.0
  %4518 = vmatpush1.msra.mxu0 0.0
  %4519 = vmatprep.subr.mxu0 0.0
  %4520 = vmatpush1.msra.mxu0 0.0
  %4521 = vmatprep.subr.mxu0 0.0
  %4522 = vmatpush1.msra.mxu0 0.0
  %4523 = vmatprep.subr.mxu0 0.0
  %4524 = vmatpush1.msra.mxu0 0.0
  %4525 = vmatprep.subr.mxu0 0.0
  %4526 = vmatpush1.msra.mxu0 0.0
  %4527 = vmatprep.subr.mxu0 0.0
  %4528 = vmatpush1.msra.mxu0 0.0
  %4529 = vmatprep.subr.mxu0 0.0
  %4530 = vmatpush1.msra.mxu0 0.0
  %4531 = vmatprep.subr.mxu0 0.0
  %4532 = vmatpush1.msra.mxu0 0.0
  %4533 = vmatprep.subr.mxu0 0.0
  %4534 = vmatpush1.msra.mxu0 0.0
  %4535 = vmatprep.subr.mxu0 0.0
  %4536 = vmatpush1.msra.mxu0 0.0
  %4537 = vmatprep.subr.mxu0 0.0
  %4538 = vmatpush1.msra.mxu0 0.0
  %4539 = vmatprep.subr.mxu0 0.0
  %4540 = vmatpush1.msra.mxu0 0.0
  %4541 = vmatprep.subr.mxu0 0.0
  %4542 = vmatpush1.msra.mxu0 0.0
  %4543 = vmatprep.subr.mxu0 0.0
  %4544 = vmatpush1.msra.mxu0 0.0
  %4545 = vmatprep.subr.mxu0 0.0
  %4546 = vmatpush1.msra.mxu0 0.0
  %4547 = vmatprep.subr.mxu0 0.0
  %4548 = vmatpush1.msra.mxu0 0.0
  %4549 = vmatprep.subr.mxu0 0.0
  %4550 = vmatpush1.msra.mxu0 0.0
  %4551 = vmatprep.subr.mxu0 0.0
  %4552 = vmatpush1.msra.mxu0 0.0
  %4553 = vmatprep.subr.mxu0 0.0
  %4554 = vmatpush1.msra.mxu0 0.0
  %4555 = vmatprep.subr.mxu0 0.0
  %4556 = vmatpush1.msra.mxu0 0.0
  %4557 = vmatprep.subr.mxu0 0.0
  %4558 = vmatpush1.msra.mxu0 0.0
  %4559 = vmatprep.subr.mxu0 0.0
  %4560 = vmatpush1.msra.mxu0 0.0
  %4561 = vmatprep.subr.mxu0 0.0
  %4562 = vmatpush1.msra.mxu0 0.0
  %4563 = vmatprep.subr.mxu0 0.0
  %4564 = vmatpush1.msra.mxu0 0.0
  %4565 = vmatprep.subr.mxu0 0.0
  %4566 = vmatpush1.msra.mxu0 0.0
  %4567 = vmatprep.mubr.f32.mxu0 0.0
  %4568 = vmatmul.mubr.f32.gmra.mrb[0].mxu0 %v4471
  %v4569 = vpop.f32.mrb[0].mxu0
  %v4570 = vadd.f32 0.0, %v4569
  %v4571 = vpop.f32.mrb[0].mxu0
  %4572 = vmatprep.mubr.f32.mxu0 0.0
  %4573 = vmatmul.mubr.f32.gmra.mrb[0].mxu0 %v4474
  %v4574 = vpop.f32.mrb[0].mxu0
  %v4575 = vadd.f32 0.0, %v4574
  %v4576 = vpop.f32.mrb[0].mxu0
  %4577 = vmatprep.mubr.f32.mxu0 0.0
  %4578 = vmatmul.mubr.f32.gmra.mrb[0].mxu0 %v4477
  %v4579 = vpop.f32.mrb[0].mxu0
  %v4580 = vadd.f32 0.0, %v4579
  %v4581 = vpop.f32.mrb[0].mxu0
  %4582 = vmatprep.mubr.f32.mxu0 0.0
  %4583 = vmatmul.mubr.f32.gmra.mrb[0].mxu0 %v4480
  %v4584 = vpop.f32.mrb[0].mxu0
  %v4585 = vadd.f32 0.0, %v4584
  %v4586 = vpop.f32.mrb[0].mxu0
  %4587 = vmatprep.mubr.f32.mxu0 0.0
  %4588 = vmatmul.mubr.f32.gmra.mrb[0].mxu0 %v4483
  %v4589 = vpop.f32.mrb[0].mxu0
  %v4590 = vadd.f32 0.0, %v4589
  %v4591 = vpop.f32.mrb[0].mxu0
  %4592 = vmatprep.mubr.f32.mxu0 0.0
  %4593 = vmatmul.mubr.f32.gmra.mrb[0].mxu0 %v4486
  %v4594 = vpop.f32.mrb[0].mxu0
  %v4595 = vadd.f32 0.0, %v4594
  %v4596 = vpop.f32.mrb[0].mxu0
  %4597 = vmatprep.mubr.f32.mxu0 0.0
  %4598 = vmatmul.mubr.f32.gmra.mrb[0].mxu0 %v4489
  %v4599 = vpop.f32.mrb[0].mxu0
  %v4600 = vadd.f32 0.0, %v4599
  %v4601 = vpop.f32.mrb[0].mxu0
  %4602 = vmatprep.mubr.f32.mxu0 0.0
  %4603 = vmatmul.mubr.f32.gmra.mrb[0].mxu0 %v4492
  %v4604 = vpop.f32.mrb[0].mxu0
  %v4605 = vadd.f32 0.0, %v4604
  %v4606 = vpop.f32.mrb[0].mxu0
  %4607 = vmatprep.mubr.f32.mxu0 0.0
  %4608 = vmatmul.mubr.f32.gmra.mrb[0].mxu0 %v4495
  %v4609 = vpop.f32.mrb[0].mxu0
  %v4610 = vadd.f32 0.0, %v4609
  %v4611 = vpop.f32.mrb[0].mxu0
  %4612 = vmatprep.mubr.f32.mxu0 0.0
  %4613 = vmatmul.mubr.f32.gmra.mrb[0].mxu0 %v4498
  %v4614 = vpop.f32.mrb[0].mxu0
  %v4615 = vadd.f32 0.0, %v4614
  %v4616 = vpop.f32.mrb[0].mxu0
  %4617 = vdwg.mxu0
  %v4618 = vadd.f32 %v4264, %v4570
  %v4619 = vadd.f32 %v4269, %v4575
  %v4620 = vadd.f32 %v4274, %v4580
  %v4621 = vadd.f32 %v4279, %v4585
  %v4622 = vadd.f32 %v4284, %v4590
  %v4623 = vadd.f32 %v4289, %v4595
  %v4624 = vadd.f32 %v4294, %v4600
  %v4625 = vadd.f32 %v4299, %v4605
  %v4626 = vadd.f32 %v4304, %v4610
  %v4627 = vadd.f32 %v4309, %v4615
  %v4628 = vld [vmem:[%s13] sm:$0xff]
  %v4629 = vld [vmem:[%s13 + $0x8] sm:$0xff]
  %v4630 = vld [vmem:[%s13 + $0x10] sm:$0xff]
  %v4631 = vld [vmem:[%s13 + $0x18] sm:$0xff]
  %v4632 = vld [vmem:[%s13 + $0x20] sm:$0xff]
  %v4633 = vld [vmem:[%s13 + $0x28] sm:$0xff]
  %v4634 = vld [vmem:[%s13 + $0x30] sm:$0xff]
  %v4635 = vld [vmem:[%s13 + $0x38] sm:$0xff]
  %v4636 = vld [vmem:[%s13 + $0x40] sm:$0xff]
  %v4637 = vld [vmem:[%s13 + $0x48] sm:$0xff]
  %4639 = vset.pattern.permute.xlu0 0
  %4640 = vperm.xlu0 %4639, %v4628
  %v4641 = vpop.permute.xlu0 %4640
  %4644 = vset.pattern.permute.xlu0 0
  %4645 = vperm.xlu0 %4644, %v4629
  %v4646 = vpop.permute.xlu0 %4645
  %4649 = vset.pattern.permute.xlu0 0
  %4650 = vperm.xlu0 %4649, %v4630
  %v4651 = vpop.permute.xlu0 %4650
  %4654 = vset.pattern.permute.xlu0 0
  %4655 = vperm.xlu0 %4654, %v4631
  %v4656 = vpop.permute.xlu0 %4655
  %4659 = vset.pattern.permute.xlu0 0
  %4660 = vperm.xlu0 %4659, %v4632
  %v4661 = vpop.permute.xlu0 %4660
  %4664 = vset.pattern.permute.xlu0 0
  %4665 = vperm.xlu0 %4664, %v4633
  %v4666 = vpop.permute.xlu0 %4665
  %4669 = vset.pattern.permute.xlu0 0
  %4670 = vperm.xlu0 %4669, %v4634
  %v4671 = vpop.permute.xlu0 %4670
  %4674 = vset.pattern.permute.xlu0 0
  %4675 = vperm.xlu0 %4674, %v4635
  %v4676 = vpop.permute.xlu0 %4675
  %4679 = vset.pattern.permute.xlu0 0
  %4680 = vperm.xlu0 %4679, %v4636
  %v4681 = vpop.permute.xlu0 %4680
  %4684 = vset.pattern.permute.xlu0 0
  %4685 = vperm.xlu0 %4684, %v4637
  %v4686 = vpop.permute.xlu0 %4685
  %v4688 = vadd.f32 %v4618, %v4641
  %v4689 = vadd.f32 %v4619, %v4646
  %v4690 = vadd.f32 %v4620, %v4651
  %v4691 = vadd.f32 %v4621, %v4656
  %v4692 = vadd.f32 %v4622, %v4661
  %v4693 = vadd.f32 %v4623, %v4666
  %v4694 = vadd.f32 %v4624, %v4671
  %v4695 = vadd.f32 %v4625, %v4676
  %v4696 = vadd.f32 %v4626, %v4681
  %v4697 = vadd.f32 %v4627, %v4686
  %v4698 = vmax.f32 %v4688, 0.0
  %v4699 = vmax.f32 %v4689, 0.0
  %v4700 = vmax.f32 %v4690, 0.0
  %v4701 = vmax.f32 %v4691, 0.0
  %v4702 = vmax.f32 %v4692, 0.0
  %v4703 = vmax.f32 %v4693, 0.0
  %v4704 = vmax.f32 %v4694, 0.0
  %v4705 = vmax.f32 %v4695, 0.0
  %v4706 = vmax.f32 %v4696, 0.0
  %v4707 = vmax.f32 %v4697, 0.0
  %v4708 = vld [vmem:[%s14] sm:$0xff]
  %v4709 = vld [vmem:[%s14 + $0x8] sm:$0xff]
  %v4710 = vld [vmem:[%s14 + $0x10] sm:$0xff]
  %v4711 = vld [vmem:[%s14 + $0x18] sm:$0xff]
  %v4712 = vld [vmem:[%s14 + $0x20] sm:$0xff]
  %v4713 = vld [vmem:[%s14 + $0x28] sm:$0xff]
  %v4714 = vld [vmem:[%s14 + $0x30] sm:$0xff]
  %v4715 = vld [vmem:[%s14 + $0x38] sm:$0xff]
  %v4716 = vld [vmem:[%s14 + $0x40] sm:$0xff]
  %v4717 = vld [vmem:[%s14 + $0x48] sm:$0xff]
  %v4718 = vld [vmem:[%s14 + $0x50] sm:$0xff]
  %v4719 = vld [vmem:[%s14 + $0x58] sm:$0xff]
  %v4720 = vld [vmem:[%s14 + $0x60] sm:$0xff]
  %v4721 = vld [vmem:[%s14 + $0x68] sm:$0xff]
  %v4722 = vld [vmem:[%s14 + $0x70] sm:$0xff]
  %v4724 = vsel %vm2614, %v4708, 0
  %v4727 = vsel %vm2614, %v4709, 0
  %v4730 = vsel %vm2614, %v4710, 0
  %v4733 = vsel %vm2614, %v4711, 0
  %v4736 = vsel %vm2614, %v4712, 0
  %v4739 = vsel %vm2614, %v4713, 0
  %v4742 = vsel %vm2614, %v4714, 0
  %v4745 = vsel %vm2614, %v4715, 0
  %v4748 = vsel %vm2614, %v4716, 0
  %v4751 = vsel %vm2614, %v4717, 0
  %v4754 = vsel %vm2614, %v4718, 0
  %v4757 = vsel %vm2614, %v4719, 0
  %v4760 = vsel %vm2614, %v4720, 0
  %v4763 = vsel %vm2614, %v4721, 0
  %v4766 = vsel %vm2614, %v4722, 0
  %4768 = vmatprep.subr.mxu0 0.0
  %4769 = vmatpush1.msra.mxu0 %v4698
  %4770 = vmatprep.subr.mxu0 0.0
  %4771 = vmatpush1.msra.mxu0 %v4699
  %4772 = vmatprep.subr.mxu0 0.0
  %4773 = vmatpush1.msra.mxu0 %v4700
  %4774 = vmatprep.subr.mxu0 0.0
  %4775 = vmatpush1.msra.mxu0 %v4701
  %4776 = vmatprep.subr.mxu0 0.0
  %4777 = vmatpush1.msra.mxu0 %v4702
  %4778 = vmatprep.subr.mxu0 0.0
  %4779 = vmatpush1.msra.mxu0 %v4703
  %4780 = vmatprep.subr.mxu0 0.0
  %4781 = vmatpush1.msra.mxu0 %v4704
  %4782 = vmatprep.subr.mxu0 0.0
  %4783 = vmatpush1.msra.mxu0 %v4705
  %4784 = vmatprep.subr.mxu0 0.0
  %4785 = vmatpush1.msra.mxu0 %v4706
  %4786 = vmatprep.subr.mxu0 0.0
  %4787 = vmatpush1.msra.mxu0 %v4707
  %4788 = vmatprep.subr.mxu0 0.0
  %4789 = vmatpush1.msra.mxu0 0.0
  %4790 = vmatprep.subr.mxu0 0.0
  %4791 = vmatpush1.msra.mxu0 0.0
  %4792 = vmatprep.subr.mxu0 0.0
  %4793 = vmatpush1.msra.mxu0 0.0
  %4794 = vmatprep.subr.mxu0 0.0
  %4795 = vmatpush1.msra.mxu0 0.0
  %4796 = vmatprep.subr.mxu0 0.0
  %4797 = vmatpush1.msra.mxu0 0.0
  %4798 = vmatprep.subr.mxu0 0.0
  %4799 = vmatpush1.msra.mxu0 0.0
  %4800 = vmatprep.subr.mxu0 0.0
  %4801 = vmatpush1.msra.mxu0 0.0
  %4802 = vmatprep.subr.mxu0 0.0
  %4803 = vmatpush1.msra.mxu0 0.0
  %4804 = vmatprep.subr.mxu0 0.0
  %4805 = vmatpush1.msra.mxu0 0.0
  %4806 = vmatprep.subr.mxu0 0.0
  %4807 = vmatpush1.msra.mxu0 0.0
  %4808 = vmatprep.subr.mxu0 0.0
  %4809 = vmatpush1.msra.mxu0 0.0
  %4810 = vmatprep.subr.mxu0 0.0
  %4811 = vmatpush1.msra.mxu0 0.0
  %4812 = vmatprep.subr.mxu0 0.0
  %4813 = vmatpush1.msra.mxu0 0.0
  %4814 = vmatprep.subr.mxu0 0.0
  %4815 = vmatpush1.msra.mxu0 0.0
  %4816 = vmatprep.subr.mxu0 0.0
  %4817 = vmatpush1.msra.mxu0 0.0
  %4818 = vmatprep.subr.mxu0 0.0
  %4819 = vmatpush1.msra.mxu0 0.0
  %4820 = vmatprep.subr.mxu0 0.0
  %4821 = vmatpush1.msra.mxu0 0.0
  %4822 = vmatprep.subr.mxu0 0.0
  %4823 = vmatpush1.msra.mxu0 0.0
  %4824 = vmatprep.subr.mxu0 0.0
  %4825 = vmatpush1.msra.mxu0 0.0
  %4826 = vmatprep.subr.mxu0 0.0
  %4827 = vmatpush1.msra.mxu0 0.0
  %4828 = vmatprep.subr.mxu0 0.0
  %4829 = vmatpush1.msra.mxu0 0.0
  %4830 = vmatprep.subr.mxu0 0.0
  %4831 = vmatpush1.msra.mxu0 0.0
  %4832 = vmatprep.mubr.f32.mxu0 0.0
  %4833 = vmatmul.mubr.f32.gmra.mrb[0].mxu0 %v4724
  %v4834 = vpop.f32.mrb[0].mxu0
  %v4835 = vadd.f32 0.0, %v4834
  %v4836 = vpop.f32.mrb[0].mxu0
  %4837 = vmatprep.mubr.f32.mxu0 0.0
  %4838 = vmatmul.mubr.f32.gmra.mrb[0].mxu0 %v4727
  %v4839 = vpop.f32.mrb[0].mxu0
  %v4840 = vadd.f32 0.0, %v4839
  %v4841 = vpop.f32.mrb[0].mxu0
  %4842 = vmatprep.mubr.f32.mxu0 0.0
  %4843 = vmatmul.mubr.f32.gmra.mrb[0].mxu0 %v4730
  %v4844 = vpop.f32.mrb[0].mxu0
  %v4845 = vadd.f32 0.0, %v4844
  %v4846 = vpop.f32.mrb[0].mxu0
  %4847 = vmatprep.mubr.f32.mxu0 0.0
  %4848 = vmatmul.mubr.f32.gmra.mrb[0].mxu0 %v4733
  %v4849 = vpop.f32.mrb[0].mxu0
  %v4850 = vadd.f32 0.0, %v4849
  %v4851 = vpop.f32.mrb[0].mxu0
  %4852 = vmatprep.mubr.f32.mxu0 0.0
  %4853 = vmatmul.mubr.f32.gmra.mrb[0].mxu0 %v4736
  %v4854 = vpop.f32.mrb[0].mxu0
  %v4855 = vadd.f32 0.0, %v4854
  %v4856 = vpop.f32.mrb[0].mxu0
  %4857 = vmatprep.mubr.f32.mxu0 0.0
  %4858 = vmatmul.mubr.f32.gmra.mrb[0].mxu0 %v4739
  %v4859 = vpop.f32.mrb[0].mxu0
  %v4860 = vadd.f32 0.0, %v4859
  %v4861 = vpop.f32.mrb[0].mxu0
  %4862 = vmatprep.mubr.f32.mxu0 0.0
  %4863 = vmatmul.mubr.f32.gmra.mrb[0].mxu0 %v4742
  %v4864 = vpop.f32.mrb[0].mxu0
  %v4865 = vadd.f32 0.0, %v4864
  %v4866 = vpop.f32.mrb[0].mxu0
  %4867 = vmatprep.mubr.f32.mxu0 0.0
  %4868 = vmatmul.mubr.f32.gmra.mrb[0].mxu0 %v4745
  %v4869 = vpop.f32.mrb[0].mxu0
  %v4870 = vadd.f32 0.0, %v4869
  %v4871 = vpop.f32.mrb[0].mxu0
  %4872 = vmatprep.mubr.f32.mxu0 0.0
  %4873 = vmatmul.mubr.f32.gmra.mrb[0].mxu0 %v4748
  %v4874 = vpop.f32.mrb[0].mxu0
  %v4875 = vadd.f32 0.0, %v4874
  %v4876 = vpop.f32.mrb[0].mxu0
  %4877 = vmatprep.mubr.f32.mxu0 0.0
  %4878 = vmatmul.mubr.f32.gmra.mrb[0].mxu0 %v4751
  %v4879 = vpop.f32.mrb[0].mxu0
  %v4880 = vadd.f32 0.0, %v4879
  %v4881 = vpop.f32.mrb[0].mxu0
  %4882 = vmatprep.mubr.f32.mxu0 0.0
  %4883 = vmatmul.mubr.f32.gmra.mrb[0].mxu0 %v4754
  %v4884 = vpop.f32.mrb[0].mxu0
  %v4885 = vadd.f32 0.0, %v4884
  %v4886 = vpop.f32.mrb[0].mxu0
  %4887 = vmatprep.mubr.f32.mxu0 0.0
  %4888 = vmatmul.mubr.f32.gmra.mrb[0].mxu0 %v4757
  %v4889 = vpop.f32.mrb[0].mxu0
  %v4890 = vadd.f32 0.0, %v4889
  %v4891 = vpop.f32.mrb[0].mxu0
  %4892 = vmatprep.mubr.f32.mxu0 0.0
  %4893 = vmatmul.mubr.f32.gmra.mrb[0].mxu0 %v4760
  %v4894 = vpop.f32.mrb[0].mxu0
  %v4895 = vadd.f32 0.0, %v4894
  %v4896 = vpop.f32.mrb[0].mxu0
  %4897 = vmatprep.mubr.f32.mxu0 0.0
  %4898 = vmatmul.mubr.f32.gmra.mrb[0].mxu0 %v4763
  %v4899 = vpop.f32.mrb[0].mxu0
  %v4900 = vadd.f32 0.0, %v4899
  %v4901 = vpop.f32.mrb[0].mxu0
  %4902 = vmatprep.mubr.f32.mxu0 0.0
  %4903 = vmatmul.mubr.f32.gmra.mrb[0].mxu0 %v4766
  %v4904 = vpop.f32.mrb[0].mxu0
  %v4905 = vadd.f32 0.0, %v4904
  %v4906 = vpop.f32.mrb[0].mxu0
  %4907 = vdwg.mxu0
  %v4908 = vld [vmem:[%s15] sm:$0xff]
  %v4909 = vld [vmem:[%s15 + $0x8] sm:$0x3]
  %s4910 = scalar_lea.vmem %s14, 120
  %v4911 = vld [vmem:[%s4910] sm:$0xff]
  %v4912 = vld [vmem:[%s4910 + $0x8] sm:$0xff]
  %v4913 = vld [vmem:[%s4910 + $0x10] sm:$0xff]
  %v4914 = vld [vmem:[%s4910 + $0x18] sm:$0xff]
  %v4915 = vld [vmem:[%s4910 + $0x20] sm:$0xff]
  %v4916 = vld [vmem:[%s4910 + $0x28] sm:$0xff]
  %v4917 = vld [vmem:[%s4910 + $0x30] sm:$0xff]
  %v4918 = vld [vmem:[%s4910 + $0x38] sm:$0xff]
  %v4919 = vld [vmem:[%s4910 + $0x40] sm:$0xff]
  %v4920 = vld [vmem:[%s4910 + $0x48] sm:$0xff]
  %v4921 = vld [vmem:[%s4910 + $0x50] sm:$0xff]
  %v4922 = vld [vmem:[%s4910 + $0x58] sm:$0xff]
  %v4923 = vld [vmem:[%s4910 + $0x60] sm:$0xff]
  %v4924 = vld [vmem:[%s4910 + $0x68] sm:$0xff]
  %v4925 = vld [vmem:[%s4910 + $0x70] sm:$0xff]
  %v4927 = vsel %vm2614, %v4911, 0
  %v4930 = vsel %vm2614, %v4912, 0
  %v4933 = vsel %vm2614, %v4913, 0
  %v4936 = vsel %vm2614, %v4914, 0
  %v4939 = vsel %vm2614, %v4915, 0
  %v4942 = vsel %vm2614, %v4916, 0
  %v4945 = vsel %vm2614, %v4917, 0
  %v4948 = vsel %vm2614, %v4918, 0
  %v4951 = vsel %vm2614, %v4919, 0
  %v4954 = vsel %vm2614, %v4920, 0
  %v4957 = vsel %vm2614, %v4921, 0
  %v4960 = vsel %vm2614, %v4922, 0
  %v4963 = vsel %vm2614, %v4923, 0
  %v4966 = vsel %vm2614, %v4924, 0
  %v4969 = vsel %vm2614, %v4925, 0
  %4971 = vmatprep.subr.mxu0 0.0
  %4972 = vmatpush1.msra.mxu0 %v4698
  %4973 = vmatprep.subr.mxu0 0.0
  %4974 = vmatpush1.msra.mxu0 %v4699
  %4975 = vmatprep.subr.mxu0 0.0
  %4976 = vmatpush1.msra.mxu0 %v4700
  %4977 = vmatprep.subr.mxu0 0.0
  %4978 = vmatpush1.msra.mxu0 %v4701
  %4979 = vmatprep.subr.mxu0 0.0
  %4980 = vmatpush1.msra.mxu0 %v4702
  %4981 = vmatprep.subr.mxu0 0.0
  %4982 = vmatpush1.msra.mxu0 %v4703
  %4983 = vmatprep.subr.mxu0 0.0
  %4984 = vmatpush1.msra.mxu0 %v4704
  %4985 = vmatprep.subr.mxu0 0.0
  %4986 = vmatpush1.msra.mxu0 %v4705
  %4987 = vmatprep.subr.mxu0 0.0
  %4988 = vmatpush1.msra.mxu0 %v4706
  %4989 = vmatprep.subr.mxu0 0.0
  %4990 = vmatpush1.msra.mxu0 %v4707
  %4991 = vmatprep.subr.mxu0 0.0
  %4992 = vmatpush1.msra.mxu0 0.0
  %4993 = vmatprep.subr.mxu0 0.0
  %4994 = vmatpush1.msra.mxu0 0.0
  %4995 = vmatprep.subr.mxu0 0.0
  %4996 = vmatpush1.msra.mxu0 0.0
  %4997 = vmatprep.subr.mxu0 0.0
  %4998 = vmatpush1.msra.mxu0 0.0
  %4999 = vmatprep.subr.mxu0 0.0
  %5000 = vmatpush1.msra.mxu0 0.0
  %5001 = vmatprep.subr.mxu0 0.0
  %5002 = vmatpush1.msra.mxu0 0.0
  %5003 = vmatprep.subr.mxu0 0.0
  %5004 = vmatpush1.msra.mxu0 0.0
  %5005 = vmatprep.subr.mxu0 0.0
  %5006 = vmatpush1.msra.mxu0 0.0
  %5007 = vmatprep.subr.mxu0 0.0
  %5008 = vmatpush1.msra.mxu0 0.0
  %5009 = vmatprep.subr.mxu0 0.0
  %5010 = vmatpush1.msra.mxu0 0.0
  %5011 = vmatprep.subr.mxu0 0.0
  %5012 = vmatpush1.msra.mxu0 0.0
  %5013 = vmatprep.subr.mxu0 0.0
  %5014 = vmatpush1.msra.mxu0 0.0
  %5015 = vmatprep.subr.mxu0 0.0
  %5016 = vmatpush1.msra.mxu0 0.0
  %5017 = vmatprep.subr.mxu0 0.0
  %5018 = vmatpush1.msra.mxu0 0.0
  %5019 = vmatprep.subr.mxu0 0.0
  %5020 = vmatpush1.msra.mxu0 0.0
  %5021 = vmatprep.subr.mxu0 0.0
  %5022 = vmatpush1.msra.mxu0 0.0
  %5023 = vmatprep.subr.mxu0 0.0
  %5024 = vmatpush1.msra.mxu0 0.0
  %5025 = vmatprep.subr.mxu0 0.0
  %5026 = vmatpush1.msra.mxu0 0.0
  %5027 = vmatprep.subr.mxu0 0.0
  %5028 = vmatpush1.msra.mxu0 0.0
  %5029 = vmatprep.subr.mxu0 0.0
  %5030 = vmatpush1.msra.mxu0 0.0
  %5031 = vmatprep.subr.mxu0 0.0
  %5032 = vmatpush1.msra.mxu0 0.0
  %5033 = vmatprep.subr.mxu0 0.0
  %5034 = vmatpush1.msra.mxu0 0.0
  %5035 = vmatprep.mubr.f32.mxu0 0.0
  %5036 = vmatmul.mubr.f32.gmra.mrb[0].mxu0 %v4927
  %v5037 = vpop.f32.mrb[0].mxu0
  %v5038 = vadd.f32 0.0, %v5037
  %v5039 = vpop.f32.mrb[0].mxu0
  %5040 = vmatprep.mubr.f32.mxu0 0.0
  %5041 = vmatmul.mubr.f32.gmra.mrb[0].mxu0 %v4930
  %v5042 = vpop.f32.mrb[0].mxu0
  %v5043 = vadd.f32 0.0, %v5042
  %v5044 = vpop.f32.mrb[0].mxu0
  %5045 = vmatprep.mubr.f32.mxu0 0.0
  %5046 = vmatmul.mubr.f32.gmra.mrb[0].mxu0 %v4933
  %v5047 = vpop.f32.mrb[0].mxu0
  %v5048 = vadd.f32 0.0, %v5047
  %v5049 = vpop.f32.mrb[0].mxu0
  %5050 = vmatprep.mubr.f32.mxu0 0.0
  %5051 = vmatmul.mubr.f32.gmra.mrb[0].mxu0 %v4936
  %v5052 = vpop.f32.mrb[0].mxu0
  %v5053 = vadd.f32 0.0, %v5052
  %v5054 = vpop.f32.mrb[0].mxu0
  %5055 = vmatprep.mubr.f32.mxu0 0.0
  %5056 = vmatmul.mubr.f32.gmra.mrb[0].mxu0 %v4939
  %v5057 = vpop.f32.mrb[0].mxu0
  %v5058 = vadd.f32 0.0, %v5057
  %v5059 = vpop.f32.mrb[0].mxu0
  %5060 = vmatprep.mubr.f32.mxu0 0.0
  %5061 = vmatmul.mubr.f32.gmra.mrb[0].mxu0 %v4942
  %v5062 = vpop.f32.mrb[0].mxu0
  %v5063 = vadd.f32 0.0, %v5062
  %v5064 = vpop.f32.mrb[0].mxu0
  %5065 = vmatprep.mubr.f32.mxu0 0.0
  %5066 = vmatmul.mubr.f32.gmra.mrb[0].mxu0 %v4945
  %v5067 = vpop.f32.mrb[0].mxu0
  %v5068 = vadd.f32 0.0, %v5067
  %v5069 = vpop.f32.mrb[0].mxu0
  %5070 = vmatprep.mubr.f32.mxu0 0.0
  %5071 = vmatmul.mubr.f32.gmra.mrb[0].mxu0 %v4948
  %v5072 = vpop.f32.mrb[0].mxu0
  %v5073 = vadd.f32 0.0, %v5072
  %v5074 = vpop.f32.mrb[0].mxu0
  %5075 = vmatprep.mubr.f32.mxu0 0.0
  %5076 = vmatmul.mubr.f32.gmra.mrb[0].mxu0 %v4951
  %v5077 = vpop.f32.mrb[0].mxu0
  %v5078 = vadd.f32 0.0, %v5077
  %v5079 = vpop.f32.mrb[0].mxu0
  %5080 = vmatprep.mubr.f32.mxu0 0.0
  %5081 = vmatmul.mubr.f32.gmra.mrb[0].mxu0 %v4954
  %v5082 = vpop.f32.mrb[0].mxu0
  %v5083 = vadd.f32 0.0, %v5082
  %v5084 = vpop.f32.mrb[0].mxu0
  %5085 = vmatprep.mubr.f32.mxu0 0.0
  %5086 = vmatmul.mubr.f32.gmra.mrb[0].mxu0 %v4957
  %v5087 = vpop.f32.mrb[0].mxu0
  %v5088 = vadd.f32 0.0, %v5087
  %v5089 = vpop.f32.mrb[0].mxu0
  %5090 = vmatprep.mubr.f32.mxu0 0.0
  %5091 = vmatmul.mubr.f32.gmra.mrb[0].mxu0 %v4960
  %v5092 = vpop.f32.mrb[0].mxu0
  %v5093 = vadd.f32 0.0, %v5092
  %v5094 = vpop.f32.mrb[0].mxu0
  %5095 = vmatprep.mubr.f32.mxu0 0.0
  %5096 = vmatmul.mubr.f32.gmra.mrb[0].mxu0 %v4963
  %v5097 = vpop.f32.mrb[0].mxu0
  %v5098 = vadd.f32 0.0, %v5097
  %v5099 = vpop.f32.mrb[0].mxu0
  %5100 = vmatprep.mubr.f32.mxu0 0.0
  %5101 = vmatmul.mubr.f32.gmra.mrb[0].mxu0 %v4966
  %v5102 = vpop.f32.mrb[0].mxu0
  %v5103 = vadd.f32 0.0, %v5102
  %v5104 = vpop.f32.mrb[0].mxu0
  %5105 = vmatprep.mubr.f32.mxu0 0.0
  %5106 = vmatmul.mubr.f32.gmra.mrb[0].mxu0 %v4969
  %v5107 = vpop.f32.mrb[0].mxu0
  %v5108 = vadd.f32 0.0, %v5107
  %v5109 = vpop.f32.mrb[0].mxu0
  %5110 = vdwg.mxu0
  %s5111 = scalar_lea.vmem %s15, 16
  %v5112 = vld [vmem:[%s5111] sm:$0xff]
  %v5113 = vld [vmem:[%s5111 + $0x8] sm:$0x3]
  %v5115 = vsel %vm2802, %v5038, 0
  %v5118 = vsel %vm2802, %v5043, 0
  %v5121 = vsel %vm2802, %v5048, 0
  %v5124 = vsel %vm2802, %v5053, 0
  %v5127 = vsel %vm2802, %v5058, 0
  %v5130 = vsel %vm2802, %v5063, 0
  %v5133 = vsel %vm2802, %v5068, 0
  %v5136 = vsel %vm2802, %v5073, 0
  %v5139 = vsel %vm2802, %v5078, 0
  %v5142 = vsel %vm2802, %v5083, 0
  %v5145 = vsel %vm2802, %v5088, 0
  %v5148 = vsel %vm2802, %v5093, 0
  %v5151 = vsel %vm2802, %v5098, 0
  %v5154 = vsel %vm2802, %v5103, 0
  %v5157 = vsel %vm2802, %v5108, 0
  %v5160 = vsel %vm2812, %v5113, 0
  %5162 = vmatprep.subr.mxu0 0.0
  %5163 = vmatpush1.msra.mxu0 %v5112
  %5164 = vmatprep.subr.mxu0 0.0
  %5165 = vmatpush1.msra.mxu0 %v5160
  %5166 = vmatprep.subr.mxu0 0.0
  %5167 = vmatpush1.msra.mxu0 0.0
  %5168 = vmatprep.subr.mxu0 0.0
  %5169 = vmatpush1.msra.mxu0 0.0
  %5170 = vmatprep.subr.mxu0 0.0
  %5171 = vmatpush1.msra.mxu0 0.0
  %5172 = vmatprep.subr.mxu0 0.0
  %5173 = vmatpush1.msra.mxu0 0.0
  %5174 = vmatprep.subr.mxu0 0.0
  %5175 = vmatpush1.msra.mxu0 0.0
  %5176 = vmatprep.subr.mxu0 0.0
  %5177 = vmatpush1.msra.mxu0 0.0
  %5178 = vmatprep.subr.mxu0 0.0
  %5179 = vmatpush1.msra.mxu0 0.0
  %5180 = vmatprep.subr.mxu0 0.0
  %5181 = vmatpush1.msra.mxu0 0.0
  %5182 = vmatprep.subr.mxu0 0.0
  %5183 = vmatpush1.msra.mxu0 0.0
  %5184 = vmatprep.subr.mxu0 0.0
  %5185 = vmatpush1.msra.mxu0 0.0
  %5186 = vmatprep.subr.mxu0 0.0
  %5187 = vmatpush1.msra.mxu0 0.0
  %5188 = vmatprep.subr.mxu0 0.0
  %5189 = vmatpush1.msra.mxu0 0.0
  %5190 = vmatprep.subr.mxu0 0.0
  %5191 = vmatpush1.msra.mxu0 0.0
  %5192 = vmatprep.subr.mxu0 0.0
  %5193 = vmatpush1.msra.mxu0 0.0
  %5194 = vmatprep.subr.mxu0 0.0
  %5195 = vmatpush1.msra.mxu0 0.0
  %5196 = vmatprep.subr.mxu0 0.0
  %5197 = vmatpush1.msra.mxu0 0.0
  %5198 = vmatprep.subr.mxu0 0.0
  %5199 = vmatpush1.msra.mxu0 0.0
  %5200 = vmatprep.subr.mxu0 0.0
  %5201 = vmatpush1.msra.mxu0 0.0
  %5202 = vmatprep.subr.mxu0 0.0
  %5203 = vmatpush1.msra.mxu0 0.0
  %5204 = vmatprep.subr.mxu0 0.0
  %5205 = vmatpush1.msra.mxu0 0.0
  %5206 = vmatprep.subr.mxu0 0.0
  %5207 = vmatpush1.msra.mxu0 0.0
  %5208 = vmatprep.subr.mxu0 0.0
  %5209 = vmatpush1.msra.mxu0 0.0
  %5210 = vmatprep.subr.mxu0 0.0
  %5211 = vmatpush1.msra.mxu0 0.0
  %5212 = vmatprep.subr.mxu0 0.0
  %5213 = vmatpush1.msra.mxu0 0.0
  %5214 = vmatprep.subr.mxu0 0.0
  %5215 = vmatpush1.msra.mxu0 0.0
  %5216 = vmatprep.subr.mxu0 0.0
  %5217 = vmatpush1.msra.mxu0 0.0
  %5218 = vmatprep.subr.mxu0 0.0
  %5219 = vmatpush1.msra.mxu0 0.0
  %5220 = vmatprep.subr.mxu0 0.0
  %5221 = vmatpush1.msra.mxu0 0.0
  %5222 = vmatprep.subr.mxu0 0.0
  %5223 = vmatpush1.msra.mxu0 0.0
  %5224 = vmatprep.subr.mxu0 0.0
  %5225 = vmatpush1.msra.mxu0 0.0
  %5226 = vmatprep.mubr.f32.mxu0 0.0
  %5227 = vmatmul.mubr.f32.gmra.mrb[0].mxu0 %v5115
  %v5228 = vpop.f32.mrb[0].mxu0
  %v5229 = vadd.f32 0.0, %v5228
  %v5230 = vpop.f32.mrb[0].mxu0
  %5231 = vmatprep.mubr.f32.mxu0 0.0
  %5232 = vmatmul.mubr.f32.gmra.mrb[0].mxu0 %v5118
  %v5233 = vpop.f32.mrb[0].mxu0
  %v5234 = vadd.f32 0.0, %v5233
  %v5235 = vpop.f32.mrb[0].mxu0
  %5236 = vmatprep.mubr.f32.mxu0 0.0
  %5237 = vmatmul.mubr.f32.gmra.mrb[0].mxu0 %v5121
  %v5238 = vpop.f32.mrb[0].mxu0
  %v5239 = vadd.f32 0.0, %v5238
  %v5240 = vpop.f32.mrb[0].mxu0
  %5241 = vmatprep.mubr.f32.mxu0 0.0
  %5242 = vmatmul.mubr.f32.gmra.mrb[0].mxu0 %v5124
  %v5243 = vpop.f32.mrb[0].mxu0
  %v5244 = vadd.f32 0.0, %v5243
  %v5245 = vpop.f32.mrb[0].mxu0
  %5246 = vmatprep.mubr.f32.mxu0 0.0
  %5247 = vmatmul.mubr.f32.gmra.mrb[0].mxu0 %v5127
  %v5248 = vpop.f32.mrb[0].mxu0
  %v5249 = vadd.f32 0.0, %v5248
  %v5250 = vpop.f32.mrb[0].mxu0
  %5251 = vmatprep.mubr.f32.mxu0 0.0
  %5252 = vmatmul.mubr.f32.gmra.mrb[0].mxu0 %v5130
  %v5253 = vpop.f32.mrb[0].mxu0
  %v5254 = vadd.f32 0.0, %v5253
  %v5255 = vpop.f32.mrb[0].mxu0
  %5256 = vmatprep.mubr.f32.mxu0 0.0
  %5257 = vmatmul.mubr.f32.gmra.mrb[0].mxu0 %v5133
  %v5258 = vpop.f32.mrb[0].mxu0
  %v5259 = vadd.f32 0.0, %v5258
  %v5260 = vpop.f32.mrb[0].mxu0
  %5261 = vmatprep.mubr.f32.mxu0 0.0
  %5262 = vmatmul.mubr.f32.gmra.mrb[0].mxu0 %v5136
  %v5263 = vpop.f32.mrb[0].mxu0
  %v5264 = vadd.f32 0.0, %v5263
  %v5265 = vpop.f32.mrb[0].mxu0
  %5266 = vmatprep.mubr.f32.mxu0 0.0
  %5267 = vmatmul.mubr.f32.gmra.mrb[0].mxu0 %v5139
  %v5268 = vpop.f32.mrb[0].mxu0
  %v5269 = vadd.f32 0.0, %v5268
  %v5270 = vpop.f32.mrb[0].mxu0
  %5271 = vmatprep.mubr.f32.mxu0 0.0
  %5272 = vmatmul.mubr.f32.gmra.mrb[0].mxu0 %v5142
  %v5273 = vpop.f32.mrb[0].mxu0
  %v5274 = vadd.f32 0.0, %v5273
  %v5275 = vpop.f32.mrb[0].mxu0
  %5276 = vmatprep.mubr.f32.mxu0 0.0
  %5277 = vmatmul.mubr.f32.gmra.mrb[0].mxu0 %v5145
  %v5278 = vpop.f32.mrb[0].mxu0
  %v5279 = vadd.f32 0.0, %v5278
  %v5280 = vpop.f32.mrb[0].mxu0
  %5281 = vmatprep.mubr.f32.mxu0 0.0
  %5282 = vmatmul.mubr.f32.gmra.mrb[0].mxu0 %v5148
  %v5283 = vpop.f32.mrb[0].mxu0
  %v5284 = vadd.f32 0.0, %v5283
  %v5285 = vpop.f32.mrb[0].mxu0
  %5286 = vmatprep.mubr.f32.mxu0 0.0
  %5287 = vmatmul.mubr.f32.gmra.mrb[0].mxu0 %v5151
  %v5288 = vpop.f32.mrb[0].mxu0
  %v5289 = vadd.f32 0.0, %v5288
  %v5290 = vpop.f32.mrb[0].mxu0
  %5291 = vmatprep.mubr.f32.mxu0 0.0
  %5292 = vmatmul.mubr.f32.gmra.mrb[0].mxu0 %v5154
  %v5293 = vpop.f32.mrb[0].mxu0
  %v5294 = vadd.f32 0.0, %v5293
  %v5295 = vpop.f32.mrb[0].mxu0
  %5296 = vmatprep.mubr.f32.mxu0 0.0
  %5297 = vmatmul.mubr.f32.gmra.mrb[0].mxu0 %v5157
  %v5298 = vpop.f32.mrb[0].mxu0
  %v5299 = vadd.f32 0.0, %v5298
  %v5300 = vpop.f32.mrb[0].mxu0
  %5301 = vdwg.mxu0
  %v5303 = vsel %vm2802, %v4835, 0
  %v5306 = vsel %vm2802, %v4840, 0
  %v5309 = vsel %vm2802, %v4845, 0
  %v5312 = vsel %vm2802, %v4850, 0
  %v5315 = vsel %vm2802, %v4855, 0
  %v5318 = vsel %vm2802, %v4860, 0
  %v5321 = vsel %vm2802, %v4865, 0
  %v5324 = vsel %vm2802, %v4870, 0
  %v5327 = vsel %vm2802, %v4875, 0
  %v5330 = vsel %vm2802, %v4880, 0
  %v5333 = vsel %vm2802, %v4885, 0
  %v5336 = vsel %vm2802, %v4890, 0
  %v5339 = vsel %vm2802, %v4895, 0
  %v5342 = vsel %vm2802, %v4900, 0
  %v5345 = vsel %vm2802, %v4905, 0
  %v5348 = vsel %vm2812, %v4909, 0
  %5350 = vmatprep.subr.mxu0 0.0
  %5351 = vmatpush1.msra.mxu0 %v4908
  %5352 = vmatprep.subr.mxu0 0.0
  %5353 = vmatpush1.msra.mxu0 %v5348
  %5354 = vmatprep.subr.mxu0 0.0
  %5355 = vmatpush1.msra.mxu0 0.0
  %5356 = vmatprep.subr.mxu0 0.0
  %5357 = vmatpush1.msra.mxu0 0.0
  %5358 = vmatprep.subr.mxu0 0.0
  %5359 = vmatpush1.msra.mxu0 0.0
  %5360 = vmatprep.subr.mxu0 0.0
  %5361 = vmatpush1.msra.mxu0 0.0
  %5362 = vmatprep.subr.mxu0 0.0
  %5363 = vmatpush1.msra.mxu0 0.0
  %5364 = vmatprep.subr.mxu0 0.0
  %5365 = vmatpush1.msra.mxu0 0.0
  %5366 = vmatprep.subr.mxu0 0.0
  %5367 = vmatpush1.msra.mxu0 0.0
  %5368 = vmatprep.subr.mxu0 0.0
  %5369 = vmatpush1.msra.mxu0 0.0
  %5370 = vmatprep.subr.mxu0 0.0
  %5371 = vmatpush1.msra.mxu0 0.0
  %5372 = vmatprep.subr.mxu0 0.0
  %5373 = vmatpush1.msra.mxu0 0.0
  %5374 = vmatprep.subr.mxu0 0.0
  %5375 = vmatpush1.msra.mxu0 0.0
  %5376 = vmatprep.subr.mxu0 0.0
  %5377 = vmatpush1.msra.mxu0 0.0
  %5378 = vmatprep.subr.mxu0 0.0
  %5379 = vmatpush1.msra.mxu0 0.0
  %5380 = vmatprep.subr.mxu0 0.0
  %5381 = vmatpush1.msra.mxu0 0.0
  %5382 = vmatprep.subr.mxu0 0.0
  %5383 = vmatpush1.msra.mxu0 0.0
  %5384 = vmatprep.subr.mxu0 0.0
  %5385 = vmatpush1.msra.mxu0 0.0
  %5386 = vmatprep.subr.mxu0 0.0
  %5387 = vmatpush1.msra.mxu0 0.0
  %5388 = vmatprep.subr.mxu0 0.0
  %5389 = vmatpush1.msra.mxu0 0.0
  %5390 = vmatprep.subr.mxu0 0.0
  %5391 = vmatpush1.msra.mxu0 0.0
  %5392 = vmatprep.subr.mxu0 0.0
  %5393 = vmatpush1.msra.mxu0 0.0
  %5394 = vmatprep.subr.mxu0 0.0
  %5395 = vmatpush1.msra.mxu0 0.0
  %5396 = vmatprep.subr.mxu0 0.0
  %5397 = vmatpush1.msra.mxu0 0.0
  %5398 = vmatprep.subr.mxu0 0.0
  %5399 = vmatpush1.msra.mxu0 0.0
  %5400 = vmatprep.subr.mxu0 0.0
  %5401 = vmatpush1.msra.mxu0 0.0
  %5402 = vmatprep.subr.mxu0 0.0
  %5403 = vmatpush1.msra.mxu0 0.0
  %5404 = vmatprep.subr.mxu0 0.0
  %5405 = vmatpush1.msra.mxu0 0.0
  %5406 = vmatprep.subr.mxu0 0.0
  %5407 = vmatpush1.msra.mxu0 0.0
  %5408 = vmatprep.subr.mxu0 0.0
  %5409 = vmatpush1.msra.mxu0 0.0
  %5410 = vmatprep.subr.mxu0 0.0
  %5411 = vmatpush1.msra.mxu0 0.0
  %5412 = vmatprep.subr.mxu0 0.0
  %5413 = vmatpush1.msra.mxu0 0.0
  %5414 = vmatprep.mubr.f32.mxu0 0.0
  %5415 = vmatmul.mubr.f32.gmra.mrb[0].mxu0 %v5303
  %v5416 = vpop.f32.mrb[0].mxu0
  %v5417 = vadd.f32 %v5229, %v5416
  %v5418 = vpop.f32.mrb[0].mxu0
  %5419 = vmatprep.mubr.f32.mxu0 0.0
  %5420 = vmatmul.mubr.f32.gmra.mrb[0].mxu0 %v5306
  %v5421 = vpop.f32.mrb[0].mxu0
  %v5422 = vadd.f32 %v5234, %v5421
  %v5423 = vpop.f32.mrb[0].mxu0
  %5424 = vmatprep.mubr.f32.mxu0 0.0
  %5425 = vmatmul.mubr.f32.gmra.mrb[0].mxu0 %v5309
  %v5426 = vpop.f32.mrb[0].mxu0
  %v5427 = vadd.f32 %v5239, %v5426
  %v5428 = vpop.f32.mrb[0].mxu0
  %5429 = vmatprep.mubr.f32.mxu0 0.0
  %5430 = vmatmul.mubr.f32.gmra.mrb[0].mxu0 %v5312
  %v5431 = vpop.f32.mrb[0].mxu0
  %v5432 = vadd.f32 %v5244, %v5431
  %v5433 = vpop.f32.mrb[0].mxu0
  %5434 = vmatprep.mubr.f32.mxu0 0.0
  %5435 = vmatmul.mubr.f32.gmra.mrb[0].mxu0 %v5315
  %v5436 = vpop.f32.mrb[0].mxu0
  %v5437 = vadd.f32 %v5249, %v5436
  %v5438 = vpop.f32.mrb[0].mxu0
  %5439 = vmatprep.mubr.f32.mxu0 0.0
  %5440 = vmatmul.mubr.f32.gmra.mrb[0].mxu0 %v5318
  %v5441 = vpop.f32.mrb[0].mxu0
  %v5442 = vadd.f32 %v5254, %v5441
  %v5443 = vpop.f32.mrb[0].mxu0
  %5444 = vmatprep.mubr.f32.mxu0 0.0
  %5445 = vmatmul.mubr.f32.gmra.mrb[0].mxu0 %v5321
  %v5446 = vpop.f32.mrb[0].mxu0
  %v5447 = vadd.f32 %v5259, %v5446
  %v5448 = vpop.f32.mrb[0].mxu0
  %5449 = vmatprep.mubr.f32.mxu0 0.0
  %5450 = vmatmul.mubr.f32.gmra.mrb[0].mxu0 %v5324
  %v5451 = vpop.f32.mrb[0].mxu0
  %v5452 = vadd.f32 %v5264, %v5451
  %v5453 = vpop.f32.mrb[0].mxu0
  %5454 = vmatprep.mubr.f32.mxu0 0.0
  %5455 = vmatmul.mubr.f32.gmra.mrb[0].mxu0 %v5327
  %v5456 = vpop.f32.mrb[0].mxu0
  %v5457 = vadd.f32 %v5269, %v5456
  %v5458 = vpop.f32.mrb[0].mxu0
  %5459 = vmatprep.mubr.f32.mxu0 0.0
  %5460 = vmatmul.mubr.f32.gmra.mrb[0].mxu0 %v5330
  %v5461 = vpop.f32.mrb[0].mxu0
  %v5462 = vadd.f32 %v5274, %v5461
  %v5463 = vpop.f32.mrb[0].mxu0
  %5464 = vmatprep.mubr.f32.mxu0 0.0
  %5465 = vmatmul.mubr.f32.gmra.mrb[0].mxu0 %v5333
  %v5466 = vpop.f32.mrb[0].mxu0
  %v5467 = vadd.f32 %v5279, %v5466
  %v5468 = vpop.f32.mrb[0].mxu0
  %5469 = vmatprep.mubr.f32.mxu0 0.0
  %5470 = vmatmul.mubr.f32.gmra.mrb[0].mxu0 %v5336
  %v5471 = vpop.f32.mrb[0].mxu0
  %v5472 = vadd.f32 %v5284, %v5471
  %v5473 = vpop.f32.mrb[0].mxu0
  %5474 = vmatprep.mubr.f32.mxu0 0.0
  %5475 = vmatmul.mubr.f32.gmra.mrb[0].mxu0 %v5339
  %v5476 = vpop.f32.mrb[0].mxu0
  %v5477 = vadd.f32 %v5289, %v5476
  %v5478 = vpop.f32.mrb[0].mxu0
  %5479 = vmatprep.mubr.f32.mxu0 0.0
  %5480 = vmatmul.mubr.f32.gmra.mrb[0].mxu0 %v5342
  %v5481 = vpop.f32.mrb[0].mxu0
  %v5482 = vadd.f32 %v5294, %v5481
  %v5483 = vpop.f32.mrb[0].mxu0
  %5484 = vmatprep.mubr.f32.mxu0 0.0
  %5485 = vmatmul.mubr.f32.gmra.mrb[0].mxu0 %v5345
  %v5486 = vpop.f32.mrb[0].mxu0
  %v5487 = vadd.f32 %v5299, %v5486
  %v5488 = vpop.f32.mrb[0].mxu0
  %5489 = vdwg.mxu0
  %s5490 = scalar_lea.vmem %s14, 240
  %v5491 = vld [vmem:[%s5490] sm:$0xff]
  %v5492 = vld [vmem:[%s5490 + $0x8] sm:$0xff]
  %v5493 = vld [vmem:[%s5490 + $0x10] sm:$0xff]
  %v5494 = vld [vmem:[%s5490 + $0x18] sm:$0xff]
  %v5495 = vld [vmem:[%s5490 + $0x20] sm:$0xff]
  %v5496 = vld [vmem:[%s5490 + $0x28] sm:$0xff]
  %v5497 = vld [vmem:[%s5490 + $0x30] sm:$0xff]
  %v5498 = vld [vmem:[%s5490 + $0x38] sm:$0xff]
  %v5499 = vld [vmem:[%s5490 + $0x40] sm:$0xff]
  %v5500 = vld [vmem:[%s5490 + $0x48] sm:$0xff]
  %v5501 = vld [vmem:[%s5490 + $0x50] sm:$0xff]
  %v5502 = vld [vmem:[%s5490 + $0x58] sm:$0xff]
  %v5503 = vld [vmem:[%s5490 + $0x60] sm:$0xff]
  %v5504 = vld [vmem:[%s5490 + $0x68] sm:$0xff]
  %v5505 = vld [vmem:[%s5490 + $0x70] sm:$0xff]
  %v5507 = vsel %vm2614, %v5491, 0
  %v5510 = vsel %vm2614, %v5492, 0
  %v5513 = vsel %vm2614, %v5493, 0
  %v5516 = vsel %vm2614, %v5494, 0
  %v5519 = vsel %vm2614, %v5495, 0
  %v5522 = vsel %vm2614, %v5496, 0
  %v5525 = vsel %vm2614, %v5497, 0
  %v5528 = vsel %vm2614, %v5498, 0
  %v5531 = vsel %vm2614, %v5499, 0
  %v5534 = vsel %vm2614, %v5500, 0
  %v5537 = vsel %vm2614, %v5501, 0
  %v5540 = vsel %vm2614, %v5502, 0
  %v5543 = vsel %vm2614, %v5503, 0
  %v5546 = vsel %vm2614, %v5504, 0
  %v5549 = vsel %vm2614, %v5505, 0
  %5551 = vmatprep.subr.mxu0 0.0
  %5552 = vmatpush1.msra.mxu0 %v4698
  %5553 = vmatprep.subr.mxu0 0.0
  %5554 = vmatpush1.msra.mxu0 %v4699
  %5555 = vmatprep.subr.mxu0 0.0
  %5556 = vmatpush1.msra.mxu0 %v4700
  %5557 = vmatprep.subr.mxu0 0.0
  %5558 = vmatpush1.msra.mxu0 %v4701
  %5559 = vmatprep.subr.mxu0 0.0
  %5560 = vmatpush1.msra.mxu0 %v4702
  %5561 = vmatprep.subr.mxu0 0.0
  %5562 = vmatpush1.msra.mxu0 %v4703
  %5563 = vmatprep.subr.mxu0 0.0
  %5564 = vmatpush1.msra.mxu0 %v4704
  %5565 = vmatprep.subr.mxu0 0.0
  %5566 = vmatpush1.msra.mxu0 %v4705
  %5567 = vmatprep.subr.mxu0 0.0
  %5568 = vmatpush1.msra.mxu0 %v4706
  %5569 = vmatprep.subr.mxu0 0.0
  %5570 = vmatpush1.msra.mxu0 %v4707
  %5571 = vmatprep.subr.mxu0 0.0
  %5572 = vmatpush1.msra.mxu0 0.0
  %5573 = vmatprep.subr.mxu0 0.0
  %5574 = vmatpush1.msra.mxu0 0.0
  %5575 = vmatprep.subr.mxu0 0.0
  %5576 = vmatpush1.msra.mxu0 0.0
  %5577 = vmatprep.subr.mxu0 0.0
  %5578 = vmatpush1.msra.mxu0 0.0
  %5579 = vmatprep.subr.mxu0 0.0
  %5580 = vmatpush1.msra.mxu0 0.0
  %5581 = vmatprep.subr.mxu0 0.0
  %5582 = vmatpush1.msra.mxu0 0.0
  %5583 = vmatprep.subr.mxu0 0.0
  %5584 = vmatpush1.msra.mxu0 0.0
  %5585 = vmatprep.subr.mxu0 0.0
  %5586 = vmatpush1.msra.mxu0 0.0
  %5587 = vmatprep.subr.mxu0 0.0
  %5588 = vmatpush1.msra.mxu0 0.0
  %5589 = vmatprep.subr.mxu0 0.0
  %5590 = vmatpush1.msra.mxu0 0.0
  %5591 = vmatprep.subr.mxu0 0.0
  %5592 = vmatpush1.msra.mxu0 0.0
  %5593 = vmatprep.subr.mxu0 0.0
  %5594 = vmatpush1.msra.mxu0 0.0
  %5595 = vmatprep.subr.mxu0 0.0
  %5596 = vmatpush1.msra.mxu0 0.0
  %5597 = vmatprep.subr.mxu0 0.0
  %5598 = vmatpush1.msra.mxu0 0.0
  %5599 = vmatprep.subr.mxu0 0.0
  %5600 = vmatpush1.msra.mxu0 0.0
  %5601 = vmatprep.subr.mxu0 0.0
  %5602 = vmatpush1.msra.mxu0 0.0
  %5603 = vmatprep.subr.mxu0 0.0
  %5604 = vmatpush1.msra.mxu0 0.0
  %5605 = vmatprep.subr.mxu0 0.0
  %5606 = vmatpush1.msra.mxu0 0.0
  %5607 = vmatprep.subr.mxu0 0.0
  %5608 = vmatpush1.msra.mxu0 0.0
  %5609 = vmatprep.subr.mxu0 0.0
  %5610 = vmatpush1.msra.mxu0 0.0
  %5611 = vmatprep.subr.mxu0 0.0
  %5612 = vmatpush1.msra.mxu0 0.0
  %5613 = vmatprep.subr.mxu0 0.0
  %5614 = vmatpush1.msra.mxu0 0.0
  %5615 = vmatprep.mubr.f32.mxu0 0.0
  %5616 = vmatmul.mubr.f32.gmra.mrb[0].mxu0 %v5507
  %v5617 = vpop.f32.mrb[0].mxu0
  %v5618 = vadd.f32 0.0, %v5617
  %v5619 = vpop.f32.mrb[0].mxu0
  %5620 = vmatprep.mubr.f32.mxu0 0.0
  %5621 = vmatmul.mubr.f32.gmra.mrb[0].mxu0 %v5510
  %v5622 = vpop.f32.mrb[0].mxu0
  %v5623 = vadd.f32 0.0, %v5622
  %v5624 = vpop.f32.mrb[0].mxu0
  %5625 = vmatprep.mubr.f32.mxu0 0.0
  %5626 = vmatmul.mubr.f32.gmra.mrb[0].mxu0 %v5513
  %v5627 = vpop.f32.mrb[0].mxu0
  %v5628 = vadd.f32 0.0, %v5627
  %v5629 = vpop.f32.mrb[0].mxu0
  %5630 = vmatprep.mubr.f32.mxu0 0.0
  %5631 = vmatmul.mubr.f32.gmra.mrb[0].mxu0 %v5516
  %v5632 = vpop.f32.mrb[0].mxu0
  %v5633 = vadd.f32 0.0, %v5632
  %v5634 = vpop.f32.mrb[0].mxu0
  %5635 = vmatprep.mubr.f32.mxu0 0.0
  %5636 = vmatmul.mubr.f32.gmra.mrb[0].mxu0 %v5519
  %v5637 = vpop.f32.mrb[0].mxu0
  %v5638 = vadd.f32 0.0, %v5637
  %v5639 = vpop.f32.mrb[0].mxu0
  %5640 = vmatprep.mubr.f32.mxu0 0.0
  %5641 = vmatmul.mubr.f32.gmra.mrb[0].mxu0 %v5522
  %v5642 = vpop.f32.mrb[0].mxu0
  %v5643 = vadd.f32 0.0, %v5642
  %v5644 = vpop.f32.mrb[0].mxu0
  %5645 = vmatprep.mubr.f32.mxu0 0.0
  %5646 = vmatmul.mubr.f32.gmra.mrb[0].mxu0 %v5525
  %v5647 = vpop.f32.mrb[0].mxu0
  %v5648 = vadd.f32 0.0, %v5647
  %v5649 = vpop.f32.mrb[0].mxu0
  %5650 = vmatprep.mubr.f32.mxu0 0.0
  %5651 = vmatmul.mubr.f32.gmra.mrb[0].mxu0 %v5528
  %v5652 = vpop.f32.mrb[0].mxu0
  %v5653 = vadd.f32 0.0, %v5652
  %v5654 = vpop.f32.mrb[0].mxu0
  %5655 = vmatprep.mubr.f32.mxu0 0.0
  %5656 = vmatmul.mubr.f32.gmra.mrb[0].mxu0 %v5531
  %v5657 = vpop.f32.mrb[0].mxu0
  %v5658 = vadd.f32 0.0, %v5657
  %v5659 = vpop.f32.mrb[0].mxu0
  %5660 = vmatprep.mubr.f32.mxu0 0.0
  %5661 = vmatmul.mubr.f32.gmra.mrb[0].mxu0 %v5534
  %v5662 = vpop.f32.mrb[0].mxu0
  %v5663 = vadd.f32 0.0, %v5662
  %v5664 = vpop.f32.mrb[0].mxu0
  %5665 = vmatprep.mubr.f32.mxu0 0.0
  %5666 = vmatmul.mubr.f32.gmra.mrb[0].mxu0 %v5537
  %v5667 = vpop.f32.mrb[0].mxu0
  %v5668 = vadd.f32 0.0, %v5667
  %v5669 = vpop.f32.mrb[0].mxu0
  %5670 = vmatprep.mubr.f32.mxu0 0.0
  %5671 = vmatmul.mubr.f32.gmra.mrb[0].mxu0 %v5540
  %v5672 = vpop.f32.mrb[0].mxu0
  %v5673 = vadd.f32 0.0, %v5672
  %v5674 = vpop.f32.mrb[0].mxu0
  %5675 = vmatprep.mubr.f32.mxu0 0.0
  %5676 = vmatmul.mubr.f32.gmra.mrb[0].mxu0 %v5543
  %v5677 = vpop.f32.mrb[0].mxu0
  %v5678 = vadd.f32 0.0, %v5677
  %v5679 = vpop.f32.mrb[0].mxu0
  %5680 = vmatprep.mubr.f32.mxu0 0.0
  %5681 = vmatmul.mubr.f32.gmra.mrb[0].mxu0 %v5546
  %v5682 = vpop.f32.mrb[0].mxu0
  %v5683 = vadd.f32 0.0, %v5682
  %v5684 = vpop.f32.mrb[0].mxu0
  %5685 = vmatprep.mubr.f32.mxu0 0.0
  %5686 = vmatmul.mubr.f32.gmra.mrb[0].mxu0 %v5549
  %v5687 = vpop.f32.mrb[0].mxu0
  %v5688 = vadd.f32 0.0, %v5687
  %v5689 = vpop.f32.mrb[0].mxu0
  %5690 = vdwg.mxu0
  %s5691 = scalar_lea.vmem %s15, 32
  %v5692 = vld [vmem:[%s5691] sm:$0xff]
  %v5693 = vld [vmem:[%s5691 + $0x8] sm:$0x3]
  %v5695 = vsel %vm2802, %v5618, 0
  %v5698 = vsel %vm2802, %v5623, 0
  %v5701 = vsel %vm2802, %v5628, 0
  %v5704 = vsel %vm2802, %v5633, 0
  %v5707 = vsel %vm2802, %v5638, 0
  %v5710 = vsel %vm2802, %v5643, 0
  %v5713 = vsel %vm2802, %v5648, 0
  %v5716 = vsel %vm2802, %v5653, 0
  %v5719 = vsel %vm2802, %v5658, 0
  %v5722 = vsel %vm2802, %v5663, 0
  %v5725 = vsel %vm2802, %v5668, 0
  %v5728 = vsel %vm2802, %v5673, 0
  %v5731 = vsel %vm2802, %v5678, 0
  %v5734 = vsel %vm2802, %v5683, 0
  %v5737 = vsel %vm2802, %v5688, 0
  %v5740 = vsel %vm2812, %v5693, 0
  %5742 = vmatprep.subr.mxu0 0.0
  %5743 = vmatpush1.msra.mxu0 %v5692
  %5744 = vmatprep.subr.mxu0 0.0
  %5745 = vmatpush1.msra.mxu0 %v5740
  %5746 = vmatprep.subr.mxu0 0.0
  %5747 = vmatpush1.msra.mxu0 0.0
  %5748 = vmatprep.subr.mxu0 0.0
  %5749 = vmatpush1.msra.mxu0 0.0
  %5750 = vmatprep.subr.mxu0 0.0
  %5751 = vmatpush1.msra.mxu0 0.0
  %5752 = vmatprep.subr.mxu0 0.0
  %5753 = vmatpush1.msra.mxu0 0.0
  %5754 = vmatprep.subr.mxu0 0.0
  %5755 = vmatpush1.msra.mxu0 0.0
  %5756 = vmatprep.subr.mxu0 0.0
  %5757 = vmatpush1.msra.mxu0 0.0
  %5758 = vmatprep.subr.mxu0 0.0
  %5759 = vmatpush1.msra.mxu0 0.0
  %5760 = vmatprep.subr.mxu0 0.0
  %5761 = vmatpush1.msra.mxu0 0.0
  %5762 = vmatprep.subr.mxu0 0.0
  %5763 = vmatpush1.msra.mxu0 0.0
  %5764 = vmatprep.subr.mxu0 0.0
  %5765 = vmatpush1.msra.mxu0 0.0
  %5766 = vmatprep.subr.mxu0 0.0
  %5767 = vmatpush1.msra.mxu0 0.0
  %5768 = vmatprep.subr.mxu0 0.0
  %5769 = vmatpush1.msra.mxu0 0.0
  %5770 = vmatprep.subr.mxu0 0.0
  %5771 = vmatpush1.msra.mxu0 0.0
  %5772 = vmatprep.subr.mxu0 0.0
  %5773 = vmatpush1.msra.mxu0 0.0
  %5774 = vmatprep.subr.mxu0 0.0
  %5775 = vmatpush1.msra.mxu0 0.0
  %5776 = vmatprep.subr.mxu0 0.0
  %5777 = vmatpush1.msra.mxu0 0.0
  %5778 = vmatprep.subr.mxu0 0.0
  %5779 = vmatpush1.msra.mxu0 0.0
  %5780 = vmatprep.subr.mxu0 0.0
  %5781 = vmatpush1.msra.mxu0 0.0
  %5782 = vmatprep.subr.mxu0 0.0
  %5783 = vmatpush1.msra.mxu0 0.0
  %5784 = vmatprep.subr.mxu0 0.0
  %5785 = vmatpush1.msra.mxu0 0.0
  %5786 = vmatprep.subr.mxu0 0.0
  %5787 = vmatpush1.msra.mxu0 0.0
  %5788 = vmatprep.subr.mxu0 0.0
  %5789 = vmatpush1.msra.mxu0 0.0
  %5790 = vmatprep.subr.mxu0 0.0
  %5791 = vmatpush1.msra.mxu0 0.0
  %5792 = vmatprep.subr.mxu0 0.0
  %5793 = vmatpush1.msra.mxu0 0.0
  %5794 = vmatprep.subr.mxu0 0.0
  %5795 = vmatpush1.msra.mxu0 0.0
  %5796 = vmatprep.subr.mxu0 0.0
  %5797 = vmatpush1.msra.mxu0 0.0
  %5798 = vmatprep.subr.mxu0 0.0
  %5799 = vmatpush1.msra.mxu0 0.0
  %5800 = vmatprep.subr.mxu0 0.0
  %5801 = vmatpush1.msra.mxu0 0.0
  %5802 = vmatprep.subr.mxu0 0.0
  %5803 = vmatpush1.msra.mxu0 0.0
  %5804 = vmatprep.subr.mxu0 0.0
  %5805 = vmatpush1.msra.mxu0 0.0
  %5806 = vmatprep.mubr.f32.mxu0 0.0
  %5807 = vmatmul.mubr.f32.gmra.mrb[0].mxu0 %v5695
  %v5808 = vpop.f32.mrb[0].mxu0
  %v5809 = vadd.f32 0.0, %v5808
  %v5810 = vpop.f32.mrb[0].mxu0
  %5811 = vmatprep.mubr.f32.mxu0 0.0
  %5812 = vmatmul.mubr.f32.gmra.mrb[0].mxu0 %v5698
  %v5813 = vpop.f32.mrb[0].mxu0
  %v5814 = vadd.f32 0.0, %v5813
  %v5815 = vpop.f32.mrb[0].mxu0
  %5816 = vmatprep.mubr.f32.mxu0 0.0
  %5817 = vmatmul.mubr.f32.gmra.mrb[0].mxu0 %v5701
  %v5818 = vpop.f32.mrb[0].mxu0
  %v5819 = vadd.f32 0.0, %v5818
  %v5820 = vpop.f32.mrb[0].mxu0
  %5821 = vmatprep.mubr.f32.mxu0 0.0
  %5822 = vmatmul.mubr.f32.gmra.mrb[0].mxu0 %v5704
  %v5823 = vpop.f32.mrb[0].mxu0
  %v5824 = vadd.f32 0.0, %v5823
  %v5825 = vpop.f32.mrb[0].mxu0
  %5826 = vmatprep.mubr.f32.mxu0 0.0
  %5827 = vmatmul.mubr.f32.gmra.mrb[0].mxu0 %v5707
  %v5828 = vpop.f32.mrb[0].mxu0
  %v5829 = vadd.f32 0.0, %v5828
  %v5830 = vpop.f32.mrb[0].mxu0
  %5831 = vmatprep.mubr.f32.mxu0 0.0
  %5832 = vmatmul.mubr.f32.gmra.mrb[0].mxu0 %v5710
  %v5833 = vpop.f32.mrb[0].mxu0
  %v5834 = vadd.f32 0.0, %v5833
  %v5835 = vpop.f32.mrb[0].mxu0
  %5836 = vmatprep.mubr.f32.mxu0 0.0
  %5837 = vmatmul.mubr.f32.gmra.mrb[0].mxu0 %v5713
  %v5838 = vpop.f32.mrb[0].mxu0
  %v5839 = vadd.f32 0.0, %v5838
  %v5840 = vpop.f32.mrb[0].mxu0
  %5841 = vmatprep.mubr.f32.mxu0 0.0
  %5842 = vmatmul.mubr.f32.gmra.mrb[0].mxu0 %v5716
  %v5843 = vpop.f32.mrb[0].mxu0
  %v5844 = vadd.f32 0.0, %v5843
  %v5845 = vpop.f32.mrb[0].mxu0
  %5846 = vmatprep.mubr.f32.mxu0 0.0
  %5847 = vmatmul.mubr.f32.gmra.mrb[0].mxu0 %v5719
  %v5848 = vpop.f32.mrb[0].mxu0
  %v5849 = vadd.f32 0.0, %v5848
  %v5850 = vpop.f32.mrb[0].mxu0
  %5851 = vmatprep.mubr.f32.mxu0 0.0
  %5852 = vmatmul.mubr.f32.gmra.mrb[0].mxu0 %v5722
  %v5853 = vpop.f32.mrb[0].mxu0
  %v5854 = vadd.f32 0.0, %v5853
  %v5855 = vpop.f32.mrb[0].mxu0
  %5856 = vmatprep.mubr.f32.mxu0 0.0
  %5857 = vmatmul.mubr.f32.gmra.mrb[0].mxu0 %v5725
  %v5858 = vpop.f32.mrb[0].mxu0
  %v5859 = vadd.f32 0.0, %v5858
  %v5860 = vpop.f32.mrb[0].mxu0
  %5861 = vmatprep.mubr.f32.mxu0 0.0
  %5862 = vmatmul.mubr.f32.gmra.mrb[0].mxu0 %v5728
  %v5863 = vpop.f32.mrb[0].mxu0
  %v5864 = vadd.f32 0.0, %v5863
  %v5865 = vpop.f32.mrb[0].mxu0
  %5866 = vmatprep.mubr.f32.mxu0 0.0
  %5867 = vmatmul.mubr.f32.gmra.mrb[0].mxu0 %v5731
  %v5868 = vpop.f32.mrb[0].mxu0
  %v5869 = vadd.f32 0.0, %v5868
  %v5870 = vpop.f32.mrb[0].mxu0
  %5871 = vmatprep.mubr.f32.mxu0 0.0
  %5872 = vmatmul.mubr.f32.gmra.mrb[0].mxu0 %v5734
  %v5873 = vpop.f32.mrb[0].mxu0
  %v5874 = vadd.f32 0.0, %v5873
  %v5875 = vpop.f32.mrb[0].mxu0
  %5876 = vmatprep.mubr.f32.mxu0 0.0
  %5877 = vmatmul.mubr.f32.gmra.mrb[0].mxu0 %v5737
  %v5878 = vpop.f32.mrb[0].mxu0
  %v5879 = vadd.f32 0.0, %v5878
  %v5880 = vpop.f32.mrb[0].mxu0
  %5881 = vdwg.mxu0
  %v5882 = vadd.f32 %v5417, %v5809
  %v5883 = vadd.f32 %v5422, %v5814
  %v5884 = vadd.f32 %v5427, %v5819
  %v5885 = vadd.f32 %v5432, %v5824
  %v5886 = vadd.f32 %v5437, %v5829
  %v5887 = vadd.f32 %v5442, %v5834
  %v5888 = vadd.f32 %v5447, %v5839
  %v5889 = vadd.f32 %v5452, %v5844
  %v5890 = vadd.f32 %v5457, %v5849
  %v5891 = vadd.f32 %v5462, %v5854
  %v5892 = vadd.f32 %v5467, %v5859
  %v5893 = vadd.f32 %v5472, %v5864
  %v5894 = vadd.f32 %v5477, %v5869
  %v5895 = vadd.f32 %v5482, %v5874
  %v5896 = vadd.f32 %v5487, %v5879
  %s5897 = scalar_lea.vmem %s14, 360
  %v5898 = vld [vmem:[%s5897] sm:$0xff]
  %v5899 = vld [vmem:[%s5897 + $0x8] sm:$0xff]
  %v5900 = vld [vmem:[%s5897 + $0x10] sm:$0xff]
  %v5901 = vld [vmem:[%s5897 + $0x18] sm:$0xff]
  %v5902 = vld [vmem:[%s5897 + $0x20] sm:$0xff]
  %v5903 = vld [vmem:[%s5897 + $0x28] sm:$0xff]
  %v5904 = vld [vmem:[%s5897 + $0x30] sm:$0xff]
  %v5905 = vld [vmem:[%s5897 + $0x38] sm:$0xff]
  %v5906 = vld [vmem:[%s5897 + $0x40] sm:$0xff]
  %v5907 = vld [vmem:[%s5897 + $0x48] sm:$0xff]
  %v5908 = vld [vmem:[%s5897 + $0x50] sm:$0xff]
  %v5909 = vld [vmem:[%s5897 + $0x58] sm:$0xff]
  %v5910 = vld [vmem:[%s5897 + $0x60] sm:$0xff]
  %v5911 = vld [vmem:[%s5897 + $0x68] sm:$0xff]
  %v5912 = vld [vmem:[%s5897 + $0x70] sm:$0xff]
  %v5914 = vsel %vm2614, %v5898, 0
  %v5917 = vsel %vm2614, %v5899, 0
  %v5920 = vsel %vm2614, %v5900, 0
  %v5923 = vsel %vm2614, %v5901, 0
  %v5926 = vsel %vm2614, %v5902, 0
  %v5929 = vsel %vm2614, %v5903, 0
  %v5932 = vsel %vm2614, %v5904, 0
  %v5935 = vsel %vm2614, %v5905, 0
  %v5938 = vsel %vm2614, %v5906, 0
  %v5941 = vsel %vm2614, %v5907, 0
  %v5944 = vsel %vm2614, %v5908, 0
  %v5947 = vsel %vm2614, %v5909, 0
  %v5950 = vsel %vm2614, %v5910, 0
  %v5953 = vsel %vm2614, %v5911, 0
  %v5956 = vsel %vm2614, %v5912, 0
  %5958 = vmatprep.subr.mxu0 0.0
  %5959 = vmatpush1.msra.mxu0 %v4698
  %5960 = vmatprep.subr.mxu0 0.0
  %5961 = vmatpush1.msra.mxu0 %v4699
  %5962 = vmatprep.subr.mxu0 0.0
  %5963 = vmatpush1.msra.mxu0 %v4700
  %5964 = vmatprep.subr.mxu0 0.0
  %5965 = vmatpush1.msra.mxu0 %v4701
  %5966 = vmatprep.subr.mxu0 0.0
  %5967 = vmatpush1.msra.mxu0 %v4702
  %5968 = vmatprep.subr.mxu0 0.0
  %5969 = vmatpush1.msra.mxu0 %v4703
  %5970 = vmatprep.subr.mxu0 0.0
  %5971 = vmatpush1.msra.mxu0 %v4704
  %5972 = vmatprep.subr.mxu0 0.0
  %5973 = vmatpush1.msra.mxu0 %v4705
  %5974 = vmatprep.subr.mxu0 0.0
  %5975 = vmatpush1.msra.mxu0 %v4706
  %5976 = vmatprep.subr.mxu0 0.0
  %5977 = vmatpush1.msra.mxu0 %v4707
  %5978 = vmatprep.subr.mxu0 0.0
  %5979 = vmatpush1.msra.mxu0 0.0
  %5980 = vmatprep.subr.mxu0 0.0
  %5981 = vmatpush1.msra.mxu0 0.0
  %5982 = vmatprep.subr.mxu0 0.0
  %5983 = vmatpush1.msra.mxu0 0.0
  %5984 = vmatprep.subr.mxu0 0.0
  %5985 = vmatpush1.msra.mxu0 0.0
  %5986 = vmatprep.subr.mxu0 0.0
  %5987 = vmatpush1.msra.mxu0 0.0
  %5988 = vmatprep.subr.mxu0 0.0
  %5989 = vmatpush1.msra.mxu0 0.0
  %5990 = vmatprep.subr.mxu0 0.0
  %5991 = vmatpush1.msra.mxu0 0.0
  %5992 = vmatprep.subr.mxu0 0.0
  %5993 = vmatpush1.msra.mxu0 0.0
  %5994 = vmatprep.subr.mxu0 0.0
  %5995 = vmatpush1.msra.mxu0 0.0
  %5996 = vmatprep.subr.mxu0 0.0
  %5997 = vmatpush1.msra.mxu0 0.0
  %5998 = vmatprep.subr.mxu0 0.0
  %5999 = vmatpush1.msra.mxu0 0.0
  %6000 = vmatprep.subr.mxu0 0.0
  %6001 = vmatpush1.msra.mxu0 0.0
  %6002 = vmatprep.subr.mxu0 0.0
  %6003 = vmatpush1.msra.mxu0 0.0
  %6004 = vmatprep.subr.mxu0 0.0
  %6005 = vmatpush1.msra.mxu0 0.0
  %6006 = vmatprep.subr.mxu0 0.0
  %6007 = vmatpush1.msra.mxu0 0.0
  %6008 = vmatprep.subr.mxu0 0.0
  %6009 = vmatpush1.msra.mxu0 0.0
  %6010 = vmatprep.subr.mxu0 0.0
  %6011 = vmatpush1.msra.mxu0 0.0
  %6012 = vmatprep.subr.mxu0 0.0
  %6013 = vmatpush1.msra.mxu0 0.0
  %6014 = vmatprep.subr.mxu0 0.0
  %6015 = vmatpush1.msra.mxu0 0.0
  %6016 = vmatprep.subr.mxu0 0.0
  %6017 = vmatpush1.msra.mxu0 0.0
  %6018 = vmatprep.subr.mxu0 0.0
  %6019 = vmatpush1.msra.mxu0 0.0
  %6020 = vmatprep.subr.mxu0 0.0
  %6021 = vmatpush1.msra.mxu0 0.0
  %6022 = vmatprep.mubr.f32.mxu0 0.0
  %6023 = vmatmul.mubr.f32.gmra.mrb[0].mxu0 %v5914
  %v6024 = vpop.f32.mrb[0].mxu0
  %v6025 = vadd.f32 0.0, %v6024
  %v6026 = vpop.f32.mrb[0].mxu0
  %6027 = vmatprep.mubr.f32.mxu0 0.0
  %6028 = vmatmul.mubr.f32.gmra.mrb[0].mxu0 %v5917
  %v6029 = vpop.f32.mrb[0].mxu0
  %v6030 = vadd.f32 0.0, %v6029
  %v6031 = vpop.f32.mrb[0].mxu0
  %6032 = vmatprep.mubr.f32.mxu0 0.0
  %6033 = vmatmul.mubr.f32.gmra.mrb[0].mxu0 %v5920
  %v6034 = vpop.f32.mrb[0].mxu0
  %v6035 = vadd.f32 0.0, %v6034
  %v6036 = vpop.f32.mrb[0].mxu0
  %6037 = vmatprep.mubr.f32.mxu0 0.0
  %6038 = vmatmul.mubr.f32.gmra.mrb[0].mxu0 %v5923
  %v6039 = vpop.f32.mrb[0].mxu0
  %v6040 = vadd.f32 0.0, %v6039
  %v6041 = vpop.f32.mrb[0].mxu0
  %6042 = vmatprep.mubr.f32.mxu0 0.0
  %6043 = vmatmul.mubr.f32.gmra.mrb[0].mxu0 %v5926
  %v6044 = vpop.f32.mrb[0].mxu0
  %v6045 = vadd.f32 0.0, %v6044
  %v6046 = vpop.f32.mrb[0].mxu0
  %6047 = vmatprep.mubr.f32.mxu0 0.0
  %6048 = vmatmul.mubr.f32.gmra.mrb[0].mxu0 %v5929
  %v6049 = vpop.f32.mrb[0].mxu0
  %v6050 = vadd.f32 0.0, %v6049
  %v6051 = vpop.f32.mrb[0].mxu0
  %6052 = vmatprep.mubr.f32.mxu0 0.0
  %6053 = vmatmul.mubr.f32.gmra.mrb[0].mxu0 %v5932
  %v6054 = vpop.f32.mrb[0].mxu0
  %v6055 = vadd.f32 0.0, %v6054
  %v6056 = vpop.f32.mrb[0].mxu0
  %6057 = vmatprep.mubr.f32.mxu0 0.0
  %6058 = vmatmul.mubr.f32.gmra.mrb[0].mxu0 %v5935
  %v6059 = vpop.f32.mrb[0].mxu0
  %v6060 = vadd.f32 0.0, %v6059
  %v6061 = vpop.f32.mrb[0].mxu0
  %6062 = vmatprep.mubr.f32.mxu0 0.0
  %6063 = vmatmul.mubr.f32.gmra.mrb[0].mxu0 %v5938
  %v6064 = vpop.f32.mrb[0].mxu0
  %v6065 = vadd.f32 0.0, %v6064
  %v6066 = vpop.f32.mrb[0].mxu0
  %6067 = vmatprep.mubr.f32.mxu0 0.0
  %6068 = vmatmul.mubr.f32.gmra.mrb[0].mxu0 %v5941
  %v6069 = vpop.f32.mrb[0].mxu0
  %v6070 = vadd.f32 0.0, %v6069
  %v6071 = vpop.f32.mrb[0].mxu0
  %6072 = vmatprep.mubr.f32.mxu0 0.0
  %6073 = vmatmul.mubr.f32.gmra.mrb[0].mxu0 %v5944
  %v6074 = vpop.f32.mrb[0].mxu0
  %v6075 = vadd.f32 0.0, %v6074
  %v6076 = vpop.f32.mrb[0].mxu0
  %6077 = vmatprep.mubr.f32.mxu0 0.0
  %6078 = vmatmul.mubr.f32.gmra.mrb[0].mxu0 %v5947
  %v6079 = vpop.f32.mrb[0].mxu0
  %v6080 = vadd.f32 0.0, %v6079
  %v6081 = vpop.f32.mrb[0].mxu0
  %6082 = vmatprep.mubr.f32.mxu0 0.0
  %6083 = vmatmul.mubr.f32.gmra.mrb[0].mxu0 %v5950
  %v6084 = vpop.f32.mrb[0].mxu0
  %v6085 = vadd.f32 0.0, %v6084
  %v6086 = vpop.f32.mrb[0].mxu0
  %6087 = vmatprep.mubr.f32.mxu0 0.0
  %6088 = vmatmul.mubr.f32.gmra.mrb[0].mxu0 %v5953
  %v6089 = vpop.f32.mrb[0].mxu0
  %v6090 = vadd.f32 0.0, %v6089
  %v6091 = vpop.f32.mrb[0].mxu0
  %6092 = vmatprep.mubr.f32.mxu0 0.0
  %6093 = vmatmul.mubr.f32.gmra.mrb[0].mxu0 %v5956
  %v6094 = vpop.f32.mrb[0].mxu0
  %v6095 = vadd.f32 0.0, %v6094
  %v6096 = vpop.f32.mrb[0].mxu0
  %6097 = vdwg.mxu0
  %s6098 = scalar_lea.vmem %s15, 48
  %v6099 = vld [vmem:[%s6098] sm:$0xff]
  %v6100 = vld [vmem:[%s6098 + $0x8] sm:$0x3]
  %v6102 = vsel %vm2802, %v6025, 0
  %v6105 = vsel %vm2802, %v6030, 0
  %v6108 = vsel %vm2802, %v6035, 0
  %v6111 = vsel %vm2802, %v6040, 0
  %v6114 = vsel %vm2802, %v6045, 0
  %v6117 = vsel %vm2802, %v6050, 0
  %v6120 = vsel %vm2802, %v6055, 0
  %v6123 = vsel %vm2802, %v6060, 0
  %v6126 = vsel %vm2802, %v6065, 0
  %v6129 = vsel %vm2802, %v6070, 0
  %v6132 = vsel %vm2802, %v6075, 0
  %v6135 = vsel %vm2802, %v6080, 0
  %v6138 = vsel %vm2802, %v6085, 0
  %v6141 = vsel %vm2802, %v6090, 0
  %v6144 = vsel %vm2802, %v6095, 0
  %v6147 = vsel %vm2812, %v6100, 0
  %6149 = vmatprep.subr.mxu0 0.0
  %6150 = vmatpush1.msra.mxu0 %v6099
  %6151 = vmatprep.subr.mxu0 0.0
  %6152 = vmatpush1.msra.mxu0 %v6147
  %6153 = vmatprep.subr.mxu0 0.0
  %6154 = vmatpush1.msra.mxu0 0.0
  %6155 = vmatprep.subr.mxu0 0.0
  %6156 = vmatpush1.msra.mxu0 0.0
  %6157 = vmatprep.subr.mxu0 0.0
  %6158 = vmatpush1.msra.mxu0 0.0
  %6159 = vmatprep.subr.mxu0 0.0
  %6160 = vmatpush1.msra.mxu0 0.0
  %6161 = vmatprep.subr.mxu0 0.0
  %6162 = vmatpush1.msra.mxu0 0.0
  %6163 = vmatprep.subr.mxu0 0.0
  %6164 = vmatpush1.msra.mxu0 0.0
  %6165 = vmatprep.subr.mxu0 0.0
  %6166 = vmatpush1.msra.mxu0 0.0
  %6167 = vmatprep.subr.mxu0 0.0
  %6168 = vmatpush1.msra.mxu0 0.0
  %6169 = vmatprep.subr.mxu0 0.0
  %6170 = vmatpush1.msra.mxu0 0.0
  %6171 = vmatprep.subr.mxu0 0.0
  %6172 = vmatpush1.msra.mxu0 0.0
  %6173 = vmatprep.subr.mxu0 0.0
  %6174 = vmatpush1.msra.mxu0 0.0
  %6175 = vmatprep.subr.mxu0 0.0
  %6176 = vmatpush1.msra.mxu0 0.0
  %6177 = vmatprep.subr.mxu0 0.0
  %6178 = vmatpush1.msra.mxu0 0.0
  %6179 = vmatprep.subr.mxu0 0.0
  %6180 = vmatpush1.msra.mxu0 0.0
  %6181 = vmatprep.subr.mxu0 0.0
  %6182 = vmatpush1.msra.mxu0 0.0
  %6183 = vmatprep.subr.mxu0 0.0
  %6184 = vmatpush1.msra.mxu0 0.0
  %6185 = vmatprep.subr.mxu0 0.0
  %6186 = vmatpush1.msra.mxu0 0.0
  %6187 = vmatprep.subr.mxu0 0.0
  %6188 = vmatpush1.msra.mxu0 0.0
  %6189 = vmatprep.subr.mxu0 0.0
  %6190 = vmatpush1.msra.mxu0 0.0
  %6191 = vmatprep.subr.mxu0 0.0
  %6192 = vmatpush1.msra.mxu0 0.0
  %6193 = vmatprep.subr.mxu0 0.0
  %6194 = vmatpush1.msra.mxu0 0.0
  %6195 = vmatprep.subr.mxu0 0.0
  %6196 = vmatpush1.msra.mxu0 0.0
  %6197 = vmatprep.subr.mxu0 0.0
  %6198 = vmatpush1.msra.mxu0 0.0
  %6199 = vmatprep.subr.mxu0 0.0
  %6200 = vmatpush1.msra.mxu0 0.0
  %6201 = vmatprep.subr.mxu0 0.0
  %6202 = vmatpush1.msra.mxu0 0.0
  %6203 = vmatprep.subr.mxu0 0.0
  %6204 = vmatpush1.msra.mxu0 0.0
  %6205 = vmatprep.subr.mxu0 0.0
  %6206 = vmatpush1.msra.mxu0 0.0
  %6207 = vmatprep.subr.mxu0 0.0
  %6208 = vmatpush1.msra.mxu0 0.0
  %6209 = vmatprep.subr.mxu0 0.0
  %6210 = vmatpush1.msra.mxu0 0.0
  %6211 = vmatprep.subr.mxu0 0.0
  %6212 = vmatpush1.msra.mxu0 0.0
  %6213 = vmatprep.mubr.f32.mxu0 0.0
  %6214 = vmatmul.mubr.f32.gmra.mrb[0].mxu0 %v6102
  %v6215 = vpop.f32.mrb[0].mxu0
  %v6216 = vadd.f32 0.0, %v6215
  %v6217 = vpop.f32.mrb[0].mxu0
  %6218 = vmatprep.mubr.f32.mxu0 0.0
  %6219 = vmatmul.mubr.f32.gmra.mrb[0].mxu0 %v6105
  %v6220 = vpop.f32.mrb[0].mxu0
  %v6221 = vadd.f32 0.0, %v6220
  %v6222 = vpop.f32.mrb[0].mxu0
  %6223 = vmatprep.mubr.f32.mxu0 0.0
  %6224 = vmatmul.mubr.f32.gmra.mrb[0].mxu0 %v6108
  %v6225 = vpop.f32.mrb[0].mxu0
  %v6226 = vadd.f32 0.0, %v6225
  %v6227 = vpop.f32.mrb[0].mxu0
  %6228 = vmatprep.mubr.f32.mxu0 0.0
  %6229 = vmatmul.mubr.f32.gmra.mrb[0].mxu0 %v6111
  %v6230 = vpop.f32.mrb[0].mxu0
  %v6231 = vadd.f32 0.0, %v6230
  %v6232 = vpop.f32.mrb[0].mxu0
  %6233 = vmatprep.mubr.f32.mxu0 0.0
  %6234 = vmatmul.mubr.f32.gmra.mrb[0].mxu0 %v6114
  %v6235 = vpop.f32.mrb[0].mxu0
  %v6236 = vadd.f32 0.0, %v6235
  %v6237 = vpop.f32.mrb[0].mxu0
  %6238 = vmatprep.mubr.f32.mxu0 0.0
  %6239 = vmatmul.mubr.f32.gmra.mrb[0].mxu0 %v6117
  %v6240 = vpop.f32.mrb[0].mxu0
  %v6241 = vadd.f32 0.0, %v6240
  %v6242 = vpop.f32.mrb[0].mxu0
  %6243 = vmatprep.mubr.f32.mxu0 0.0
  %6244 = vmatmul.mubr.f32.gmra.mrb[0].mxu0 %v6120
  %v6245 = vpop.f32.mrb[0].mxu0
  %v6246 = vadd.f32 0.0, %v6245
  %v6247 = vpop.f32.mrb[0].mxu0
  %6248 = vmatprep.mubr.f32.mxu0 0.0
  %6249 = vmatmul.mubr.f32.gmra.mrb[0].mxu0 %v6123
  %v6250 = vpop.f32.mrb[0].mxu0
  %v6251 = vadd.f32 0.0, %v6250
  %v6252 = vpop.f32.mrb[0].mxu0
  %6253 = vmatprep.mubr.f32.mxu0 0.0
  %6254 = vmatmul.mubr.f32.gmra.mrb[0].mxu0 %v6126
  %v6255 = vpop.f32.mrb[0].mxu0
  %v6256 = vadd.f32 0.0, %v6255
  %v6257 = vpop.f32.mrb[0].mxu0
  %6258 = vmatprep.mubr.f32.mxu0 0.0
  %6259 = vmatmul.mubr.f32.gmra.mrb[0].mxu0 %v6129
  %v6260 = vpop.f32.mrb[0].mxu0
  %v6261 = vadd.f32 0.0, %v6260
  %v6262 = vpop.f32.mrb[0].mxu0
  %6263 = vmatprep.mubr.f32.mxu0 0.0
  %6264 = vmatmul.mubr.f32.gmra.mrb[0].mxu0 %v6132
  %v6265 = vpop.f32.mrb[0].mxu0
  %v6266 = vadd.f32 0.0, %v6265
  %v6267 = vpop.f32.mrb[0].mxu0
  %6268 = vmatprep.mubr.f32.mxu0 0.0
  %6269 = vmatmul.mubr.f32.gmra.mrb[0].mxu0 %v6135
  %v6270 = vpop.f32.mrb[0].mxu0
  %v6271 = vadd.f32 0.0, %v6270
  %v6272 = vpop.f32.mrb[0].mxu0
  %6273 = vmatprep.mubr.f32.mxu0 0.0
  %6274 = vmatmul.mubr.f32.gmra.mrb[0].mxu0 %v6138
  %v6275 = vpop.f32.mrb[0].mxu0
  %v6276 = vadd.f32 0.0, %v6275
  %v6277 = vpop.f32.mrb[0].mxu0
  %6278 = vmatprep.mubr.f32.mxu0 0.0
  %6279 = vmatmul.mubr.f32.gmra.mrb[0].mxu0 %v6141
  %v6280 = vpop.f32.mrb[0].mxu0
  %v6281 = vadd.f32 0.0, %v6280
  %v6282 = vpop.f32.mrb[0].mxu0
  %6283 = vmatprep.mubr.f32.mxu0 0.0
  %6284 = vmatmul.mubr.f32.gmra.mrb[0].mxu0 %v6144
  %v6285 = vpop.f32.mrb[0].mxu0
  %v6286 = vadd.f32 0.0, %v6285
  %v6287 = vpop.f32.mrb[0].mxu0
  %6288 = vdwg.mxu0
  %v6289 = vadd.f32 %v5882, %v6216
  %v6290 = vadd.f32 %v5883, %v6221
  %v6291 = vadd.f32 %v5884, %v6226
  %v6292 = vadd.f32 %v5885, %v6231
  %v6293 = vadd.f32 %v5886, %v6236
  %v6294 = vadd.f32 %v5887, %v6241
  %v6295 = vadd.f32 %v5888, %v6246
  %v6296 = vadd.f32 %v5889, %v6251
  %v6297 = vadd.f32 %v5890, %v6256
  %v6298 = vadd.f32 %v5891, %v6261
  %v6299 = vadd.f32 %v5892, %v6266
  %v6300 = vadd.f32 %v5893, %v6271
  %v6301 = vadd.f32 %v5894, %v6276
  %v6302 = vadd.f32 %v5895, %v6281
  %v6303 = vadd.f32 %v5896, %v6286
  %s6304 = scalar_lea.vmem %s14, 480
  %v6305 = vld [vmem:[%s6304] sm:$0xff]
  %v6306 = vld [vmem:[%s6304 + $0x8] sm:$0xff]
  %v6307 = vld [vmem:[%s6304 + $0x10] sm:$0xff]
  %v6308 = vld [vmem:[%s6304 + $0x18] sm:$0xff]
  %v6309 = vld [vmem:[%s6304 + $0x20] sm:$0xff]
  %v6310 = vld [vmem:[%s6304 + $0x28] sm:$0xff]
  %v6311 = vld [vmem:[%s6304 + $0x30] sm:$0xff]
  %v6312 = vld [vmem:[%s6304 + $0x38] sm:$0xff]
  %v6313 = vld [vmem:[%s6304 + $0x40] sm:$0xff]
  %v6314 = vld [vmem:[%s6304 + $0x48] sm:$0xff]
  %v6315 = vld [vmem:[%s6304 + $0x50] sm:$0xff]
  %v6316 = vld [vmem:[%s6304 + $0x58] sm:$0xff]
  %v6317 = vld [vmem:[%s6304 + $0x60] sm:$0xff]
  %v6318 = vld [vmem:[%s6304 + $0x68] sm:$0xff]
  %v6319 = vld [vmem:[%s6304 + $0x70] sm:$0xff]
  %v6321 = vsel %vm2614, %v6305, 0
  %v6324 = vsel %vm2614, %v6306, 0
  %v6327 = vsel %vm2614, %v6307, 0
  %v6330 = vsel %vm2614, %v6308, 0
  %v6333 = vsel %vm2614, %v6309, 0
  %v6336 = vsel %vm2614, %v6310, 0
  %v6339 = vsel %vm2614, %v6311, 0
  %v6342 = vsel %vm2614, %v6312, 0
  %v6345 = vsel %vm2614, %v6313, 0
  %v6348 = vsel %vm2614, %v6314, 0
  %v6351 = vsel %vm2614, %v6315, 0
  %v6354 = vsel %vm2614, %v6316, 0
  %v6357 = vsel %vm2614, %v6317, 0
  %v6360 = vsel %vm2614, %v6318, 0
  %v6363 = vsel %vm2614, %v6319, 0
  %6365 = vmatprep.subr.mxu0 0.0
  %6366 = vmatpush1.msra.mxu0 %v4698
  %6367 = vmatprep.subr.mxu0 0.0
  %6368 = vmatpush1.msra.mxu0 %v4699
  %6369 = vmatprep.subr.mxu0 0.0
  %6370 = vmatpush1.msra.mxu0 %v4700
  %6371 = vmatprep.subr.mxu0 0.0
  %6372 = vmatpush1.msra.mxu0 %v4701
  %6373 = vmatprep.subr.mxu0 0.0
  %6374 = vmatpush1.msra.mxu0 %v4702
  %6375 = vmatprep.subr.mxu0 0.0
  %6376 = vmatpush1.msra.mxu0 %v4703
  %6377 = vmatprep.subr.mxu0 0.0
  %6378 = vmatpush1.msra.mxu0 %v4704
  %6379 = vmatprep.subr.mxu0 0.0
  %6380 = vmatpush1.msra.mxu0 %v4705
  %6381 = vmatprep.subr.mxu0 0.0
  %6382 = vmatpush1.msra.mxu0 %v4706
  %6383 = vmatprep.subr.mxu0 0.0
  %6384 = vmatpush1.msra.mxu0 %v4707
  %6385 = vmatprep.subr.mxu0 0.0
  %6386 = vmatpush1.msra.mxu0 0.0
  %6387 = vmatprep.subr.mxu0 0.0
  %6388 = vmatpush1.msra.mxu0 0.0
  %6389 = vmatprep.subr.mxu0 0.0
  %6390 = vmatpush1.msra.mxu0 0.0
  %6391 = vmatprep.subr.mxu0 0.0
  %6392 = vmatpush1.msra.mxu0 0.0
  %6393 = vmatprep.subr.mxu0 0.0
  %6394 = vmatpush1.msra.mxu0 0.0
  %6395 = vmatprep.subr.mxu0 0.0
  %6396 = vmatpush1.msra.mxu0 0.0
  %6397 = vmatprep.subr.mxu0 0.0
  %6398 = vmatpush1.msra.mxu0 0.0
  %6399 = vmatprep.subr.mxu0 0.0
  %6400 = vmatpush1.msra.mxu0 0.0
  %6401 = vmatprep.subr.mxu0 0.0
  %6402 = vmatpush1.msra.mxu0 0.0
  %6403 = vmatprep.subr.mxu0 0.0
  %6404 = vmatpush1.msra.mxu0 0.0
  %6405 = vmatprep.subr.mxu0 0.0
  %6406 = vmatpush1.msra.mxu0 0.0
  %6407 = vmatprep.subr.mxu0 0.0
  %6408 = vmatpush1.msra.mxu0 0.0
  %6409 = vmatprep.subr.mxu0 0.0
  %6410 = vmatpush1.msra.mxu0 0.0
  %6411 = vmatprep.subr.mxu0 0.0
  %6412 = vmatpush1.msra.mxu0 0.0
  %6413 = vmatprep.subr.mxu0 0.0
  %6414 = vmatpush1.msra.mxu0 0.0
  %6415 = vmatprep.subr.mxu0 0.0
  %6416 = vmatpush1.msra.mxu0 0.0
  %6417 = vmatprep.subr.mxu0 0.0
  %6418 = vmatpush1.msra.mxu0 0.0
  %6419 = vmatprep.subr.mxu0 0.0
  %6420 = vmatpush1.msra.mxu0 0.0
  %6421 = vmatprep.subr.mxu0 0.0
  %6422 = vmatpush1.msra.mxu0 0.0
  %6423 = vmatprep.subr.mxu0 0.0
  %6424 = vmatpush1.msra.mxu0 0.0
  %6425 = vmatprep.subr.mxu0 0.0
  %6426 = vmatpush1.msra.mxu0 0.0
  %6427 = vmatprep.subr.mxu0 0.0
  %6428 = vmatpush1.msra.mxu0 0.0
  %6429 = vmatprep.mubr.f32.mxu0 0.0
  %6430 = vmatmul.mubr.f32.gmra.mrb[0].mxu0 %v6321
  %v6431 = vpop.f32.mrb[0].mxu0
  %v6432 = vadd.f32 0.0, %v6431
  %v6433 = vpop.f32.mrb[0].mxu0
  %6434 = vmatprep.mubr.f32.mxu0 0.0
  %6435 = vmatmul.mubr.f32.gmra.mrb[0].mxu0 %v6324
  %v6436 = vpop.f32.mrb[0].mxu0
  %v6437 = vadd.f32 0.0, %v6436
  %v6438 = vpop.f32.mrb[0].mxu0
  %6439 = vmatprep.mubr.f32.mxu0 0.0
  %6440 = vmatmul.mubr.f32.gmra.mrb[0].mxu0 %v6327
  %v6441 = vpop.f32.mrb[0].mxu0
  %v6442 = vadd.f32 0.0, %v6441
  %v6443 = vpop.f32.mrb[0].mxu0
  %6444 = vmatprep.mubr.f32.mxu0 0.0
  %6445 = vmatmul.mubr.f32.gmra.mrb[0].mxu0 %v6330
  %v6446 = vpop.f32.mrb[0].mxu0
  %v6447 = vadd.f32 0.0, %v6446
  %v6448 = vpop.f32.mrb[0].mxu0
  %6449 = vmatprep.mubr.f32.mxu0 0.0
  %6450 = vmatmul.mubr.f32.gmra.mrb[0].mxu0 %v6333
  %v6451 = vpop.f32.mrb[0].mxu0
  %v6452 = vadd.f32 0.0, %v6451
  %v6453 = vpop.f32.mrb[0].mxu0
  %6454 = vmatprep.mubr.f32.mxu0 0.0
  %6455 = vmatmul.mubr.f32.gmra.mrb[0].mxu0 %v6336
  %v6456 = vpop.f32.mrb[0].mxu0
  %v6457 = vadd.f32 0.0, %v6456
  %v6458 = vpop.f32.mrb[0].mxu0
  %6459 = vmatprep.mubr.f32.mxu0 0.0
  %6460 = vmatmul.mubr.f32.gmra.mrb[0].mxu0 %v6339
  %v6461 = vpop.f32.mrb[0].mxu0
  %v6462 = vadd.f32 0.0, %v6461
  %v6463 = vpop.f32.mrb[0].mxu0
  %6464 = vmatprep.mubr.f32.mxu0 0.0
  %6465 = vmatmul.mubr.f32.gmra.mrb[0].mxu0 %v6342
  %v6466 = vpop.f32.mrb[0].mxu0
  %v6467 = vadd.f32 0.0, %v6466
  %v6468 = vpop.f32.mrb[0].mxu0
  %6469 = vmatprep.mubr.f32.mxu0 0.0
  %6470 = vmatmul.mubr.f32.gmra.mrb[0].mxu0 %v6345
  %v6471 = vpop.f32.mrb[0].mxu0
  %v6472 = vadd.f32 0.0, %v6471
  %v6473 = vpop.f32.mrb[0].mxu0
  %6474 = vmatprep.mubr.f32.mxu0 0.0
  %6475 = vmatmul.mubr.f32.gmra.mrb[0].mxu0 %v6348
  %v6476 = vpop.f32.mrb[0].mxu0
  %v6477 = vadd.f32 0.0, %v6476
  %v6478 = vpop.f32.mrb[0].mxu0
  %6479 = vmatprep.mubr.f32.mxu0 0.0
  %6480 = vmatmul.mubr.f32.gmra.mrb[0].mxu0 %v6351
  %v6481 = vpop.f32.mrb[0].mxu0
  %v6482 = vadd.f32 0.0, %v6481
  %v6483 = vpop.f32.mrb[0].mxu0
  %6484 = vmatprep.mubr.f32.mxu0 0.0
  %6485 = vmatmul.mubr.f32.gmra.mrb[0].mxu0 %v6354
  %v6486 = vpop.f32.mrb[0].mxu0
  %v6487 = vadd.f32 0.0, %v6486
  %v6488 = vpop.f32.mrb[0].mxu0
  %6489 = vmatprep.mubr.f32.mxu0 0.0
  %6490 = vmatmul.mubr.f32.gmra.mrb[0].mxu0 %v6357
  %v6491 = vpop.f32.mrb[0].mxu0
  %v6492 = vadd.f32 0.0, %v6491
  %v6493 = vpop.f32.mrb[0].mxu0
  %6494 = vmatprep.mubr.f32.mxu0 0.0
  %6495 = vmatmul.mubr.f32.gmra.mrb[0].mxu0 %v6360
  %v6496 = vpop.f32.mrb[0].mxu0
  %v6497 = vadd.f32 0.0, %v6496
  %v6498 = vpop.f32.mrb[0].mxu0
  %6499 = vmatprep.mubr.f32.mxu0 0.0
  %6500 = vmatmul.mubr.f32.gmra.mrb[0].mxu0 %v6363
  %v6501 = vpop.f32.mrb[0].mxu0
  %v6502 = vadd.f32 0.0, %v6501
  %v6503 = vpop.f32.mrb[0].mxu0
  %6504 = vdwg.mxu0
  %s6505 = scalar_lea.vmem %s15, 64
  %v6506 = vld [vmem:[%s6505] sm:$0xff]
  %v6507 = vld [vmem:[%s6505 + $0x8] sm:$0x3]
  %v6509 = vsel %vm2802, %v6432, 0
  %v6512 = vsel %vm2802, %v6437, 0
  %v6515 = vsel %vm2802, %v6442, 0
  %v6518 = vsel %vm2802, %v6447, 0
  %v6521 = vsel %vm2802, %v6452, 0
  %v6524 = vsel %vm2802, %v6457, 0
  %v6527 = vsel %vm2802, %v6462, 0
  %v6530 = vsel %vm2802, %v6467, 0
  %v6533 = vsel %vm2802, %v6472, 0
  %v6536 = vsel %vm2802, %v6477, 0
  %v6539 = vsel %vm2802, %v6482, 0
  %v6542 = vsel %vm2802, %v6487, 0
  %v6545 = vsel %vm2802, %v6492, 0
  %v6548 = vsel %vm2802, %v6497, 0
  %v6551 = vsel %vm2802, %v6502, 0
  %v6554 = vsel %vm2812, %v6507, 0
  %6556 = vmatprep.subr.mxu0 0.0
  %6557 = vmatpush1.msra.mxu0 %v6506
  %6558 = vmatprep.subr.mxu0 0.0
  %6559 = vmatpush1.msra.mxu0 %v6554
  %6560 = vmatprep.subr.mxu0 0.0
  %6561 = vmatpush1.msra.mxu0 0.0
  %6562 = vmatprep.subr.mxu0 0.0
  %6563 = vmatpush1.msra.mxu0 0.0
  %6564 = vmatprep.subr.mxu0 0.0
  %6565 = vmatpush1.msra.mxu0 0.0
  %6566 = vmatprep.subr.mxu0 0.0
  %6567 = vmatpush1.msra.mxu0 0.0
  %6568 = vmatprep.subr.mxu0 0.0
  %6569 = vmatpush1.msra.mxu0 0.0
  %6570 = vmatprep.subr.mxu0 0.0
  %6571 = vmatpush1.msra.mxu0 0.0
  %6572 = vmatprep.subr.mxu0 0.0
  %6573 = vmatpush1.msra.mxu0 0.0
  %6574 = vmatprep.subr.mxu0 0.0
  %6575 = vmatpush1.msra.mxu0 0.0
  %6576 = vmatprep.subr.mxu0 0.0
  %6577 = vmatpush1.msra.mxu0 0.0
  %6578 = vmatprep.subr.mxu0 0.0
  %6579 = vmatpush1.msra.mxu0 0.0
  %6580 = vmatprep.subr.mxu0 0.0
  %6581 = vmatpush1.msra.mxu0 0.0
  %6582 = vmatprep.subr.mxu0 0.0
  %6583 = vmatpush1.msra.mxu0 0.0
  %6584 = vmatprep.subr.mxu0 0.0
  %6585 = vmatpush1.msra.mxu0 0.0
  %6586 = vmatprep.subr.mxu0 0.0
  %6587 = vmatpush1.msra.mxu0 0.0
  %6588 = vmatprep.subr.mxu0 0.0
  %6589 = vmatpush1.msra.mxu0 0.0
  %6590 = vmatprep.subr.mxu0 0.0
  %6591 = vmatpush1.msra.mxu0 0.0
  %6592 = vmatprep.subr.mxu0 0.0
  %6593 = vmatpush1.msra.mxu0 0.0
  %6594 = vmatprep.subr.mxu0 0.0
  %6595 = vmatpush1.msra.mxu0 0.0
  %6596 = vmatprep.subr.mxu0 0.0
  %6597 = vmatpush1.msra.mxu0 0.0
  %6598 = vmatprep.subr.mxu0 0.0
  %6599 = vmatpush1.msra.mxu0 0.0
  %6600 = vmatprep.subr.mxu0 0.0
  %6601 = vmatpush1.msra.mxu0 0.0
  %6602 = vmatprep.subr.mxu0 0.0
  %6603 = vmatpush1.msra.mxu0 0.0
  %6604 = vmatprep.subr.mxu0 0.0
  %6605 = vmatpush1.msra.mxu0 0.0
  %6606 = vmatprep.subr.mxu0 0.0
  %6607 = vmatpush1.msra.mxu0 0.0
  %6608 = vmatprep.subr.mxu0 0.0
  %6609 = vmatpush1.msra.mxu0 0.0
  %6610 = vmatprep.subr.mxu0 0.0
  %6611 = vmatpush1.msra.mxu0 0.0
  %6612 = vmatprep.subr.mxu0 0.0
  %6613 = vmatpush1.msra.mxu0 0.0
  %6614 = vmatprep.subr.mxu0 0.0
  %6615 = vmatpush1.msra.mxu0 0.0
  %6616 = vmatprep.subr.mxu0 0.0
  %6617 = vmatpush1.msra.mxu0 0.0
  %6618 = vmatprep.subr.mxu0 0.0
  %6619 = vmatpush1.msra.mxu0 0.0
  %6620 = vmatprep.mubr.f32.mxu0 0.0
  %6621 = vmatmul.mubr.f32.gmra.mrb[0].mxu0 %v6509
  %v6622 = vpop.f32.mrb[0].mxu0
  %v6623 = vadd.f32 0.0, %v6622
  %v6624 = vpop.f32.mrb[0].mxu0
  %6625 = vmatprep.mubr.f32.mxu0 0.0
  %6626 = vmatmul.mubr.f32.gmra.mrb[0].mxu0 %v6512
  %v6627 = vpop.f32.mrb[0].mxu0
  %v6628 = vadd.f32 0.0, %v6627
  %v6629 = vpop.f32.mrb[0].mxu0
  %6630 = vmatprep.mubr.f32.mxu0 0.0
  %6631 = vmatmul.mubr.f32.gmra.mrb[0].mxu0 %v6515
  %v6632 = vpop.f32.mrb[0].mxu0
  %v6633 = vadd.f32 0.0, %v6632
  %v6634 = vpop.f32.mrb[0].mxu0
  %6635 = vmatprep.mubr.f32.mxu0 0.0
  %6636 = vmatmul.mubr.f32.gmra.mrb[0].mxu0 %v6518
  %v6637 = vpop.f32.mrb[0].mxu0
  %v6638 = vadd.f32 0.0, %v6637
  %v6639 = vpop.f32.mrb[0].mxu0
  %6640 = vmatprep.mubr.f32.mxu0 0.0
  %6641 = vmatmul.mubr.f32.gmra.mrb[0].mxu0 %v6521
  %v6642 = vpop.f32.mrb[0].mxu0
  %v6643 = vadd.f32 0.0, %v6642
  %v6644 = vpop.f32.mrb[0].mxu0
  %6645 = vmatprep.mubr.f32.mxu0 0.0
  %6646 = vmatmul.mubr.f32.gmra.mrb[0].mxu0 %v6524
  %v6647 = vpop.f32.mrb[0].mxu0
  %v6648 = vadd.f32 0.0, %v6647
  %v6649 = vpop.f32.mrb[0].mxu0
  %6650 = vmatprep.mubr.f32.mxu0 0.0
  %6651 = vmatmul.mubr.f32.gmra.mrb[0].mxu0 %v6527
  %v6652 = vpop.f32.mrb[0].mxu0
  %v6653 = vadd.f32 0.0, %v6652
  %v6654 = vpop.f32.mrb[0].mxu0
  %6655 = vmatprep.mubr.f32.mxu0 0.0
  %6656 = vmatmul.mubr.f32.gmra.mrb[0].mxu0 %v6530
  %v6657 = vpop.f32.mrb[0].mxu0
  %v6658 = vadd.f32 0.0, %v6657
  %v6659 = vpop.f32.mrb[0].mxu0
  %6660 = vmatprep.mubr.f32.mxu0 0.0
  %6661 = vmatmul.mubr.f32.gmra.mrb[0].mxu0 %v6533
  %v6662 = vpop.f32.mrb[0].mxu0
  %v6663 = vadd.f32 0.0, %v6662
  %v6664 = vpop.f32.mrb[0].mxu0
  %6665 = vmatprep.mubr.f32.mxu0 0.0
  %6666 = vmatmul.mubr.f32.gmra.mrb[0].mxu0 %v6536
  %v6667 = vpop.f32.mrb[0].mxu0
  %v6668 = vadd.f32 0.0, %v6667
  %v6669 = vpop.f32.mrb[0].mxu0
  %6670 = vmatprep.mubr.f32.mxu0 0.0
  %6671 = vmatmul.mubr.f32.gmra.mrb[0].mxu0 %v6539
  %v6672 = vpop.f32.mrb[0].mxu0
  %v6673 = vadd.f32 0.0, %v6672
  %v6674 = vpop.f32.mrb[0].mxu0
  %6675 = vmatprep.mubr.f32.mxu0 0.0
  %6676 = vmatmul.mubr.f32.gmra.mrb[0].mxu0 %v6542
  %v6677 = vpop.f32.mrb[0].mxu0
  %v6678 = vadd.f32 0.0, %v6677
  %v6679 = vpop.f32.mrb[0].mxu0
  %6680 = vmatprep.mubr.f32.mxu0 0.0
  %6681 = vmatmul.mubr.f32.gmra.mrb[0].mxu0 %v6545
  %v6682 = vpop.f32.mrb[0].mxu0
  %v6683 = vadd.f32 0.0, %v6682
  %v6684 = vpop.f32.mrb[0].mxu0
  %6685 = vmatprep.mubr.f32.mxu0 0.0
  %6686 = vmatmul.mubr.f32.gmra.mrb[0].mxu0 %v6548
  %v6687 = vpop.f32.mrb[0].mxu0
  %v6688 = vadd.f32 0.0, %v6687
  %v6689 = vpop.f32.mrb[0].mxu0
  %6690 = vmatprep.mubr.f32.mxu0 0.0
  %6691 = vmatmul.mubr.f32.gmra.mrb[0].mxu0 %v6551
  %v6692 = vpop.f32.mrb[0].mxu0
  %v6693 = vadd.f32 0.0, %v6692
  %v6694 = vpop.f32.mrb[0].mxu0
  %6695 = vdwg.mxu0
  %v6696 = vadd.f32 %v6289, %v6623
  %v6697 = vadd.f32 %v6290, %v6628
  %v6698 = vadd.f32 %v6291, %v6633
  %v6699 = vadd.f32 %v6292, %v6638
  %v6700 = vadd.f32 %v6293, %v6643
  %v6701 = vadd.f32 %v6294, %v6648
  %v6702 = vadd.f32 %v6295, %v6653
  %v6703 = vadd.f32 %v6296, %v6658
  %v6704 = vadd.f32 %v6297, %v6663
  %v6705 = vadd.f32 %v6298, %v6668
  %v6706 = vadd.f32 %v6299, %v6673
  %v6707 = vadd.f32 %v6300, %v6678
  %v6708 = vadd.f32 %v6301, %v6683
  %v6709 = vadd.f32 %v6302, %v6688
  %v6710 = vadd.f32 %v6303, %v6693
  %v6711 = vld [vmem:[%s16] sm:$0xff]
  %v6712 = vld [vmem:[%s16 + $0x8] sm:$0xff]
  %v6713 = vld [vmem:[%s16 + $0x10] sm:$0xff]
  %v6714 = vld [vmem:[%s16 + $0x18] sm:$0xff]
  %v6715 = vld [vmem:[%s16 + $0x20] sm:$0xff]
  %v6716 = vld [vmem:[%s16 + $0x28] sm:$0xff]
  %v6717 = vld [vmem:[%s16 + $0x30] sm:$0xff]
  %v6718 = vld [vmem:[%s16 + $0x38] sm:$0xff]
  %v6719 = vld [vmem:[%s16 + $0x40] sm:$0xff]
  %v6720 = vld [vmem:[%s16 + $0x48] sm:$0xff]
  %v6721 = vld [vmem:[%s16 + $0x50] sm:$0xff]
  %v6722 = vld [vmem:[%s16 + $0x58] sm:$0xff]
  %v6723 = vld [vmem:[%s16 + $0x60] sm:$0xff]
  %v6724 = vld [vmem:[%s16 + $0x68] sm:$0xff]
  %v6725 = vld [vmem:[%s16 + $0x70] sm:$0xff]
  %6727 = vset.pattern.permute.xlu0 0
  %6728 = vperm.xlu0 %6727, %v6711
  %v6729 = vpop.permute.xlu0 %6728
  %6732 = vset.pattern.permute.xlu0 0
  %6733 = vperm.xlu0 %6732, %v6712
  %v6734 = vpop.permute.xlu0 %6733
  %6737 = vset.pattern.permute.xlu0 0
  %6738 = vperm.xlu0 %6737, %v6713
  %v6739 = vpop.permute.xlu0 %6738
  %6742 = vset.pattern.permute.xlu0 0
  %6743 = vperm.xlu0 %6742, %v6714
  %v6744 = vpop.permute.xlu0 %6743
  %6747 = vset.pattern.permute.xlu0 0
  %6748 = vperm.xlu0 %6747, %v6715
  %v6749 = vpop.permute.xlu0 %6748
  %6752 = vset.pattern.permute.xlu0 0
  %6753 = vperm.xlu0 %6752, %v6716
  %v6754 = vpop.permute.xlu0 %6753
  %6757 = vset.pattern.permute.xlu0 0
  %6758 = vperm.xlu0 %6757, %v6717
  %v6759 = vpop.permute.xlu0 %6758
  %6762 = vset.pattern.permute.xlu0 0
  %6763 = vperm.xlu0 %6762, %v6718
  %v6764 = vpop.permute.xlu0 %6763
  %6767 = vset.pattern.permute.xlu0 0
  %6768 = vperm.xlu0 %6767, %v6719
  %v6769 = vpop.permute.xlu0 %6768
  %6772 = vset.pattern.permute.xlu0 0
  %6773 = vperm.xlu0 %6772, %v6720
  %v6774 = vpop.permute.xlu0 %6773
  %6777 = vset.pattern.permute.xlu0 0
  %6778 = vperm.xlu0 %6777, %v6721
  %v6779 = vpop.permute.xlu0 %6778
  %6782 = vset.pattern.permute.xlu0 0
  %6783 = vperm.xlu0 %6782, %v6722
  %v6784 = vpop.permute.xlu0 %6783
  %6787 = vset.pattern.permute.xlu0 0
  %6788 = vperm.xlu0 %6787, %v6723
  %v6789 = vpop.permute.xlu0 %6788
  %6792 = vset.pattern.permute.xlu0 0
  %6793 = vperm.xlu0 %6792, %v6724
  %v6794 = vpop.permute.xlu0 %6793
  %6797 = vset.pattern.permute.xlu0 0
  %6798 = vperm.xlu0 %6797, %v6725
  %v6799 = vpop.permute.xlu0 %6798
  %v6801 = vadd.f32 %v6696, %v6729
  %v6802 = vadd.f32 %v6697, %v6734
  %v6803 = vadd.f32 %v6698, %v6739
  %v6804 = vadd.f32 %v6699, %v6744
  %v6805 = vadd.f32 %v6700, %v6749
  %v6806 = vadd.f32 %v6701, %v6754
  %v6807 = vadd.f32 %v6702, %v6759
  %v6808 = vadd.f32 %v6703, %v6764
  %v6809 = vadd.f32 %v6704, %v6769
  %v6810 = vadd.f32 %v6705, %v6774
  %v6811 = vadd.f32 %v6706, %v6779
  %v6812 = vadd.f32 %v6707, %v6784
  %v6813 = vadd.f32 %v6708, %v6789
  %v6814 = vadd.f32 %v6709, %v6794
  %v6815 = vadd.f32 %v6710, %v6799
  %v6816 = vmax.f32 %v6801, 0.0
  %v6817 = vmax.f32 %v6802, 0.0
  %v6818 = vmax.f32 %v6803, 0.0
  %v6819 = vmax.f32 %v6804, 0.0
  %v6820 = vmax.f32 %v6805, 0.0
  %v6821 = vmax.f32 %v6806, 0.0
  %v6822 = vmax.f32 %v6807, 0.0
  %v6823 = vmax.f32 %v6808, 0.0
  %v6824 = vmax.f32 %v6809, 0.0
  %v6825 = vmax.f32 %v6810, 0.0
  %v6826 = vmax.f32 %v6811, 0.0
  %v6827 = vmax.f32 %v6812, 0.0
  %v6828 = vmax.f32 %v6813, 0.0
  %v6829 = vmax.f32 %v6814, 0.0
  %v6830 = vmax.f32 %v6815, 0.0
  %v6831 = vld [vmem:[%s17] sm:$0xff]
  %v6832 = vld [vmem:[%s17 + $0x8] sm:$0xff]
  %v6833 = vld [vmem:[%s17 + $0x10] sm:$0xff]
  %v6834 = vld [vmem:[%s17 + $0x18] sm:$0xf]
  %vm6835 = vcmask 982016
  %v6837 = vsel %vm6835, %v6831, 0
  %v6840 = vsel %vm6835, %v6832, 0
  %v6843 = vsel %vm6835, %v6833, 0
  %v6846 = vsel %vm6835, %v6834, 0
  %6848 = vmatprep.subr.mxu0 0.0
  %6849 = vmatpush1.msra.mxu0 %v6816
  %6850 = vmatprep.subr.mxu0 0.0
  %6851 = vmatpush1.msra.mxu0 %v6817
  %6852 = vmatprep.subr.mxu0 0.0
  %6853 = vmatpush1.msra.mxu0 %v6818
  %6854 = vmatprep.subr.mxu0 0.0
  %6855 = vmatpush1.msra.mxu0 %v6819
  %6856 = vmatprep.subr.mxu0 0.0
  %6857 = vmatpush1.msra.mxu0 %v6820
  %6858 = vmatprep.subr.mxu0 0.0
  %6859 = vmatpush1.msra.mxu0 %v6821
  %6860 = vmatprep.subr.mxu0 0.0
  %6861 = vmatpush1.msra.mxu0 %v6822
  %6862 = vmatprep.subr.mxu0 0.0
  %6863 = vmatpush1.msra.mxu0 %v6823
  %6864 = vmatprep.subr.mxu0 0.0
  %6865 = vmatpush1.msra.mxu0 %v6824
  %6866 = vmatprep.subr.mxu0 0.0
  %6867 = vmatpush1.msra.mxu0 %v6825
  %6868 = vmatprep.subr.mxu0 0.0
  %6869 = vmatpush1.msra.mxu0 %v6826
  %6870 = vmatprep.subr.mxu0 0.0
  %6871 = vmatpush1.msra.mxu0 %v6827
  %6872 = vmatprep.subr.mxu0 0.0
  %6873 = vmatpush1.msra.mxu0 %v6828
  %6874 = vmatprep.subr.mxu0 0.0
  %6875 = vmatpush1.msra.mxu0 %v6829
  %6876 = vmatprep.subr.mxu0 0.0
  %6877 = vmatpush1.msra.mxu0 %v6830
  %6878 = vmatprep.subr.mxu0 0.0
  %6879 = vmatpush1.msra.mxu0 0.0
  %6880 = vmatprep.subr.mxu0 0.0
  %6881 = vmatpush1.msra.mxu0 0.0
  %6882 = vmatprep.subr.mxu0 0.0
  %6883 = vmatpush1.msra.mxu0 0.0
  %6884 = vmatprep.subr.mxu0 0.0
  %6885 = vmatpush1.msra.mxu0 0.0
  %6886 = vmatprep.subr.mxu0 0.0
  %6887 = vmatpush1.msra.mxu0 0.0
  %6888 = vmatprep.subr.mxu0 0.0
  %6889 = vmatpush1.msra.mxu0 0.0
  %6890 = vmatprep.subr.mxu0 0.0
  %6891 = vmatpush1.msra.mxu0 0.0
  %6892 = vmatprep.subr.mxu0 0.0
  %6893 = vmatpush1.msra.mxu0 0.0
  %6894 = vmatprep.subr.mxu0 0.0
  %6895 = vmatpush1.msra.mxu0 0.0
  %6896 = vmatprep.subr.mxu0 0.0
  %6897 = vmatpush1.msra.mxu0 0.0
  %6898 = vmatprep.subr.mxu0 0.0
  %6899 = vmatpush1.msra.mxu0 0.0
  %6900 = vmatprep.subr.mxu0 0.0
  %6901 = vmatpush1.msra.mxu0 0.0
  %6902 = vmatprep.subr.mxu0 0.0
  %6903 = vmatpush1.msra.mxu0 0.0
  %6904 = vmatprep.subr.mxu0 0.0
  %6905 = vmatpush1.msra.mxu0 0.0
  %6906 = vmatprep.subr.mxu0 0.0
  %6907 = vmatpush1.msra.mxu0 0.0
  %6908 = vmatprep.subr.mxu0 0.0
  %6909 = vmatpush1.msra.mxu0 0.0
  %6910 = vmatprep.subr.mxu0 0.0
  %6911 = vmatpush1.msra.mxu0 0.0
  %6912 = vmatprep.mubr.f32.mxu0 0.0
  %6913 = vmatmul.mubr.f32.gmra.mrb[0].mxu0 %v6837
  %v6914 = vpop.f32.mrb[0].mxu0
  %v6915 = vadd.f32 0.0, %v6914
  %v6916 = vpop.f32.mrb[0].mxu0
  %6917 = vmatprep.mubr.f32.mxu0 0.0
  %6918 = vmatmul.mubr.f32.gmra.mrb[0].mxu0 %v6840
  %v6919 = vpop.f32.mrb[0].mxu0
  %v6920 = vadd.f32 0.0, %v6919
  %v6921 = vpop.f32.mrb[0].mxu0
  %6922 = vmatprep.mubr.f32.mxu0 0.0
  %6923 = vmatmul.mubr.f32.gmra.mrb[0].mxu0 %v6843
  %v6924 = vpop.f32.mrb[0].mxu0
  %v6925 = vadd.f32 0.0, %v6924
  %v6926 = vpop.f32.mrb[0].mxu0
  %6927 = vmatprep.mubr.f32.mxu0 0.0
  %6928 = vmatmul.mubr.f32.gmra.mrb[0].mxu0 %v6846
  %v6929 = vpop.f32.mrb[0].mxu0
  %v6930 = vadd.f32 0.0, %v6929
  %v6931 = vpop.f32.mrb[0].mxu0
  %6932 = vdwg.mxu0
  %v6933 = vld [vmem:[%s18] sm:$0xff]
  %v6934 = vld [vmem:[%s18 + $0x8] sm:$0xff]
  %v6935 = vld [vmem:[%s18 + $0x10] sm:$0xff]
  %v6936 = vld [vmem:[%s18 + $0x18] sm:$0x3f]
  %s6937 = scalar_lea.vmem %s17, 32
  %v6938 = vld [vmem:[%s6937] sm:$0xff]
  %v6939 = vld [vmem:[%s6937 + $0x8] sm:$0xff]
  %v6940 = vld [vmem:[%s6937 + $0x10] sm:$0xff]
  %v6941 = vld [vmem:[%s6937 + $0x18] sm:$0xf]
  %v6943 = vsel %vm6835, %v6938, 0
  %v6946 = vsel %vm6835, %v6939, 0
  %v6949 = vsel %vm6835, %v6940, 0
  %v6952 = vsel %vm6835, %v6941, 0
  %6954 = vmatprep.subr.mxu0 0.0
  %6955 = vmatpush1.msra.mxu0 %v6816
  %6956 = vmatprep.subr.mxu0 0.0
  %6957 = vmatpush1.msra.mxu0 %v6817
  %6958 = vmatprep.subr.mxu0 0.0
  %6959 = vmatpush1.msra.mxu0 %v6818
  %6960 = vmatprep.subr.mxu0 0.0
  %6961 = vmatpush1.msra.mxu0 %v6819
  %6962 = vmatprep.subr.mxu0 0.0
  %6963 = vmatpush1.msra.mxu0 %v6820
  %6964 = vmatprep.subr.mxu0 0.0
  %6965 = vmatpush1.msra.mxu0 %v6821
  %6966 = vmatprep.subr.mxu0 0.0
  %6967 = vmatpush1.msra.mxu0 %v6822
  %6968 = vmatprep.subr.mxu0 0.0
  %6969 = vmatpush1.msra.mxu0 %v6823
  %6970 = vmatprep.subr.mxu0 0.0
  %6971 = vmatpush1.msra.mxu0 %v6824
  %6972 = vmatprep.subr.mxu0 0.0
  %6973 = vmatpush1.msra.mxu0 %v6825
  %6974 = vmatprep.subr.mxu0 0.0
  %6975 = vmatpush1.msra.mxu0 %v6826
  %6976 = vmatprep.subr.mxu0 0.0
  %6977 = vmatpush1.msra.mxu0 %v6827
  %6978 = vmatprep.subr.mxu0 0.0
  %6979 = vmatpush1.msra.mxu0 %v6828
  %6980 = vmatprep.subr.mxu0 0.0
  %6981 = vmatpush1.msra.mxu0 %v6829
  %6982 = vmatprep.subr.mxu0 0.0
  %6983 = vmatpush1.msra.mxu0 %v6830
  %6984 = vmatprep.subr.mxu0 0.0
  %6985 = vmatpush1.msra.mxu0 0.0
  %6986 = vmatprep.subr.mxu0 0.0
  %6987 = vmatpush1.msra.mxu0 0.0
  %6988 = vmatprep.subr.mxu0 0.0
  %6989 = vmatpush1.msra.mxu0 0.0
  %6990 = vmatprep.subr.mxu0 0.0
  %6991 = vmatpush1.msra.mxu0 0.0
  %6992 = vmatprep.subr.mxu0 0.0
  %6993 = vmatpush1.msra.mxu0 0.0
  %6994 = vmatprep.subr.mxu0 0.0
  %6995 = vmatpush1.msra.mxu0 0.0
  %6996 = vmatprep.subr.mxu0 0.0
  %6997 = vmatpush1.msra.mxu0 0.0
  %6998 = vmatprep.subr.mxu0 0.0
  %6999 = vmatpush1.msra.mxu0 0.0
  %7000 = vmatprep.subr.mxu0 0.0
  %7001 = vmatpush1.msra.mxu0 0.0
  %7002 = vmatprep.subr.mxu0 0.0
  %7003 = vmatpush1.msra.mxu0 0.0
  %7004 = vmatprep.subr.mxu0 0.0
  %7005 = vmatpush1.msra.mxu0 0.0
  %7006 = vmatprep.subr.mxu0 0.0
  %7007 = vmatpush1.msra.mxu0 0.0
  %7008 = vmatprep.subr.mxu0 0.0
  %7009 = vmatpush1.msra.mxu0 0.0
  %7010 = vmatprep.subr.mxu0 0.0
  %7011 = vmatpush1.msra.mxu0 0.0
  %7012 = vmatprep.subr.mxu0 0.0
  %7013 = vmatpush1.msra.mxu0 0.0
  %7014 = vmatprep.subr.mxu0 0.0
  %7015 = vmatpush1.msra.mxu0 0.0
  %7016 = vmatprep.subr.mxu0 0.0
  %7017 = vmatpush1.msra.mxu0 0.0
  %7018 = vmatprep.mubr.f32.mxu0 0.0
  %7019 = vmatmul.mubr.f32.gmra.mrb[0].mxu0 %v6943
  %v7020 = vpop.f32.mrb[0].mxu0
  %v7021 = vadd.f32 0.0, %v7020
  %v7022 = vpop.f32.mrb[0].mxu0
  %7023 = vmatprep.mubr.f32.mxu0 0.0
  %7024 = vmatmul.mubr.f32.gmra.mrb[0].mxu0 %v6946
  %v7025 = vpop.f32.mrb[0].mxu0
  %v7026 = vadd.f32 0.0, %v7025
  %v7027 = vpop.f32.mrb[0].mxu0
  %7028 = vmatprep.mubr.f32.mxu0 0.0
  %7029 = vmatmul.mubr.f32.gmra.mrb[0].mxu0 %v6949
  %v7030 = vpop.f32.mrb[0].mxu0
  %v7031 = vadd.f32 0.0, %v7030
  %v7032 = vpop.f32.mrb[0].mxu0
  %7033 = vmatprep.mubr.f32.mxu0 0.0
  %7034 = vmatmul.mubr.f32.gmra.mrb[0].mxu0 %v6952
  %v7035 = vpop.f32.mrb[0].mxu0
  %v7036 = vadd.f32 0.0, %v7035
  %v7037 = vpop.f32.mrb[0].mxu0
  %7038 = vdwg.mxu0
  %s7039 = scalar_lea.vmem %s18, 32
  %v7040 = vld [vmem:[%s7039] sm:$0xff]
  %v7041 = vld [vmem:[%s7039 + $0x8] sm:$0xff]
  %v7042 = vld [vmem:[%s7039 + $0x10] sm:$0xff]
  %v7043 = vld [vmem:[%s7039 + $0x18] sm:$0x3f]
  %vm7044 = vcmask 244736
  %v7046 = vsel %vm7044, %v7021, 0
  %v7049 = vsel %vm7044, %v7026, 0
  %v7052 = vsel %vm7044, %v7031, 0
  %v7055 = vsel %vm7044, %v7036, 0
  %v7058 = vsel %vm3295, %v7043, 0
  %7060 = vmatprep.subr.mxu0 0.0
  %7061 = vmatpush1.msra.mxu0 %v7040
  %7062 = vmatprep.subr.mxu0 0.0
  %7063 = vmatpush1.msra.mxu0 %v7041
  %7064 = vmatprep.subr.mxu0 0.0
  %7065 = vmatpush1.msra.mxu0 %v7042
  %7066 = vmatprep.subr.mxu0 0.0
  %7067 = vmatpush1.msra.mxu0 %v7058
  %7068 = vmatprep.subr.mxu0 0.0
  %7069 = vmatpush1.msra.mxu0 0.0
  %7070 = vmatprep.subr.mxu0 0.0
  %7071 = vmatpush1.msra.mxu0 0.0
  %7072 = vmatprep.subr.mxu0 0.0
  %7073 = vmatpush1.msra.mxu0 0.0
  %7074 = vmatprep.subr.mxu0 0.0
  %7075 = vmatpush1.msra.mxu0 0.0
  %7076 = vmatprep.subr.mxu0 0.0
  %7077 = vmatpush1.msra.mxu0 0.0
  %7078 = vmatprep.subr.mxu0 0.0
  %7079 = vmatpush1.msra.mxu0 0.0
  %7080 = vmatprep.subr.mxu0 0.0
  %7081 = vmatpush1.msra.mxu0 0.0
  %7082 = vmatprep.subr.mxu0 0.0
  %7083 = vmatpush1.msra.mxu0 0.0
  %7084 = vmatprep.subr.mxu0 0.0
  %7085 = vmatpush1.msra.mxu0 0.0
  %7086 = vmatprep.subr.mxu0 0.0
  %7087 = vmatpush1.msra.mxu0 0.0
  %7088 = vmatprep.subr.mxu0 0.0
  %7089 = vmatpush1.msra.mxu0 0.0
  %7090 = vmatprep.subr.mxu0 0.0
  %7091 = vmatpush1.msra.mxu0 0.0
  %7092 = vmatprep.subr.mxu0 0.0
  %7093 = vmatpush1.msra.mxu0 0.0
  %7094 = vmatprep.subr.mxu0 0.0
  %7095 = vmatpush1.msra.mxu0 0.0
  %7096 = vmatprep.subr.mxu0 0.0
  %7097 = vmatpush1.msra.mxu0 0.0
  %7098 = vmatprep.subr.mxu0 0.0
  %7099 = vmatpush1.msra.mxu0 0.0
  %7100 = vmatprep.subr.mxu0 0.0
  %7101 = vmatpush1.msra.mxu0 0.0
  %7102 = vmatprep.subr.mxu0 0.0
  %7103 = vmatpush1.msra.mxu0 0.0
  %7104 = vmatprep.subr.mxu0 0.0
  %7105 = vmatpush1.msra.mxu0 0.0
  %7106 = vmatprep.subr.mxu0 0.0
  %7107 = vmatpush1.msra.mxu0 0.0
  %7108 = vmatprep.subr.mxu0 0.0
  %7109 = vmatpush1.msra.mxu0 0.0
  %7110 = vmatprep.subr.mxu0 0.0
  %7111 = vmatpush1.msra.mxu0 0.0
  %7112 = vmatprep.subr.mxu0 0.0
  %7113 = vmatpush1.msra.mxu0 0.0
  %7114 = vmatprep.subr.mxu0 0.0
  %7115 = vmatpush1.msra.mxu0 0.0
  %7116 = vmatprep.subr.mxu0 0.0
  %7117 = vmatpush1.msra.mxu0 0.0
  %7118 = vmatprep.subr.mxu0 0.0
  %7119 = vmatpush1.msra.mxu0 0.0
  %7120 = vmatprep.subr.mxu0 0.0
  %7121 = vmatpush1.msra.mxu0 0.0
  %7122 = vmatprep.subr.mxu0 0.0
  %7123 = vmatpush1.msra.mxu0 0.0
  %7124 = vmatprep.mubr.f32.mxu0 0.0
  %7125 = vmatmul.mubr.f32.gmra.mrb[0].mxu0 %v7046
  %v7126 = vpop.f32.mrb[0].mxu0
  %v7127 = vadd.f32 0.0, %v7126
  %v7128 = vpop.f32.mrb[0].mxu0
  %7129 = vmatprep.mubr.f32.mxu0 0.0
  %7130 = vmatmul.mubr.f32.gmra.mrb[0].mxu0 %v7049
  %v7131 = vpop.f32.mrb[0].mxu0
  %v7132 = vadd.f32 0.0, %v7131
  %v7133 = vpop.f32.mrb[0].mxu0
  %7134 = vmatprep.mubr.f32.mxu0 0.0
  %7135 = vmatmul.mubr.f32.gmra.mrb[0].mxu0 %v7052
  %v7136 = vpop.f32.mrb[0].mxu0
  %v7137 = vadd.f32 0.0, %v7136
  %v7138 = vpop.f32.mrb[0].mxu0
  %7139 = vmatprep.mubr.f32.mxu0 0.0
  %7140 = vmatmul.mubr.f32.gmra.mrb[0].mxu0 %v7055
  %v7141 = vpop.f32.mrb[0].mxu0
  %v7142 = vadd.f32 0.0, %v7141
  %v7143 = vpop.f32.mrb[0].mxu0
  %7144 = vdwg.mxu0
  %v7146 = vsel %vm7044, %v6915, 0
  %v7149 = vsel %vm7044, %v6920, 0
  %v7152 = vsel %vm7044, %v6925, 0
  %v7155 = vsel %vm7044, %v6930, 0
  %v7158 = vsel %vm3295, %v6936, 0
  %7160 = vmatprep.subr.mxu0 0.0
  %7161 = vmatpush1.msra.mxu0 %v6933
  %7162 = vmatprep.subr.mxu0 0.0
  %7163 = vmatpush1.msra.mxu0 %v6934
  %7164 = vmatprep.subr.mxu0 0.0
  %7165 = vmatpush1.msra.mxu0 %v6935
  %7166 = vmatprep.subr.mxu0 0.0
  %7167 = vmatpush1.msra.mxu0 %v7158
  %7168 = vmatprep.subr.mxu0 0.0
  %7169 = vmatpush1.msra.mxu0 0.0
  %7170 = vmatprep.subr.mxu0 0.0
  %7171 = vmatpush1.msra.mxu0 0.0
  %7172 = vmatprep.subr.mxu0 0.0
  %7173 = vmatpush1.msra.mxu0 0.0
  %7174 = vmatprep.subr.mxu0 0.0
  %7175 = vmatpush1.msra.mxu0 0.0
  %7176 = vmatprep.subr.mxu0 0.0
  %7177 = vmatpush1.msra.mxu0 0.0
  %7178 = vmatprep.subr.mxu0 0.0
  %7179 = vmatpush1.msra.mxu0 0.0
  %7180 = vmatprep.subr.mxu0 0.0
  %7181 = vmatpush1.msra.mxu0 0.0
  %7182 = vmatprep.subr.mxu0 0.0
  %7183 = vmatpush1.msra.mxu0 0.0
  %7184 = vmatprep.subr.mxu0 0.0
  %7185 = vmatpush1.msra.mxu0 0.0
  %7186 = vmatprep.subr.mxu0 0.0
  %7187 = vmatpush1.msra.mxu0 0.0
  %7188 = vmatprep.subr.mxu0 0.0
  %7189 = vmatpush1.msra.mxu0 0.0
  %7190 = vmatprep.subr.mxu0 0.0
  %7191 = vmatpush1.msra.mxu0 0.0
  %7192 = vmatprep.subr.mxu0 0.0
  %7193 = vmatpush1.msra.mxu0 0.0
  %7194 = vmatprep.subr.mxu0 0.0
  %7195 = vmatpush1.msra.mxu0 0.0
  %7196 = vmatprep.subr.mxu0 0.0
  %7197 = vmatpush1.msra.mxu0 0.0
  %7198 = vmatprep.subr.mxu0 0.0
  %7199 = vmatpush1.msra.mxu0 0.0
  %7200 = vmatprep.subr.mxu0 0.0
  %7201 = vmatpush1.msra.mxu0 0.0
  %7202 = vmatprep.subr.mxu0 0.0
  %7203 = vmatpush1.msra.mxu0 0.0
  %7204 = vmatprep.subr.mxu0 0.0
  %7205 = vmatpush1.msra.mxu0 0.0
  %7206 = vmatprep.subr.mxu0 0.0
  %7207 = vmatpush1.msra.mxu0 0.0
  %7208 = vmatprep.subr.mxu0 0.0
  %7209 = vmatpush1.msra.mxu0 0.0
  %7210 = vmatprep.subr.mxu0 0.0
  %7211 = vmatpush1.msra.mxu0 0.0
  %7212 = vmatprep.subr.mxu0 0.0
  %7213 = vmatpush1.msra.mxu0 0.0
  %7214 = vmatprep.subr.mxu0 0.0
  %7215 = vmatpush1.msra.mxu0 0.0
  %7216 = vmatprep.subr.mxu0 0.0
  %7217 = vmatpush1.msra.mxu0 0.0
  %7218 = vmatprep.subr.mxu0 0.0
  %7219 = vmatpush1.msra.mxu0 0.0
  %7220 = vmatprep.subr.mxu0 0.0
  %7221 = vmatpush1.msra.mxu0 0.0
  %7222 = vmatprep.subr.mxu0 0.0
  %7223 = vmatpush1.msra.mxu0 0.0
  %7224 = vmatprep.mubr.f32.mxu0 0.0
  %7225 = vmatmul.mubr.f32.gmra.mrb[0].mxu0 %v7146
  %v7226 = vpop.f32.mrb[0].mxu0
  %v7227 = vadd.f32 %v7127, %v7226
  %v7228 = vpop.f32.mrb[0].mxu0
  %7229 = vmatprep.mubr.f32.mxu0 0.0
  %7230 = vmatmul.mubr.f32.gmra.mrb[0].mxu0 %v7149
  %v7231 = vpop.f32.mrb[0].mxu0
  %v7232 = vadd.f32 %v7132, %v7231
  %v7233 = vpop.f32.mrb[0].mxu0
  %7234 = vmatprep.mubr.f32.mxu0 0.0
  %7235 = vmatmul.mubr.f32.gmra.mrb[0].mxu0 %v7152
  %v7236 = vpop.f32.mrb[0].mxu0
  %v7237 = vadd.f32 %v7137, %v7236
  %v7238 = vpop.f32.mrb[0].mxu0
  %7239 = vmatprep.mubr.f32.mxu0 0.0
  %7240 = vmatmul.mubr.f32.gmra.mrb[0].mxu0 %v7155
  %v7241 = vpop.f32.mrb[0].mxu0
  %v7242 = vadd.f32 %v7142, %v7241
  %v7243 = vpop.f32.mrb[0].mxu0
  %7244 = vdwg.mxu0
  %v7245 = vld [vmem:[%s19] sm:$0xff]
  %v7246 = vld [vmem:[%s19 + $0x8] sm:$0xff]
  %v7247 = vld [vmem:[%s19 + $0x10] sm:$0xff]
  %v7248 = vld [vmem:[%s19 + $0x18] sm:$0xf]
  %7250 = vset.pattern.permute.xlu0 0
  %7251 = vperm.xlu0 %7250, %v7245
  %v7252 = vpop.permute.xlu0 %7251
  %7255 = vset.pattern.permute.xlu0 0
  %7256 = vperm.xlu0 %7255, %v7246
  %v7257 = vpop.permute.xlu0 %7256
  %7260 = vset.pattern.permute.xlu0 0
  %7261 = vperm.xlu0 %7260, %v7247
  %v7262 = vpop.permute.xlu0 %7261
  %7265 = vset.pattern.permute.xlu0 0
  %7266 = vperm.xlu0 %7265, %v7248
  %v7267 = vpop.permute.xlu0 %7266
  %v7269 = vadd.f32 %v7227, %v7252
  %v7270 = vadd.f32 %v7232, %v7257
  %v7271 = vadd.f32 %v7237, %v7262
  %v7272 = vadd.f32 %v7242, %v7267
  %v7273 = vtanh.pop %v7269
  %v7274 = vtanh.pop %v7270
  %v7275 = vtanh.pop %v7271
  %v7276 = vtanh.pop %v7272
  %7277 = vst.msk [vmem:[%s20] sm:$0xff] %vm90, %v7273
  %7278 = vst.msk [vmem:[%s20 + $0x8] sm:$0xff] %vm90, %v7274
  %7279 = vst.msk [vmem:[%s20 + $0x10] sm:$0xff] %vm90, %v7275
  %vm7280 = vcmask 224256
  %7281 = vst.msk [vmem:[%s20 + $0x18] sm:$0xf] %vm7280, %v7276
  %7286 = vrot.lane.b32.xlu0 %v7273, 100
  %v7287 = vpop.permute.xlu0 %7286
  %7288 = vrot.lane.b32.xlu0 %v7274, 100
  %v7289 = vpop.permute.xlu0 %7288
  %7290 = vrot.lane.b32.xlu0 %v7275, 100
  %v7291 = vpop.permute.xlu0 %7290
  %7292 = vrot.lane.b32.xlu0 %v7276, 100
  %v7293 = vpop.permute.xlu0 %7292
  %s7298 = scalar_lea.vmem %s20, 32
  %7299 = vst.msk [vmem:[%s7298] sm:$0xff] %vm90, %v7287
  %7300 = vst.msk [vmem:[%s7298 + $0x8] sm:$0xff] %vm90, %v7289
  %7301 = vst.msk [vmem:[%s7298 + $0x10] sm:$0xff] %vm90, %v7291
  %7302 = vst.msk [vmem:[%s7298 + $0x18] sm:$0xf] %vm7280, %v7293
  // Predicated region
  $region82: #{tpu_custom_call.1} parent=0 // pred_check
    _
  $region83: #{tpu_custom_call.1} parent=0 // pred_check_branch
    %7304 = sbr.rel (0) target = $region85
  $region84: #{tpu_custom_call.1} parent=0 // pred_region
    _
  $region85: #{tpu_custom_call.1} parent=0 // pred_fallthru
    _
  // Predicated region
  $region86: #{tpu_custom_call.1} parent=0 // pred_check
    _
  $region87: #{tpu_custom_call.1} parent=0 // pred_check_branch
    %7306 = sbr.rel (0) target = $region89
  $region88: #{tpu_custom_call.1} parent=0 // pred_region
    _
  $region89: #{tpu_custom_call.1} parent=0 // pred_fallthru
    _

</llo_original>
